<compile_context>
chip_gen: v7x
topology: tpu7x:2x2x1
jax: 0.10.0
libtpu: 0.0.40
codegen_flags: <defaults>
</compile_context>

<pallas_src>
import math

import jax
import jax.numpy as jnp
from jax.experimental import pallas as pl
from jax.experimental.pallas import tpu as pltpu

LRELU_SLOPE = 0.1
_SUBLANE = 16  # bf16 sublane-packing tile height -> 16-aligned column bases


def _round_up(v, m):
    return ((v + m - 1) // m) * m


def make_fused_kernel(cfg, ncols, period):
    """Build the fused conv-stack kernel.

    cfg[i]: static per-layer dict(Hin, Hin_pad, Hout, Hout_pad, K, S, Cin, Cout, act).
    Ref order:
      x, (w_hbm_0, b_hbm_0), ..., (w_hbm_{L-1}, b_hbm_{L-1}), out,
      w_vmem_0..L-1, b_vmem_0..L-1, act_0..L-2, copy_sem
    """
    L = len(cfg)

    def kernel(*refs):
        x_ref = refs[0]
        w_hbm = [refs[1 + 2 * i] for i in range(L)]
        b_hbm = [refs[2 + 2 * i] for i in range(L)]
        o_ref = refs[1 + 2 * L]
        scr = refs[2 + 2 * L:]
        w_vmem = list(scr[:L])
        b_vmem = list(scr[L:2 * L])
        acts = list(scr[2 * L:3 * L - 1])
        copy_sem = scr[3 * L - 1]

        # ---- one-time weight residency: HBM -> single-buffered VMEM scratch ----
        # (grid axis is serial/"arbitrary"; later steps reuse the same scratch)
        @pl.when(pl.program_id(0) == 0)
        def _load_weights():
            for i in range(L):
                pltpu.make_async_copy(w_hbm[i], w_vmem[i], copy_sem.at[2 * i]).start()
                pltpu.make_async_copy(b_hbm[i], b_vmem[i], copy_sem.at[2 * i + 1]).start()
            for i in range(L):
                pltpu.make_async_copy(w_hbm[i], w_vmem[i], copy_sem.at[2 * i]).wait()
                pltpu.make_async_copy(b_hbm[i], b_vmem[i], copy_sem.at[2 * i + 1]).wait()

        in_r = x_ref
        for i, c in enumerate(cfg):
            last = i == L - 1
            K, S = c["K"], c["S"]
            Hout, Hout_pad, Hin_pad = c["Hout"], c["Hout_pad"], c["Hin_pad"]
            # Rows actually computed per column: dense (stride-1) span for S>1.
            Hd = c["Hin"] - K + 1 if S > 1 else Hout

            # Per-layer invariants hoisted out of the column loop.
            wk = [w_vmem[i][k] for k in range(K)]          # (Cin, Cout) bf16 taps
            bias = b_vmem[i][...]                          # (1, Cout) f32
            if S > 1:
                # 0/1 row-selection matrix picking rows 0, S, 2S, ... of the dense
                # result.  One tiny extra MXU matmul per column replaces K strided
                # (XLU-retiling) sublane loads.
                r = jax.lax.broadcasted_iota(jnp.int32, (Hout, Hd), 0)
                q = jax.lax.broadcasted_iota(jnp.int32, (Hout, Hd), 1)
                sel = (q == r * S).astype(jnp.float32)

            # Columns = (batch-in-block, period) pairs; independent because the
            # conv kernels have width 1.  ncols is small & static -> unrolled.
            # TODO(synk): switch to lax.fori_loop for very large batch_block*period.
            for n in range(ncols):
                base = n * Hin_pad                         # 16-aligned column base
                acc = None
                for k in range(K):
                    tap = in_r[pl.ds(base + k, Hd), :]     # contiguous bf16 load
                    part = jnp.dot(tap, wk[k],
                                   preferred_element_type=jnp.float32)
                    acc = part if acc is None else acc + part
                if S > 1:
                    acc = jnp.dot(sel, acc, preferred_element_type=jnp.float32)
                y = acc + bias                             # f32 epilogue
                if c["act"]:
                    y = jnp.where(y >= 0.0, y, y * LRELU_SLOPE)
                if last:
                    # Lane-major flat output block (Bt, period*Hout*Cout).
                    t, col = divmod(n, period)
                    fc = Hout * c["Cout"]
                    o_ref[pl.ds(t, 1), pl.ds(col * fc, fc)] = (
                        y.reshape(1, fc).astype(o_ref.dtype))
                else:
                    acts[i][pl.ds(n * Hout_pad, Hout), :] = y.astype(acts[i].dtype)
            if not last:
                in_r = acts[i]

    return kernel


def pack_kernel_layers(layers):
    """One-time packing of the conv stack that runs inside the kernel.

    Grouped OIHW weights -> dense block-diagonal (K, Cin, Cout) bf16 (fast MXU
    path); biases -> (1, Cout) f32 (epilogue stays in f32)."""
    packed = []
    for lyr in layers:
        w4 = lyr["w"]                              # (Cout, Cin_g, K, 1)
        g = lyr["groups"]
        Cout, Cin_g, K, _ = w4.shape
        Cin, Cout_g = Cin_g * g, Cout // g
        w3 = jnp.zeros((K, Cin, Cout), jnp.float32)
        for gi in range(g):
            wg = jnp.transpose(w4[gi * Cout_g:(gi + 1) * Cout_g, :, :, 0],
                               (2, 1, 0))          # (K, Cin_g, Cout_g)
            w3 = w3.at[:, gi * Cin_g:(gi + 1) * Cin_g,
                       gi * Cout_g:(gi + 1) * Cout_g].set(wg)
        packed.append(dict(w3=w3.astype(jnp.bfloat16),
                           b2=lyr["b"].reshape(1, Cout).astype(jnp.float32),
                           K=K, S=lyr["stride"], Cin=Cin, Cout=Cout,
                           act=lyr["act"]))
    return packed


def prepare_params(layers):
    """Split params: raw input_layer (hoisted to XLA) + packed kernel layers."""
    return dict(w0=layers[0]["w"], b0=layers[0]["b"], s0=layers[0]["stride"],
                klayers=pack_kernel_layers(layers[1:]))


def _input_layer_xla(x, w0, b0, period, stride):
    """torch pad/reshape/transpose + input_layer conv, hoisted to XLA.

    The Cin=1 image would be ~128x lane-padded in VMEM, so this trivial conv runs
    in XLA and the kernel ingests a lane-dense (period*H1, channels) activation."""
    B, T = x.shape
    pad = (-T) % period
    xp = jnp.pad(x, ((0, 0), (0, pad)))                              # zero pad
    Hp = xp.shape[1] // period
    img = jnp.transpose(xp.reshape(B, 1, period, Hp), (0, 1, 3, 2))  # NCHW (B,1,Hp,period)
    y = jax.lax.conv_general_dilated(img, w0, window_strides=(stride, 1),
                                     padding="VALID",
                                     dimension_numbers=("NCHW", "OIHW", "NCHW"))
    y = y + b0[None, :, None, None]            # input_layer has no activation
    return jnp.transpose(y, (0, 3, 2, 1))      # (B, period, H1, C)


def periodic_discriminator_forward(x, params, period, logit=True, batch_block=2):
    """x: (B, T) raw signal, params = prepare_params(layers).
    Returns NCHW (B, C_final, H_final, period), matching the torch module."""
    B, _ = x.shape
    bt = math.gcd(B, max(1, batch_block))      # batch elements folded per grid step
    ncols = bt * period

    a1 = _input_layer_xla(x, params["w0"], params["b0"], period, params["s0"])
    H1, C1 = a1.shape[2], a1.shape[3]
    H1p = _round_up(H1, _SUBLANE)              # 16-aligned column stride (bf16 tile)
    a1 = jnp.pad(a1, ((0, 0), (0, 0), (0, H1p - H1), (0, 0)))
    # Column (b, w) occupies rows [(t*period + w)*H1p, ...) of its batch block.
    x_in = a1.reshape(B // bt, ncols * H1p, C1).astype(jnp.bfloat16)

    use = params["klayers"] if logit else params["klayers"][:-1]
    cfg, Hin, Hin_pad = [], H1, H1p
    for lyr in use:
        Hout = (Hin - lyr["K"]) // lyr["S"] + 1
        cfg.append(dict(Hin=Hin, Hin_pad=Hin_pad, Hout=Hout,
                        Hout_pad=_round_up(Hout, _SUBLANE), K=lyr["K"], S=lyr["S"],
                        Cin=lyr["Cin"], Cout=lyr["Cout"], act=lyr["act"]))
        Hin, Hin_pad = Hout, cfg[-1]["Hout_pad"]
    L = len(cfg)
    Hf, Cf = cfg[-1]["Hout"], cfg[-1]["Cout"]
    F = period * Hf * Cf

    in_specs = [pl.BlockSpec((None, ncols * H1p, C1), lambda b: (b, 0, 0))]
    inputs = [x_in]
    for lyr in use:
        # Weights/biases stay in HBM (pl.ANY) and are DMA'd once into
        # single-buffered VMEM scratch -- avoids the default 2x weight VMEM.
        in_specs += [pl.BlockSpec(memory_space=pl.ANY),
                     pl.BlockSpec(memory_space=pl.ANY)]
        inputs += [lyr["w3"], lyr["b2"]]

    scratch = ([pltpu.VMEM((c["K"], c["Cin"], c["Cout"]), jnp.bfloat16) for c in cfg]
               + [pltpu.VMEM((1, c["Cout"]), jnp.float32) for c in cfg]
               + [pltpu.VMEM((ncols * c["Hout_pad"], c["Cout"]), jnp.bfloat16)
                  for c in cfg[:-1]]
               + [pltpu.SemaphoreType.DMA((2 * L,))])

    # Explicit VMEM budget (v7x: 64 MiB physical, 32 MiB default scoped limit).
    def nbytes(shape, dt):
        return math.prod(shape) * jnp.dtype(dt).itemsize
    est = (2 * nbytes((ncols * H1p, C1), jnp.bfloat16)
           + 2 * nbytes((bt, F), jnp.float32))
    for c in cfg:
        est += nbytes((c["K"], c["Cin"], c["Cout"]), jnp.bfloat16)
        est += nbytes((1, c["Cout"]), jnp.float32)
    for c in cfg[:-1]:
        est += nbytes((ncols * c["Hout_pad"], c["Cout"]), jnp.bfloat16)
    vmem_limit = int(min(max(4 * est, 32 * 1024 * 1024), 64 * 1024 * 1024))

    out = pl.pallas_call(
        make_fused_kernel(cfg, ncols, period),
        out_shape=jax.ShapeDtypeStruct((B // bt, bt, F), jnp.float32),
        grid=(B // bt,),
        in_specs=in_specs,
        out_specs=pl.BlockSpec((None, bt, F), lambda b: (b, 0, 0)),
        scratch_shapes=scratch,
        # "arbitrary": the one-time weight load at step 0 requires a serial grid;
        # on v7x one would switch to multi-buffered weights + a "parallel" axis.
        compiler_params=pltpu.CompilerParams(
            dimension_semantics=("arbitrary",),
            vmem_limit_bytes=vmem_limit),
    )(*inputs)

    # (B//bt, bt, period*Hf*Cf) -> NCHW (B, Cf, Hf, period); tiny, torch parity.
    return jnp.transpose(out.reshape(B, period, Hf, Cf), (0, 3, 2, 1))


def _spectral_normalize(w, iters=30):
    """nn.utils.spectral_norm semantics: W / sigma_max(W.reshape(Cout, -1))."""
    cout = w.shape[0]
    wm = w.reshape(cout, -1).astype(jnp.float32)
    v = jnp.ones((wm.shape[1],), jnp.float32) / jnp.sqrt(float(wm.shape[1]))
    u = jnp.ones((cout,), jnp.float32)
    for _ in range(iters):
        u = wm @ v
        u = u / (jnp.linalg.norm(u) + 1e-12)
        v = wm.T @ u
        v = v / (jnp.linalg.norm(v) + 1e-12)
    sigma = u @ (wm @ v)
    return w / sigma


def init_periodic_discriminator_params(key, channels, kernel_size, stride,
                                       num_stages, groups):
    """Deterministic synthetic parameters with the module's weight shapes."""
    def mk(k, cout, cin_g, kh):
        kw, kb = jax.random.split(k)
        w = jax.random.normal(kw, (cout, cin_g, kh, 1), jnp.float32) * 0.2
        w = _spectral_normalize(w)
        b = jax.random.normal(kb, (cout,), jnp.float32) * 0.1
        return w, b

    keys = jax.random.split(key, num_stages + 3)
    layers = []
    # input_layer: Conv2d(1, channels, (K,1), (S,1)); no activation after it.
    w, b = mk(keys[0], channels, 1, kernel_size)
    layers.append(dict(w=w, b=b, stride=stride, groups=1, act=False))
    for i in range(num_stages):
        c = channels * 2 ** i
        c_next = channels * 2 ** (i + 1)
        g = groups[i]
        if i == num_stages - 1:
            w, b = mk(keys[1 + i], c, c // g, kernel_size)
            layers.append(dict(w=w, b=b, stride=stride, groups=g, act=False))
        else:
            # Conv -> Dropout (identity at eval) -> LeakyReLU(0.1)
            # TODO(synk): training-mode stochastic dropout (rate=0.2) not implemented.
            w, b = mk(keys[1 + i], c_next, c // g, kernel_size)
            layers.append(dict(w=w, b=b, stride=stride, groups=g, act=True))
    c = channels * 2 ** (num_stages - 1)
    w, b = mk(keys[num_stages + 1], c, c, 5)       # final_conv (5,1), stride 1
    layers.append(dict(w=w, b=b, stride=1, groups=1, act=True))    # + final_relu
    w, b = mk(keys[num_stages + 2], 1, c, 3)       # output_layer (3,1), stride 1
    layers.append(dict(w=w, b=b, stride=1, groups=1, act=False))
    return layers


def reference_forward(x, layers, period, logit=True):
    """Pure-JAX (lax.conv) reference replicating the torch forward exactly."""
    B, T = x.shape
    pad = (-T) % period
    xp = jnp.pad(x, ((0, 0), (0, pad)))
    Hp = xp.shape[1] // period
    h = jnp.transpose(xp.reshape(B, period, Hp)[:, None, :, :], (0, 1, 3, 2))
    use = layers if logit else layers[:-1]
    for lyr in use:
        h = jax.lax.conv_general_dilated(
            h, lyr["w"], window_strides=(lyr["stride"], 1), padding="VALID",
            dimension_numbers=("NCHW", "OIHW", "NCHW"),
            feature_group_count=lyr["groups"])
        h = h + lyr["b"][None, :, None, None]
        if lyr["act"]:
            h = jnp.where(h >= 0, h, LRELU_SLOPE * h)
    return h


if __name__ == "__main__":
    key = jax.random.PRNGKey(0)
    kx, kp = jax.random.split(key)

    # Small hyperparameters consistent with the module's constructor.
    B, T = 4, 431          # T % period != 0 -> exercises the zero-pad branch
    period = 2
    channels, kernel_size, stride = 8, 5, 3
    num_stages = 2
    groups = (2, 1)        # groups[] must be supplied to the module

    x = jax.random.normal(kx, (B, T), dtype=jnp.float32)
    layers = init_periodic_discriminator_params(kp, channels, kernel_size,
                                                stride, num_stages, groups)
    params = prepare_params(layers)   # one-time packing (bf16), outside forward

    out = periodic_discriminator_forward(x, params, period, logit=True,
                                         batch_block=2)
    out = jax.block_until_ready(out)

    ref = reference_forward(x, layers, period, logit=True)
    assert out.shape == ref.shape, (out.shape, ref.shape)
    err = float(jnp.max(jnp.abs(out - ref)))
    # bf16 weights/activations with f32 accumulation -> loosened tolerance.
    assert err < 3e-2, f"max abs error vs reference: {err}"

    print("KERNEL_OK")
</pallas_src>

<mosaic_0001>
module attributes {stable_mosaic.version = 11 : i64} {
  func.func @kernel(%arg0: i32, %arg1: memref<1x320x8xbf16, #tpu.memory_space<vmem>>, %arg2: memref<5x8x16xbf16, #tpu.memory_space<any>>, %arg3: memref<1x16xf32, #tpu.memory_space<any>>, %arg4: memref<5x16x16xbf16, #tpu.memory_space<any>>, %arg5: memref<1x16xf32, #tpu.memory_space<any>>, %arg6: memref<5x16x16xbf16, #tpu.memory_space<any>>, %arg7: memref<1x16xf32, #tpu.memory_space<any>>, %arg8: memref<3x16x1xbf16, #tpu.memory_space<any>>, %arg9: memref<1x1xf32, #tpu.memory_space<any>>, %arg10: memref<1x2x2xf32, #tpu.memory_space<vmem>>, %arg11: memref<5x8x16xbf16, #tpu.memory_space<vmem>>, %arg12: memref<5x16x16xbf16, #tpu.memory_space<vmem>>, %arg13: memref<5x16x16xbf16, #tpu.memory_space<vmem>>, %arg14: memref<3x16x1xbf16, #tpu.memory_space<vmem>>, %arg15: memref<1x16xf32, #tpu.memory_space<vmem>>, %arg16: memref<1x16xf32, #tpu.memory_space<vmem>>, %arg17: memref<1x16xf32, #tpu.memory_space<vmem>>, %arg18: memref<1x1xf32, #tpu.memory_space<vmem>>, %arg19: memref<128x16xbf16, #tpu.memory_space<vmem>>, %arg20: memref<64x16xbf16, #tpu.memory_space<vmem>>, %arg21: memref<64x16xbf16, #tpu.memory_space<vmem>>, %arg22: memref<8x!tpu.dma_semaphore, #tpu.memory_space<semaphore_mem>>) attributes {dimension_semantics = [#tpu.dimension_semantics<arbitrary>], iteration_bounds = array<i64: 2>, scalar_prefetch = 0 : i64, scratch_operands = 12 : i64, tpu.core_type = #tpu.core_type<tc>, window_params = [{transform_indices = @transform_0, window_bounds = array<i64: 1, 320, 8>}, {}, {}, {}, {}, {}, {}, {}, {}, {transform_indices = @transform_9, window_bounds = array<i64: 1, 2, 2>}]} {
    %c0_i32 = arith.constant 0 : i32
    %0 = arith.cmpi eq, %arg0, %c0_i32 : i32
    %1 = arith.extui %0 : i1 to i32
    %c0_i32_0 = arith.constant 0 : i32
    %2 = arith.cmpi ne, %1, %c0_i32_0 : i32
    scf.if %2 {
      %c0_i32_314 = arith.constant 0 : i32
      %389 = tpu.memref_slice %arg22[%c0_i32_314] : memref<8x!tpu.dma_semaphore, #tpu.memory_space<semaphore_mem>> -> memref<1x!tpu.dma_semaphore, #tpu.memory_space<semaphore_mem>>
      %390 = tpu.memref_squeeze %389 : memref<1x!tpu.dma_semaphore, #tpu.memory_space<semaphore_mem>> -> memref<!tpu.dma_semaphore, #tpu.memory_space<semaphore_mem>>
      tpu.enqueue_dma source(%arg2 : memref<5x8x16xbf16, #tpu.memory_space<any>>) target(%arg11 : memref<5x8x16xbf16, #tpu.memory_space<vmem>>) target_semaphore(%390 : memref<!tpu.dma_semaphore, #tpu.memory_space<semaphore_mem>>)
      %c1_i32 = arith.constant 1 : i32
      %391 = tpu.memref_slice %arg22[%c1_i32] : memref<8x!tpu.dma_semaphore, #tpu.memory_space<semaphore_mem>> -> memref<1x!tpu.dma_semaphore, #tpu.memory_space<semaphore_mem>>
      %392 = tpu.memref_squeeze %391 : memref<1x!tpu.dma_semaphore, #tpu.memory_space<semaphore_mem>> -> memref<!tpu.dma_semaphore, #tpu.memory_space<semaphore_mem>>
      tpu.enqueue_dma source(%arg3 : memref<1x16xf32, #tpu.memory_space<any>>) target(%arg15 : memref<1x16xf32, #tpu.memory_space<vmem>>) target_semaphore(%392 : memref<!tpu.dma_semaphore, #tpu.memory_space<semaphore_mem>>)
      %c2_i32 = arith.constant 2 : i32
      %393 = tpu.memref_slice %arg22[%c2_i32] : memref<8x!tpu.dma_semaphore, #tpu.memory_space<semaphore_mem>> -> memref<1x!tpu.dma_semaphore, #tpu.memory_space<semaphore_mem>>
      %394 = tpu.memref_squeeze %393 : memref<1x!tpu.dma_semaphore, #tpu.memory_space<semaphore_mem>> -> memref<!tpu.dma_semaphore, #tpu.memory_space<semaphore_mem>>
      tpu.enqueue_dma source(%arg4 : memref<5x16x16xbf16, #tpu.memory_space<any>>) target(%arg12 : memref<5x16x16xbf16, #tpu.memory_space<vmem>>) target_semaphore(%394 : memref<!tpu.dma_semaphore, #tpu.memory_space<semaphore_mem>>)
      %c3_i32_315 = arith.constant 3 : i32
      %395 = tpu.memref_slice %arg22[%c3_i32_315] : memref<8x!tpu.dma_semaphore, #tpu.memory_space<semaphore_mem>> -> memref<1x!tpu.dma_semaphore, #tpu.memory_space<semaphore_mem>>
      %396 = tpu.memref_squeeze %395 : memref<1x!tpu.dma_semaphore, #tpu.memory_space<semaphore_mem>> -> memref<!tpu.dma_semaphore, #tpu.memory_space<semaphore_mem>>
      tpu.enqueue_dma source(%arg5 : memref<1x16xf32, #tpu.memory_space<any>>) target(%arg16 : memref<1x16xf32, #tpu.memory_space<vmem>>) target_semaphore(%396 : memref<!tpu.dma_semaphore, #tpu.memory_space<semaphore_mem>>)
      %c4_i32 = arith.constant 4 : i32
      %397 = tpu.memref_slice %arg22[%c4_i32] : memref<8x!tpu.dma_semaphore, #tpu.memory_space<semaphore_mem>> -> memref<1x!tpu.dma_semaphore, #tpu.memory_space<semaphore_mem>>
      %398 = tpu.memref_squeeze %397 : memref<1x!tpu.dma_semaphore, #tpu.memory_space<semaphore_mem>> -> memref<!tpu.dma_semaphore, #tpu.memory_space<semaphore_mem>>
      tpu.enqueue_dma source(%arg6 : memref<5x16x16xbf16, #tpu.memory_space<any>>) target(%arg13 : memref<5x16x16xbf16, #tpu.memory_space<vmem>>) target_semaphore(%398 : memref<!tpu.dma_semaphore, #tpu.memory_space<semaphore_mem>>)
      %c5_i32 = arith.constant 5 : i32
      %399 = tpu.memref_slice %arg22[%c5_i32] : memref<8x!tpu.dma_semaphore, #tpu.memory_space<semaphore_mem>> -> memref<1x!tpu.dma_semaphore, #tpu.memory_space<semaphore_mem>>
      %400 = tpu.memref_squeeze %399 : memref<1x!tpu.dma_semaphore, #tpu.memory_space<semaphore_mem>> -> memref<!tpu.dma_semaphore, #tpu.memory_space<semaphore_mem>>
      tpu.enqueue_dma source(%arg7 : memref<1x16xf32, #tpu.memory_space<any>>) target(%arg17 : memref<1x16xf32, #tpu.memory_space<vmem>>) target_semaphore(%400 : memref<!tpu.dma_semaphore, #tpu.memory_space<semaphore_mem>>)
      %c6_i32 = arith.constant 6 : i32
      %401 = tpu.memref_slice %arg22[%c6_i32] : memref<8x!tpu.dma_semaphore, #tpu.memory_space<semaphore_mem>> -> memref<1x!tpu.dma_semaphore, #tpu.memory_space<semaphore_mem>>
      %402 = tpu.memref_squeeze %401 : memref<1x!tpu.dma_semaphore, #tpu.memory_space<semaphore_mem>> -> memref<!tpu.dma_semaphore, #tpu.memory_space<semaphore_mem>>
      tpu.enqueue_dma source(%arg8 : memref<3x16x1xbf16, #tpu.memory_space<any>>) target(%arg14 : memref<3x16x1xbf16, #tpu.memory_space<vmem>>) target_semaphore(%402 : memref<!tpu.dma_semaphore, #tpu.memory_space<semaphore_mem>>)
      %c7_i32 = arith.constant 7 : i32
      %403 = tpu.memref_slice %arg22[%c7_i32] : memref<8x!tpu.dma_semaphore, #tpu.memory_space<semaphore_mem>> -> memref<1x!tpu.dma_semaphore, #tpu.memory_space<semaphore_mem>>
      %404 = tpu.memref_squeeze %403 : memref<1x!tpu.dma_semaphore, #tpu.memory_space<semaphore_mem>> -> memref<!tpu.dma_semaphore, #tpu.memory_space<semaphore_mem>>
      tpu.enqueue_dma source(%arg9 : memref<1x1xf32, #tpu.memory_space<any>>) target(%arg18 : memref<1x1xf32, #tpu.memory_space<vmem>>) target_semaphore(%404 : memref<!tpu.dma_semaphore, #tpu.memory_space<semaphore_mem>>)
      %c0_i32_316 = arith.constant 0 : i32
      %405 = tpu.memref_slice %arg22[%c0_i32_316] : memref<8x!tpu.dma_semaphore, #tpu.memory_space<semaphore_mem>> -> memref<1x!tpu.dma_semaphore, #tpu.memory_space<semaphore_mem>>
      %406 = tpu.memref_squeeze %405 : memref<1x!tpu.dma_semaphore, #tpu.memory_space<semaphore_mem>> -> memref<!tpu.dma_semaphore, #tpu.memory_space<semaphore_mem>>
      tpu.wait_dma2 semaphore(%406 : memref<!tpu.dma_semaphore, #tpu.memory_space<semaphore_mem>>) src(%arg2 : memref<5x8x16xbf16, #tpu.memory_space<any>>) dst(%arg11 : memref<5x8x16xbf16, #tpu.memory_space<vmem>>)
      %c1_i32_317 = arith.constant 1 : i32
      %407 = tpu.memref_slice %arg22[%c1_i32_317] : memref<8x!tpu.dma_semaphore, #tpu.memory_space<semaphore_mem>> -> memref<1x!tpu.dma_semaphore, #tpu.memory_space<semaphore_mem>>
      %408 = tpu.memref_squeeze %407 : memref<1x!tpu.dma_semaphore, #tpu.memory_space<semaphore_mem>> -> memref<!tpu.dma_semaphore, #tpu.memory_space<semaphore_mem>>
      tpu.wait_dma2 semaphore(%408 : memref<!tpu.dma_semaphore, #tpu.memory_space<semaphore_mem>>) src(%arg3 : memref<1x16xf32, #tpu.memory_space<any>>) dst(%arg15 : memref<1x16xf32, #tpu.memory_space<vmem>>)
      %c2_i32_318 = arith.constant 2 : i32
      %409 = tpu.memref_slice %arg22[%c2_i32_318] : memref<8x!tpu.dma_semaphore, #tpu.memory_space<semaphore_mem>> -> memref<1x!tpu.dma_semaphore, #tpu.memory_space<semaphore_mem>>
      %410 = tpu.memref_squeeze %409 : memref<1x!tpu.dma_semaphore, #tpu.memory_space<semaphore_mem>> -> memref<!tpu.dma_semaphore, #tpu.memory_space<semaphore_mem>>
      tpu.wait_dma2 semaphore(%410 : memref<!tpu.dma_semaphore, #tpu.memory_space<semaphore_mem>>) src(%arg4 : memref<5x16x16xbf16, #tpu.memory_space<any>>) dst(%arg12 : memref<5x16x16xbf16, #tpu.memory_space<vmem>>)
      %c3_i32_319 = arith.constant 3 : i32
      %411 = tpu.memref_slice %arg22[%c3_i32_319] : memref<8x!tpu.dma_semaphore, #tpu.memory_space<semaphore_mem>> -> memref<1x!tpu.dma_semaphore, #tpu.memory_space<semaphore_mem>>
      %412 = tpu.memref_squeeze %411 : memref<1x!tpu.dma_semaphore, #tpu.memory_space<semaphore_mem>> -> memref<!tpu.dma_semaphore, #tpu.memory_space<semaphore_mem>>
      tpu.wait_dma2 semaphore(%412 : memref<!tpu.dma_semaphore, #tpu.memory_space<semaphore_mem>>) src(%arg5 : memref<1x16xf32, #tpu.memory_space<any>>) dst(%arg16 : memref<1x16xf32, #tpu.memory_space<vmem>>)
      %c4_i32_320 = arith.constant 4 : i32
      %413 = tpu.memref_slice %arg22[%c4_i32_320] : memref<8x!tpu.dma_semaphore, #tpu.memory_space<semaphore_mem>> -> memref<1x!tpu.dma_semaphore, #tpu.memory_space<semaphore_mem>>
      %414 = tpu.memref_squeeze %413 : memref<1x!tpu.dma_semaphore, #tpu.memory_space<semaphore_mem>> -> memref<!tpu.dma_semaphore, #tpu.memory_space<semaphore_mem>>
      tpu.wait_dma2 semaphore(%414 : memref<!tpu.dma_semaphore, #tpu.memory_space<semaphore_mem>>) src(%arg6 : memref<5x16x16xbf16, #tpu.memory_space<any>>) dst(%arg13 : memref<5x16x16xbf16, #tpu.memory_space<vmem>>)
      %c5_i32_321 = arith.constant 5 : i32
      %415 = tpu.memref_slice %arg22[%c5_i32_321] : memref<8x!tpu.dma_semaphore, #tpu.memory_space<semaphore_mem>> -> memref<1x!tpu.dma_semaphore, #tpu.memory_space<semaphore_mem>>
      %416 = tpu.memref_squeeze %415 : memref<1x!tpu.dma_semaphore, #tpu.memory_space<semaphore_mem>> -> memref<!tpu.dma_semaphore, #tpu.memory_space<semaphore_mem>>
      tpu.wait_dma2 semaphore(%416 : memref<!tpu.dma_semaphore, #tpu.memory_space<semaphore_mem>>) src(%arg7 : memref<1x16xf32, #tpu.memory_space<any>>) dst(%arg17 : memref<1x16xf32, #tpu.memory_space<vmem>>)
      %c6_i32_322 = arith.constant 6 : i32
      %417 = tpu.memref_slice %arg22[%c6_i32_322] : memref<8x!tpu.dma_semaphore, #tpu.memory_space<semaphore_mem>> -> memref<1x!tpu.dma_semaphore, #tpu.memory_space<semaphore_mem>>
      %418 = tpu.memref_squeeze %417 : memref<1x!tpu.dma_semaphore, #tpu.memory_space<semaphore_mem>> -> memref<!tpu.dma_semaphore, #tpu.memory_space<semaphore_mem>>
      tpu.wait_dma2 semaphore(%418 : memref<!tpu.dma_semaphore, #tpu.memory_space<semaphore_mem>>) src(%arg8 : memref<3x16x1xbf16, #tpu.memory_space<any>>) dst(%arg14 : memref<3x16x1xbf16, #tpu.memory_space<vmem>>)
      %c7_i32_323 = arith.constant 7 : i32
      %419 = tpu.memref_slice %arg22[%c7_i32_323] : memref<8x!tpu.dma_semaphore, #tpu.memory_space<semaphore_mem>> -> memref<1x!tpu.dma_semaphore, #tpu.memory_space<semaphore_mem>>
      %420 = tpu.memref_squeeze %419 : memref<1x!tpu.dma_semaphore, #tpu.memory_space<semaphore_mem>> -> memref<!tpu.dma_semaphore, #tpu.memory_space<semaphore_mem>>
      tpu.wait_dma2 semaphore(%420 : memref<!tpu.dma_semaphore, #tpu.memory_space<semaphore_mem>>) src(%arg9 : memref<1x1xf32, #tpu.memory_space<any>>) dst(%arg18 : memref<1x1xf32, #tpu.memory_space<vmem>>)
    } else {
    }
    %c0 = arith.constant 0 : index
    %c0_1 = arith.constant 0 : index
    %c0_2 = arith.constant 0 : index
    %3 = vector.load %arg11[%c0, %c0_1, %c0_2] : memref<5x8x16xbf16, #tpu.memory_space<vmem>>, vector<1x8x16xbf16>
    %4 = vector.shape_cast %3 : vector<1x8x16xbf16> to vector<8x16xbf16>
    %c1 = arith.constant 1 : index
    %c0_3 = arith.constant 0 : index
    %c0_4 = arith.constant 0 : index
    %5 = vector.load %arg11[%c1, %c0_3, %c0_4] : memref<5x8x16xbf16, #tpu.memory_space<vmem>>, vector<1x8x16xbf16>
    %6 = vector.shape_cast %5 : vector<1x8x16xbf16> to vector<8x16xbf16>
    %c2 = arith.constant 2 : index
    %c0_5 = arith.constant 0 : index
    %c0_6 = arith.constant 0 : index
    %7 = vector.load %arg11[%c2, %c0_5, %c0_6] : memref<5x8x16xbf16, #tpu.memory_space<vmem>>, vector<1x8x16xbf16>
    %8 = vector.shape_cast %7 : vector<1x8x16xbf16> to vector<8x16xbf16>
    %c3 = arith.constant 3 : index
    %c0_7 = arith.constant 0 : index
    %c0_8 = arith.constant 0 : index
    %9 = vector.load %arg11[%c3, %c0_7, %c0_8] : memref<5x8x16xbf16, #tpu.memory_space<vmem>>, vector<1x8x16xbf16>
    %10 = vector.shape_cast %9 : vector<1x8x16xbf16> to vector<8x16xbf16>
    %c4 = arith.constant 4 : index
    %c0_9 = arith.constant 0 : index
    %c0_10 = arith.constant 0 : index
    %11 = vector.load %arg11[%c4, %c0_9, %c0_10] : memref<5x8x16xbf16, #tpu.memory_space<vmem>>, vector<1x8x16xbf16>
    %12 = vector.shape_cast %11 : vector<1x8x16xbf16> to vector<8x16xbf16>
    %c0_11 = arith.constant 0 : index
    %c0_12 = arith.constant 0 : index
    %13 = vector.load %arg15[%c0_11, %c0_12] : memref<1x16xf32, #tpu.memory_space<vmem>>, vector<1x16xf32>
    %14 = tpu.iota {dimensions = array<i32: 0>} : vector<23x67xi32>
    %15 = tpu.iota {dimensions = array<i32: 1>} : vector<23x67xi32>
    %c3_i32 = arith.constant 3 : i32
    %16 = vector.broadcast %c3_i32 : i32 to vector<23x67xi32>
    %17 = arith.muli %14, %16 : vector<23x67xi32>
    %18 = arith.cmpi eq, %15, %17 : vector<23x67xi32>
    %19 = arith.extui %18 : vector<23x67xi1> to vector<23x67xi32>
    %20 = arith.sitofp %19 : vector<23x67xi32> to vector<23x67xf32>
    %c0_13 = arith.constant 0 : index
    %c0_14 = arith.constant 0 : index
    %c0_15 = arith.constant 0 : index
    %21 = vector.load %arg1[%c0_13, %c0_14, %c0_15] : memref<1x320x8xbf16, #tpu.memory_space<vmem>>, vector<1x67x8xbf16>
    %22 = vector.shape_cast %21 : vector<1x67x8xbf16> to vector<67x8xbf16>
    %cst = arith.constant dense<0.000000e+00> : vector<67x16xf32>
    %23 = tpu.matmul %22, %4, %cst {dimension_numbers = #tpu.dot_dimension_numbers<[1], [0], [0], [1], [0, 0, 1, 1], [], []>} : vector<67x8xbf16>, vector<8x16xbf16>, vector<67x16xf32> -> vector<67x16xf32>
    %c0_16 = arith.constant 0 : index
    %c1_17 = arith.constant 1 : index
    %c0_18 = arith.constant 0 : index
    %24 = vector.load %arg1[%c0_16, %c1_17, %c0_18] : memref<1x320x8xbf16, #tpu.memory_space<vmem>>, vector<1x67x8xbf16>
    %25 = vector.shape_cast %24 : vector<1x67x8xbf16> to vector<67x8xbf16>
    %cst_19 = arith.constant dense<0.000000e+00> : vector<67x16xf32>
    %26 = tpu.matmul %25, %6, %cst_19 {dimension_numbers = #tpu.dot_dimension_numbers<[1], [0], [0], [1], [0, 0, 1, 1], [], []>} : vector<67x8xbf16>, vector<8x16xbf16>, vector<67x16xf32> -> vector<67x16xf32>
    %27 = arith.addf %23, %26 : vector<67x16xf32>
    %c0_20 = arith.constant 0 : index
    %c2_21 = arith.constant 2 : index
    %c0_22 = arith.constant 0 : index
    %28 = vector.load %arg1[%c0_20, %c2_21, %c0_22] : memref<1x320x8xbf16, #tpu.memory_space<vmem>>, vector<1x67x8xbf16>
    %29 = vector.shape_cast %28 : vector<1x67x8xbf16> to vector<67x8xbf16>
    %cst_23 = arith.constant dense<0.000000e+00> : vector<67x16xf32>
    %30 = tpu.matmul %29, %8, %cst_23 {dimension_numbers = #tpu.dot_dimension_numbers<[1], [0], [0], [1], [0, 0, 1, 1], [], []>} : vector<67x8xbf16>, vector<8x16xbf16>, vector<67x16xf32> -> vector<67x16xf32>
    %31 = arith.addf %27, %30 : vector<67x16xf32>
    %c0_24 = arith.constant 0 : index
    %c3_25 = arith.constant 3 : index
    %c0_26 = arith.constant 0 : index
    %32 = vector.load %arg1[%c0_24, %c3_25, %c0_26] : memref<1x320x8xbf16, #tpu.memory_space<vmem>>, vector<1x67x8xbf16>
    %33 = vector.shape_cast %32 : vector<1x67x8xbf16> to vector<67x8xbf16>
    %cst_27 = arith.constant dense<0.000000e+00> : vector<67x16xf32>
    %34 = tpu.matmul %33, %10, %cst_27 {dimension_numbers = #tpu.dot_dimension_numbers<[1], [0], [0], [1], [0, 0, 1, 1], [], []>} : vector<67x8xbf16>, vector<8x16xbf16>, vector<67x16xf32> -> vector<67x16xf32>
    %35 = arith.addf %31, %34 : vector<67x16xf32>
    %c0_28 = arith.constant 0 : index
    %c4_29 = arith.constant 4 : index
    %c0_30 = arith.constant 0 : index
    %36 = vector.load %arg1[%c0_28, %c4_29, %c0_30] : memref<1x320x8xbf16, #tpu.memory_space<vmem>>, vector<1x67x8xbf16>
    %37 = vector.shape_cast %36 : vector<1x67x8xbf16> to vector<67x8xbf16>
    %cst_31 = arith.constant dense<0.000000e+00> : vector<67x16xf32>
    %38 = tpu.matmul %37, %12, %cst_31 {dimension_numbers = #tpu.dot_dimension_numbers<[1], [0], [0], [1], [0, 0, 1, 1], [], []>} : vector<67x8xbf16>, vector<8x16xbf16>, vector<67x16xf32> -> vector<67x16xf32>
    %39 = arith.addf %35, %38 : vector<67x16xf32>
    %cst_32 = arith.constant dense<0.000000e+00> : vector<23x16xf32>
    %40 = tpu.matmul %20, %39, %cst_32 {dimension_numbers = #tpu.dot_dimension_numbers<[1], [0], [0], [1], [0, 0, 1, 1], [], []>} : vector<23x67xf32>, vector<67x16xf32>, vector<23x16xf32> -> vector<23x16xf32>
    %41 = vector.broadcast %13 : vector<1x16xf32> to vector<23x16xf32>
    %42 = arith.addf %40, %41 : vector<23x16xf32>
    %cst_33 = arith.constant 0.000000e+00 : f32
    %43 = vector.broadcast %cst_33 : f32 to vector<23x16xf32>
    %44 = arith.cmpf oge, %42, %43 : vector<23x16xf32>
    %cst_34 = arith.constant 1.000000e-01 : f32
    %45 = vector.broadcast %cst_34 : f32 to vector<23x16xf32>
    %46 = arith.mulf %42, %45 : vector<23x16xf32>
    %47 = arith.select %44, %42, %46 : vector<23x16xi1>, vector<23x16xf32>
    %48 = arith.truncf %47 : vector<23x16xf32> to vector<23x16xbf16>
    %c0_35 = arith.constant 0 : index
    %c0_36 = arith.constant 0 : index
    %49 = vector.load %arg19[%c0_35, %c0_36] : memref<128x16xbf16, #tpu.memory_space<vmem>>, vector<23x16xbf16>
    tpu.vector_store %arg19[%c0_35, %c0_36], %48 {strides = array<i32>} : memref<128x16xbf16, #tpu.memory_space<vmem>>, vector<23x16xbf16>,
    %c0_37 = arith.constant 0 : index
    %c80 = arith.constant 80 : index
    %c0_38 = arith.constant 0 : index
    %50 = vector.load %arg1[%c0_37, %c80, %c0_38] : memref<1x320x8xbf16, #tpu.memory_space<vmem>>, vector<1x67x8xbf16>
    %51 = vector.shape_cast %50 : vector<1x67x8xbf16> to vector<67x8xbf16>
    %cst_39 = arith.constant dense<0.000000e+00> : vector<67x16xf32>
    %52 = tpu.matmul %51, %4, %cst_39 {dimension_numbers = #tpu.dot_dimension_numbers<[1], [0], [0], [1], [0, 0, 1, 1], [], []>} : vector<67x8xbf16>, vector<8x16xbf16>, vector<67x16xf32> -> vector<67x16xf32>
    %c0_40 = arith.constant 0 : index
    %c81 = arith.constant 81 : index
    %c0_41 = arith.constant 0 : index
    %53 = vector.load %arg1[%c0_40, %c81, %c0_41] : memref<1x320x8xbf16, #tpu.memory_space<vmem>>, vector<1x67x8xbf16>
    %54 = vector.shape_cast %53 : vector<1x67x8xbf16> to vector<67x8xbf16>
    %cst_42 = arith.constant dense<0.000000e+00> : vector<67x16xf32>
    %55 = tpu.matmul %54, %6, %cst_42 {dimension_numbers = #tpu.dot_dimension_numbers<[1], [0], [0], [1], [0, 0, 1, 1], [], []>} : vector<67x8xbf16>, vector<8x16xbf16>, vector<67x16xf32> -> vector<67x16xf32>
    %56 = arith.addf %52, %55 : vector<67x16xf32>
    %c0_43 = arith.constant 0 : index
    %c82 = arith.constant 82 : index
    %c0_44 = arith.constant 0 : index
    %57 = vector.load %arg1[%c0_43, %c82, %c0_44] : memref<1x320x8xbf16, #tpu.memory_space<vmem>>, vector<1x67x8xbf16>
    %58 = vector.shape_cast %57 : vector<1x67x8xbf16> to vector<67x8xbf16>
    %cst_45 = arith.constant dense<0.000000e+00> : vector<67x16xf32>
    %59 = tpu.matmul %58, %8, %cst_45 {dimension_numbers = #tpu.dot_dimension_numbers<[1], [0], [0], [1], [0, 0, 1, 1], [], []>} : vector<67x8xbf16>, vector<8x16xbf16>, vector<67x16xf32> -> vector<67x16xf32>
    %60 = arith.addf %56, %59 : vector<67x16xf32>
    %c0_46 = arith.constant 0 : index
    %c83 = arith.constant 83 : index
    %c0_47 = arith.constant 0 : index
    %61 = vector.load %arg1[%c0_46, %c83, %c0_47] : memref<1x320x8xbf16, #tpu.memory_space<vmem>>, vector<1x67x8xbf16>
    %62 = vector.shape_cast %61 : vector<1x67x8xbf16> to vector<67x8xbf16>
    %cst_48 = arith.constant dense<0.000000e+00> : vector<67x16xf32>
    %63 = tpu.matmul %62, %10, %cst_48 {dimension_numbers = #tpu.dot_dimension_numbers<[1], [0], [0], [1], [0, 0, 1, 1], [], []>} : vector<67x8xbf16>, vector<8x16xbf16>, vector<67x16xf32> -> vector<67x16xf32>
    %64 = arith.addf %60, %63 : vector<67x16xf32>
    %c0_49 = arith.constant 0 : index
    %c84 = arith.constant 84 : index
    %c0_50 = arith.constant 0 : index
    %65 = vector.load %arg1[%c0_49, %c84, %c0_50] : memref<1x320x8xbf16, #tpu.memory_space<vmem>>, vector<1x67x8xbf16>
    %66 = vector.shape_cast %65 : vector<1x67x8xbf16> to vector<67x8xbf16>
    %cst_51 = arith.constant dense<0.000000e+00> : vector<67x16xf32>
    %67 = tpu.matmul %66, %12, %cst_51 {dimension_numbers = #tpu.dot_dimension_numbers<[1], [0], [0], [1], [0, 0, 1, 1], [], []>} : vector<67x8xbf16>, vector<8x16xbf16>, vector<67x16xf32> -> vector<67x16xf32>
    %68 = arith.addf %64, %67 : vector<67x16xf32>
    %cst_52 = arith.constant dense<0.000000e+00> : vector<23x16xf32>
    %69 = tpu.matmul %20, %68, %cst_52 {dimension_numbers = #tpu.dot_dimension_numbers<[1], [0], [0], [1], [0, 0, 1, 1], [], []>} : vector<23x67xf32>, vector<67x16xf32>, vector<23x16xf32> -> vector<23x16xf32>
    %70 = vector.broadcast %13 : vector<1x16xf32> to vector<23x16xf32>
    %71 = arith.addf %69, %70 : vector<23x16xf32>
    %cst_53 = arith.constant 0.000000e+00 : f32
    %72 = vector.broadcast %cst_53 : f32 to vector<23x16xf32>
    %73 = arith.cmpf oge, %71, %72 : vector<23x16xf32>
    %cst_54 = arith.constant 1.000000e-01 : f32
    %74 = vector.broadcast %cst_54 : f32 to vector<23x16xf32>
    %75 = arith.mulf %71, %74 : vector<23x16xf32>
    %76 = arith.select %73, %71, %75 : vector<23x16xi1>, vector<23x16xf32>
    %77 = arith.truncf %76 : vector<23x16xf32> to vector<23x16xbf16>
    %c32 = arith.constant 32 : index
    %c0_55 = arith.constant 0 : index
    %78 = vector.load %arg19[%c32, %c0_55] : memref<128x16xbf16, #tpu.memory_space<vmem>>, vector<23x16xbf16>
    tpu.vector_store %arg19[%c32, %c0_55], %77 {strides = array<i32>} : memref<128x16xbf16, #tpu.memory_space<vmem>>, vector<23x16xbf16>,
    %c0_56 = arith.constant 0 : index
    %c160 = arith.constant 160 : index
    %c0_57 = arith.constant 0 : index
    %79 = vector.load %arg1[%c0_56, %c160, %c0_57] : memref<1x320x8xbf16, #tpu.memory_space<vmem>>, vector<1x67x8xbf16>
    %80 = vector.shape_cast %79 : vector<1x67x8xbf16> to vector<67x8xbf16>
    %cst_58 = arith.constant dense<0.000000e+00> : vector<67x16xf32>
    %81 = tpu.matmul %80, %4, %cst_58 {dimension_numbers = #tpu.dot_dimension_numbers<[1], [0], [0], [1], [0, 0, 1, 1], [], []>} : vector<67x8xbf16>, vector<8x16xbf16>, vector<67x16xf32> -> vector<67x16xf32>
    %c0_59 = arith.constant 0 : index
    %c161 = arith.constant 161 : index
    %c0_60 = arith.constant 0 : index
    %82 = vector.load %arg1[%c0_59, %c161, %c0_60] : memref<1x320x8xbf16, #tpu.memory_space<vmem>>, vector<1x67x8xbf16>
    %83 = vector.shape_cast %82 : vector<1x67x8xbf16> to vector<67x8xbf16>
    %cst_61 = arith.constant dense<0.000000e+00> : vector<67x16xf32>
    %84 = tpu.matmul %83, %6, %cst_61 {dimension_numbers = #tpu.dot_dimension_numbers<[1], [0], [0], [1], [0, 0, 1, 1], [], []>} : vector<67x8xbf16>, vector<8x16xbf16>, vector<67x16xf32> -> vector<67x16xf32>
    %85 = arith.addf %81, %84 : vector<67x16xf32>
    %c0_62 = arith.constant 0 : index
    %c162 = arith.constant 162 : index
    %c0_63 = arith.constant 0 : index
    %86 = vector.load %arg1[%c0_62, %c162, %c0_63] : memref<1x320x8xbf16, #tpu.memory_space<vmem>>, vector<1x67x8xbf16>
    %87 = vector.shape_cast %86 : vector<1x67x8xbf16> to vector<67x8xbf16>
    %cst_64 = arith.constant dense<0.000000e+00> : vector<67x16xf32>
    %88 = tpu.matmul %87, %8, %cst_64 {dimension_numbers = #tpu.dot_dimension_numbers<[1], [0], [0], [1], [0, 0, 1, 1], [], []>} : vector<67x8xbf16>, vector<8x16xbf16>, vector<67x16xf32> -> vector<67x16xf32>
    %89 = arith.addf %85, %88 : vector<67x16xf32>
    %c0_65 = arith.constant 0 : index
    %c163 = arith.constant 163 : index
    %c0_66 = arith.constant 0 : index
    %90 = vector.load %arg1[%c0_65, %c163, %c0_66] : memref<1x320x8xbf16, #tpu.memory_space<vmem>>, vector<1x67x8xbf16>
    %91 = vector.shape_cast %90 : vector<1x67x8xbf16> to vector<67x8xbf16>
    %cst_67 = arith.constant dense<0.000000e+00> : vector<67x16xf32>
    %92 = tpu.matmul %91, %10, %cst_67 {dimension_numbers = #tpu.dot_dimension_numbers<[1], [0], [0], [1], [0, 0, 1, 1], [], []>} : vector<67x8xbf16>, vector<8x16xbf16>, vector<67x16xf32> -> vector<67x16xf32>
    %93 = arith.addf %89, %92 : vector<67x16xf32>
    %c0_68 = arith.constant 0 : index
    %c164 = arith.constant 164 : index
    %c0_69 = arith.constant 0 : index
    %94 = vector.load %arg1[%c0_68, %c164, %c0_69] : memref<1x320x8xbf16, #tpu.memory_space<vmem>>, vector<1x67x8xbf16>
    %95 = vector.shape_cast %94 : vector<1x67x8xbf16> to vector<67x8xbf16>
    %cst_70 = arith.constant dense<0.000000e+00> : vector<67x16xf32>
    %96 = tpu.matmul %95, %12, %cst_70 {dimension_numbers = #tpu.dot_dimension_numbers<[1], [0], [0], [1], [0, 0, 1, 1], [], []>} : vector<67x8xbf16>, vector<8x16xbf16>, vector<67x16xf32> -> vector<67x16xf32>
    %97 = arith.addf %93, %96 : vector<67x16xf32>
    %cst_71 = arith.constant dense<0.000000e+00> : vector<23x16xf32>
    %98 = tpu.matmul %20, %97, %cst_71 {dimension_numbers = #tpu.dot_dimension_numbers<[1], [0], [0], [1], [0, 0, 1, 1], [], []>} : vector<23x67xf32>, vector<67x16xf32>, vector<23x16xf32> -> vector<23x16xf32>
    %99 = vector.broadcast %13 : vector<1x16xf32> to vector<23x16xf32>
    %100 = arith.addf %98, %99 : vector<23x16xf32>
    %cst_72 = arith.constant 0.000000e+00 : f32
    %101 = vector.broadcast %cst_72 : f32 to vector<23x16xf32>
    %102 = arith.cmpf oge, %100, %101 : vector<23x16xf32>
    %cst_73 = arith.constant 1.000000e-01 : f32
    %103 = vector.broadcast %cst_73 : f32 to vector<23x16xf32>
    %104 = arith.mulf %100, %103 : vector<23x16xf32>
    %105 = arith.select %102, %100, %104 : vector<23x16xi1>, vector<23x16xf32>
    %106 = arith.truncf %105 : vector<23x16xf32> to vector<23x16xbf16>
    %c64 = arith.constant 64 : index
    %c0_74 = arith.constant 0 : index
    %107 = vector.load %arg19[%c64, %c0_74] : memref<128x16xbf16, #tpu.memory_space<vmem>>, vector<23x16xbf16>
    tpu.vector_store %arg19[%c64, %c0_74], %106 {strides = array<i32>} : memref<128x16xbf16, #tpu.memory_space<vmem>>, vector<23x16xbf16>,
    %c0_75 = arith.constant 0 : index
    %c240 = arith.constant 240 : index
    %c0_76 = arith.constant 0 : index
    %108 = vector.load %arg1[%c0_75, %c240, %c0_76] : memref<1x320x8xbf16, #tpu.memory_space<vmem>>, vector<1x67x8xbf16>
    %109 = vector.shape_cast %108 : vector<1x67x8xbf16> to vector<67x8xbf16>
    %cst_77 = arith.constant dense<0.000000e+00> : vector<67x16xf32>
    %110 = tpu.matmul %109, %4, %cst_77 {dimension_numbers = #tpu.dot_dimension_numbers<[1], [0], [0], [1], [0, 0, 1, 1], [], []>} : vector<67x8xbf16>, vector<8x16xbf16>, vector<67x16xf32> -> vector<67x16xf32>
    %c0_78 = arith.constant 0 : index
    %c241 = arith.constant 241 : index
    %c0_79 = arith.constant 0 : index
    %111 = vector.load %arg1[%c0_78, %c241, %c0_79] : memref<1x320x8xbf16, #tpu.memory_space<vmem>>, vector<1x67x8xbf16>
    %112 = vector.shape_cast %111 : vector<1x67x8xbf16> to vector<67x8xbf16>
    %cst_80 = arith.constant dense<0.000000e+00> : vector<67x16xf32>
    %113 = tpu.matmul %112, %6, %cst_80 {dimension_numbers = #tpu.dot_dimension_numbers<[1], [0], [0], [1], [0, 0, 1, 1], [], []>} : vector<67x8xbf16>, vector<8x16xbf16>, vector<67x16xf32> -> vector<67x16xf32>
    %114 = arith.addf %110, %113 : vector<67x16xf32>
    %c0_81 = arith.constant 0 : index
    %c242 = arith.constant 242 : index
    %c0_82 = arith.constant 0 : index
    %115 = vector.load %arg1[%c0_81, %c242, %c0_82] : memref<1x320x8xbf16, #tpu.memory_space<vmem>>, vector<1x67x8xbf16>
    %116 = vector.shape_cast %115 : vector<1x67x8xbf16> to vector<67x8xbf16>
    %cst_83 = arith.constant dense<0.000000e+00> : vector<67x16xf32>
    %117 = tpu.matmul %116, %8, %cst_83 {dimension_numbers = #tpu.dot_dimension_numbers<[1], [0], [0], [1], [0, 0, 1, 1], [], []>} : vector<67x8xbf16>, vector<8x16xbf16>, vector<67x16xf32> -> vector<67x16xf32>
    %118 = arith.addf %114, %117 : vector<67x16xf32>
    %c0_84 = arith.constant 0 : index
    %c243 = arith.constant 243 : index
    %c0_85 = arith.constant 0 : index
    %119 = vector.load %arg1[%c0_84, %c243, %c0_85] : memref<1x320x8xbf16, #tpu.memory_space<vmem>>, vector<1x67x8xbf16>
    %120 = vector.shape_cast %119 : vector<1x67x8xbf16> to vector<67x8xbf16>
    %cst_86 = arith.constant dense<0.000000e+00> : vector<67x16xf32>
    %121 = tpu.matmul %120, %10, %cst_86 {dimension_numbers = #tpu.dot_dimension_numbers<[1], [0], [0], [1], [0, 0, 1, 1], [], []>} : vector<67x8xbf16>, vector<8x16xbf16>, vector<67x16xf32> -> vector<67x16xf32>
    %122 = arith.addf %118, %121 : vector<67x16xf32>
    %c0_87 = arith.constant 0 : index
    %c244 = arith.constant 244 : index
    %c0_88 = arith.constant 0 : index
    %123 = vector.load %arg1[%c0_87, %c244, %c0_88] : memref<1x320x8xbf16, #tpu.memory_space<vmem>>, vector<1x67x8xbf16>
    %124 = vector.shape_cast %123 : vector<1x67x8xbf16> to vector<67x8xbf16>
    %cst_89 = arith.constant dense<0.000000e+00> : vector<67x16xf32>
    %125 = tpu.matmul %124, %12, %cst_89 {dimension_numbers = #tpu.dot_dimension_numbers<[1], [0], [0], [1], [0, 0, 1, 1], [], []>} : vector<67x8xbf16>, vector<8x16xbf16>, vector<67x16xf32> -> vector<67x16xf32>
    %126 = arith.addf %122, %125 : vector<67x16xf32>
    %cst_90 = arith.constant dense<0.000000e+00> : vector<23x16xf32>
    %127 = tpu.matmul %20, %126, %cst_90 {dimension_numbers = #tpu.dot_dimension_numbers<[1], [0], [0], [1], [0, 0, 1, 1], [], []>} : vector<23x67xf32>, vector<67x16xf32>, vector<23x16xf32> -> vector<23x16xf32>
    %128 = vector.broadcast %13 : vector<1x16xf32> to vector<23x16xf32>
    %129 = arith.addf %127, %128 : vector<23x16xf32>
    %cst_91 = arith.constant 0.000000e+00 : f32
    %130 = vector.broadcast %cst_91 : f32 to vector<23x16xf32>
    %131 = arith.cmpf oge, %129, %130 : vector<23x16xf32>
    %cst_92 = arith.constant 1.000000e-01 : f32
    %132 = vector.broadcast %cst_92 : f32 to vector<23x16xf32>
    %133 = arith.mulf %129, %132 : vector<23x16xf32>
    %134 = arith.select %131, %129, %133 : vector<23x16xi1>, vector<23x16xf32>
    %135 = arith.truncf %134 : vector<23x16xf32> to vector<23x16xbf16>
    %c96 = arith.constant 96 : index
    %c0_93 = arith.constant 0 : index
    %136 = vector.load %arg19[%c96, %c0_93] : memref<128x16xbf16, #tpu.memory_space<vmem>>, vector<23x16xbf16>
    tpu.vector_store %arg19[%c96, %c0_93], %135 {strides = array<i32>} : memref<128x16xbf16, #tpu.memory_space<vmem>>, vector<23x16xbf16>,
    %c0_94 = arith.constant 0 : index
    %c0_95 = arith.constant 0 : index
    %c0_96 = arith.constant 0 : index
    %137 = vector.load %arg12[%c0_94, %c0_95, %c0_96] : memref<5x16x16xbf16, #tpu.memory_space<vmem>>, vector<1x16x16xbf16>
    %138 = vector.shape_cast %137 : vector<1x16x16xbf16> to vector<16x16xbf16>
    %c1_97 = arith.constant 1 : index
    %c0_98 = arith.constant 0 : index
    %c0_99 = arith.constant 0 : index
    %139 = vector.load %arg12[%c1_97, %c0_98, %c0_99] : memref<5x16x16xbf16, #tpu.memory_space<vmem>>, vector<1x16x16xbf16>
    %140 = vector.shape_cast %139 : vector<1x16x16xbf16> to vector<16x16xbf16>
    %c2_100 = arith.constant 2 : index
    %c0_101 = arith.constant 0 : index
    %c0_102 = arith.constant 0 : index
    %141 = vector.load %arg12[%c2_100, %c0_101, %c0_102] : memref<5x16x16xbf16, #tpu.memory_space<vmem>>, vector<1x16x16xbf16>
    %142 = vector.shape_cast %141 : vector<1x16x16xbf16> to vector<16x16xbf16>
    %c3_103 = arith.constant 3 : index
    %c0_104 = arith.constant 0 : index
    %c0_105 = arith.constant 0 : index
    %143 = vector.load %arg12[%c3_103, %c0_104, %c0_105] : memref<5x16x16xbf16, #tpu.memory_space<vmem>>, vector<1x16x16xbf16>
    %144 = vector.shape_cast %143 : vector<1x16x16xbf16> to vector<16x16xbf16>
    %c4_106 = arith.constant 4 : index
    %c0_107 = arith.constant 0 : index
    %c0_108 = arith.constant 0 : index
    %145 = vector.load %arg12[%c4_106, %c0_107, %c0_108] : memref<5x16x16xbf16, #tpu.memory_space<vmem>>, vector<1x16x16xbf16>
    %146 = vector.shape_cast %145 : vector<1x16x16xbf16> to vector<16x16xbf16>
    %c0_109 = arith.constant 0 : index
    %c0_110 = arith.constant 0 : index
    %147 = vector.load %arg16[%c0_109, %c0_110] : memref<1x16xf32, #tpu.memory_space<vmem>>, vector<1x16xf32>
    %148 = tpu.iota {dimensions = array<i32: 0>} : vector<7x19xi32>
    %149 = tpu.iota {dimensions = array<i32: 1>} : vector<7x19xi32>
    %c3_i32_111 = arith.constant 3 : i32
    %150 = vector.broadcast %c3_i32_111 : i32 to vector<7x19xi32>
    %151 = arith.muli %148, %150 : vector<7x19xi32>
    %152 = arith.cmpi eq, %149, %151 : vector<7x19xi32>
    %153 = arith.extui %152 : vector<7x19xi1> to vector<7x19xi32>
    %154 = arith.sitofp %153 : vector<7x19xi32> to vector<7x19xf32>
    %c0_112 = arith.constant 0 : index
    %c0_113 = arith.constant 0 : index
    %155 = vector.load %arg19[%c0_112, %c0_113] : memref<128x16xbf16, #tpu.memory_space<vmem>>, vector<19x16xbf16>
    %cst_114 = arith.constant dense<0.000000e+00> : vector<19x16xf32>
    %156 = tpu.matmul %155, %138, %cst_114 {dimension_numbers = #tpu.dot_dimension_numbers<[1], [0], [0], [1], [0, 0, 1, 1], [], []>} : vector<19x16xbf16>, vector<16x16xbf16>, vector<19x16xf32> -> vector<19x16xf32>
    %c1_115 = arith.constant 1 : index
    %c0_116 = arith.constant 0 : index
    %157 = vector.load %arg19[%c1_115, %c0_116] : memref<128x16xbf16, #tpu.memory_space<vmem>>, vector<19x16xbf16>
    %cst_117 = arith.constant dense<0.000000e+00> : vector<19x16xf32>
    %158 = tpu.matmul %157, %140, %cst_117 {dimension_numbers = #tpu.dot_dimension_numbers<[1], [0], [0], [1], [0, 0, 1, 1], [], []>} : vector<19x16xbf16>, vector<16x16xbf16>, vector<19x16xf32> -> vector<19x16xf32>
    %159 = arith.addf %156, %158 : vector<19x16xf32>
    %c2_118 = arith.constant 2 : index
    %c0_119 = arith.constant 0 : index
    %160 = vector.load %arg19[%c2_118, %c0_119] : memref<128x16xbf16, #tpu.memory_space<vmem>>, vector<19x16xbf16>
    %cst_120 = arith.constant dense<0.000000e+00> : vector<19x16xf32>
    %161 = tpu.matmul %160, %142, %cst_120 {dimension_numbers = #tpu.dot_dimension_numbers<[1], [0], [0], [1], [0, 0, 1, 1], [], []>} : vector<19x16xbf16>, vector<16x16xbf16>, vector<19x16xf32> -> vector<19x16xf32>
    %162 = arith.addf %159, %161 : vector<19x16xf32>
    %c3_121 = arith.constant 3 : index
    %c0_122 = arith.constant 0 : index
    %163 = vector.load %arg19[%c3_121, %c0_122] : memref<128x16xbf16, #tpu.memory_space<vmem>>, vector<19x16xbf16>
    %cst_123 = arith.constant dense<0.000000e+00> : vector<19x16xf32>
    %164 = tpu.matmul %163, %144, %cst_123 {dimension_numbers = #tpu.dot_dimension_numbers<[1], [0], [0], [1], [0, 0, 1, 1], [], []>} : vector<19x16xbf16>, vector<16x16xbf16>, vector<19x16xf32> -> vector<19x16xf32>
    %165 = arith.addf %162, %164 : vector<19x16xf32>
    %c4_124 = arith.constant 4 : index
    %c0_125 = arith.constant 0 : index
    %166 = vector.load %arg19[%c4_124, %c0_125] : memref<128x16xbf16, #tpu.memory_space<vmem>>, vector<19x16xbf16>
    %cst_126 = arith.constant dense<0.000000e+00> : vector<19x16xf32>
    %167 = tpu.matmul %166, %146, %cst_126 {dimension_numbers = #tpu.dot_dimension_numbers<[1], [0], [0], [1], [0, 0, 1, 1], [], []>} : vector<19x16xbf16>, vector<16x16xbf16>, vector<19x16xf32> -> vector<19x16xf32>
    %168 = arith.addf %165, %167 : vector<19x16xf32>
    %cst_127 = arith.constant dense<0.000000e+00> : vector<7x16xf32>
    %169 = tpu.matmul %154, %168, %cst_127 {dimension_numbers = #tpu.dot_dimension_numbers<[1], [0], [0], [1], [0, 0, 1, 1], [], []>} : vector<7x19xf32>, vector<19x16xf32>, vector<7x16xf32> -> vector<7x16xf32>
    %170 = vector.broadcast %147 : vector<1x16xf32> to vector<7x16xf32>
    %171 = arith.addf %169, %170 : vector<7x16xf32>
    %172 = arith.truncf %171 : vector<7x16xf32> to vector<7x16xbf16>
    %c0_128 = arith.constant 0 : index
    %c0_129 = arith.constant 0 : index
    %173 = vector.load %arg20[%c0_128, %c0_129] : memref<64x16xbf16, #tpu.memory_space<vmem>>, vector<7x16xbf16>
    tpu.vector_store %arg20[%c0_128, %c0_129], %172 {strides = array<i32>} : memref<64x16xbf16, #tpu.memory_space<vmem>>, vector<7x16xbf16>,
    %c32_130 = arith.constant 32 : index
    %c0_131 = arith.constant 0 : index
    %174 = vector.load %arg19[%c32_130, %c0_131] : memref<128x16xbf16, #tpu.memory_space<vmem>>, vector<19x16xbf16>
    %cst_132 = arith.constant dense<0.000000e+00> : vector<19x16xf32>
    %175 = tpu.matmul %174, %138, %cst_132 {dimension_numbers = #tpu.dot_dimension_numbers<[1], [0], [0], [1], [0, 0, 1, 1], [], []>} : vector<19x16xbf16>, vector<16x16xbf16>, vector<19x16xf32> -> vector<19x16xf32>
    %c33 = arith.constant 33 : index
    %c0_133 = arith.constant 0 : index
    %176 = vector.load %arg19[%c33, %c0_133] : memref<128x16xbf16, #tpu.memory_space<vmem>>, vector<19x16xbf16>
    %cst_134 = arith.constant dense<0.000000e+00> : vector<19x16xf32>
    %177 = tpu.matmul %176, %140, %cst_134 {dimension_numbers = #tpu.dot_dimension_numbers<[1], [0], [0], [1], [0, 0, 1, 1], [], []>} : vector<19x16xbf16>, vector<16x16xbf16>, vector<19x16xf32> -> vector<19x16xf32>
    %178 = arith.addf %175, %177 : vector<19x16xf32>
    %c34 = arith.constant 34 : index
    %c0_135 = arith.constant 0 : index
    %179 = vector.load %arg19[%c34, %c0_135] : memref<128x16xbf16, #tpu.memory_space<vmem>>, vector<19x16xbf16>
    %cst_136 = arith.constant dense<0.000000e+00> : vector<19x16xf32>
    %180 = tpu.matmul %179, %142, %cst_136 {dimension_numbers = #tpu.dot_dimension_numbers<[1], [0], [0], [1], [0, 0, 1, 1], [], []>} : vector<19x16xbf16>, vector<16x16xbf16>, vector<19x16xf32> -> vector<19x16xf32>
    %181 = arith.addf %178, %180 : vector<19x16xf32>
    %c35 = arith.constant 35 : index
    %c0_137 = arith.constant 0 : index
    %182 = vector.load %arg19[%c35, %c0_137] : memref<128x16xbf16, #tpu.memory_space<vmem>>, vector<19x16xbf16>
    %cst_138 = arith.constant dense<0.000000e+00> : vector<19x16xf32>
    %183 = tpu.matmul %182, %144, %cst_138 {dimension_numbers = #tpu.dot_dimension_numbers<[1], [0], [0], [1], [0, 0, 1, 1], [], []>} : vector<19x16xbf16>, vector<16x16xbf16>, vector<19x16xf32> -> vector<19x16xf32>
    %184 = arith.addf %181, %183 : vector<19x16xf32>
    %c36 = arith.constant 36 : index
    %c0_139 = arith.constant 0 : index
    %185 = vector.load %arg19[%c36, %c0_139] : memref<128x16xbf16, #tpu.memory_space<vmem>>, vector<19x16xbf16>
    %cst_140 = arith.constant dense<0.000000e+00> : vector<19x16xf32>
    %186 = tpu.matmul %185, %146, %cst_140 {dimension_numbers = #tpu.dot_dimension_numbers<[1], [0], [0], [1], [0, 0, 1, 1], [], []>} : vector<19x16xbf16>, vector<16x16xbf16>, vector<19x16xf32> -> vector<19x16xf32>
    %187 = arith.addf %184, %186 : vector<19x16xf32>
    %cst_141 = arith.constant dense<0.000000e+00> : vector<7x16xf32>
    %188 = tpu.matmul %154, %187, %cst_141 {dimension_numbers = #tpu.dot_dimension_numbers<[1], [0], [0], [1], [0, 0, 1, 1], [], []>} : vector<7x19xf32>, vector<19x16xf32>, vector<7x16xf32> -> vector<7x16xf32>
    %189 = vector.broadcast %147 : vector<1x16xf32> to vector<7x16xf32>
    %190 = arith.addf %188, %189 : vector<7x16xf32>
    %191 = arith.truncf %190 : vector<7x16xf32> to vector<7x16xbf16>
    %c16 = arith.constant 16 : index
    %c0_142 = arith.constant 0 : index
    %192 = vector.load %arg20[%c16, %c0_142] : memref<64x16xbf16, #tpu.memory_space<vmem>>, vector<7x16xbf16>
    tpu.vector_store %arg20[%c16, %c0_142], %191 {strides = array<i32>} : memref<64x16xbf16, #tpu.memory_space<vmem>>, vector<7x16xbf16>,
    %c64_143 = arith.constant 64 : index
    %c0_144 = arith.constant 0 : index
    %193 = vector.load %arg19[%c64_143, %c0_144] : memref<128x16xbf16, #tpu.memory_space<vmem>>, vector<19x16xbf16>
    %cst_145 = arith.constant dense<0.000000e+00> : vector<19x16xf32>
    %194 = tpu.matmul %193, %138, %cst_145 {dimension_numbers = #tpu.dot_dimension_numbers<[1], [0], [0], [1], [0, 0, 1, 1], [], []>} : vector<19x16xbf16>, vector<16x16xbf16>, vector<19x16xf32> -> vector<19x16xf32>
    %c65 = arith.constant 65 : index
    %c0_146 = arith.constant 0 : index
    %195 = vector.load %arg19[%c65, %c0_146] : memref<128x16xbf16, #tpu.memory_space<vmem>>, vector<19x16xbf16>
    %cst_147 = arith.constant dense<0.000000e+00> : vector<19x16xf32>
    %196 = tpu.matmul %195, %140, %cst_147 {dimension_numbers = #tpu.dot_dimension_numbers<[1], [0], [0], [1], [0, 0, 1, 1], [], []>} : vector<19x16xbf16>, vector<16x16xbf16>, vector<19x16xf32> -> vector<19x16xf32>
    %197 = arith.addf %194, %196 : vector<19x16xf32>
    %c66 = arith.constant 66 : index
    %c0_148 = arith.constant 0 : index
    %198 = vector.load %arg19[%c66, %c0_148] : memref<128x16xbf16, #tpu.memory_space<vmem>>, vector<19x16xbf16>
    %cst_149 = arith.constant dense<0.000000e+00> : vector<19x16xf32>
    %199 = tpu.matmul %198, %142, %cst_149 {dimension_numbers = #tpu.dot_dimension_numbers<[1], [0], [0], [1], [0, 0, 1, 1], [], []>} : vector<19x16xbf16>, vector<16x16xbf16>, vector<19x16xf32> -> vector<19x16xf32>
    %200 = arith.addf %197, %199 : vector<19x16xf32>
    %c67 = arith.constant 67 : index
    %c0_150 = arith.constant 0 : index
    %201 = vector.load %arg19[%c67, %c0_150] : memref<128x16xbf16, #tpu.memory_space<vmem>>, vector<19x16xbf16>
    %cst_151 = arith.constant dense<0.000000e+00> : vector<19x16xf32>
    %202 = tpu.matmul %201, %144, %cst_151 {dimension_numbers = #tpu.dot_dimension_numbers<[1], [0], [0], [1], [0, 0, 1, 1], [], []>} : vector<19x16xbf16>, vector<16x16xbf16>, vector<19x16xf32> -> vector<19x16xf32>
    %203 = arith.addf %200, %202 : vector<19x16xf32>
    %c68 = arith.constant 68 : index
    %c0_152 = arith.constant 0 : index
    %204 = vector.load %arg19[%c68, %c0_152] : memref<128x16xbf16, #tpu.memory_space<vmem>>, vector<19x16xbf16>
    %cst_153 = arith.constant dense<0.000000e+00> : vector<19x16xf32>
    %205 = tpu.matmul %204, %146, %cst_153 {dimension_numbers = #tpu.dot_dimension_numbers<[1], [0], [0], [1], [0, 0, 1, 1], [], []>} : vector<19x16xbf16>, vector<16x16xbf16>, vector<19x16xf32> -> vector<19x16xf32>
    %206 = arith.addf %203, %205 : vector<19x16xf32>
    %cst_154 = arith.constant dense<0.000000e+00> : vector<7x16xf32>
    %207 = tpu.matmul %154, %206, %cst_154 {dimension_numbers = #tpu.dot_dimension_numbers<[1], [0], [0], [1], [0, 0, 1, 1], [], []>} : vector<7x19xf32>, vector<19x16xf32>, vector<7x16xf32> -> vector<7x16xf32>
    %208 = vector.broadcast %147 : vector<1x16xf32> to vector<7x16xf32>
    %209 = arith.addf %207, %208 : vector<7x16xf32>
    %210 = arith.truncf %209 : vector<7x16xf32> to vector<7x16xbf16>
    %c32_155 = arith.constant 32 : index
    %c0_156 = arith.constant 0 : index
    %211 = vector.load %arg20[%c32_155, %c0_156] : memref<64x16xbf16, #tpu.memory_space<vmem>>, vector<7x16xbf16>
    tpu.vector_store %arg20[%c32_155, %c0_156], %210 {strides = array<i32>} : memref<64x16xbf16, #tpu.memory_space<vmem>>, vector<7x16xbf16>,
    %c96_157 = arith.constant 96 : index
    %c0_158 = arith.constant 0 : index
    %212 = vector.load %arg19[%c96_157, %c0_158] : memref<128x16xbf16, #tpu.memory_space<vmem>>, vector<19x16xbf16>
    %cst_159 = arith.constant dense<0.000000e+00> : vector<19x16xf32>
    %213 = tpu.matmul %212, %138, %cst_159 {dimension_numbers = #tpu.dot_dimension_numbers<[1], [0], [0], [1], [0, 0, 1, 1], [], []>} : vector<19x16xbf16>, vector<16x16xbf16>, vector<19x16xf32> -> vector<19x16xf32>
    %c97 = arith.constant 97 : index
    %c0_160 = arith.constant 0 : index
    %214 = vector.load %arg19[%c97, %c0_160] : memref<128x16xbf16, #tpu.memory_space<vmem>>, vector<19x16xbf16>
    %cst_161 = arith.constant dense<0.000000e+00> : vector<19x16xf32>
    %215 = tpu.matmul %214, %140, %cst_161 {dimension_numbers = #tpu.dot_dimension_numbers<[1], [0], [0], [1], [0, 0, 1, 1], [], []>} : vector<19x16xbf16>, vector<16x16xbf16>, vector<19x16xf32> -> vector<19x16xf32>
    %216 = arith.addf %213, %215 : vector<19x16xf32>
    %c98 = arith.constant 98 : index
    %c0_162 = arith.constant 0 : index
    %217 = vector.load %arg19[%c98, %c0_162] : memref<128x16xbf16, #tpu.memory_space<vmem>>, vector<19x16xbf16>
    %cst_163 = arith.constant dense<0.000000e+00> : vector<19x16xf32>
    %218 = tpu.matmul %217, %142, %cst_163 {dimension_numbers = #tpu.dot_dimension_numbers<[1], [0], [0], [1], [0, 0, 1, 1], [], []>} : vector<19x16xbf16>, vector<16x16xbf16>, vector<19x16xf32> -> vector<19x16xf32>
    %219 = arith.addf %216, %218 : vector<19x16xf32>
    %c99 = arith.constant 99 : index
    %c0_164 = arith.constant 0 : index
    %220 = vector.load %arg19[%c99, %c0_164] : memref<128x16xbf16, #tpu.memory_space<vmem>>, vector<19x16xbf16>
    %cst_165 = arith.constant dense<0.000000e+00> : vector<19x16xf32>
    %221 = tpu.matmul %220, %144, %cst_165 {dimension_numbers = #tpu.dot_dimension_numbers<[1], [0], [0], [1], [0, 0, 1, 1], [], []>} : vector<19x16xbf16>, vector<16x16xbf16>, vector<19x16xf32> -> vector<19x16xf32>
    %222 = arith.addf %219, %221 : vector<19x16xf32>
    %c100 = arith.constant 100 : index
    %c0_166 = arith.constant 0 : index
    %223 = vector.load %arg19[%c100, %c0_166] : memref<128x16xbf16, #tpu.memory_space<vmem>>, vector<19x16xbf16>
    %cst_167 = arith.constant dense<0.000000e+00> : vector<19x16xf32>
    %224 = tpu.matmul %223, %146, %cst_167 {dimension_numbers = #tpu.dot_dimension_numbers<[1], [0], [0], [1], [0, 0, 1, 1], [], []>} : vector<19x16xbf16>, vector<16x16xbf16>, vector<19x16xf32> -> vector<19x16xf32>
    %225 = arith.addf %222, %224 : vector<19x16xf32>
    %cst_168 = arith.constant dense<0.000000e+00> : vector<7x16xf32>
    %226 = tpu.matmul %154, %225, %cst_168 {dimension_numbers = #tpu.dot_dimension_numbers<[1], [0], [0], [1], [0, 0, 1, 1], [], []>} : vector<7x19xf32>, vector<19x16xf32>, vector<7x16xf32> -> vector<7x16xf32>
    %227 = vector.broadcast %147 : vector<1x16xf32> to vector<7x16xf32>
    %228 = arith.addf %226, %227 : vector<7x16xf32>
    %229 = arith.truncf %228 : vector<7x16xf32> to vector<7x16xbf16>
    %c48 = arith.constant 48 : index
    %c0_169 = arith.constant 0 : index
    %230 = vector.load %arg20[%c48, %c0_169] : memref<64x16xbf16, #tpu.memory_space<vmem>>, vector<7x16xbf16>
    tpu.vector_store %arg20[%c48, %c0_169], %229 {strides = array<i32>} : memref<64x16xbf16, #tpu.memory_space<vmem>>, vector<7x16xbf16>,
    %c0_170 = arith.constant 0 : index
    %c0_171 = arith.constant 0 : index
    %c0_172 = arith.constant 0 : index
    %231 = vector.load %arg13[%c0_170, %c0_171, %c0_172] : memref<5x16x16xbf16, #tpu.memory_space<vmem>>, vector<1x16x16xbf16>
    %232 = vector.shape_cast %231 : vector<1x16x16xbf16> to vector<16x16xbf16>
    %c1_173 = arith.constant 1 : index
    %c0_174 = arith.constant 0 : index
    %c0_175 = arith.constant 0 : index
    %233 = vector.load %arg13[%c1_173, %c0_174, %c0_175] : memref<5x16x16xbf16, #tpu.memory_space<vmem>>, vector<1x16x16xbf16>
    %234 = vector.shape_cast %233 : vector<1x16x16xbf16> to vector<16x16xbf16>
    %c2_176 = arith.constant 2 : index
    %c0_177 = arith.constant 0 : index
    %c0_178 = arith.constant 0 : index
    %235 = vector.load %arg13[%c2_176, %c0_177, %c0_178] : memref<5x16x16xbf16, #tpu.memory_space<vmem>>, vector<1x16x16xbf16>
    %236 = vector.shape_cast %235 : vector<1x16x16xbf16> to vector<16x16xbf16>
    %c3_179 = arith.constant 3 : index
    %c0_180 = arith.constant 0 : index
    %c0_181 = arith.constant 0 : index
    %237 = vector.load %arg13[%c3_179, %c0_180, %c0_181] : memref<5x16x16xbf16, #tpu.memory_space<vmem>>, vector<1x16x16xbf16>
    %238 = vector.shape_cast %237 : vector<1x16x16xbf16> to vector<16x16xbf16>
    %c4_182 = arith.constant 4 : index
    %c0_183 = arith.constant 0 : index
    %c0_184 = arith.constant 0 : index
    %239 = vector.load %arg13[%c4_182, %c0_183, %c0_184] : memref<5x16x16xbf16, #tpu.memory_space<vmem>>, vector<1x16x16xbf16>
    %240 = vector.shape_cast %239 : vector<1x16x16xbf16> to vector<16x16xbf16>
    %c0_185 = arith.constant 0 : index
    %c0_186 = arith.constant 0 : index
    %241 = vector.load %arg17[%c0_185, %c0_186] : memref<1x16xf32, #tpu.memory_space<vmem>>, vector<1x16xf32>
    %c0_187 = arith.constant 0 : index
    %c0_188 = arith.constant 0 : index
    %242 = vector.load %arg20[%c0_187, %c0_188] : memref<64x16xbf16, #tpu.memory_space<vmem>>, vector<3x16xbf16>
    %cst_189 = arith.constant dense<0.000000e+00> : vector<3x16xf32>
    %243 = tpu.matmul %242, %232, %cst_189 {dimension_numbers = #tpu.dot_dimension_numbers<[1], [0], [0], [1], [0, 0, 1, 1], [], []>} : vector<3x16xbf16>, vector<16x16xbf16>, vector<3x16xf32> -> vector<3x16xf32>
    %c1_190 = arith.constant 1 : index
    %c0_191 = arith.constant 0 : index
    %244 = vector.load %arg20[%c1_190, %c0_191] : memref<64x16xbf16, #tpu.memory_space<vmem>>, vector<3x16xbf16>
    %cst_192 = arith.constant dense<0.000000e+00> : vector<3x16xf32>
    %245 = tpu.matmul %244, %234, %cst_192 {dimension_numbers = #tpu.dot_dimension_numbers<[1], [0], [0], [1], [0, 0, 1, 1], [], []>} : vector<3x16xbf16>, vector<16x16xbf16>, vector<3x16xf32> -> vector<3x16xf32>
    %246 = arith.addf %243, %245 : vector<3x16xf32>
    %c2_193 = arith.constant 2 : index
    %c0_194 = arith.constant 0 : index
    %247 = vector.load %arg20[%c2_193, %c0_194] : memref<64x16xbf16, #tpu.memory_space<vmem>>, vector<3x16xbf16>
    %cst_195 = arith.constant dense<0.000000e+00> : vector<3x16xf32>
    %248 = tpu.matmul %247, %236, %cst_195 {dimension_numbers = #tpu.dot_dimension_numbers<[1], [0], [0], [1], [0, 0, 1, 1], [], []>} : vector<3x16xbf16>, vector<16x16xbf16>, vector<3x16xf32> -> vector<3x16xf32>
    %249 = arith.addf %246, %248 : vector<3x16xf32>
    %c3_196 = arith.constant 3 : index
    %c0_197 = arith.constant 0 : index
    %250 = vector.load %arg20[%c3_196, %c0_197] : memref<64x16xbf16, #tpu.memory_space<vmem>>, vector<3x16xbf16>
    %cst_198 = arith.constant dense<0.000000e+00> : vector<3x16xf32>
    %251 = tpu.matmul %250, %238, %cst_198 {dimension_numbers = #tpu.dot_dimension_numbers<[1], [0], [0], [1], [0, 0, 1, 1], [], []>} : vector<3x16xbf16>, vector<16x16xbf16>, vector<3x16xf32> -> vector<3x16xf32>
    %252 = arith.addf %249, %251 : vector<3x16xf32>
    %c4_199 = arith.constant 4 : index
    %c0_200 = arith.constant 0 : index
    %253 = vector.load %arg20[%c4_199, %c0_200] : memref<64x16xbf16, #tpu.memory_space<vmem>>, vector<3x16xbf16>
    %cst_201 = arith.constant dense<0.000000e+00> : vector<3x16xf32>
    %254 = tpu.matmul %253, %240, %cst_201 {dimension_numbers = #tpu.dot_dimension_numbers<[1], [0], [0], [1], [0, 0, 1, 1], [], []>} : vector<3x16xbf16>, vector<16x16xbf16>, vector<3x16xf32> -> vector<3x16xf32>
    %255 = arith.addf %252, %254 : vector<3x16xf32>
    %256 = vector.broadcast %241 : vector<1x16xf32> to vector<3x16xf32>
    %257 = arith.addf %255, %256 : vector<3x16xf32>
    %cst_202 = arith.constant 0.000000e+00 : f32
    %258 = vector.broadcast %cst_202 : f32 to vector<3x16xf32>
    %259 = arith.cmpf oge, %257, %258 : vector<3x16xf32>
    %cst_203 = arith.constant 1.000000e-01 : f32
    %260 = vector.broadcast %cst_203 : f32 to vector<3x16xf32>
    %261 = arith.mulf %257, %260 : vector<3x16xf32>
    %262 = arith.select %259, %257, %261 : vector<3x16xi1>, vector<3x16xf32>
    %263 = arith.truncf %262 : vector<3x16xf32> to vector<3x16xbf16>
    %c0_204 = arith.constant 0 : index
    %c0_205 = arith.constant 0 : index
    %264 = vector.load %arg21[%c0_204, %c0_205] : memref<64x16xbf16, #tpu.memory_space<vmem>>, vector<3x16xbf16>
    tpu.vector_store %arg21[%c0_204, %c0_205], %263 {strides = array<i32>} : memref<64x16xbf16, #tpu.memory_space<vmem>>, vector<3x16xbf16>,
    %c16_206 = arith.constant 16 : index
    %c0_207 = arith.constant 0 : index
    %265 = vector.load %arg20[%c16_206, %c0_207] : memref<64x16xbf16, #tpu.memory_space<vmem>>, vector<3x16xbf16>
    %cst_208 = arith.constant dense<0.000000e+00> : vector<3x16xf32>
    %266 = tpu.matmul %265, %232, %cst_208 {dimension_numbers = #tpu.dot_dimension_numbers<[1], [0], [0], [1], [0, 0, 1, 1], [], []>} : vector<3x16xbf16>, vector<16x16xbf16>, vector<3x16xf32> -> vector<3x16xf32>
    %c17 = arith.constant 17 : index
    %c0_209 = arith.constant 0 : index
    %267 = vector.load %arg20[%c17, %c0_209] : memref<64x16xbf16, #tpu.memory_space<vmem>>, vector<3x16xbf16>
    %cst_210 = arith.constant dense<0.000000e+00> : vector<3x16xf32>
    %268 = tpu.matmul %267, %234, %cst_210 {dimension_numbers = #tpu.dot_dimension_numbers<[1], [0], [0], [1], [0, 0, 1, 1], [], []>} : vector<3x16xbf16>, vector<16x16xbf16>, vector<3x16xf32> -> vector<3x16xf32>
    %269 = arith.addf %266, %268 : vector<3x16xf32>
    %c18 = arith.constant 18 : index
    %c0_211 = arith.constant 0 : index
    %270 = vector.load %arg20[%c18, %c0_211] : memref<64x16xbf16, #tpu.memory_space<vmem>>, vector<3x16xbf16>
    %cst_212 = arith.constant dense<0.000000e+00> : vector<3x16xf32>
    %271 = tpu.matmul %270, %236, %cst_212 {dimension_numbers = #tpu.dot_dimension_numbers<[1], [0], [0], [1], [0, 0, 1, 1], [], []>} : vector<3x16xbf16>, vector<16x16xbf16>, vector<3x16xf32> -> vector<3x16xf32>
    %272 = arith.addf %269, %271 : vector<3x16xf32>
    %c19 = arith.constant 19 : index
    %c0_213 = arith.constant 0 : index
    %273 = vector.load %arg20[%c19, %c0_213] : memref<64x16xbf16, #tpu.memory_space<vmem>>, vector<3x16xbf16>
    %cst_214 = arith.constant dense<0.000000e+00> : vector<3x16xf32>
    %274 = tpu.matmul %273, %238, %cst_214 {dimension_numbers = #tpu.dot_dimension_numbers<[1], [0], [0], [1], [0, 0, 1, 1], [], []>} : vector<3x16xbf16>, vector<16x16xbf16>, vector<3x16xf32> -> vector<3x16xf32>
    %275 = arith.addf %272, %274 : vector<3x16xf32>
    %c20 = arith.constant 20 : index
    %c0_215 = arith.constant 0 : index
    %276 = vector.load %arg20[%c20, %c0_215] : memref<64x16xbf16, #tpu.memory_space<vmem>>, vector<3x16xbf16>
    %cst_216 = arith.constant dense<0.000000e+00> : vector<3x16xf32>
    %277 = tpu.matmul %276, %240, %cst_216 {dimension_numbers = #tpu.dot_dimension_numbers<[1], [0], [0], [1], [0, 0, 1, 1], [], []>} : vector<3x16xbf16>, vector<16x16xbf16>, vector<3x16xf32> -> vector<3x16xf32>
    %278 = arith.addf %275, %277 : vector<3x16xf32>
    %279 = vector.broadcast %241 : vector<1x16xf32> to vector<3x16xf32>
    %280 = arith.addf %278, %279 : vector<3x16xf32>
    %cst_217 = arith.constant 0.000000e+00 : f32
    %281 = vector.broadcast %cst_217 : f32 to vector<3x16xf32>
    %282 = arith.cmpf oge, %280, %281 : vector<3x16xf32>
    %cst_218 = arith.constant 1.000000e-01 : f32
    %283 = vector.broadcast %cst_218 : f32 to vector<3x16xf32>
    %284 = arith.mulf %280, %283 : vector<3x16xf32>
    %285 = arith.select %282, %280, %284 : vector<3x16xi1>, vector<3x16xf32>
    %286 = arith.truncf %285 : vector<3x16xf32> to vector<3x16xbf16>
    %c16_219 = arith.constant 16 : index
    %c0_220 = arith.constant 0 : index
    %287 = vector.load %arg21[%c16_219, %c0_220] : memref<64x16xbf16, #tpu.memory_space<vmem>>, vector<3x16xbf16>
    tpu.vector_store %arg21[%c16_219, %c0_220], %286 {strides = array<i32>} : memref<64x16xbf16, #tpu.memory_space<vmem>>, vector<3x16xbf16>,
    %c32_221 = arith.constant 32 : index
    %c0_222 = arith.constant 0 : index
    %288 = vector.load %arg20[%c32_221, %c0_222] : memref<64x16xbf16, #tpu.memory_space<vmem>>, vector<3x16xbf16>
    %cst_223 = arith.constant dense<0.000000e+00> : vector<3x16xf32>
    %289 = tpu.matmul %288, %232, %cst_223 {dimension_numbers = #tpu.dot_dimension_numbers<[1], [0], [0], [1], [0, 0, 1, 1], [], []>} : vector<3x16xbf16>, vector<16x16xbf16>, vector<3x16xf32> -> vector<3x16xf32>
    %c33_224 = arith.constant 33 : index
    %c0_225 = arith.constant 0 : index
    %290 = vector.load %arg20[%c33_224, %c0_225] : memref<64x16xbf16, #tpu.memory_space<vmem>>, vector<3x16xbf16>
    %cst_226 = arith.constant dense<0.000000e+00> : vector<3x16xf32>
    %291 = tpu.matmul %290, %234, %cst_226 {dimension_numbers = #tpu.dot_dimension_numbers<[1], [0], [0], [1], [0, 0, 1, 1], [], []>} : vector<3x16xbf16>, vector<16x16xbf16>, vector<3x16xf32> -> vector<3x16xf32>
    %292 = arith.addf %289, %291 : vector<3x16xf32>
    %c34_227 = arith.constant 34 : index
    %c0_228 = arith.constant 0 : index
    %293 = vector.load %arg20[%c34_227, %c0_228] : memref<64x16xbf16, #tpu.memory_space<vmem>>, vector<3x16xbf16>
    %cst_229 = arith.constant dense<0.000000e+00> : vector<3x16xf32>
    %294 = tpu.matmul %293, %236, %cst_229 {dimension_numbers = #tpu.dot_dimension_numbers<[1], [0], [0], [1], [0, 0, 1, 1], [], []>} : vector<3x16xbf16>, vector<16x16xbf16>, vector<3x16xf32> -> vector<3x16xf32>
    %295 = arith.addf %292, %294 : vector<3x16xf32>
    %c35_230 = arith.constant 35 : index
    %c0_231 = arith.constant 0 : index
    %296 = vector.load %arg20[%c35_230, %c0_231] : memref<64x16xbf16, #tpu.memory_space<vmem>>, vector<3x16xbf16>
    %cst_232 = arith.constant dense<0.000000e+00> : vector<3x16xf32>
    %297 = tpu.matmul %296, %238, %cst_232 {dimension_numbers = #tpu.dot_dimension_numbers<[1], [0], [0], [1], [0, 0, 1, 1], [], []>} : vector<3x16xbf16>, vector<16x16xbf16>, vector<3x16xf32> -> vector<3x16xf32>
    %298 = arith.addf %295, %297 : vector<3x16xf32>
    %c36_233 = arith.constant 36 : index
    %c0_234 = arith.constant 0 : index
    %299 = vector.load %arg20[%c36_233, %c0_234] : memref<64x16xbf16, #tpu.memory_space<vmem>>, vector<3x16xbf16>
    %cst_235 = arith.constant dense<0.000000e+00> : vector<3x16xf32>
    %300 = tpu.matmul %299, %240, %cst_235 {dimension_numbers = #tpu.dot_dimension_numbers<[1], [0], [0], [1], [0, 0, 1, 1], [], []>} : vector<3x16xbf16>, vector<16x16xbf16>, vector<3x16xf32> -> vector<3x16xf32>
    %301 = arith.addf %298, %300 : vector<3x16xf32>
    %302 = vector.broadcast %241 : vector<1x16xf32> to vector<3x16xf32>
    %303 = arith.addf %301, %302 : vector<3x16xf32>
    %cst_236 = arith.constant 0.000000e+00 : f32
    %304 = vector.broadcast %cst_236 : f32 to vector<3x16xf32>
    %305 = arith.cmpf oge, %303, %304 : vector<3x16xf32>
    %cst_237 = arith.constant 1.000000e-01 : f32
    %306 = vector.broadcast %cst_237 : f32 to vector<3x16xf32>
    %307 = arith.mulf %303, %306 : vector<3x16xf32>
    %308 = arith.select %305, %303, %307 : vector<3x16xi1>, vector<3x16xf32>
    %309 = arith.truncf %308 : vector<3x16xf32> to vector<3x16xbf16>
    %c32_238 = arith.constant 32 : index
    %c0_239 = arith.constant 0 : index
    %310 = vector.load %arg21[%c32_238, %c0_239] : memref<64x16xbf16, #tpu.memory_space<vmem>>, vector<3x16xbf16>
    tpu.vector_store %arg21[%c32_238, %c0_239], %309 {strides = array<i32>} : memref<64x16xbf16, #tpu.memory_space<vmem>>, vector<3x16xbf16>,
    %c48_240 = arith.constant 48 : index
    %c0_241 = arith.constant 0 : index
    %311 = vector.load %arg20[%c48_240, %c0_241] : memref<64x16xbf16, #tpu.memory_space<vmem>>, vector<3x16xbf16>
    %cst_242 = arith.constant dense<0.000000e+00> : vector<3x16xf32>
    %312 = tpu.matmul %311, %232, %cst_242 {dimension_numbers = #tpu.dot_dimension_numbers<[1], [0], [0], [1], [0, 0, 1, 1], [], []>} : vector<3x16xbf16>, vector<16x16xbf16>, vector<3x16xf32> -> vector<3x16xf32>
    %c49 = arith.constant 49 : index
    %c0_243 = arith.constant 0 : index
    %313 = vector.load %arg20[%c49, %c0_243] : memref<64x16xbf16, #tpu.memory_space<vmem>>, vector<3x16xbf16>
    %cst_244 = arith.constant dense<0.000000e+00> : vector<3x16xf32>
    %314 = tpu.matmul %313, %234, %cst_244 {dimension_numbers = #tpu.dot_dimension_numbers<[1], [0], [0], [1], [0, 0, 1, 1], [], []>} : vector<3x16xbf16>, vector<16x16xbf16>, vector<3x16xf32> -> vector<3x16xf32>
    %315 = arith.addf %312, %314 : vector<3x16xf32>
    %c50 = arith.constant 50 : index
    %c0_245 = arith.constant 0 : index
    %316 = vector.load %arg20[%c50, %c0_245] : memref<64x16xbf16, #tpu.memory_space<vmem>>, vector<3x16xbf16>
    %cst_246 = arith.constant dense<0.000000e+00> : vector<3x16xf32>
    %317 = tpu.matmul %316, %236, %cst_246 {dimension_numbers = #tpu.dot_dimension_numbers<[1], [0], [0], [1], [0, 0, 1, 1], [], []>} : vector<3x16xbf16>, vector<16x16xbf16>, vector<3x16xf32> -> vector<3x16xf32>
    %318 = arith.addf %315, %317 : vector<3x16xf32>
    %c51 = arith.constant 51 : index
    %c0_247 = arith.constant 0 : index
    %319 = vector.load %arg20[%c51, %c0_247] : memref<64x16xbf16, #tpu.memory_space<vmem>>, vector<3x16xbf16>
    %cst_248 = arith.constant dense<0.000000e+00> : vector<3x16xf32>
    %320 = tpu.matmul %319, %238, %cst_248 {dimension_numbers = #tpu.dot_dimension_numbers<[1], [0], [0], [1], [0, 0, 1, 1], [], []>} : vector<3x16xbf16>, vector<16x16xbf16>, vector<3x16xf32> -> vector<3x16xf32>
    %321 = arith.addf %318, %320 : vector<3x16xf32>
    %c52 = arith.constant 52 : index
    %c0_249 = arith.constant 0 : index
    %322 = vector.load %arg20[%c52, %c0_249] : memref<64x16xbf16, #tpu.memory_space<vmem>>, vector<3x16xbf16>
    %cst_250 = arith.constant dense<0.000000e+00> : vector<3x16xf32>
    %323 = tpu.matmul %322, %240, %cst_250 {dimension_numbers = #tpu.dot_dimension_numbers<[1], [0], [0], [1], [0, 0, 1, 1], [], []>} : vector<3x16xbf16>, vector<16x16xbf16>, vector<3x16xf32> -> vector<3x16xf32>
    %324 = arith.addf %321, %323 : vector<3x16xf32>
    %325 = vector.broadcast %241 : vector<1x16xf32> to vector<3x16xf32>
    %326 = arith.addf %324, %325 : vector<3x16xf32>
    %cst_251 = arith.constant 0.000000e+00 : f32
    %327 = vector.broadcast %cst_251 : f32 to vector<3x16xf32>
    %328 = arith.cmpf oge, %326, %327 : vector<3x16xf32>
    %cst_252 = arith.constant 1.000000e-01 : f32
    %329 = vector.broadcast %cst_252 : f32 to vector<3x16xf32>
    %330 = arith.mulf %326, %329 : vector<3x16xf32>
    %331 = arith.select %328, %326, %330 : vector<3x16xi1>, vector<3x16xf32>
    %332 = arith.truncf %331 : vector<3x16xf32> to vector<3x16xbf16>
    %c48_253 = arith.constant 48 : index
    %c0_254 = arith.constant 0 : index
    %333 = vector.load %arg21[%c48_253, %c0_254] : memref<64x16xbf16, #tpu.memory_space<vmem>>, vector<3x16xbf16>
    tpu.vector_store %arg21[%c48_253, %c0_254], %332 {strides = array<i32>} : memref<64x16xbf16, #tpu.memory_space<vmem>>, vector<3x16xbf16>,
    %c0_255 = arith.constant 0 : index
    %c0_256 = arith.constant 0 : index
    %c0_257 = arith.constant 0 : index
    %334 = vector.load %arg14[%c0_255, %c0_256, %c0_257] : memref<3x16x1xbf16, #tpu.memory_space<vmem>>, vector<1x16x1xbf16>
    %335 = vector.shape_cast %334 : vector<1x16x1xbf16> to vector<16x1xbf16>
    %c1_258 = arith.constant 1 : index
    %c0_259 = arith.constant 0 : index
    %c0_260 = arith.constant 0 : index
    %336 = vector.load %arg14[%c1_258, %c0_259, %c0_260] : memref<3x16x1xbf16, #tpu.memory_space<vmem>>, vector<1x16x1xbf16>
    %337 = vector.shape_cast %336 : vector<1x16x1xbf16> to vector<16x1xbf16>
    %c2_261 = arith.constant 2 : index
    %c0_262 = arith.constant 0 : index
    %c0_263 = arith.constant 0 : index
    %338 = vector.load %arg14[%c2_261, %c0_262, %c0_263] : memref<3x16x1xbf16, #tpu.memory_space<vmem>>, vector<1x16x1xbf16>
    %339 = vector.shape_cast %338 : vector<1x16x1xbf16> to vector<16x1xbf16>
    %c0_264 = arith.constant 0 : index
    %c0_265 = arith.constant 0 : index
    %340 = vector.load %arg18[%c0_264, %c0_265] : memref<1x1xf32, #tpu.memory_space<vmem>>, vector<1x1xf32>
    %c0_266 = arith.constant 0 : index
    %c0_267 = arith.constant 0 : index
    %341 = vector.load %arg21[%c0_266, %c0_267] : memref<64x16xbf16, #tpu.memory_space<vmem>>, vector<1x16xbf16>
    %cst_268 = arith.constant dense<0.000000e+00> : vector<1x1xf32>
    %342 = tpu.matmul %341, %335, %cst_268 {dimension_numbers = #tpu.dot_dimension_numbers<[1], [0], [0], [1], [0, 0, 1, 1], [], []>} : vector<1x16xbf16>, vector<16x1xbf16>, vector<1x1xf32> -> vector<1x1xf32>
    %c1_269 = arith.constant 1 : index
    %c0_270 = arith.constant 0 : index
    %343 = vector.load %arg21[%c1_269, %c0_270] : memref<64x16xbf16, #tpu.memory_space<vmem>>, vector<1x16xbf16>
    %cst_271 = arith.constant dense<0.000000e+00> : vector<1x1xf32>
    %344 = tpu.matmul %343, %337, %cst_271 {dimension_numbers = #tpu.dot_dimension_numbers<[1], [0], [0], [1], [0, 0, 1, 1], [], []>} : vector<1x16xbf16>, vector<16x1xbf16>, vector<1x1xf32> -> vector<1x1xf32>
    %345 = arith.addf %342, %344 : vector<1x1xf32>
    %c2_272 = arith.constant 2 : index
    %c0_273 = arith.constant 0 : index
    %346 = vector.load %arg21[%c2_272, %c0_273] : memref<64x16xbf16, #tpu.memory_space<vmem>>, vector<1x16xbf16>
    %cst_274 = arith.constant dense<0.000000e+00> : vector<1x1xf32>
    %347 = tpu.matmul %346, %339, %cst_274 {dimension_numbers = #tpu.dot_dimension_numbers<[1], [0], [0], [1], [0, 0, 1, 1], [], []>} : vector<1x16xbf16>, vector<16x1xbf16>, vector<1x1xf32> -> vector<1x1xf32>
    %348 = arith.addf %345, %347 : vector<1x1xf32>
    %349 = arith.addf %348, %340 : vector<1x1xf32>
    %c0_275 = arith.constant 0 : index
    %c0_276 = arith.constant 0 : index
    %c0_277 = arith.constant 0 : index
    %350 = vector.load %arg10[%c0_275, %c0_276, %c0_277] : memref<1x2x2xf32, #tpu.memory_space<vmem>>, vector<1x1x1xf32>
    %351 = vector.shape_cast %350 : vector<1x1x1xf32> to vector<1x1xf32>
    %352 = vector.shape_cast %349 : vector<1x1xf32> to vector<1x1x1xf32>
    tpu.vector_store %arg10[%c0_275, %c0_276, %c0_277], %352 {strides = array<i32>} : memref<1x2x2xf32, #tpu.memory_space<vmem>>, vector<1x1x1xf32>,
    %c16_278 = arith.constant 16 : index
    %c0_279 = arith.constant 0 : index
    %353 = vector.load %arg21[%c16_278, %c0_279] : memref<64x16xbf16, #tpu.memory_space<vmem>>, vector<1x16xbf16>
    %cst_280 = arith.constant dense<0.000000e+00> : vector<1x1xf32>
    %354 = tpu.matmul %353, %335, %cst_280 {dimension_numbers = #tpu.dot_dimension_numbers<[1], [0], [0], [1], [0, 0, 1, 1], [], []>} : vector<1x16xbf16>, vector<16x1xbf16>, vector<1x1xf32> -> vector<1x1xf32>
    %c17_281 = arith.constant 17 : index
    %c0_282 = arith.constant 0 : index
    %355 = vector.load %arg21[%c17_281, %c0_282] : memref<64x16xbf16, #tpu.memory_space<vmem>>, vector<1x16xbf16>
    %cst_283 = arith.constant dense<0.000000e+00> : vector<1x1xf32>
    %356 = tpu.matmul %355, %337, %cst_283 {dimension_numbers = #tpu.dot_dimension_numbers<[1], [0], [0], [1], [0, 0, 1, 1], [], []>} : vector<1x16xbf16>, vector<16x1xbf16>, vector<1x1xf32> -> vector<1x1xf32>
    %357 = arith.addf %354, %356 : vector<1x1xf32>
    %c18_284 = arith.constant 18 : index
    %c0_285 = arith.constant 0 : index
    %358 = vector.load %arg21[%c18_284, %c0_285] : memref<64x16xbf16, #tpu.memory_space<vmem>>, vector<1x16xbf16>
    %cst_286 = arith.constant dense<0.000000e+00> : vector<1x1xf32>
    %359 = tpu.matmul %358, %339, %cst_286 {dimension_numbers = #tpu.dot_dimension_numbers<[1], [0], [0], [1], [0, 0, 1, 1], [], []>} : vector<1x16xbf16>, vector<16x1xbf16>, vector<1x1xf32> -> vector<1x1xf32>
    %360 = arith.addf %357, %359 : vector<1x1xf32>
    %361 = arith.addf %360, %340 : vector<1x1xf32>
    %c0_287 = arith.constant 0 : index
    %c0_288 = arith.constant 0 : index
    %c1_289 = arith.constant 1 : index
    %362 = vector.load %arg10[%c0_287, %c0_288, %c1_289] : memref<1x2x2xf32, #tpu.memory_space<vmem>>, vector<1x1x1xf32>
    %363 = vector.shape_cast %362 : vector<1x1x1xf32> to vector<1x1xf32>
    %364 = vector.shape_cast %361 : vector<1x1xf32> to vector<1x1x1xf32>
    tpu.vector_store %arg10[%c0_287, %c0_288, %c1_289], %364 {strides = array<i32>} : memref<1x2x2xf32, #tpu.memory_space<vmem>>, vector<1x1x1xf32>,
    %c32_290 = arith.constant 32 : index
    %c0_291 = arith.constant 0 : index
    %365 = vector.load %arg21[%c32_290, %c0_291] : memref<64x16xbf16, #tpu.memory_space<vmem>>, vector<1x16xbf16>
    %cst_292 = arith.constant dense<0.000000e+00> : vector<1x1xf32>
    %366 = tpu.matmul %365, %335, %cst_292 {dimension_numbers = #tpu.dot_dimension_numbers<[1], [0], [0], [1], [0, 0, 1, 1], [], []>} : vector<1x16xbf16>, vector<16x1xbf16>, vector<1x1xf32> -> vector<1x1xf32>
    %c33_293 = arith.constant 33 : index
    %c0_294 = arith.constant 0 : index
    %367 = vector.load %arg21[%c33_293, %c0_294] : memref<64x16xbf16, #tpu.memory_space<vmem>>, vector<1x16xbf16>
    %cst_295 = arith.constant dense<0.000000e+00> : vector<1x1xf32>
    %368 = tpu.matmul %367, %337, %cst_295 {dimension_numbers = #tpu.dot_dimension_numbers<[1], [0], [0], [1], [0, 0, 1, 1], [], []>} : vector<1x16xbf16>, vector<16x1xbf16>, vector<1x1xf32> -> vector<1x1xf32>
    %369 = arith.addf %366, %368 : vector<1x1xf32>
    %c34_296 = arith.constant 34 : index
    %c0_297 = arith.constant 0 : index
    %370 = vector.load %arg21[%c34_296, %c0_297] : memref<64x16xbf16, #tpu.memory_space<vmem>>, vector<1x16xbf16>
    %cst_298 = arith.constant dense<0.000000e+00> : vector<1x1xf32>
    %371 = tpu.matmul %370, %339, %cst_298 {dimension_numbers = #tpu.dot_dimension_numbers<[1], [0], [0], [1], [0, 0, 1, 1], [], []>} : vector<1x16xbf16>, vector<16x1xbf16>, vector<1x1xf32> -> vector<1x1xf32>
    %372 = arith.addf %369, %371 : vector<1x1xf32>
    %373 = arith.addf %372, %340 : vector<1x1xf32>
    %c0_299 = arith.constant 0 : index
    %c1_300 = arith.constant 1 : index
    %c0_301 = arith.constant 0 : index
    %374 = vector.load %arg10[%c0_299, %c1_300, %c0_301] : memref<1x2x2xf32, #tpu.memory_space<vmem>>, vector<1x1x1xf32>
    %375 = vector.shape_cast %374 : vector<1x1x1xf32> to vector<1x1xf32>
    %376 = vector.shape_cast %373 : vector<1x1xf32> to vector<1x1x1xf32>
    tpu.vector_store %arg10[%c0_299, %c1_300, %c0_301], %376 {strides = array<i32>} : memref<1x2x2xf32, #tpu.memory_space<vmem>>, vector<1x1x1xf32>,
    %c48_302 = arith.constant 48 : index
    %c0_303 = arith.constant 0 : index
    %377 = vector.load %arg21[%c48_302, %c0_303] : memref<64x16xbf16, #tpu.memory_space<vmem>>, vector<1x16xbf16>
    %cst_304 = arith.constant dense<0.000000e+00> : vector<1x1xf32>
    %378 = tpu.matmul %377, %335, %cst_304 {dimension_numbers = #tpu.dot_dimension_numbers<[1], [0], [0], [1], [0, 0, 1, 1], [], []>} : vector<1x16xbf16>, vector<16x1xbf16>, vector<1x1xf32> -> vector<1x1xf32>
    %c49_305 = arith.constant 49 : index
    %c0_306 = arith.constant 0 : index
    %379 = vector.load %arg21[%c49_305, %c0_306] : memref<64x16xbf16, #tpu.memory_space<vmem>>, vector<1x16xbf16>
    %cst_307 = arith.constant dense<0.000000e+00> : vector<1x1xf32>
    %380 = tpu.matmul %379, %337, %cst_307 {dimension_numbers = #tpu.dot_dimension_numbers<[1], [0], [0], [1], [0, 0, 1, 1], [], []>} : vector<1x16xbf16>, vector<16x1xbf16>, vector<1x1xf32> -> vector<1x1xf32>
    %381 = arith.addf %378, %380 : vector<1x1xf32>
    %c50_308 = arith.constant 50 : index
    %c0_309 = arith.constant 0 : index
    %382 = vector.load %arg21[%c50_308, %c0_309] : memref<64x16xbf16, #tpu.memory_space<vmem>>, vector<1x16xbf16>
    %cst_310 = arith.constant dense<0.000000e+00> : vector<1x1xf32>
    %383 = tpu.matmul %382, %339, %cst_310 {dimension_numbers = #tpu.dot_dimension_numbers<[1], [0], [0], [1], [0, 0, 1, 1], [], []>} : vector<1x16xbf16>, vector<16x1xbf16>, vector<1x1xf32> -> vector<1x1xf32>
    %384 = arith.addf %381, %383 : vector<1x1xf32>
    %385 = arith.addf %384, %340 : vector<1x1xf32>
    %c0_311 = arith.constant 0 : index
    %c1_312 = arith.constant 1 : index
    %c1_313 = arith.constant 1 : index
    %386 = vector.load %arg10[%c0_311, %c1_312, %c1_313] : memref<1x2x2xf32, #tpu.memory_space<vmem>>, vector<1x1x1xf32>
    %387 = vector.shape_cast %386 : vector<1x1x1xf32> to vector<1x1xf32>
    %388 = vector.shape_cast %385 : vector<1x1xf32> to vector<1x1x1xf32>
    tpu.vector_store %arg10[%c0_311, %c1_312, %c1_313], %388 {strides = array<i32>} : memref<1x2x2xf32, #tpu.memory_space<vmem>>, vector<1x1x1xf32>,
    return
  }
  func.func @transform_0(%arg0: i32) -> (i32, i32, i32) {
    %c0_i32 = arith.constant 0 : i32
    %c0_i32_0 = arith.constant 0 : i32
    %c0_i32_1 = arith.constant 0 : i32
    return %arg0, %c0_i32, %c0_i32_0 : i32, i32, i32
  }
  func.func @transform_9(%arg0: i32) -> (i32, i32, i32) {
    %c0_i32 = arith.constant 0 : i32
    %c0_i32_0 = arith.constant 0 : i32
    %c0_i32_1 = arith.constant 0 : i32
    return %arg0, %c0_i32, %c0_i32_0 : i32, i32, i32
  }
}

</mosaic_0001>

<llo_original>
// kernel: tpu_custom_call.1
$region0: #{tpu_custom_call.1}
  #allocation0 [shape = 'u32[]', space=smem, size = 0x4, offset = 0x4, fixed_abs, tag = 'smem constant byte address 0x4 - core index']
  #allocation1 [shape = 'u32[144,128]{1,0:T(1,128)}', space=vmem, size = 0x12000, scoped, tag = 'internal scratch']
  #allocation2 [shape = 'bf16[5,8,16]{2,1,0:T(8,128)(2,1)}', space=vmem, size = 0x2800, scoped, tag = 'scratch operand']
  #allocation3 [shape = 'bf16[5,16,16]{2,1,0:T(16,128)(2,1)}', space=vmem, size = 0x5000, scoped, tag = 'scratch operand']
  #allocation4 [shape = 'bf16[5,16,16]{2,1,0:T(16,128)(2,1)}', space=vmem, size = 0x5000, scoped, tag = 'scratch operand']
  #allocation5 [shape = 'bf16[3,16,1]{2,1,0:T(16,128)(2,1)}', space=vmem, size = 0x3000, scoped, tag = 'scratch operand']
  #allocation6 [shape = 'f32[1,16]{1,0:T(1,128)}', space=vmem, size = 0x200, scoped, tag = 'scratch operand']
  #allocation7 [shape = 'f32[1,16]{1,0:T(1,128)}', space=vmem, size = 0x200, scoped, tag = 'scratch operand']
  #allocation8 [shape = 'f32[1,16]{1,0:T(1,128)}', space=vmem, size = 0x200, scoped, tag = 'scratch operand']
  #allocation9 [shape = 'f32[1,1]{1,0:T(1,128)}', space=vmem, size = 0x200, scoped, tag = 'scratch operand']
  #allocation10 [shape = 'bf16[128,16]{1,0:T(16,128)(2,1)}', space=vmem, size = 0x8000, scoped, tag = 'scratch operand']
  #allocation11 [shape = 'bf16[64,16]{1,0:T(16,128)(2,1)}', space=vmem, size = 0x4000, scoped, tag = 'scratch operand']
  #allocation12 [shape = 'bf16[64,16]{1,0:T(16,128)(2,1)}', space=vmem, size = 0x4000, scoped, tag = 'scratch operand']
  #allocation13 [shape = 's32[8]{0}', space=sflag, size = 0x20, scoped, tag = 'scratch operand']
  #allocation14 [shape = 'f32[1,1]{1,0:T(1,128)S(1)}', space=vmem, size = 0x200, scoped, tag = 'scoped memory for tpu_custom_call.1']
  #allocation17 [shape = 's32[]', space=sflag, size = 0x4, offset = 0, fixed_abs, tag = 'sflag constant byte address 0x0 - dummy sync flag']
  #allocation18 [shape = 's32[]', space=sflag, size = 0x4, offset = 0, fixed_abs, tag = 'sflag constant byte address 0x0 - dummy sync flag']
  #allocation19 [shape = 's32[]', space=sflag, size = 0x4, offset = 0, fixed_abs, tag = 'sflag constant byte address 0x0 - dummy sync flag']
  #allocation20 [shape = 's32[]', space=sflag, size = 0x4, offset = 0, fixed_abs, tag = 'sflag constant byte address 0x0 - dummy sync flag']
  #allocation21 [shape = 's32[]', space=sflag, size = 0x4, offset = 0, fixed_abs, tag = 'sflag constant byte address 0x0 - dummy sync flag']
  #allocation22 [shape = 's32[]', space=sflag, size = 0x4, offset = 0, fixed_abs, tag = 'sflag constant byte address 0x0 - dummy sync flag']
  #allocation23 [shape = 's32[]', space=sflag, size = 0x4, offset = 0, fixed_abs, tag = 'sflag constant byte address 0x0 - dummy sync flag']
  #allocation24 [shape = 's32[]', space=sflag, size = 0x4, offset = 0, fixed_abs, tag = 'sflag constant byte address 0x0 - dummy sync flag']
  %s0 = inlined_call_operand.vmem [shape: bf16[2,320,8], index: 0, kind: input, shape index: {}]
  %s1 = inlined_call_operand.vmem [shape: bf16[5,8,16], index: 1, kind: input, shape index: {}]
  %s2 = inlined_call_operand.vmem [shape: f32[1,16], index: 2, kind: input, shape index: {}]
  %s3 = inlined_call_operand.vmem [shape: bf16[5,16,16], index: 3, kind: input, shape index: {}]
  %s4 = inlined_call_operand.vmem [shape: f32[1,16], index: 4, kind: input, shape index: {}]
  %s5 = inlined_call_operand.vmem [shape: bf16[5,16,16], index: 5, kind: input, shape index: {}]
  %s6 = inlined_call_operand.vmem [shape: f32[1,16], index: 6, kind: input, shape index: {}]
  %s7 = inlined_call_operand.vmem [shape: bf16[3,16,1], index: 7, kind: input, shape index: {}]
  %s8 = inlined_call_operand.<no memory space> [shape: f32[1,1], index: 8, kind: input, shape index: {}]
  %s9 = inlined_call_operand.hbm [shape: f32[2,2,2], index: 9, kind: output, shape index: {}]
  %s10 = sld [smem:[#allocation0]]
  $region300: #{tpu_custom_call.1} parent=0
    _
  %s12 = ssub.s32 1, %s10
  %s13 = scalar_select 0, %s12, %s10
  %v14 = vstv %s8
  %15 = vst [vmem:[#allocation14] sm:$0x1] %v14
  $region1: #{tpu_custom_call.1} parent=0
    #allocation15 [shape = 'u8[2048]{0}', space=vmem, size = 0x800, scoped, tag = 'output window, operand 0']
    #allocation16 [shape = 's32[2]{0}', space=sflag, size = 0x8, scoped, tag = 'scoped memory for tpu_custom_call.1']
    %16 = vsyncpa [#allocation16], 0
    %s17 = scalar_lea.sflag [#allocation16], 1
    %18 = vsyncpa %s17, 0
    loop: start=0, step=1, limit=4
    $region2: #{tpu_custom_call.1} parent=1 // loop_pre_header
      _
    $region3: #{tpu_custom_call.1} parent=1 // loop_header
      %s20 = sphi 0, %s24
      %p21 = scmp.ge.s32.totalorder %s20, 4
      %s30 = sphi 0, %s32
      %s33 = sphi 0, %s30
      %s34 = sphi 0, %s33
      %s50 = sphi 0, %s34
      %s56 = sphi 0, %s58
      %s59 = sphi 0, %s56
      %s60 = sphi 0, %s59
      %s76 = sphi 0, %s60
    $region4: #{tpu_custom_call.1} parent=1 // loop_header_branch
      %23 = sbr.rel (%p21) target = $region8
    $region5: #{tpu_custom_call.1} parent=1 // loop_body
      %s25 = ssub.s32 %s20, 1
      %s26 = ssub.s32 %s20, 2
      %s27 = sadd.s32 %s20, 1
      %s28 = ssub.s32 %s20, %s27
      %p29 = scmp.eq.s32.totalorder %s28, 0
      %s31 = sadd.s32 %s30, 1
      %s32 = scalar_select %p29, %s30, %s31
      %p35 = pneg %p29
      %p36 = scmp.eq.s32.totalorder %s20, 1
      %p37 = por %p35, %p36
      %p38 = scmp.ne.s32.totalorder %s30, %s33
      %p39 = scmp.eq.s32.totalorder %s20, 0
      %p40 = por %p38, %p39
      %p41 = scmp.ne.s32.totalorder %s30, %s33
      %p42 = scmp.eq.s32.totalorder %s25, 1
      %p43 = por %p41, %p42
      %p44 = scmp.ne.s32.totalorder %s33, %s34
      %p45 = scmp.eq.s32.totalorder %s25, 0
      %p46 = por %p44, %p45
      %p47 = scmp.ne.s32.totalorder %s33, %s34
      %p48 = scmp.eq.s32.totalorder %s26, 1
      %p49 = por %p47, %p48
      %p51 = scmp.ne.s32.totalorder %s34, %s50
      %p52 = scmp.eq.s32.totalorder %s26, 0
      %p53 = por %p51, %p52
      %s54 = ssub.s32 %s20, %s27
      %p55 = scmp.eq.s32.totalorder %s54, 0
      %s57 = sadd.s32 %s56, 1
      %s58 = scalar_select %p55, %s56, %s57
      %p61 = pneg %p55
      %p62 = scmp.eq.s32.totalorder %s20, 1
      %p63 = por %p61, %p62
      %p64 = scmp.ne.s32.totalorder %s56, %s59
      %p65 = scmp.eq.s32.totalorder %s20, 0
      %p66 = por %p64, %p65
      %p67 = scmp.ne.s32.totalorder %s56, %s59
      %p68 = scmp.eq.s32.totalorder %s25, 1
      %p69 = por %p67, %p68
      %p70 = scmp.ne.s32.totalorder %s59, %s60
      %p71 = scmp.eq.s32.totalorder %s25, 0
      %p72 = por %p70, %p71
      %p73 = scmp.ne.s32.totalorder %s59, %s60
      %p74 = scmp.eq.s32.totalorder %s26, 1
      %p75 = por %p73, %p74
      %p77 = scmp.ne.s32.totalorder %s60, %s76
      %p78 = scmp.eq.s32.totalorder %s26, 0
      %p79 = por %p77, %p78
      %p80 = scmp.le.s32.totalorder 1, %s20
      %p81 = scmp.lt.s32.totalorder %s20, 3
      %p82 = pnand %p80, %p81
      %p83 = pneg %p82
      // Predicated region
      $region9: #{tpu_custom_call.1} parent=5 // pred_check
        _
      $region10: #{tpu_custom_call.1} parent=5 // pred_check_branch
        %85 = sbr.rel (%p82) target = $region12
      $region11: #{tpu_custom_call.1} parent=5 // pred_region
        %s86 = ssub.s32 %s20, 1
      $region12: #{tpu_custom_call.1} parent=5 // pred_fallthru
        _
      %p87 = scmp.lt.s32.totalorder %s20, 2
      // Predicated region
      $region13: #{tpu_custom_call.1} parent=5 // pred_check
        %p88 = pneg %p87
      $region14: #{tpu_custom_call.1} parent=5 // pred_check_branch
        %90 = sbr.rel (%p88) target = $region16
      $region15: #{tpu_custom_call.1} parent=5 // pred_region
        // Predicated region
        $region17: #{tpu_custom_call.1} parent=15 // pred_check
          %p91 = pneg %p40
        $region18: #{tpu_custom_call.1} parent=15 // pred_check_branch
          %93 = sbr.rel (%p91) target = $region20
        $region19: #{tpu_custom_call.1} parent=15 // pred_region
          %p94 = scmp.lt.s32.totalorder %s20, 1
          %s95 = scalar_select %p94, %s20, 1
          %s96 = smul.addr %s95, 40
          %s97 = smul.addr %s96, 4
          %s98 = scalar_lea.vmem %s0, %s97
        $region20: #{tpu_custom_call.1} parent=15 // pred_fallthru
          _
      $region16: #{tpu_custom_call.1} parent=5 // pred_fallthru
        _
      %p99 = scmp.le.s32.totalorder 1, %s20
      %p100 = scmp.lt.s32.totalorder %s20, 3
      %p101 = pnand %p99, %p100
      %p102 = pneg %p101
      // Predicated region
      $region21: #{tpu_custom_call.1} parent=5 // pred_check
        _
      $region22: #{tpu_custom_call.1} parent=5 // pred_check_branch
        %104 = sbr.rel (%p101) target = $region24
      $region23: #{tpu_custom_call.1} parent=5 // pred_region
        %s105 = ssub.s32 %s20, 1
        %p106 = scmp.lt.s32.totalorder %s25, 1
        %s107 = scalar_select %p106, %s25, 1
        %s108 = smul.addr %s107, 40
        %s109 = smul.addr %s108, 4
        %s110 = scalar_lea.vmem %s0, %s109
        %p111 = pneg %p46
        %p112 = pneg %p43
        %p113 = pneg %p72
        %p114 = pneg %p69
        %s115 = sand.u32 %s59, 1
        %s116 = scalar_lea.sflag [#allocation16], %s115
        %s117 = sand.u32 %s59, 1
        %s118 = smul.addr %s117, 2
        %s119 = scalar_lea.vmem [#allocation15], %s118
        %p120 = scmp.lt.s32.totalorder %s25, 1
        %s121 = scalar_select %p120, %s25, 1
        %s122 = smul.addr %s121, 40
        %s123 = smul.addr %s122, 4
        %s124 = scalar_lea.vmem %s0, %s123
        %p126 = scmp.eq.s32.totalorder %s25, 0
        // Predicated region
        $region25: #{tpu_custom_call.1} parent=23 // pred_check
          %p127 = pneg %p126
        $region26: #{tpu_custom_call.1} parent=23 // pred_check_branch
          %129 = sbr.rel (%p127) target = $region28
        $region27: #{tpu_custom_call.1} parent=23 // pred_region
          %p131 = scmp.lt.u32.totalorder 20, 8
          %p132 = pneg %p131
          // Predicated region
          $region29: #{tpu_custom_call.1} parent=27 // pred_check
            _
          $region30: #{tpu_custom_call.1} parent=27 // pred_check_branch
            %134 = sbr.rel (%p131) target = $region32
          $region31: #{tpu_custom_call.1} parent=27 // pred_region
            %s149 = sand.u32 20, 7
            %p150 = scmp.eq.s32.totalorder %s149, 0
            %p151 = pneg %p150
            // Predicated region
            $region44: #{tpu_custom_call.1} parent=31 // pred_check
              _
            $region45: #{tpu_custom_call.1} parent=31 // pred_check_branch
              %153 = sbr.rel (%p150) target = $region47
            $region46: #{tpu_custom_call.1} parent=31 // pred_region
              %s154 = sand.u32 20, 7
              %s155 = ssub.s32 20, %s154
              %s156 = scalar_lea.vmem %s1, %s155
              %s157 = ssub.s32 20, %s154
              %s158 = scalar_lea.vmem [#allocation2], %s157
              loop: start=0, step=1, limit=1
              $region48: #{tpu_custom_call.1} parent=46 // loop_pre_header
                _
              $region49: #{tpu_custom_call.1} parent=46 // loop_header
                %s160 = sphi 0, %s164
                %p161 = scmp.ge.s32.totalorder %s160, 1
                %s165 = sphi %s1, %s1
                %s166 = sphi [#allocation2], [#allocation2]
              $region50: #{tpu_custom_call.1} parent=46 // loop_header_branch
                %163 = sbr.rel (%p161) target = $region54
              $region51: #{tpu_custom_call.1} parent=46 // loop_body
                %v167 = vld [vmem:[%s165] sm:$0xff]
                %168 = vst [vmem:[%s166] sm:$0xff] %v167
                %v169 = vld [vmem:[%s165 + $0x8] sm:$0xff]
                %170 = vst [vmem:[%s166 + $0x8] sm:$0xff] %v169
              $region52: #{tpu_custom_call.1} parent=46 // loop_footer
                %s164 = sadd.s32 1, %s160
              $region53: #{tpu_custom_call.1} parent=46 // loop_footer_branch
                %159 = sbr.rel target = $region49
              $region54: #{tpu_custom_call.1} parent=46 // loop_exit
                _
              %s171 = sshllo.u32 0, %s154
              loop: start=0, step=1, limit=1
              $region55: #{tpu_custom_call.1} parent=46 // loop_pre_header
                _
              $region56: #{tpu_custom_call.1} parent=46 // loop_header
                %s173 = sphi 0, %s177
                %p174 = scmp.ge.s32.totalorder %s173, 1
                %s178 = sphi %s156, %s156
                %s179 = sphi %s158, %s158
              $region57: #{tpu_custom_call.1} parent=46 // loop_header_branch
                %176 = sbr.rel (%p174) target = $region61
              $region58: #{tpu_custom_call.1} parent=46 // loop_body
                %v180 = vld [vmem:[%s178] sm:%s171]
                %181 = vst [vmem:[%s179] sm:%s171] %v180
              $region59: #{tpu_custom_call.1} parent=46 // loop_footer
                %s177 = sadd.s32 1, %s173
              $region60: #{tpu_custom_call.1} parent=46 // loop_footer_branch
                %172 = sbr.rel target = $region56
              $region61: #{tpu_custom_call.1} parent=46 // loop_exit
                _
            $region47: #{tpu_custom_call.1} parent=31 // pred_fallthru
              _
          $region32: #{tpu_custom_call.1} parent=27 // pred_fallthru
            _
          // Predicated region
          $region33: #{tpu_custom_call.1} parent=27 // pred_check
            %p135 = pneg %p131
          $region34: #{tpu_custom_call.1} parent=27 // pred_check_branch
            %137 = sbr.rel (%p135) target = $region36
          $region35: #{tpu_custom_call.1} parent=27 // pred_region
            %s138 = sshllo.u32 0, 20
            loop: start=0, step=1, limit=1
            $region37: #{tpu_custom_call.1} parent=35 // loop_pre_header
              _
            $region38: #{tpu_custom_call.1} parent=35 // loop_header
              %s140 = sphi 0, %s144
              %p141 = scmp.ge.s32.totalorder %s140, 1
              %s145 = sphi %s1, %s1
              %s146 = sphi [#allocation2], [#allocation2]
            $region39: #{tpu_custom_call.1} parent=35 // loop_header_branch
              %143 = sbr.rel (%p141) target = $region43
            $region40: #{tpu_custom_call.1} parent=35 // loop_body
              %v147 = vld [vmem:[%s145] sm:%s138]
              %148 = vst [vmem:[%s146] sm:%s138] %v147
            $region41: #{tpu_custom_call.1} parent=35 // loop_footer
              %s144 = sadd.s32 1, %s140
            $region42: #{tpu_custom_call.1} parent=35 // loop_footer_branch
              %139 = sbr.rel target = $region38
            $region43: #{tpu_custom_call.1} parent=35 // loop_exit
              _
          $region36: #{tpu_custom_call.1} parent=27 // pred_fallthru
            _
          // Predicated region
          $region62: #{tpu_custom_call.1} parent=27 // pred_check
            _
          $region63: #{tpu_custom_call.1} parent=27 // pred_check_branch
            %184 = sbr.rel (0) target = $region65
          $region64: #{tpu_custom_call.1} parent=27 // pred_region
            %185 = vsyncadd [#allocation13], 320
          $region65: #{tpu_custom_call.1} parent=27 // pred_fallthru
            _
          %s186 = scalar_lea.sflag [#allocation13], 1
          %p188 = scmp.lt.u32.totalorder 1, 8
          %p189 = pneg %p188
          // Predicated region
          $region66: #{tpu_custom_call.1} parent=27 // pred_check
            _
          $region67: #{tpu_custom_call.1} parent=27 // pred_check_branch
            %191 = sbr.rel (%p188) target = $region69
          $region68: #{tpu_custom_call.1} parent=27 // pred_region
            %s206 = sand.u32 1, 7
            %p207 = scmp.eq.s32.totalorder %s206, 0
            %p208 = pneg %p207
            // Predicated region
            $region81: #{tpu_custom_call.1} parent=68 // pred_check
              _
            $region82: #{tpu_custom_call.1} parent=68 // pred_check_branch
              %210 = sbr.rel (%p207) target = $region84
            $region83: #{tpu_custom_call.1} parent=68 // pred_region
              %s211 = sand.u32 1, 7
              %s212 = ssub.s32 1, %s211
              %s213 = scalar_lea.vmem %s2, %s212
              %s214 = ssub.s32 1, %s211
              %s215 = scalar_lea.vmem [#allocation6], %s214
              %s216 = sshllo.u32 0, %s211
              loop: start=0, step=1, limit=1
              $region85: #{tpu_custom_call.1} parent=83 // loop_pre_header
                _
              $region86: #{tpu_custom_call.1} parent=83 // loop_header
                %s218 = sphi 0, %s222
                %p219 = scmp.ge.s32.totalorder %s218, 1
                %s223 = sphi %s213, %s213
                %s224 = sphi %s215, %s215
              $region87: #{tpu_custom_call.1} parent=83 // loop_header_branch
                %221 = sbr.rel (%p219) target = $region91
              $region88: #{tpu_custom_call.1} parent=83 // loop_body
                %v225 = vld [vmem:[%s223] sm:%s216]
                %226 = vst [vmem:[%s224] sm:%s216] %v225
              $region89: #{tpu_custom_call.1} parent=83 // loop_footer
                %s222 = sadd.s32 1, %s218
              $region90: #{tpu_custom_call.1} parent=83 // loop_footer_branch
                %217 = sbr.rel target = $region86
              $region91: #{tpu_custom_call.1} parent=83 // loop_exit
                _
            $region84: #{tpu_custom_call.1} parent=68 // pred_fallthru
              _
          $region69: #{tpu_custom_call.1} parent=27 // pred_fallthru
            _
          // Predicated region
          $region70: #{tpu_custom_call.1} parent=27 // pred_check
            %p192 = pneg %p188
          $region71: #{tpu_custom_call.1} parent=27 // pred_check_branch
            %194 = sbr.rel (%p192) target = $region73
          $region72: #{tpu_custom_call.1} parent=27 // pred_region
            %s195 = sshllo.u32 0, 1
            loop: start=0, step=1, limit=1
            $region74: #{tpu_custom_call.1} parent=72 // loop_pre_header
              _
            $region75: #{tpu_custom_call.1} parent=72 // loop_header
              %s197 = sphi 0, %s201
              %p198 = scmp.ge.s32.totalorder %s197, 1
              %s202 = sphi %s2, %s2
              %s203 = sphi [#allocation6], [#allocation6]
            $region76: #{tpu_custom_call.1} parent=72 // loop_header_branch
              %200 = sbr.rel (%p198) target = $region80
            $region77: #{tpu_custom_call.1} parent=72 // loop_body
              %v204 = vld [vmem:[%s202] sm:%s195]
              %205 = vst [vmem:[%s203] sm:%s195] %v204
            $region78: #{tpu_custom_call.1} parent=72 // loop_footer
              %s201 = sadd.s32 1, %s197
            $region79: #{tpu_custom_call.1} parent=72 // loop_footer_branch
              %196 = sbr.rel target = $region75
            $region80: #{tpu_custom_call.1} parent=72 // loop_exit
              _
          $region73: #{tpu_custom_call.1} parent=27 // pred_fallthru
            _
          // Predicated region
          $region92: #{tpu_custom_call.1} parent=27 // pred_check
            _
          $region93: #{tpu_custom_call.1} parent=27 // pred_check_branch
            %229 = sbr.rel (0) target = $region95
          $region94: #{tpu_custom_call.1} parent=27 // pred_region
            %230 = vsyncadd %s186, 16
          $region95: #{tpu_custom_call.1} parent=27 // pred_fallthru
            _
          %s231 = scalar_lea.sflag [#allocation13], 2
          %p233 = scmp.lt.u32.totalorder 40, 8
          %p234 = pneg %p233
          // Predicated region
          $region96: #{tpu_custom_call.1} parent=27 // pred_check
            _
          $region97: #{tpu_custom_call.1} parent=27 // pred_check_branch
            %236 = sbr.rel (%p233) target = $region99
          $region98: #{tpu_custom_call.1} parent=27 // pred_region
            %s251 = sand.u32 40, 7
            %p252 = scmp.eq.s32.totalorder %s251, 0
            // Predicated region
            $region111: #{tpu_custom_call.1} parent=98 // pred_check
              %p253 = pneg %p252
            $region112: #{tpu_custom_call.1} parent=98 // pred_check_branch
              %255 = sbr.rel (%p253) target = $region114
            $region113: #{tpu_custom_call.1} parent=98 // pred_region
              loop: start=0, step=1, limit=1
              $region115: #{tpu_custom_call.1} parent=113 // loop_pre_header
                _
              $region116: #{tpu_custom_call.1} parent=113 // loop_header
                %s257 = sphi 0, %s261
                %p258 = scmp.ge.s32.totalorder %s257, 1
                %s262 = sphi %s3, %s3
                %s263 = sphi [#allocation3], [#allocation3]
              $region117: #{tpu_custom_call.1} parent=113 // loop_header_branch
                %260 = sbr.rel (%p258) target = $region121
              $region118: #{tpu_custom_call.1} parent=113 // loop_body
                %v264 = vld [vmem:[%s262] sm:$0xff]
                %265 = vst [vmem:[%s263] sm:$0xff] %v264
                %v266 = vld [vmem:[%s262 + $0x8] sm:$0xff]
                %267 = vst [vmem:[%s263 + $0x8] sm:$0xff] %v266
                %v268 = vld [vmem:[%s262 + $0x10] sm:$0xff]
                %269 = vst [vmem:[%s263 + $0x10] sm:$0xff] %v268
                %v270 = vld [vmem:[%s262 + $0x18] sm:$0xff]
                %271 = vst [vmem:[%s263 + $0x18] sm:$0xff] %v270
                %v272 = vld [vmem:[%s262 + $0x20] sm:$0xff]
                %273 = vst [vmem:[%s263 + $0x20] sm:$0xff] %v272
              $region119: #{tpu_custom_call.1} parent=113 // loop_footer
                %s261 = sadd.s32 1, %s257
              $region120: #{tpu_custom_call.1} parent=113 // loop_footer_branch
                %256 = sbr.rel target = $region116
              $region121: #{tpu_custom_call.1} parent=113 // loop_exit
                _
            $region114: #{tpu_custom_call.1} parent=98 // pred_fallthru
              _
            %p274 = pneg %p252
            // Predicated region
            $region122: #{tpu_custom_call.1} parent=98 // pred_check
              _
            $region123: #{tpu_custom_call.1} parent=98 // pred_check_branch
              %276 = sbr.rel (%p252) target = $region125
            $region124: #{tpu_custom_call.1} parent=98 // pred_region
              %s277 = sand.u32 40, 7
            $region125: #{tpu_custom_call.1} parent=98 // pred_fallthru
              _
          $region99: #{tpu_custom_call.1} parent=27 // pred_fallthru
            _
          // Predicated region
          $region100: #{tpu_custom_call.1} parent=27 // pred_check
            %p237 = pneg %p233
          $region101: #{tpu_custom_call.1} parent=27 // pred_check_branch
            %239 = sbr.rel (%p237) target = $region103
          $region102: #{tpu_custom_call.1} parent=27 // pred_region
            %s240 = sshllo.u32 0, 40
            loop: start=0, step=1, limit=1
            $region104: #{tpu_custom_call.1} parent=102 // loop_pre_header
              _
            $region105: #{tpu_custom_call.1} parent=102 // loop_header
              %s242 = sphi 0, %s246
              %p243 = scmp.ge.s32.totalorder %s242, 1
              %s247 = sphi %s3, %s3
              %s248 = sphi [#allocation3], [#allocation3]
            $region106: #{tpu_custom_call.1} parent=102 // loop_header_branch
              %245 = sbr.rel (%p243) target = $region110
            $region107: #{tpu_custom_call.1} parent=102 // loop_body
              %v249 = vld [vmem:[%s247] sm:%s240]
              %250 = vst [vmem:[%s248] sm:%s240] %v249
            $region108: #{tpu_custom_call.1} parent=102 // loop_footer
              %s246 = sadd.s32 1, %s242
            $region109: #{tpu_custom_call.1} parent=102 // loop_footer_branch
              %241 = sbr.rel target = $region105
            $region110: #{tpu_custom_call.1} parent=102 // loop_exit
              _
          $region103: #{tpu_custom_call.1} parent=27 // pred_fallthru
            _
          // Predicated region
          $region126: #{tpu_custom_call.1} parent=27 // pred_check
            _
          $region127: #{tpu_custom_call.1} parent=27 // pred_check_branch
            %280 = sbr.rel (0) target = $region129
          $region128: #{tpu_custom_call.1} parent=27 // pred_region
            %281 = vsyncadd %s231, 640
          $region129: #{tpu_custom_call.1} parent=27 // pred_fallthru
            _
          %s282 = scalar_lea.sflag [#allocation13], 3
          %p284 = scmp.lt.u32.totalorder 1, 8
          %p285 = pneg %p284
          // Predicated region
          $region130: #{tpu_custom_call.1} parent=27 // pred_check
            _
          $region131: #{tpu_custom_call.1} parent=27 // pred_check_branch
            %287 = sbr.rel (%p284) target = $region133
          $region132: #{tpu_custom_call.1} parent=27 // pred_region
            %s302 = sand.u32 1, 7
            %p303 = scmp.eq.s32.totalorder %s302, 0
            %p304 = pneg %p303
            // Predicated region
            $region145: #{tpu_custom_call.1} parent=132 // pred_check
              _
            $region146: #{tpu_custom_call.1} parent=132 // pred_check_branch
              %306 = sbr.rel (%p303) target = $region148
            $region147: #{tpu_custom_call.1} parent=132 // pred_region
              %s307 = sand.u32 1, 7
              %s308 = ssub.s32 1, %s307
              %s309 = scalar_lea.vmem %s4, %s308
              %s310 = ssub.s32 1, %s307
              %s311 = scalar_lea.vmem [#allocation7], %s310
              %s312 = sshllo.u32 0, %s307
              loop: start=0, step=1, limit=1
              $region149: #{tpu_custom_call.1} parent=147 // loop_pre_header
                _
              $region150: #{tpu_custom_call.1} parent=147 // loop_header
                %s314 = sphi 0, %s318
                %p315 = scmp.ge.s32.totalorder %s314, 1
                %s319 = sphi %s309, %s309
                %s320 = sphi %s311, %s311
              $region151: #{tpu_custom_call.1} parent=147 // loop_header_branch
                %317 = sbr.rel (%p315) target = $region155
              $region152: #{tpu_custom_call.1} parent=147 // loop_body
                %v321 = vld [vmem:[%s319] sm:%s312]
                %322 = vst [vmem:[%s320] sm:%s312] %v321
              $region153: #{tpu_custom_call.1} parent=147 // loop_footer
                %s318 = sadd.s32 1, %s314
              $region154: #{tpu_custom_call.1} parent=147 // loop_footer_branch
                %313 = sbr.rel target = $region150
              $region155: #{tpu_custom_call.1} parent=147 // loop_exit
                _
            $region148: #{tpu_custom_call.1} parent=132 // pred_fallthru
              _
          $region133: #{tpu_custom_call.1} parent=27 // pred_fallthru
            _
          // Predicated region
          $region134: #{tpu_custom_call.1} parent=27 // pred_check
            %p288 = pneg %p284
          $region135: #{tpu_custom_call.1} parent=27 // pred_check_branch
            %290 = sbr.rel (%p288) target = $region137
          $region136: #{tpu_custom_call.1} parent=27 // pred_region
            %s291 = sshllo.u32 0, 1
            loop: start=0, step=1, limit=1
            $region138: #{tpu_custom_call.1} parent=136 // loop_pre_header
              _
            $region139: #{tpu_custom_call.1} parent=136 // loop_header
              %s293 = sphi 0, %s297
              %p294 = scmp.ge.s32.totalorder %s293, 1
              %s298 = sphi %s4, %s4
              %s299 = sphi [#allocation7], [#allocation7]
            $region140: #{tpu_custom_call.1} parent=136 // loop_header_branch
              %296 = sbr.rel (%p294) target = $region144
            $region141: #{tpu_custom_call.1} parent=136 // loop_body
              %v300 = vld [vmem:[%s298] sm:%s291]
              %301 = vst [vmem:[%s299] sm:%s291] %v300
            $region142: #{tpu_custom_call.1} parent=136 // loop_footer
              %s297 = sadd.s32 1, %s293
            $region143: #{tpu_custom_call.1} parent=136 // loop_footer_branch
              %292 = sbr.rel target = $region139
            $region144: #{tpu_custom_call.1} parent=136 // loop_exit
              _
          $region137: #{tpu_custom_call.1} parent=27 // pred_fallthru
            _
          // Predicated region
          $region156: #{tpu_custom_call.1} parent=27 // pred_check
            _
          $region157: #{tpu_custom_call.1} parent=27 // pred_check_branch
            %325 = sbr.rel (0) target = $region159
          $region158: #{tpu_custom_call.1} parent=27 // pred_region
            %326 = vsyncadd %s282, 16
          $region159: #{tpu_custom_call.1} parent=27 // pred_fallthru
            _
          %s327 = scalar_lea.sflag [#allocation13], 4
          %p329 = scmp.lt.u32.totalorder 40, 8
          %p330 = pneg %p329
          // Predicated region
          $region160: #{tpu_custom_call.1} parent=27 // pred_check
            _
          $region161: #{tpu_custom_call.1} parent=27 // pred_check_branch
            %332 = sbr.rel (%p329) target = $region163
          $region162: #{tpu_custom_call.1} parent=27 // pred_region
            %s347 = sand.u32 40, 7
            %p348 = scmp.eq.s32.totalorder %s347, 0
            // Predicated region
            $region175: #{tpu_custom_call.1} parent=162 // pred_check
              %p349 = pneg %p348
            $region176: #{tpu_custom_call.1} parent=162 // pred_check_branch
              %351 = sbr.rel (%p349) target = $region178
            $region177: #{tpu_custom_call.1} parent=162 // pred_region
              loop: start=0, step=1, limit=1
              $region179: #{tpu_custom_call.1} parent=177 // loop_pre_header
                _
              $region180: #{tpu_custom_call.1} parent=177 // loop_header
                %s353 = sphi 0, %s357
                %p354 = scmp.ge.s32.totalorder %s353, 1
                %s358 = sphi %s5, %s5
                %s359 = sphi [#allocation4], [#allocation4]
              $region181: #{tpu_custom_call.1} parent=177 // loop_header_branch
                %356 = sbr.rel (%p354) target = $region185
              $region182: #{tpu_custom_call.1} parent=177 // loop_body
                %v360 = vld [vmem:[%s358] sm:$0xff]
                %361 = vst [vmem:[%s359] sm:$0xff] %v360
                %v362 = vld [vmem:[%s358 + $0x8] sm:$0xff]
                %363 = vst [vmem:[%s359 + $0x8] sm:$0xff] %v362
                %v364 = vld [vmem:[%s358 + $0x10] sm:$0xff]
                %365 = vst [vmem:[%s359 + $0x10] sm:$0xff] %v364
                %v366 = vld [vmem:[%s358 + $0x18] sm:$0xff]
                %367 = vst [vmem:[%s359 + $0x18] sm:$0xff] %v366
                %v368 = vld [vmem:[%s358 + $0x20] sm:$0xff]
                %369 = vst [vmem:[%s359 + $0x20] sm:$0xff] %v368
              $region183: #{tpu_custom_call.1} parent=177 // loop_footer
                %s357 = sadd.s32 1, %s353
              $region184: #{tpu_custom_call.1} parent=177 // loop_footer_branch
                %352 = sbr.rel target = $region180
              $region185: #{tpu_custom_call.1} parent=177 // loop_exit
                _
            $region178: #{tpu_custom_call.1} parent=162 // pred_fallthru
              _
            %p370 = pneg %p348
            // Predicated region
            $region186: #{tpu_custom_call.1} parent=162 // pred_check
              _
            $region187: #{tpu_custom_call.1} parent=162 // pred_check_branch
              %372 = sbr.rel (%p348) target = $region189
            $region188: #{tpu_custom_call.1} parent=162 // pred_region
              %s373 = sand.u32 40, 7
            $region189: #{tpu_custom_call.1} parent=162 // pred_fallthru
              _
          $region163: #{tpu_custom_call.1} parent=27 // pred_fallthru
            _
          // Predicated region
          $region164: #{tpu_custom_call.1} parent=27 // pred_check
            %p333 = pneg %p329
          $region165: #{tpu_custom_call.1} parent=27 // pred_check_branch
            %335 = sbr.rel (%p333) target = $region167
          $region166: #{tpu_custom_call.1} parent=27 // pred_region
            %s336 = sshllo.u32 0, 40
            loop: start=0, step=1, limit=1
            $region168: #{tpu_custom_call.1} parent=166 // loop_pre_header
              _
            $region169: #{tpu_custom_call.1} parent=166 // loop_header
              %s338 = sphi 0, %s342
              %p339 = scmp.ge.s32.totalorder %s338, 1
              %s343 = sphi %s5, %s5
              %s344 = sphi [#allocation4], [#allocation4]
            $region170: #{tpu_custom_call.1} parent=166 // loop_header_branch
              %341 = sbr.rel (%p339) target = $region174
            $region171: #{tpu_custom_call.1} parent=166 // loop_body
              %v345 = vld [vmem:[%s343] sm:%s336]
              %346 = vst [vmem:[%s344] sm:%s336] %v345
            $region172: #{tpu_custom_call.1} parent=166 // loop_footer
              %s342 = sadd.s32 1, %s338
            $region173: #{tpu_custom_call.1} parent=166 // loop_footer_branch
              %337 = sbr.rel target = $region169
            $region174: #{tpu_custom_call.1} parent=166 // loop_exit
              _
          $region167: #{tpu_custom_call.1} parent=27 // pred_fallthru
            _
          // Predicated region
          $region190: #{tpu_custom_call.1} parent=27 // pred_check
            _
          $region191: #{tpu_custom_call.1} parent=27 // pred_check_branch
            %376 = sbr.rel (0) target = $region193
          $region192: #{tpu_custom_call.1} parent=27 // pred_region
            %377 = vsyncadd %s327, 640
          $region193: #{tpu_custom_call.1} parent=27 // pred_fallthru
            _
          %s378 = scalar_lea.sflag [#allocation13], 5
          %p380 = scmp.lt.u32.totalorder 1, 8
          %p381 = pneg %p380
          // Predicated region
          $region194: #{tpu_custom_call.1} parent=27 // pred_check
            _
          $region195: #{tpu_custom_call.1} parent=27 // pred_check_branch
            %383 = sbr.rel (%p380) target = $region197
          $region196: #{tpu_custom_call.1} parent=27 // pred_region
            %s398 = sand.u32 1, 7
            %p399 = scmp.eq.s32.totalorder %s398, 0
            %p400 = pneg %p399
            // Predicated region
            $region209: #{tpu_custom_call.1} parent=196 // pred_check
              _
            $region210: #{tpu_custom_call.1} parent=196 // pred_check_branch
              %402 = sbr.rel (%p399) target = $region212
            $region211: #{tpu_custom_call.1} parent=196 // pred_region
              %s403 = sand.u32 1, 7
              %s404 = ssub.s32 1, %s403
              %s405 = scalar_lea.vmem %s6, %s404
              %s406 = ssub.s32 1, %s403
              %s407 = scalar_lea.vmem [#allocation8], %s406
              %s408 = sshllo.u32 0, %s403
              loop: start=0, step=1, limit=1
              $region213: #{tpu_custom_call.1} parent=211 // loop_pre_header
                _
              $region214: #{tpu_custom_call.1} parent=211 // loop_header
                %s410 = sphi 0, %s414
                %p411 = scmp.ge.s32.totalorder %s410, 1
                %s415 = sphi %s405, %s405
                %s416 = sphi %s407, %s407
              $region215: #{tpu_custom_call.1} parent=211 // loop_header_branch
                %413 = sbr.rel (%p411) target = $region219
              $region216: #{tpu_custom_call.1} parent=211 // loop_body
                %v417 = vld [vmem:[%s415] sm:%s408]
                %418 = vst [vmem:[%s416] sm:%s408] %v417
              $region217: #{tpu_custom_call.1} parent=211 // loop_footer
                %s414 = sadd.s32 1, %s410
              $region218: #{tpu_custom_call.1} parent=211 // loop_footer_branch
                %409 = sbr.rel target = $region214
              $region219: #{tpu_custom_call.1} parent=211 // loop_exit
                _
            $region212: #{tpu_custom_call.1} parent=196 // pred_fallthru
              _
          $region197: #{tpu_custom_call.1} parent=27 // pred_fallthru
            _
          // Predicated region
          $region198: #{tpu_custom_call.1} parent=27 // pred_check
            %p384 = pneg %p380
          $region199: #{tpu_custom_call.1} parent=27 // pred_check_branch
            %386 = sbr.rel (%p384) target = $region201
          $region200: #{tpu_custom_call.1} parent=27 // pred_region
            %s387 = sshllo.u32 0, 1
            loop: start=0, step=1, limit=1
            $region202: #{tpu_custom_call.1} parent=200 // loop_pre_header
              _
            $region203: #{tpu_custom_call.1} parent=200 // loop_header
              %s389 = sphi 0, %s393
              %p390 = scmp.ge.s32.totalorder %s389, 1
              %s394 = sphi %s6, %s6
              %s395 = sphi [#allocation8], [#allocation8]
            $region204: #{tpu_custom_call.1} parent=200 // loop_header_branch
              %392 = sbr.rel (%p390) target = $region208
            $region205: #{tpu_custom_call.1} parent=200 // loop_body
              %v396 = vld [vmem:[%s394] sm:%s387]
              %397 = vst [vmem:[%s395] sm:%s387] %v396
            $region206: #{tpu_custom_call.1} parent=200 // loop_footer
              %s393 = sadd.s32 1, %s389
            $region207: #{tpu_custom_call.1} parent=200 // loop_footer_branch
              %388 = sbr.rel target = $region203
            $region208: #{tpu_custom_call.1} parent=200 // loop_exit
              _
          $region201: #{tpu_custom_call.1} parent=27 // pred_fallthru
            _
          // Predicated region
          $region220: #{tpu_custom_call.1} parent=27 // pred_check
            _
          $region221: #{tpu_custom_call.1} parent=27 // pred_check_branch
            %421 = sbr.rel (0) target = $region223
          $region222: #{tpu_custom_call.1} parent=27 // pred_region
            %422 = vsyncadd %s378, 16
          $region223: #{tpu_custom_call.1} parent=27 // pred_fallthru
            _
          %s423 = scalar_lea.sflag [#allocation13], 6
          %p425 = scmp.lt.u32.totalorder 24, 8
          %p426 = pneg %p425
          // Predicated region
          $region224: #{tpu_custom_call.1} parent=27 // pred_check
            _
          $region225: #{tpu_custom_call.1} parent=27 // pred_check_branch
            %428 = sbr.rel (%p425) target = $region227
          $region226: #{tpu_custom_call.1} parent=27 // pred_region
            %s443 = sand.u32 24, 7
            %p444 = scmp.eq.s32.totalorder %s443, 0
            // Predicated region
            $region239: #{tpu_custom_call.1} parent=226 // pred_check
              %p445 = pneg %p444
            $region240: #{tpu_custom_call.1} parent=226 // pred_check_branch
              %447 = sbr.rel (%p445) target = $region242
            $region241: #{tpu_custom_call.1} parent=226 // pred_region
              loop: start=0, step=1, limit=1
              $region243: #{tpu_custom_call.1} parent=241 // loop_pre_header
                _
              $region244: #{tpu_custom_call.1} parent=241 // loop_header
                %s449 = sphi 0, %s453
                %p450 = scmp.ge.s32.totalorder %s449, 1
                %s454 = sphi %s7, %s7
                %s455 = sphi [#allocation5], [#allocation5]
              $region245: #{tpu_custom_call.1} parent=241 // loop_header_branch
                %452 = sbr.rel (%p450) target = $region249
              $region246: #{tpu_custom_call.1} parent=241 // loop_body
                %v456 = vld [vmem:[%s454] sm:$0xff]
                %457 = vst [vmem:[%s455] sm:$0xff] %v456
                %v458 = vld [vmem:[%s454 + $0x8] sm:$0xff]
                %459 = vst [vmem:[%s455 + $0x8] sm:$0xff] %v458
                %v460 = vld [vmem:[%s454 + $0x10] sm:$0xff]
                %461 = vst [vmem:[%s455 + $0x10] sm:$0xff] %v460
              $region247: #{tpu_custom_call.1} parent=241 // loop_footer
                %s453 = sadd.s32 1, %s449
              $region248: #{tpu_custom_call.1} parent=241 // loop_footer_branch
                %448 = sbr.rel target = $region244
              $region249: #{tpu_custom_call.1} parent=241 // loop_exit
                _
            $region242: #{tpu_custom_call.1} parent=226 // pred_fallthru
              _
            %p462 = pneg %p444
            // Predicated region
            $region250: #{tpu_custom_call.1} parent=226 // pred_check
              _
            $region251: #{tpu_custom_call.1} parent=226 // pred_check_branch
              %464 = sbr.rel (%p444) target = $region253
            $region252: #{tpu_custom_call.1} parent=226 // pred_region
              %s465 = sand.u32 24, 7
            $region253: #{tpu_custom_call.1} parent=226 // pred_fallthru
              _
          $region227: #{tpu_custom_call.1} parent=27 // pred_fallthru
            _
          // Predicated region
          $region228: #{tpu_custom_call.1} parent=27 // pred_check
            %p429 = pneg %p425
          $region229: #{tpu_custom_call.1} parent=27 // pred_check_branch
            %431 = sbr.rel (%p429) target = $region231
          $region230: #{tpu_custom_call.1} parent=27 // pred_region
            %s432 = sshllo.u32 0, 24
            loop: start=0, step=1, limit=1
            $region232: #{tpu_custom_call.1} parent=230 // loop_pre_header
              _
            $region233: #{tpu_custom_call.1} parent=230 // loop_header
              %s434 = sphi 0, %s438
              %p435 = scmp.ge.s32.totalorder %s434, 1
              %s439 = sphi %s7, %s7
              %s440 = sphi [#allocation5], [#allocation5]
            $region234: #{tpu_custom_call.1} parent=230 // loop_header_branch
              %437 = sbr.rel (%p435) target = $region238
            $region235: #{tpu_custom_call.1} parent=230 // loop_body
              %v441 = vld [vmem:[%s439] sm:%s432]
              %442 = vst [vmem:[%s440] sm:%s432] %v441
            $region236: #{tpu_custom_call.1} parent=230 // loop_footer
              %s438 = sadd.s32 1, %s434
            $region237: #{tpu_custom_call.1} parent=230 // loop_footer_branch
              %433 = sbr.rel target = $region233
            $region238: #{tpu_custom_call.1} parent=230 // loop_exit
              _
          $region231: #{tpu_custom_call.1} parent=27 // pred_fallthru
            _
          // Predicated region
          $region254: #{tpu_custom_call.1} parent=27 // pred_check
            _
          $region255: #{tpu_custom_call.1} parent=27 // pred_check_branch
            %468 = sbr.rel (0) target = $region257
          $region256: #{tpu_custom_call.1} parent=27 // pred_region
            %469 = vsyncadd %s423, 384
          $region257: #{tpu_custom_call.1} parent=27 // pred_fallthru
            _
          %s470 = scalar_lea.sflag [#allocation13], 7
          %p472 = scmp.lt.u32.totalorder 1, 8
          %p473 = pneg %p472
          // Predicated region
          $region258: #{tpu_custom_call.1} parent=27 // pred_check
            _
          $region259: #{tpu_custom_call.1} parent=27 // pred_check_branch
            %475 = sbr.rel (%p472) target = $region261
          $region260: #{tpu_custom_call.1} parent=27 // pred_region
            %s490 = sand.u32 1, 7
            %p491 = scmp.eq.s32.totalorder %s490, 0
            %p492 = pneg %p491
            // Predicated region
            $region273: #{tpu_custom_call.1} parent=260 // pred_check
              _
            $region274: #{tpu_custom_call.1} parent=260 // pred_check_branch
              %494 = sbr.rel (%p491) target = $region276
            $region275: #{tpu_custom_call.1} parent=260 // pred_region
              %s495 = sand.u32 1, 7
              %s496 = ssub.s32 1, %s495
              %s497 = scalar_lea.vmem [#allocation14], %s496
              %s498 = ssub.s32 1, %s495
              %s499 = scalar_lea.vmem [#allocation9], %s498
              %s500 = sshllo.u32 0, %s495
              loop: start=0, step=1, limit=1
              $region277: #{tpu_custom_call.1} parent=275 // loop_pre_header
                _
              $region278: #{tpu_custom_call.1} parent=275 // loop_header
                %s502 = sphi 0, %s506
                %p503 = scmp.ge.s32.totalorder %s502, 1
                %s507 = sphi %s497, %s497
                %s508 = sphi %s499, %s499
              $region279: #{tpu_custom_call.1} parent=275 // loop_header_branch
                %505 = sbr.rel (%p503) target = $region283
              $region280: #{tpu_custom_call.1} parent=275 // loop_body
                %v509 = vld [vmem:[%s507] sm:%s500]
                %510 = vst [vmem:[%s508] sm:%s500] %v509
              $region281: #{tpu_custom_call.1} parent=275 // loop_footer
                %s506 = sadd.s32 1, %s502
              $region282: #{tpu_custom_call.1} parent=275 // loop_footer_branch
                %501 = sbr.rel target = $region278
              $region283: #{tpu_custom_call.1} parent=275 // loop_exit
                _
            $region276: #{tpu_custom_call.1} parent=260 // pred_fallthru
              _
          $region261: #{tpu_custom_call.1} parent=27 // pred_fallthru
            _
          // Predicated region
          $region262: #{tpu_custom_call.1} parent=27 // pred_check
            %p476 = pneg %p472
          $region263: #{tpu_custom_call.1} parent=27 // pred_check_branch
            %478 = sbr.rel (%p476) target = $region265
          $region264: #{tpu_custom_call.1} parent=27 // pred_region
            %s479 = sshllo.u32 0, 1
            loop: start=0, step=1, limit=1
            $region266: #{tpu_custom_call.1} parent=264 // loop_pre_header
              _
            $region267: #{tpu_custom_call.1} parent=264 // loop_header
              %s481 = sphi 0, %s485
              %p482 = scmp.ge.s32.totalorder %s481, 1
              %s486 = sphi [#allocation14], [#allocation14]
              %s487 = sphi [#allocation9], [#allocation9]
            $region268: #{tpu_custom_call.1} parent=264 // loop_header_branch
              %484 = sbr.rel (%p482) target = $region272
            $region269: #{tpu_custom_call.1} parent=264 // loop_body
              %v488 = vld [vmem:[%s486] sm:%s479]
              %489 = vst [vmem:[%s487] sm:%s479] %v488
            $region270: #{tpu_custom_call.1} parent=264 // loop_footer
              %s485 = sadd.s32 1, %s481
            $region271: #{tpu_custom_call.1} parent=264 // loop_footer_branch
              %480 = sbr.rel target = $region267
            $region272: #{tpu_custom_call.1} parent=264 // loop_exit
              _
          $region265: #{tpu_custom_call.1} parent=27 // pred_fallthru
            _
          // Predicated region
          $region284: #{tpu_custom_call.1} parent=27 // pred_check
            _
          $region285: #{tpu_custom_call.1} parent=27 // pred_check_branch
            %513 = sbr.rel (0) target = $region287
          $region286: #{tpu_custom_call.1} parent=27 // pred_region
            %514 = vsyncadd %s470, 16
          $region287: #{tpu_custom_call.1} parent=27 // pred_fallthru
            _
          %s515 = smul.u32 4, 5
          %s516 = smul.u32 %s515, 1
          %s517 = smul.u32 %s516, 1
          %s518 = sshll.u32 %s517, 4
          %519 = dma.done [#allocation13], %s518
          %s520 = smul.u32 1, 1
          %s521 = sshll.u32 %s520, 4
          %522 = dma.done %s186, %s521
          %s523 = smul.u32 %s515, 2
          %s524 = smul.u32 %s523, 1
          %s525 = sshll.u32 %s524, 4
          %526 = dma.done %s231, %s525
          %s527 = sshll.u32 %s520, 4
          %528 = dma.done %s282, %s527
          %s529 = sshll.u32 %s524, 4
          %530 = dma.done %s327, %s529
          %s531 = sshll.u32 %s520, 4
          %532 = dma.done %s378, %s531
          %s533 = smul.u32 4, 3
          %s534 = smul.u32 %s533, 2
          %s535 = smul.u32 %s534, 1
          %s536 = sshll.u32 %s535, 4
          %537 = dma.done %s423, %s536
          %s538 = sshll.u32 %s520, 4
          %539 = dma.done %s470, %s538
        $region28: #{tpu_custom_call.1} parent=23 // pred_fallthru
          _
        %v540 = vld [vmem:[#allocation2] sm:$0xf]
        %s541 = scalar_lea.vmem [#allocation2], 4
        %v542 = vld [vmem:[%s541] sm:$0xf]
        %s543 = scalar_lea.vmem [#allocation2], 8
        %v544 = vld [vmem:[%s543] sm:$0xf]
        %s545 = scalar_lea.vmem [#allocation2], 12
        %v546 = vld [vmem:[%s545] sm:$0xf]
        %s547 = scalar_lea.vmem [#allocation2], 16
        %v548 = vld [vmem:[%s547] sm:$0xf]
        %v549 = vld [vmem:[#allocation6] sm:$0x1]
        %v550 = vlaneseq
        %v551 = vshrl.u32 %v550, 7
        %v552 = vadd.s32 %v551, 8
        %v553 = vadd.s32 %v551, 16
        %v554 = vlaneseq
        %v555 = vand.u32 %v554, 127
        %v556 = vmul.u32 %v551, 3
        %v557 = vmul.u32 %v552, 3
        %v558 = vmul.u32 %v553, 3
        %vm559 = vcmp.eq.s32.totalorder %v555, %v556
        %vm560 = vcmp.eq.s32.totalorder %v555, %v557
        %vm561 = vcmp.eq.s32.totalorder %v555, %v558
        %v562 = vsel %vm559, 1, 0
        %v563 = vsel %vm560, 1, 0
        %v564 = vsel %vm561, 1, 0
        %v565 = vcvt.s32.f32 %v562
        %v566 = vcvt.s32.f32 %v563
        %v567 = vcvt.s32.f32 %v564
        %v568 = vld [vmem:[%s124] sm:$0xf]
        %v569 = vld [vmem:[%s124 + $0x4] sm:$0xf]
        %v570 = vld [vmem:[%s124 + $0x8] sm:$0xf]
        %v571 = vld [vmem:[%s124 + $0xc] sm:$0xf]
        %v572 = vld [vmem:[%s124 + $0x10] sm:$0xf]
        %v573 = vld [vmem:[%s124 + $0x14] sm:$0xf]
        %v574 = vld [vmem:[%s124 + $0x18] sm:$0xf]
        %v575 = vld [vmem:[%s124 + $0x1c] sm:$0xf]
        %v576 = vld [vmem:[%s124 + $0x20] sm:$0x3]
        %v586 = vunpack.c.l.b16 %v568
        %v587 = vunpack.c.l.b16 %v569
        %v588 = vunpack.c.l.b16 %v570
        %v589 = vunpack.c.l.b16 %v571
        %v590 = vunpack.c.l.b16 %v572
        %v591 = vunpack.c.l.b16 %v573
        %v592 = vunpack.c.l.b16 %v574
        %v593 = vunpack.c.l.b16 %v575
        %v594 = vunpack.c.l.b16 %v576
        %v595 = vpack.c.b16 %v587, %v586
        %v596 = vpack.c.b16 %v589, %v588
        %v597 = vpack.c.b16 %v591, %v590
        %v598 = vpack.c.b16 %v593, %v592
        %v599 = vpack.c.b16 %v594, %v594
        %vm600 = vsmask.f32 7424
        %v602 = vshrl.u32 %v595, 16
        %v604 = vshll.u32 %v595, 16
        %v606 = vrot.slane %v604, 1
        %v607 = vor.u32 %v602, %v606
        %v609 = vshll.u32 %v596, 16
        %v611 = vrot.slane %v609, 1
        %v612 = vsel %vm600, %v607, %v611
        %v613 = vshrl.u32 %v596, 16
        %v615 = vor.u32 %v613, %v611
        %v617 = vshll.u32 %v597, 16
        %v619 = vrot.slane %v617, 1
        %v620 = vsel %vm600, %v615, %v619
        %v621 = vshrl.u32 %v597, 16
        %v623 = vor.u32 %v621, %v619
        %v625 = vshll.u32 %v598, 16
        %v627 = vrot.slane %v625, 1
        %v628 = vsel %vm600, %v623, %v627
        %v629 = vshrl.u32 %v598, 16
        %v631 = vor.u32 %v629, %v627
        %v633 = vshll.u32 %v599, 16
        %v635 = vrot.slane %v633, 1
        %v636 = vsel %vm600, %v631, %v635
        %v637 = vshrl.u32 %v599, 16
        %v639 = vor.u32 %v637, %v635
        %vm640 = vcmask 64512
        %v642 = vsel %vm640, %v612, 0
        %v645 = vsel %vm640, %v620, 0
        %v648 = vsel %vm640, %v628, 0
        %v651 = vsel %vm640, %v636, 0
        %v654 = vsel %vm640, %v639, 0
        %vm656 = vcmask 1043456
        %v658 = vsel %vm656, %v542, 0
        %660 = vmatprep.subr.bf16.mxu0 0
        %661 = vmatpush1.bf16.msra.mxu0 %v658
        %662 = vmatprep.subr.bf16.mxu0 0
        %663 = vmatpush1.bf16.msra.mxu0 0
        %664 = vmatprep.subr.bf16.mxu0 0
        %665 = vmatpush1.bf16.msra.mxu0 0
        %666 = vmatprep.subr.bf16.mxu0 0
        %667 = vmatpush1.bf16.msra.mxu0 0
        %668 = vmatprep.subr.bf16.mxu0 0
        %669 = vmatpush1.bf16.msra.mxu0 0
        %670 = vmatprep.subr.bf16.mxu0 0
        %671 = vmatpush1.bf16.msra.mxu0 0
        %672 = vmatprep.subr.bf16.mxu0 0
        %673 = vmatpush1.bf16.msra.mxu0 0
        %674 = vmatprep.subr.bf16.mxu0 0
        %675 = vmatpush1.bf16.msra.mxu0 0
        %676 = vmatprep.subr.bf16.mxu0 0
        %677 = vmatpush1.bf16.msra.mxu0 0
        %678 = vmatprep.subr.bf16.mxu0 0
        %679 = vmatpush1.bf16.msra.mxu0 0
        %680 = vmatprep.subr.bf16.mxu0 0
        %681 = vmatpush1.bf16.msra.mxu0 0
        %682 = vmatprep.subr.bf16.mxu0 0
        %683 = vmatpush1.bf16.msra.mxu0 0
        %684 = vmatprep.subr.bf16.mxu0 0
        %685 = vmatpush1.bf16.msra.mxu0 0
        %686 = vmatprep.subr.bf16.mxu0 0
        %687 = vmatpush1.bf16.msra.mxu0 0
        %688 = vmatprep.subr.bf16.mxu0 0
        %689 = vmatpush1.bf16.msra.mxu0 0
        %690 = vmatprep.subr.bf16.mxu0 0
        %691 = vmatpush1.bf16.msra.mxu0 0
        %692 = vmatprep.mubr.bf16.mxu0 0
        %693 = vmatmul.mubr.bf16.gmra.mrb[0].mxu0 %v642
        %v694 = vpop.f32.mrb[0].mxu0
        %v695 = vadd.f32 0.0, %v694
        %v696 = vpop.f32.mrb[0].mxu0
        %v697 = vpop.f32.mrb[0].mxu0
        %v698 = vadd.f32 0.0, %v697
        %v699 = vpop.f32.mrb[0].mxu0
        %700 = vmatprep.mubr.bf16.mxu0 0
        %701 = vmatmul.mubr.bf16.gmra.mrb[0].mxu0 %v645
        %v702 = vpop.f32.mrb[0].mxu0
        %v703 = vadd.f32 0.0, %v702
        %v704 = vpop.f32.mrb[0].mxu0
        %v705 = vpop.f32.mrb[0].mxu0
        %v706 = vadd.f32 0.0, %v705
        %v707 = vpop.f32.mrb[0].mxu0
        %708 = vmatprep.mubr.bf16.mxu0 0
        %709 = vmatmul.mubr.bf16.gmra.mrb[0].mxu0 %v648
        %v710 = vpop.f32.mrb[0].mxu0
        %v711 = vadd.f32 0.0, %v710
        %v712 = vpop.f32.mrb[0].mxu0
        %v713 = vpop.f32.mrb[0].mxu0
        %v714 = vadd.f32 0.0, %v713
        %v715 = vpop.f32.mrb[0].mxu0
        %716 = vmatprep.mubr.bf16.mxu0 0
        %717 = vmatmul.mubr.bf16.gmra.mrb[0].mxu0 %v651
        %v718 = vpop.f32.mrb[0].mxu0
        %v719 = vadd.f32 0.0, %v718
        %v720 = vpop.f32.mrb[0].mxu0
        %v721 = vpop.f32.mrb[0].mxu0
        %v722 = vadd.f32 0.0, %v721
        %v723 = vpop.f32.mrb[0].mxu0
        %724 = vmatprep.mubr.bf16.mxu0 0
        %725 = vmatmul.mubr.bf16.gmra.mrb[0].mxu0 %v654
        %v726 = vpop.f32.mrb[0].mxu0
        %v727 = vadd.f32 0.0, %v726
        %v728 = vpop.f32.mrb[0].mxu0
        %v729 = vpop.f32.mrb[0].mxu0
        %v730 = vpop.f32.mrb[0].mxu0
        %731 = vdwg.mxu0
        %v732 = vsel %vm640, %v595, 0
        %v734 = vsel %vm640, %v596, 0
        %v736 = vsel %vm640, %v597, 0
        %v738 = vsel %vm640, %v598, 0
        %v740 = vsel %vm640, %v599, 0
        %v743 = vsel %vm656, %v540, 0
        %745 = vmatprep.subr.bf16.mxu0 0
        %746 = vmatpush1.bf16.msra.mxu0 %v743
        %747 = vmatprep.subr.bf16.mxu0 0
        %748 = vmatpush1.bf16.msra.mxu0 0
        %749 = vmatprep.subr.bf16.mxu0 0
        %750 = vmatpush1.bf16.msra.mxu0 0
        %751 = vmatprep.subr.bf16.mxu0 0
        %752 = vmatpush1.bf16.msra.mxu0 0
        %753 = vmatprep.subr.bf16.mxu0 0
        %754 = vmatpush1.bf16.msra.mxu0 0
        %755 = vmatprep.subr.bf16.mxu0 0
        %756 = vmatpush1.bf16.msra.mxu0 0
        %757 = vmatprep.subr.bf16.mxu0 0
        %758 = vmatpush1.bf16.msra.mxu0 0
        %759 = vmatprep.subr.bf16.mxu0 0
        %760 = vmatpush1.bf16.msra.mxu0 0
        %761 = vmatprep.subr.bf16.mxu0 0
        %762 = vmatpush1.bf16.msra.mxu0 0
        %763 = vmatprep.subr.bf16.mxu0 0
        %764 = vmatpush1.bf16.msra.mxu0 0
        %765 = vmatprep.subr.bf16.mxu0 0
        %766 = vmatpush1.bf16.msra.mxu0 0
        %767 = vmatprep.subr.bf16.mxu0 0
        %768 = vmatpush1.bf16.msra.mxu0 0
        %769 = vmatprep.subr.bf16.mxu0 0
        %770 = vmatpush1.bf16.msra.mxu0 0
        %771 = vmatprep.subr.bf16.mxu0 0
        %772 = vmatpush1.bf16.msra.mxu0 0
        %773 = vmatprep.subr.bf16.mxu0 0
        %774 = vmatpush1.bf16.msra.mxu0 0
        %775 = vmatprep.subr.bf16.mxu0 0
        %776 = vmatpush1.bf16.msra.mxu0 0
        %777 = vmatprep.mubr.bf16.mxu0 0
        %778 = vmatmul.mubr.bf16.gmra.mrb[0].mxu0 %v732
        %v779 = vpop.f32.mrb[0].mxu0
        %v780 = vadd.f32 %v695, %v779
        %v781 = vpop.f32.mrb[0].mxu0
        %v782 = vpop.f32.mrb[0].mxu0
        %v783 = vadd.f32 %v698, %v782
        %v784 = vpop.f32.mrb[0].mxu0
        %785 = vmatprep.mubr.bf16.mxu0 0
        %786 = vmatmul.mubr.bf16.gmra.mrb[0].mxu0 %v734
        %v787 = vpop.f32.mrb[0].mxu0
        %v788 = vadd.f32 %v703, %v787
        %v789 = vpop.f32.mrb[0].mxu0
        %v790 = vpop.f32.mrb[0].mxu0
        %v791 = vadd.f32 %v706, %v790
        %v792 = vpop.f32.mrb[0].mxu0
        %793 = vmatprep.mubr.bf16.mxu0 0
        %794 = vmatmul.mubr.bf16.gmra.mrb[0].mxu0 %v736
        %v795 = vpop.f32.mrb[0].mxu0
        %v796 = vadd.f32 %v711, %v795
        %v797 = vpop.f32.mrb[0].mxu0
        %v798 = vpop.f32.mrb[0].mxu0
        %v799 = vadd.f32 %v714, %v798
        %v800 = vpop.f32.mrb[0].mxu0
        %801 = vmatprep.mubr.bf16.mxu0 0
        %802 = vmatmul.mubr.bf16.gmra.mrb[0].mxu0 %v738
        %v803 = vpop.f32.mrb[0].mxu0
        %v804 = vadd.f32 %v719, %v803
        %v805 = vpop.f32.mrb[0].mxu0
        %v806 = vpop.f32.mrb[0].mxu0
        %v807 = vadd.f32 %v722, %v806
        %v808 = vpop.f32.mrb[0].mxu0
        %809 = vmatprep.mubr.bf16.mxu0 0
        %810 = vmatmul.mubr.bf16.gmra.mrb[0].mxu0 %v740
        %v811 = vpop.f32.mrb[0].mxu0
        %v812 = vadd.f32 %v727, %v811
        %v813 = vpop.f32.mrb[0].mxu0
        %v814 = vpop.f32.mrb[0].mxu0
        %v815 = vpop.f32.mrb[0].mxu0
        %816 = vdwg.mxu0
        %v817 = vld [vmem:[%s124] sm:$0xe]
        %v818 = vld [vmem:[%s124 + $0x20] sm:$0x7]
        %v821 = vunpack.c.l.b16 %v817
        %v822 = vunpack.c.l.b16 %v818
        %v823 = vpack.c.b16 %v587, %v821
        %v824 = vpack.c.b16 %v822, %v822
        %vm825 = vcmask 1046528
        %v826 = vrot.slane %v823, 1
        %v827 = vrot.slane %v596, 1
        %v828 = vsel %vm825, %v826, %v827
        %v829 = vrot.slane %v597, 1
        %v830 = vsel %vm825, %v827, %v829
        %v831 = vrot.slane %v598, 1
        %v832 = vsel %vm825, %v829, %v831
        %v833 = vrot.slane %v824, 1
        %v834 = vsel %vm825, %v831, %v833
        %v836 = vsel %vm640, %v828, 0
        %v839 = vsel %vm640, %v830, 0
        %v842 = vsel %vm640, %v832, 0
        %v845 = vsel %vm640, %v834, 0
        %v848 = vsel %vm640, %v833, 0
        %v851 = vsel %vm656, %v544, 0
        %853 = vmatprep.subr.bf16.mxu0 0
        %854 = vmatpush1.bf16.msra.mxu0 %v851
        %855 = vmatprep.subr.bf16.mxu0 0
        %856 = vmatpush1.bf16.msra.mxu0 0
        %857 = vmatprep.subr.bf16.mxu0 0
        %858 = vmatpush1.bf16.msra.mxu0 0
        %859 = vmatprep.subr.bf16.mxu0 0
        %860 = vmatpush1.bf16.msra.mxu0 0
        %861 = vmatprep.subr.bf16.mxu0 0
        %862 = vmatpush1.bf16.msra.mxu0 0
        %863 = vmatprep.subr.bf16.mxu0 0
        %864 = vmatpush1.bf16.msra.mxu0 0
        %865 = vmatprep.subr.bf16.mxu0 0
        %866 = vmatpush1.bf16.msra.mxu0 0
        %867 = vmatprep.subr.bf16.mxu0 0
        %868 = vmatpush1.bf16.msra.mxu0 0
        %869 = vmatprep.subr.bf16.mxu0 0
        %870 = vmatpush1.bf16.msra.mxu0 0
        %871 = vmatprep.subr.bf16.mxu0 0
        %872 = vmatpush1.bf16.msra.mxu0 0
        %873 = vmatprep.subr.bf16.mxu0 0
        %874 = vmatpush1.bf16.msra.mxu0 0
        %875 = vmatprep.subr.bf16.mxu0 0
        %876 = vmatpush1.bf16.msra.mxu0 0
        %877 = vmatprep.subr.bf16.mxu0 0
        %878 = vmatpush1.bf16.msra.mxu0 0
        %879 = vmatprep.subr.bf16.mxu0 0
        %880 = vmatpush1.bf16.msra.mxu0 0
        %881 = vmatprep.subr.bf16.mxu0 0
        %882 = vmatpush1.bf16.msra.mxu0 0
        %883 = vmatprep.subr.bf16.mxu0 0
        %884 = vmatpush1.bf16.msra.mxu0 0
        %885 = vmatprep.mubr.bf16.mxu0 0
        %886 = vmatmul.mubr.bf16.gmra.mrb[0].mxu0 %v836
        %v887 = vpop.f32.mrb[0].mxu0
        %v888 = vadd.f32 0.0, %v887
        %v889 = vpop.f32.mrb[0].mxu0
        %v890 = vpop.f32.mrb[0].mxu0
        %v891 = vadd.f32 0.0, %v890
        %v892 = vpop.f32.mrb[0].mxu0
        %893 = vmatprep.mubr.bf16.mxu0 0
        %894 = vmatmul.mubr.bf16.gmra.mrb[0].mxu0 %v839
        %v895 = vpop.f32.mrb[0].mxu0
        %v896 = vadd.f32 0.0, %v895
        %v897 = vpop.f32.mrb[0].mxu0
        %v898 = vpop.f32.mrb[0].mxu0
        %v899 = vadd.f32 0.0, %v898
        %v900 = vpop.f32.mrb[0].mxu0
        %901 = vmatprep.mubr.bf16.mxu0 0
        %902 = vmatmul.mubr.bf16.gmra.mrb[0].mxu0 %v842
        %v903 = vpop.f32.mrb[0].mxu0
        %v904 = vadd.f32 0.0, %v903
        %v905 = vpop.f32.mrb[0].mxu0
        %v906 = vpop.f32.mrb[0].mxu0
        %v907 = vadd.f32 0.0, %v906
        %v908 = vpop.f32.mrb[0].mxu0
        %909 = vmatprep.mubr.bf16.mxu0 0
        %910 = vmatmul.mubr.bf16.gmra.mrb[0].mxu0 %v845
        %v911 = vpop.f32.mrb[0].mxu0
        %v912 = vadd.f32 0.0, %v911
        %v913 = vpop.f32.mrb[0].mxu0
        %v914 = vpop.f32.mrb[0].mxu0
        %v915 = vadd.f32 0.0, %v914
        %v916 = vpop.f32.mrb[0].mxu0
        %917 = vmatprep.mubr.bf16.mxu0 0
        %918 = vmatmul.mubr.bf16.gmra.mrb[0].mxu0 %v848
        %v919 = vpop.f32.mrb[0].mxu0
        %v920 = vadd.f32 0.0, %v919
        %v921 = vpop.f32.mrb[0].mxu0
        %v922 = vpop.f32.mrb[0].mxu0
        %v923 = vpop.f32.mrb[0].mxu0
        %924 = vdwg.mxu0
        %v925 = vadd.f32 %v780, %v888
        %v926 = vadd.f32 %v783, %v891
        %v927 = vadd.f32 %v788, %v896
        %v928 = vadd.f32 %v791, %v899
        %v929 = vadd.f32 %v796, %v904
        %v930 = vadd.f32 %v799, %v907
        %v931 = vadd.f32 %v804, %v912
        %v932 = vadd.f32 %v807, %v915
        %v933 = vadd.f32 %v812, %v920
        %vm934 = vsmask.f32 6400
        %v936 = vshrl.u32 %v823, 16
        %v938 = vrot.slane %v936, 1
        %v939 = vshll.u32 %v823, 16
        %v941 = vrot.slane %v939, 2
        %v942 = vor.u32 %v938, %v941
        %v943 = vrot.slane %v613, 1
        %v944 = vrot.slane %v609, 2
        %v945 = vor.u32 %v943, %v944
        %v946 = vsel %vm934, %v942, %v945
        %v947 = vrot.slane %v621, 1
        %v948 = vrot.slane %v617, 2
        %v949 = vor.u32 %v947, %v948
        %v950 = vsel %vm934, %v945, %v949
        %v951 = vrot.slane %v629, 1
        %v952 = vrot.slane %v625, 2
        %v953 = vor.u32 %v951, %v952
        %v954 = vsel %vm934, %v949, %v953
        %v956 = vshrl.u32 %v824, 16
        %v958 = vrot.slane %v956, 1
        %v959 = vshll.u32 %v824, 16
        %v961 = vrot.slane %v959, 2
        %v962 = vor.u32 %v958, %v961
        %v963 = vsel %vm934, %v953, %v962
        %v965 = vsel %vm640, %v946, 0
        %v968 = vsel %vm640, %v950, 0
        %v971 = vsel %vm640, %v954, 0
        %v974 = vsel %vm640, %v963, 0
        %v977 = vsel %vm640, %v962, 0
        %v980 = vsel %vm656, %v546, 0
        %982 = vmatprep.subr.bf16.mxu0 0
        %983 = vmatpush1.bf16.msra.mxu0 %v980
        %984 = vmatprep.subr.bf16.mxu0 0
        %985 = vmatpush1.bf16.msra.mxu0 0
        %986 = vmatprep.subr.bf16.mxu0 0
        %987 = vmatpush1.bf16.msra.mxu0 0
        %988 = vmatprep.subr.bf16.mxu0 0
        %989 = vmatpush1.bf16.msra.mxu0 0
        %990 = vmatprep.subr.bf16.mxu0 0
        %991 = vmatpush1.bf16.msra.mxu0 0
        %992 = vmatprep.subr.bf16.mxu0 0
        %993 = vmatpush1.bf16.msra.mxu0 0
        %994 = vmatprep.subr.bf16.mxu0 0
        %995 = vmatpush1.bf16.msra.mxu0 0
        %996 = vmatprep.subr.bf16.mxu0 0
        %997 = vmatpush1.bf16.msra.mxu0 0
        %998 = vmatprep.subr.bf16.mxu0 0
        %999 = vmatpush1.bf16.msra.mxu0 0
        %1000 = vmatprep.subr.bf16.mxu0 0
        %1001 = vmatpush1.bf16.msra.mxu0 0
        %1002 = vmatprep.subr.bf16.mxu0 0
        %1003 = vmatpush1.bf16.msra.mxu0 0
        %1004 = vmatprep.subr.bf16.mxu0 0
        %1005 = vmatpush1.bf16.msra.mxu0 0
        %1006 = vmatprep.subr.bf16.mxu0 0
        %1007 = vmatpush1.bf16.msra.mxu0 0
        %1008 = vmatprep.subr.bf16.mxu0 0
        %1009 = vmatpush1.bf16.msra.mxu0 0
        %1010 = vmatprep.subr.bf16.mxu0 0
        %1011 = vmatpush1.bf16.msra.mxu0 0
        %1012 = vmatprep.subr.bf16.mxu0 0
        %1013 = vmatpush1.bf16.msra.mxu0 0
        %1014 = vmatprep.mubr.bf16.mxu0 0
        %1015 = vmatmul.mubr.bf16.gmra.mrb[0].mxu0 %v965
        %v1016 = vpop.f32.mrb[0].mxu0
        %v1017 = vadd.f32 0.0, %v1016
        %v1018 = vpop.f32.mrb[0].mxu0
        %v1019 = vpop.f32.mrb[0].mxu0
        %v1020 = vadd.f32 0.0, %v1019
        %v1021 = vpop.f32.mrb[0].mxu0
        %1022 = vmatprep.mubr.bf16.mxu0 0
        %1023 = vmatmul.mubr.bf16.gmra.mrb[0].mxu0 %v968
        %v1024 = vpop.f32.mrb[0].mxu0
        %v1025 = vadd.f32 0.0, %v1024
        %v1026 = vpop.f32.mrb[0].mxu0
        %v1027 = vpop.f32.mrb[0].mxu0
        %v1028 = vadd.f32 0.0, %v1027
        %v1029 = vpop.f32.mrb[0].mxu0
        %1030 = vmatprep.mubr.bf16.mxu0 0
        %1031 = vmatmul.mubr.bf16.gmra.mrb[0].mxu0 %v971
        %v1032 = vpop.f32.mrb[0].mxu0
        %v1033 = vadd.f32 0.0, %v1032
        %v1034 = vpop.f32.mrb[0].mxu0
        %v1035 = vpop.f32.mrb[0].mxu0
        %v1036 = vadd.f32 0.0, %v1035
        %v1037 = vpop.f32.mrb[0].mxu0
        %1038 = vmatprep.mubr.bf16.mxu0 0
        %1039 = vmatmul.mubr.bf16.gmra.mrb[0].mxu0 %v974
        %v1040 = vpop.f32.mrb[0].mxu0
        %v1041 = vadd.f32 0.0, %v1040
        %v1042 = vpop.f32.mrb[0].mxu0
        %v1043 = vpop.f32.mrb[0].mxu0
        %v1044 = vadd.f32 0.0, %v1043
        %v1045 = vpop.f32.mrb[0].mxu0
        %1046 = vmatprep.mubr.bf16.mxu0 0
        %1047 = vmatmul.mubr.bf16.gmra.mrb[0].mxu0 %v977
        %v1048 = vpop.f32.mrb[0].mxu0
        %v1049 = vadd.f32 0.0, %v1048
        %v1050 = vpop.f32.mrb[0].mxu0
        %v1051 = vpop.f32.mrb[0].mxu0
        %v1052 = vpop.f32.mrb[0].mxu0
        %1053 = vdwg.mxu0
        %v1054 = vadd.f32 %v925, %v1017
        %v1055 = vadd.f32 %v926, %v1020
        %v1056 = vadd.f32 %v927, %v1025
        %v1057 = vadd.f32 %v928, %v1028
        %v1058 = vadd.f32 %v929, %v1033
        %v1059 = vadd.f32 %v930, %v1036
        %v1060 = vadd.f32 %v931, %v1041
        %v1061 = vadd.f32 %v932, %v1044
        %v1062 = vadd.f32 %v933, %v1049
        %v1063 = vld [vmem:[%s124] sm:$0xc]
        %v1064 = vld [vmem:[%s124 + $0x20] sm:$0xf]
        %v1067 = vunpack.c.l.b16 %v1063
        %v1068 = vunpack.c.l.b16 %v1064
        %v1069 = vpack.c.b16 %v587, %v1067
        %v1070 = vpack.c.b16 %v1068, %v1068
        %vm1071 = vcmask 1045504
        %v1072 = vrot.slane %v1069, 2
        %v1073 = vrot.slane %v596, 2
        %v1074 = vsel %vm1071, %v1072, %v1073
        %v1075 = vrot.slane %v597, 2
        %v1076 = vsel %vm1071, %v1073, %v1075
        %v1077 = vrot.slane %v598, 2
        %v1078 = vsel %vm1071, %v1075, %v1077
        %v1079 = vrot.slane %v1070, 2
        %v1080 = vsel %vm1071, %v1077, %v1079
        %v1082 = vsel %vm640, %v1074, 0
        %v1085 = vsel %vm640, %v1076, 0
        %v1088 = vsel %vm640, %v1078, 0
        %v1091 = vsel %vm640, %v1080, 0
        %v1094 = vsel %vm640, %v1079, 0
        %v1097 = vsel %vm656, %v548, 0
        %1099 = vmatprep.subr.bf16.mxu0 0
        %1100 = vmatpush1.bf16.msra.mxu0 %v1097
        %1101 = vmatprep.subr.bf16.mxu0 0
        %1102 = vmatpush1.bf16.msra.mxu0 0
        %1103 = vmatprep.subr.bf16.mxu0 0
        %1104 = vmatpush1.bf16.msra.mxu0 0
        %1105 = vmatprep.subr.bf16.mxu0 0
        %1106 = vmatpush1.bf16.msra.mxu0 0
        %1107 = vmatprep.subr.bf16.mxu0 0
        %1108 = vmatpush1.bf16.msra.mxu0 0
        %1109 = vmatprep.subr.bf16.mxu0 0
        %1110 = vmatpush1.bf16.msra.mxu0 0
        %1111 = vmatprep.subr.bf16.mxu0 0
        %1112 = vmatpush1.bf16.msra.mxu0 0
        %1113 = vmatprep.subr.bf16.mxu0 0
        %1114 = vmatpush1.bf16.msra.mxu0 0
        %1115 = vmatprep.subr.bf16.mxu0 0
        %1116 = vmatpush1.bf16.msra.mxu0 0
        %1117 = vmatprep.subr.bf16.mxu0 0
        %1118 = vmatpush1.bf16.msra.mxu0 0
        %1119 = vmatprep.subr.bf16.mxu0 0
        %1120 = vmatpush1.bf16.msra.mxu0 0
        %1121 = vmatprep.subr.bf16.mxu0 0
        %1122 = vmatpush1.bf16.msra.mxu0 0
        %1123 = vmatprep.subr.bf16.mxu0 0
        %1124 = vmatpush1.bf16.msra.mxu0 0
        %1125 = vmatprep.subr.bf16.mxu0 0
        %1126 = vmatpush1.bf16.msra.mxu0 0
        %1127 = vmatprep.subr.bf16.mxu0 0
        %1128 = vmatpush1.bf16.msra.mxu0 0
        %1129 = vmatprep.subr.bf16.mxu0 0
        %1130 = vmatpush1.bf16.msra.mxu0 0
        %1131 = vmatprep.mubr.bf16.mxu0 0
        %1132 = vmatmul.mubr.bf16.gmra.mrb[0].mxu0 %v1082
        %v1133 = vpop.f32.mrb[0].mxu0
        %v1134 = vadd.f32 0.0, %v1133
        %v1135 = vpop.f32.mrb[0].mxu0
        %v1136 = vpop.f32.mrb[0].mxu0
        %v1137 = vadd.f32 0.0, %v1136
        %v1138 = vpop.f32.mrb[0].mxu0
        %1139 = vmatprep.mubr.bf16.mxu0 0
        %1140 = vmatmul.mubr.bf16.gmra.mrb[0].mxu0 %v1085
        %v1141 = vpop.f32.mrb[0].mxu0
        %v1142 = vadd.f32 0.0, %v1141
        %v1143 = vpop.f32.mrb[0].mxu0
        %v1144 = vpop.f32.mrb[0].mxu0
        %v1145 = vadd.f32 0.0, %v1144
        %v1146 = vpop.f32.mrb[0].mxu0
        %1147 = vmatprep.mubr.bf16.mxu0 0
        %1148 = vmatmul.mubr.bf16.gmra.mrb[0].mxu0 %v1088
        %v1149 = vpop.f32.mrb[0].mxu0
        %v1150 = vadd.f32 0.0, %v1149
        %v1151 = vpop.f32.mrb[0].mxu0
        %v1152 = vpop.f32.mrb[0].mxu0
        %v1153 = vadd.f32 0.0, %v1152
        %v1154 = vpop.f32.mrb[0].mxu0
        %1155 = vmatprep.mubr.bf16.mxu0 0
        %1156 = vmatmul.mubr.bf16.gmra.mrb[0].mxu0 %v1091
        %v1157 = vpop.f32.mrb[0].mxu0
        %v1158 = vadd.f32 0.0, %v1157
        %v1159 = vpop.f32.mrb[0].mxu0
        %v1160 = vpop.f32.mrb[0].mxu0
        %v1161 = vadd.f32 0.0, %v1160
        %v1162 = vpop.f32.mrb[0].mxu0
        %1163 = vmatprep.mubr.bf16.mxu0 0
        %1164 = vmatmul.mubr.bf16.gmra.mrb[0].mxu0 %v1094
        %v1165 = vpop.f32.mrb[0].mxu0
        %v1166 = vadd.f32 0.0, %v1165
        %v1167 = vpop.f32.mrb[0].mxu0
        %v1168 = vpop.f32.mrb[0].mxu0
        %v1169 = vpop.f32.mrb[0].mxu0
        %1170 = vdwg.mxu0
        %v1171 = vadd.f32 %v1054, %v1134
        %v1172 = vadd.f32 %v1055, %v1137
        %v1173 = vadd.f32 %v1056, %v1142
        %v1174 = vadd.f32 %v1057, %v1145
        %v1175 = vadd.f32 %v1058, %v1150
        %v1176 = vadd.f32 %v1059, %v1153
        %v1177 = vadd.f32 %v1060, %v1158
        %v1178 = vadd.f32 %v1061, %v1161
        %v1179 = vadd.f32 %v1062, %v1166
        %v1181 = vlaneseq
        %v1182 = vshrl.u32 %v1181, 7
        %v1183 = vsub.s32 0, %v1182
        %v1184 = vrot.slane %v549, %v1183
        %vm1186 = vcmask 547840
        %v1188 = vsel %vm1186, %v565, 0
        %v1191 = vsel %vm1186, %v566, 0
        %v1194 = vsel %vm1186, %v567, 0
        %vm1196 = vcmask 1042432
        %v1198 = vsel %vm1196, %v1179, 0
        %1200 = vmatprep.subr.mxu0 0.0
        %1201 = vmatpush1.msra.mxu0 %v1171
        %1202 = vmatprep.subr.mxu0 0.0
        %1203 = vmatpush1.msra.mxu0 %v1172
        %1204 = vmatprep.subr.mxu0 0.0
        %1205 = vmatpush1.msra.mxu0 %v1173
        %1206 = vmatprep.subr.mxu0 0.0
        %1207 = vmatpush1.msra.mxu0 %v1174
        %1208 = vmatprep.subr.mxu0 0.0
        %1209 = vmatpush1.msra.mxu0 %v1175
        %1210 = vmatprep.subr.mxu0 0.0
        %1211 = vmatpush1.msra.mxu0 %v1176
        %1212 = vmatprep.subr.mxu0 0.0
        %1213 = vmatpush1.msra.mxu0 %v1177
        %1214 = vmatprep.subr.mxu0 0.0
        %1215 = vmatpush1.msra.mxu0 %v1178
        %1216 = vmatprep.subr.mxu0 0.0
        %1217 = vmatpush1.msra.mxu0 %v1198
        %1218 = vmatprep.subr.mxu0 0.0
        %1219 = vmatpush1.msra.mxu0 0.0
        %1220 = vmatprep.subr.mxu0 0.0
        %1221 = vmatpush1.msra.mxu0 0.0
        %1222 = vmatprep.subr.mxu0 0.0
        %1223 = vmatpush1.msra.mxu0 0.0
        %1224 = vmatprep.subr.mxu0 0.0
        %1225 = vmatpush1.msra.mxu0 0.0
        %1226 = vmatprep.subr.mxu0 0.0
        %1227 = vmatpush1.msra.mxu0 0.0
        %1228 = vmatprep.subr.mxu0 0.0
        %1229 = vmatpush1.msra.mxu0 0.0
        %1230 = vmatprep.subr.mxu0 0.0
        %1231 = vmatpush1.msra.mxu0 0.0
        %1232 = vmatprep.subr.mxu0 0.0
        %1233 = vmatpush1.msra.mxu0 0.0
        %1234 = vmatprep.subr.mxu0 0.0
        %1235 = vmatpush1.msra.mxu0 0.0
        %1236 = vmatprep.subr.mxu0 0.0
        %1237 = vmatpush1.msra.mxu0 0.0
        %1238 = vmatprep.subr.mxu0 0.0
        %1239 = vmatpush1.msra.mxu0 0.0
        %1240 = vmatprep.subr.mxu0 0.0
        %1241 = vmatpush1.msra.mxu0 0.0
        %1242 = vmatprep.subr.mxu0 0.0
        %1243 = vmatpush1.msra.mxu0 0.0
        %1244 = vmatprep.subr.mxu0 0.0
        %1245 = vmatpush1.msra.mxu0 0.0
        %1246 = vmatprep.subr.mxu0 0.0
        %1247 = vmatpush1.msra.mxu0 0.0
        %1248 = vmatprep.subr.mxu0 0.0
        %1249 = vmatpush1.msra.mxu0 0.0
        %1250 = vmatprep.subr.mxu0 0.0
        %1251 = vmatpush1.msra.mxu0 0.0
        %1252 = vmatprep.subr.mxu0 0.0
        %1253 = vmatpush1.msra.mxu0 0.0
        %1254 = vmatprep.subr.mxu0 0.0
        %1255 = vmatpush1.msra.mxu0 0.0
        %1256 = vmatprep.subr.mxu0 0.0
        %1257 = vmatpush1.msra.mxu0 0.0
        %1258 = vmatprep.subr.mxu0 0.0
        %1259 = vmatpush1.msra.mxu0 0.0
        %1260 = vmatprep.subr.mxu0 0.0
        %1261 = vmatpush1.msra.mxu0 0.0
        %1262 = vmatprep.subr.mxu0 0.0
        %1263 = vmatpush1.msra.mxu0 0.0
        %1264 = vmatprep.mubr.f32.mxu0 0.0
        %1265 = vmatmul.mubr.f32.gmra.mrb[0].mxu0 %v1188
        %v1266 = vpop.f32.mrb[0].mxu0
        %v1267 = vadd.f32 %v1184, %v1266
        %v1268 = vpop.f32.mrb[0].mxu0
        %1269 = vmatprep.mubr.f32.mxu0 0.0
        %1270 = vmatmul.mubr.f32.gmra.mrb[0].mxu0 %v1191
        %v1271 = vpop.f32.mrb[0].mxu0
        %v1272 = vadd.f32 %v1184, %v1271
        %v1273 = vpop.f32.mrb[0].mxu0
        %1274 = vmatprep.mubr.f32.mxu0 0.0
        %1275 = vmatmul.mubr.f32.gmra.mrb[0].mxu0 %v1194
        %v1276 = vpop.f32.mrb[0].mxu0
        %v1277 = vadd.f32 %v1184, %v1276
        %v1278 = vpop.f32.mrb[0].mxu0
        %1279 = vdwg.mxu0
        %vm1280 = vcmp.ge.f32.partialorder %v1267, 0.0
        %vm1281 = vcmp.ge.f32.partialorder %v1272, 0.0
        %vm1282 = vcmp.ge.f32.partialorder %v1277, 0.0
        %v1283 = vmul.f32 %v1267, 0.1
        %v1284 = vmul.f32 %v1272, 0.1
        %v1285 = vmul.f32 %v1277, 0.1
        %v1286 = vsel %vm1280, %v1267, %v1283
        %v1287 = vsel %vm1281, %v1272, %v1284
        %v1288 = vsel %vm1282, %v1277, %v1285
        %v1289 = vpack.c.bf16 %v1287, %v1286
        %v1290 = vpack.c.bf16 %v1288, %v1288
        %vm1291 = vcmask 130048
        %1292 = vst.msk [vmem:[#allocation10] sm:$0xff] %vm1291, %v1289
        %vm1293 = vcmask 125952
        %vm1294 = vsmask.f32 3328
        %vm1295 = vmand %vm1293, %vm1294
        %v1296 = vld [vmem:[#allocation10 + $0x8] sm:$0xf]
        %v1297 = vsel %vm1295, %v1290, %v1296
        %1298 = vst [vmem:[#allocation10 + $0x8] sm:$0xf] %v1297
        %v1299 = vld [vmem:[%s124 + $0x28] sm:$0xf]
        %v1300 = vld [vmem:[%s124 + $0x2c] sm:$0xf]
        %v1301 = vld [vmem:[%s124 + $0x30] sm:$0xf]
        %v1302 = vld [vmem:[%s124 + $0x34] sm:$0xf]
        %v1303 = vld [vmem:[%s124 + $0x38] sm:$0xf]
        %v1304 = vld [vmem:[%s124 + $0x3c] sm:$0xf]
        %v1305 = vld [vmem:[%s124 + $0x40] sm:$0xf]
        %v1306 = vld [vmem:[%s124 + $0x44] sm:$0xf]
        %v1307 = vld [vmem:[%s124 + $0x48] sm:$0x3]
        %v1317 = vunpack.c.l.b16 %v1299
        %v1318 = vunpack.c.l.b16 %v1300
        %v1319 = vunpack.c.l.b16 %v1301
        %v1320 = vunpack.c.l.b16 %v1302
        %v1321 = vunpack.c.l.b16 %v1303
        %v1322 = vunpack.c.l.b16 %v1304
        %v1323 = vunpack.c.l.b16 %v1305
        %v1324 = vunpack.c.l.b16 %v1306
        %v1325 = vunpack.c.l.b16 %v1307
        %v1326 = vpack.c.b16 %v1318, %v1317
        %v1327 = vpack.c.b16 %v1320, %v1319
        %v1328 = vpack.c.b16 %v1322, %v1321
        %v1329 = vpack.c.b16 %v1324, %v1323
        %v1330 = vpack.c.b16 %v1325, %v1325
        %v1332 = vshrl.u32 %v1326, 16
        %v1334 = vshll.u32 %v1326, 16
        %v1336 = vrot.slane %v1334, 1
        %v1337 = vor.u32 %v1332, %v1336
        %v1339 = vshll.u32 %v1327, 16
        %v1341 = vrot.slane %v1339, 1
        %v1342 = vsel %vm600, %v1337, %v1341
        %v1343 = vshrl.u32 %v1327, 16
        %v1345 = vor.u32 %v1343, %v1341
        %v1347 = vshll.u32 %v1328, 16
        %v1349 = vrot.slane %v1347, 1
        %v1350 = vsel %vm600, %v1345, %v1349
        %v1351 = vshrl.u32 %v1328, 16
        %v1353 = vor.u32 %v1351, %v1349
        %v1355 = vshll.u32 %v1329, 16
        %v1357 = vrot.slane %v1355, 1
        %v1358 = vsel %vm600, %v1353, %v1357
        %v1359 = vshrl.u32 %v1329, 16
        %v1361 = vor.u32 %v1359, %v1357
        %v1363 = vshll.u32 %v1330, 16
        %v1365 = vrot.slane %v1363, 1
        %v1366 = vsel %vm600, %v1361, %v1365
        %v1367 = vshrl.u32 %v1330, 16
        %v1369 = vor.u32 %v1367, %v1365
        %v1371 = vsel %vm640, %v1342, 0
        %v1374 = vsel %vm640, %v1350, 0
        %v1377 = vsel %vm640, %v1358, 0
        %v1380 = vsel %vm640, %v1366, 0
        %v1383 = vsel %vm640, %v1369, 0
        %1385 = vmatprep.subr.bf16.mxu0 0
        %1386 = vmatpush1.bf16.msra.mxu0 %v658
        %1387 = vmatprep.subr.bf16.mxu0 0
        %1388 = vmatpush1.bf16.msra.mxu0 0
        %1389 = vmatprep.subr.bf16.mxu0 0
        %1390 = vmatpush1.bf16.msra.mxu0 0
        %1391 = vmatprep.subr.bf16.mxu0 0
        %1392 = vmatpush1.bf16.msra.mxu0 0
        %1393 = vmatprep.subr.bf16.mxu0 0
        %1394 = vmatpush1.bf16.msra.mxu0 0
        %1395 = vmatprep.subr.bf16.mxu0 0
        %1396 = vmatpush1.bf16.msra.mxu0 0
        %1397 = vmatprep.subr.bf16.mxu0 0
        %1398 = vmatpush1.bf16.msra.mxu0 0
        %1399 = vmatprep.subr.bf16.mxu0 0
        %1400 = vmatpush1.bf16.msra.mxu0 0
        %1401 = vmatprep.subr.bf16.mxu0 0
        %1402 = vmatpush1.bf16.msra.mxu0 0
        %1403 = vmatprep.subr.bf16.mxu0 0
        %1404 = vmatpush1.bf16.msra.mxu0 0
        %1405 = vmatprep.subr.bf16.mxu0 0
        %1406 = vmatpush1.bf16.msra.mxu0 0
        %1407 = vmatprep.subr.bf16.mxu0 0
        %1408 = vmatpush1.bf16.msra.mxu0 0
        %1409 = vmatprep.subr.bf16.mxu0 0
        %1410 = vmatpush1.bf16.msra.mxu0 0
        %1411 = vmatprep.subr.bf16.mxu0 0
        %1412 = vmatpush1.bf16.msra.mxu0 0
        %1413 = vmatprep.subr.bf16.mxu0 0
        %1414 = vmatpush1.bf16.msra.mxu0 0
        %1415 = vmatprep.subr.bf16.mxu0 0
        %1416 = vmatpush1.bf16.msra.mxu0 0
        %1417 = vmatprep.mubr.bf16.mxu0 0
        %1418 = vmatmul.mubr.bf16.gmra.mrb[0].mxu0 %v1371
        %v1419 = vpop.f32.mrb[0].mxu0
        %v1420 = vadd.f32 0.0, %v1419
        %v1421 = vpop.f32.mrb[0].mxu0
        %v1422 = vpop.f32.mrb[0].mxu0
        %v1423 = vadd.f32 0.0, %v1422
        %v1424 = vpop.f32.mrb[0].mxu0
        %1425 = vmatprep.mubr.bf16.mxu0 0
        %1426 = vmatmul.mubr.bf16.gmra.mrb[0].mxu0 %v1374
        %v1427 = vpop.f32.mrb[0].mxu0
        %v1428 = vadd.f32 0.0, %v1427
        %v1429 = vpop.f32.mrb[0].mxu0
        %v1430 = vpop.f32.mrb[0].mxu0
        %v1431 = vadd.f32 0.0, %v1430
        %v1432 = vpop.f32.mrb[0].mxu0
        %1433 = vmatprep.mubr.bf16.mxu0 0
        %1434 = vmatmul.mubr.bf16.gmra.mrb[0].mxu0 %v1377
        %v1435 = vpop.f32.mrb[0].mxu0
        %v1436 = vadd.f32 0.0, %v1435
        %v1437 = vpop.f32.mrb[0].mxu0
        %v1438 = vpop.f32.mrb[0].mxu0
        %v1439 = vadd.f32 0.0, %v1438
        %v1440 = vpop.f32.mrb[0].mxu0
        %1441 = vmatprep.mubr.bf16.mxu0 0
        %1442 = vmatmul.mubr.bf16.gmra.mrb[0].mxu0 %v1380
        %v1443 = vpop.f32.mrb[0].mxu0
        %v1444 = vadd.f32 0.0, %v1443
        %v1445 = vpop.f32.mrb[0].mxu0
        %v1446 = vpop.f32.mrb[0].mxu0
        %v1447 = vadd.f32 0.0, %v1446
        %v1448 = vpop.f32.mrb[0].mxu0
        %1449 = vmatprep.mubr.bf16.mxu0 0
        %1450 = vmatmul.mubr.bf16.gmra.mrb[0].mxu0 %v1383
        %v1451 = vpop.f32.mrb[0].mxu0
        %v1452 = vadd.f32 0.0, %v1451
        %v1453 = vpop.f32.mrb[0].mxu0
        %v1454 = vpop.f32.mrb[0].mxu0
        %v1455 = vpop.f32.mrb[0].mxu0
        %1456 = vdwg.mxu0
        %v1457 = vsel %vm640, %v1326, 0
        %v1459 = vsel %vm640, %v1327, 0
        %v1461 = vsel %vm640, %v1328, 0
        %v1463 = vsel %vm640, %v1329, 0
        %v1465 = vsel %vm640, %v1330, 0
        %1467 = vmatprep.subr.bf16.mxu0 0
        %1468 = vmatpush1.bf16.msra.mxu0 %v743
        %1469 = vmatprep.subr.bf16.mxu0 0
        %1470 = vmatpush1.bf16.msra.mxu0 0
        %1471 = vmatprep.subr.bf16.mxu0 0
        %1472 = vmatpush1.bf16.msra.mxu0 0
        %1473 = vmatprep.subr.bf16.mxu0 0
        %1474 = vmatpush1.bf16.msra.mxu0 0
        %1475 = vmatprep.subr.bf16.mxu0 0
        %1476 = vmatpush1.bf16.msra.mxu0 0
        %1477 = vmatprep.subr.bf16.mxu0 0
        %1478 = vmatpush1.bf16.msra.mxu0 0
        %1479 = vmatprep.subr.bf16.mxu0 0
        %1480 = vmatpush1.bf16.msra.mxu0 0
        %1481 = vmatprep.subr.bf16.mxu0 0
        %1482 = vmatpush1.bf16.msra.mxu0 0
        %1483 = vmatprep.subr.bf16.mxu0 0
        %1484 = vmatpush1.bf16.msra.mxu0 0
        %1485 = vmatprep.subr.bf16.mxu0 0
        %1486 = vmatpush1.bf16.msra.mxu0 0
        %1487 = vmatprep.subr.bf16.mxu0 0
        %1488 = vmatpush1.bf16.msra.mxu0 0
        %1489 = vmatprep.subr.bf16.mxu0 0
        %1490 = vmatpush1.bf16.msra.mxu0 0
        %1491 = vmatprep.subr.bf16.mxu0 0
        %1492 = vmatpush1.bf16.msra.mxu0 0
        %1493 = vmatprep.subr.bf16.mxu0 0
        %1494 = vmatpush1.bf16.msra.mxu0 0
        %1495 = vmatprep.subr.bf16.mxu0 0
        %1496 = vmatpush1.bf16.msra.mxu0 0
        %1497 = vmatprep.subr.bf16.mxu0 0
        %1498 = vmatpush1.bf16.msra.mxu0 0
        %1499 = vmatprep.mubr.bf16.mxu0 0
        %1500 = vmatmul.mubr.bf16.gmra.mrb[0].mxu0 %v1457
        %v1501 = vpop.f32.mrb[0].mxu0
        %v1502 = vadd.f32 %v1420, %v1501
        %v1503 = vpop.f32.mrb[0].mxu0
        %v1504 = vpop.f32.mrb[0].mxu0
        %v1505 = vadd.f32 %v1423, %v1504
        %v1506 = vpop.f32.mrb[0].mxu0
        %1507 = vmatprep.mubr.bf16.mxu0 0
        %1508 = vmatmul.mubr.bf16.gmra.mrb[0].mxu0 %v1459
        %v1509 = vpop.f32.mrb[0].mxu0
        %v1510 = vadd.f32 %v1428, %v1509
        %v1511 = vpop.f32.mrb[0].mxu0
        %v1512 = vpop.f32.mrb[0].mxu0
        %v1513 = vadd.f32 %v1431, %v1512
        %v1514 = vpop.f32.mrb[0].mxu0
        %1515 = vmatprep.mubr.bf16.mxu0 0
        %1516 = vmatmul.mubr.bf16.gmra.mrb[0].mxu0 %v1461
        %v1517 = vpop.f32.mrb[0].mxu0
        %v1518 = vadd.f32 %v1436, %v1517
        %v1519 = vpop.f32.mrb[0].mxu0
        %v1520 = vpop.f32.mrb[0].mxu0
        %v1521 = vadd.f32 %v1439, %v1520
        %v1522 = vpop.f32.mrb[0].mxu0
        %1523 = vmatprep.mubr.bf16.mxu0 0
        %1524 = vmatmul.mubr.bf16.gmra.mrb[0].mxu0 %v1463
        %v1525 = vpop.f32.mrb[0].mxu0
        %v1526 = vadd.f32 %v1444, %v1525
        %v1527 = vpop.f32.mrb[0].mxu0
        %v1528 = vpop.f32.mrb[0].mxu0
        %v1529 = vadd.f32 %v1447, %v1528
        %v1530 = vpop.f32.mrb[0].mxu0
        %1531 = vmatprep.mubr.bf16.mxu0 0
        %1532 = vmatmul.mubr.bf16.gmra.mrb[0].mxu0 %v1465
        %v1533 = vpop.f32.mrb[0].mxu0
        %v1534 = vadd.f32 %v1452, %v1533
        %v1535 = vpop.f32.mrb[0].mxu0
        %v1536 = vpop.f32.mrb[0].mxu0
        %v1537 = vpop.f32.mrb[0].mxu0
        %1538 = vdwg.mxu0
        %v1539 = vld [vmem:[%s124 + $0x28] sm:$0xe]
        %v1540 = vld [vmem:[%s124 + $0x48] sm:$0x7]
        %v1543 = vunpack.c.l.b16 %v1539
        %v1544 = vunpack.c.l.b16 %v1540
        %v1545 = vpack.c.b16 %v1318, %v1543
        %v1546 = vpack.c.b16 %v1544, %v1544
        %v1547 = vrot.slane %v1545, 1
        %v1548 = vrot.slane %v1327, 1
        %v1549 = vsel %vm825, %v1547, %v1548
        %v1550 = vrot.slane %v1328, 1
        %v1551 = vsel %vm825, %v1548, %v1550
        %v1552 = vrot.slane %v1329, 1
        %v1553 = vsel %vm825, %v1550, %v1552
        %v1554 = vrot.slane %v1546, 1
        %v1555 = vsel %vm825, %v1552, %v1554
        %v1557 = vsel %vm640, %v1549, 0
        %v1560 = vsel %vm640, %v1551, 0
        %v1563 = vsel %vm640, %v1553, 0
        %v1566 = vsel %vm640, %v1555, 0
        %v1569 = vsel %vm640, %v1554, 0
        %1571 = vmatprep.subr.bf16.mxu0 0
        %1572 = vmatpush1.bf16.msra.mxu0 %v851
        %1573 = vmatprep.subr.bf16.mxu0 0
        %1574 = vmatpush1.bf16.msra.mxu0 0
        %1575 = vmatprep.subr.bf16.mxu0 0
        %1576 = vmatpush1.bf16.msra.mxu0 0
        %1577 = vmatprep.subr.bf16.mxu0 0
        %1578 = vmatpush1.bf16.msra.mxu0 0
        %1579 = vmatprep.subr.bf16.mxu0 0
        %1580 = vmatpush1.bf16.msra.mxu0 0
        %1581 = vmatprep.subr.bf16.mxu0 0
        %1582 = vmatpush1.bf16.msra.mxu0 0
        %1583 = vmatprep.subr.bf16.mxu0 0
        %1584 = vmatpush1.bf16.msra.mxu0 0
        %1585 = vmatprep.subr.bf16.mxu0 0
        %1586 = vmatpush1.bf16.msra.mxu0 0
        %1587 = vmatprep.subr.bf16.mxu0 0
        %1588 = vmatpush1.bf16.msra.mxu0 0
        %1589 = vmatprep.subr.bf16.mxu0 0
        %1590 = vmatpush1.bf16.msra.mxu0 0
        %1591 = vmatprep.subr.bf16.mxu0 0
        %1592 = vmatpush1.bf16.msra.mxu0 0
        %1593 = vmatprep.subr.bf16.mxu0 0
        %1594 = vmatpush1.bf16.msra.mxu0 0
        %1595 = vmatprep.subr.bf16.mxu0 0
        %1596 = vmatpush1.bf16.msra.mxu0 0
        %1597 = vmatprep.subr.bf16.mxu0 0
        %1598 = vmatpush1.bf16.msra.mxu0 0
        %1599 = vmatprep.subr.bf16.mxu0 0
        %1600 = vmatpush1.bf16.msra.mxu0 0
        %1601 = vmatprep.subr.bf16.mxu0 0
        %1602 = vmatpush1.bf16.msra.mxu0 0
        %1603 = vmatprep.mubr.bf16.mxu0 0
        %1604 = vmatmul.mubr.bf16.gmra.mrb[0].mxu0 %v1557
        %v1605 = vpop.f32.mrb[0].mxu0
        %v1606 = vadd.f32 0.0, %v1605
        %v1607 = vpop.f32.mrb[0].mxu0
        %v1608 = vpop.f32.mrb[0].mxu0
        %v1609 = vadd.f32 0.0, %v1608
        %v1610 = vpop.f32.mrb[0].mxu0
        %1611 = vmatprep.mubr.bf16.mxu0 0
        %1612 = vmatmul.mubr.bf16.gmra.mrb[0].mxu0 %v1560
        %v1613 = vpop.f32.mrb[0].mxu0
        %v1614 = vadd.f32 0.0, %v1613
        %v1615 = vpop.f32.mrb[0].mxu0
        %v1616 = vpop.f32.mrb[0].mxu0
        %v1617 = vadd.f32 0.0, %v1616
        %v1618 = vpop.f32.mrb[0].mxu0
        %1619 = vmatprep.mubr.bf16.mxu0 0
        %1620 = vmatmul.mubr.bf16.gmra.mrb[0].mxu0 %v1563
        %v1621 = vpop.f32.mrb[0].mxu0
        %v1622 = vadd.f32 0.0, %v1621
        %v1623 = vpop.f32.mrb[0].mxu0
        %v1624 = vpop.f32.mrb[0].mxu0
        %v1625 = vadd.f32 0.0, %v1624
        %v1626 = vpop.f32.mrb[0].mxu0
        %1627 = vmatprep.mubr.bf16.mxu0 0
        %1628 = vmatmul.mubr.bf16.gmra.mrb[0].mxu0 %v1566
        %v1629 = vpop.f32.mrb[0].mxu0
        %v1630 = vadd.f32 0.0, %v1629
        %v1631 = vpop.f32.mrb[0].mxu0
        %v1632 = vpop.f32.mrb[0].mxu0
        %v1633 = vadd.f32 0.0, %v1632
        %v1634 = vpop.f32.mrb[0].mxu0
        %1635 = vmatprep.mubr.bf16.mxu0 0
        %1636 = vmatmul.mubr.bf16.gmra.mrb[0].mxu0 %v1569
        %v1637 = vpop.f32.mrb[0].mxu0
        %v1638 = vadd.f32 0.0, %v1637
        %v1639 = vpop.f32.mrb[0].mxu0
        %v1640 = vpop.f32.mrb[0].mxu0
        %v1641 = vpop.f32.mrb[0].mxu0
        %1642 = vdwg.mxu0
        %v1643 = vadd.f32 %v1502, %v1606
        %v1644 = vadd.f32 %v1505, %v1609
        %v1645 = vadd.f32 %v1510, %v1614
        %v1646 = vadd.f32 %v1513, %v1617
        %v1647 = vadd.f32 %v1518, %v1622
        %v1648 = vadd.f32 %v1521, %v1625
        %v1649 = vadd.f32 %v1526, %v1630
        %v1650 = vadd.f32 %v1529, %v1633
        %v1651 = vadd.f32 %v1534, %v1638
        %v1653 = vshrl.u32 %v1545, 16
        %v1655 = vrot.slane %v1653, 1
        %v1656 = vshll.u32 %v1545, 16
        %v1658 = vrot.slane %v1656, 2
        %v1659 = vor.u32 %v1655, %v1658
        %v1660 = vrot.slane %v1343, 1
        %v1661 = vrot.slane %v1339, 2
        %v1662 = vor.u32 %v1660, %v1661
        %v1663 = vsel %vm934, %v1659, %v1662
        %v1664 = vrot.slane %v1351, 1
        %v1665 = vrot.slane %v1347, 2
        %v1666 = vor.u32 %v1664, %v1665
        %v1667 = vsel %vm934, %v1662, %v1666
        %v1668 = vrot.slane %v1359, 1
        %v1669 = vrot.slane %v1355, 2
        %v1670 = vor.u32 %v1668, %v1669
        %v1671 = vsel %vm934, %v1666, %v1670
        %v1673 = vshrl.u32 %v1546, 16
        %v1675 = vrot.slane %v1673, 1
        %v1676 = vshll.u32 %v1546, 16
        %v1678 = vrot.slane %v1676, 2
        %v1679 = vor.u32 %v1675, %v1678
        %v1680 = vsel %vm934, %v1670, %v1679
        %v1682 = vsel %vm640, %v1663, 0
        %v1685 = vsel %vm640, %v1667, 0
        %v1688 = vsel %vm640, %v1671, 0
        %v1691 = vsel %vm640, %v1680, 0
        %v1694 = vsel %vm640, %v1679, 0
        %1696 = vmatprep.subr.bf16.mxu0 0
        %1697 = vmatpush1.bf16.msra.mxu0 %v980
        %1698 = vmatprep.subr.bf16.mxu0 0
        %1699 = vmatpush1.bf16.msra.mxu0 0
        %1700 = vmatprep.subr.bf16.mxu0 0
        %1701 = vmatpush1.bf16.msra.mxu0 0
        %1702 = vmatprep.subr.bf16.mxu0 0
        %1703 = vmatpush1.bf16.msra.mxu0 0
        %1704 = vmatprep.subr.bf16.mxu0 0
        %1705 = vmatpush1.bf16.msra.mxu0 0
        %1706 = vmatprep.subr.bf16.mxu0 0
        %1707 = vmatpush1.bf16.msra.mxu0 0
        %1708 = vmatprep.subr.bf16.mxu0 0
        %1709 = vmatpush1.bf16.msra.mxu0 0
        %1710 = vmatprep.subr.bf16.mxu0 0
        %1711 = vmatpush1.bf16.msra.mxu0 0
        %1712 = vmatprep.subr.bf16.mxu0 0
        %1713 = vmatpush1.bf16.msra.mxu0 0
        %1714 = vmatprep.subr.bf16.mxu0 0
        %1715 = vmatpush1.bf16.msra.mxu0 0
        %1716 = vmatprep.subr.bf16.mxu0 0
        %1717 = vmatpush1.bf16.msra.mxu0 0
        %1718 = vmatprep.subr.bf16.mxu0 0
        %1719 = vmatpush1.bf16.msra.mxu0 0
        %1720 = vmatprep.subr.bf16.mxu0 0
        %1721 = vmatpush1.bf16.msra.mxu0 0
        %1722 = vmatprep.subr.bf16.mxu0 0
        %1723 = vmatpush1.bf16.msra.mxu0 0
        %1724 = vmatprep.subr.bf16.mxu0 0
        %1725 = vmatpush1.bf16.msra.mxu0 0
        %1726 = vmatprep.subr.bf16.mxu0 0
        %1727 = vmatpush1.bf16.msra.mxu0 0
        %1728 = vmatprep.mubr.bf16.mxu0 0
        %1729 = vmatmul.mubr.bf16.gmra.mrb[0].mxu0 %v1682
        %v1730 = vpop.f32.mrb[0].mxu0
        %v1731 = vadd.f32 0.0, %v1730
        %v1732 = vpop.f32.mrb[0].mxu0
        %v1733 = vpop.f32.mrb[0].mxu0
        %v1734 = vadd.f32 0.0, %v1733
        %v1735 = vpop.f32.mrb[0].mxu0
        %1736 = vmatprep.mubr.bf16.mxu0 0
        %1737 = vmatmul.mubr.bf16.gmra.mrb[0].mxu0 %v1685
        %v1738 = vpop.f32.mrb[0].mxu0
        %v1739 = vadd.f32 0.0, %v1738
        %v1740 = vpop.f32.mrb[0].mxu0
        %v1741 = vpop.f32.mrb[0].mxu0
        %v1742 = vadd.f32 0.0, %v1741
        %v1743 = vpop.f32.mrb[0].mxu0
        %1744 = vmatprep.mubr.bf16.mxu0 0
        %1745 = vmatmul.mubr.bf16.gmra.mrb[0].mxu0 %v1688
        %v1746 = vpop.f32.mrb[0].mxu0
        %v1747 = vadd.f32 0.0, %v1746
        %v1748 = vpop.f32.mrb[0].mxu0
        %v1749 = vpop.f32.mrb[0].mxu0
        %v1750 = vadd.f32 0.0, %v1749
        %v1751 = vpop.f32.mrb[0].mxu0
        %1752 = vmatprep.mubr.bf16.mxu0 0
        %1753 = vmatmul.mubr.bf16.gmra.mrb[0].mxu0 %v1691
        %v1754 = vpop.f32.mrb[0].mxu0
        %v1755 = vadd.f32 0.0, %v1754
        %v1756 = vpop.f32.mrb[0].mxu0
        %v1757 = vpop.f32.mrb[0].mxu0
        %v1758 = vadd.f32 0.0, %v1757
        %v1759 = vpop.f32.mrb[0].mxu0
        %1760 = vmatprep.mubr.bf16.mxu0 0
        %1761 = vmatmul.mubr.bf16.gmra.mrb[0].mxu0 %v1694
        %v1762 = vpop.f32.mrb[0].mxu0
        %v1763 = vadd.f32 0.0, %v1762
        %v1764 = vpop.f32.mrb[0].mxu0
        %v1765 = vpop.f32.mrb[0].mxu0
        %v1766 = vpop.f32.mrb[0].mxu0
        %1767 = vdwg.mxu0
        %v1768 = vadd.f32 %v1643, %v1731
        %v1769 = vadd.f32 %v1644, %v1734
        %v1770 = vadd.f32 %v1645, %v1739
        %v1771 = vadd.f32 %v1646, %v1742
        %v1772 = vadd.f32 %v1647, %v1747
        %v1773 = vadd.f32 %v1648, %v1750
        %v1774 = vadd.f32 %v1649, %v1755
        %v1775 = vadd.f32 %v1650, %v1758
        %v1776 = vadd.f32 %v1651, %v1763
        %v1777 = vld [vmem:[%s124 + $0x28] sm:$0xc]
        %v1778 = vld [vmem:[%s124 + $0x48] sm:$0xf]
        %v1781 = vunpack.c.l.b16 %v1777
        %v1782 = vunpack.c.l.b16 %v1778
        %v1783 = vpack.c.b16 %v1318, %v1781
        %v1784 = vpack.c.b16 %v1782, %v1782
        %v1785 = vrot.slane %v1783, 2
        %v1786 = vrot.slane %v1327, 2
        %v1787 = vsel %vm1071, %v1785, %v1786
        %v1788 = vrot.slane %v1328, 2
        %v1789 = vsel %vm1071, %v1786, %v1788
        %v1790 = vrot.slane %v1329, 2
        %v1791 = vsel %vm1071, %v1788, %v1790
        %v1792 = vrot.slane %v1784, 2
        %v1793 = vsel %vm1071, %v1790, %v1792
        %v1795 = vsel %vm640, %v1787, 0
        %v1798 = vsel %vm640, %v1789, 0
        %v1801 = vsel %vm640, %v1791, 0
        %v1804 = vsel %vm640, %v1793, 0
        %v1807 = vsel %vm640, %v1792, 0
        %1809 = vmatprep.subr.bf16.mxu0 0
        %1810 = vmatpush1.bf16.msra.mxu0 %v1097
        %1811 = vmatprep.subr.bf16.mxu0 0
        %1812 = vmatpush1.bf16.msra.mxu0 0
        %1813 = vmatprep.subr.bf16.mxu0 0
        %1814 = vmatpush1.bf16.msra.mxu0 0
        %1815 = vmatprep.subr.bf16.mxu0 0
        %1816 = vmatpush1.bf16.msra.mxu0 0
        %1817 = vmatprep.subr.bf16.mxu0 0
        %1818 = vmatpush1.bf16.msra.mxu0 0
        %1819 = vmatprep.subr.bf16.mxu0 0
        %1820 = vmatpush1.bf16.msra.mxu0 0
        %1821 = vmatprep.subr.bf16.mxu0 0
        %1822 = vmatpush1.bf16.msra.mxu0 0
        %1823 = vmatprep.subr.bf16.mxu0 0
        %1824 = vmatpush1.bf16.msra.mxu0 0
        %1825 = vmatprep.subr.bf16.mxu0 0
        %1826 = vmatpush1.bf16.msra.mxu0 0
        %1827 = vmatprep.subr.bf16.mxu0 0
        %1828 = vmatpush1.bf16.msra.mxu0 0
        %1829 = vmatprep.subr.bf16.mxu0 0
        %1830 = vmatpush1.bf16.msra.mxu0 0
        %1831 = vmatprep.subr.bf16.mxu0 0
        %1832 = vmatpush1.bf16.msra.mxu0 0
        %1833 = vmatprep.subr.bf16.mxu0 0
        %1834 = vmatpush1.bf16.msra.mxu0 0
        %1835 = vmatprep.subr.bf16.mxu0 0
        %1836 = vmatpush1.bf16.msra.mxu0 0
        %1837 = vmatprep.subr.bf16.mxu0 0
        %1838 = vmatpush1.bf16.msra.mxu0 0
        %1839 = vmatprep.subr.bf16.mxu0 0
        %1840 = vmatpush1.bf16.msra.mxu0 0
        %1841 = vmatprep.mubr.bf16.mxu0 0
        %1842 = vmatmul.mubr.bf16.gmra.mrb[0].mxu0 %v1795
        %v1843 = vpop.f32.mrb[0].mxu0
        %v1844 = vadd.f32 0.0, %v1843
        %v1845 = vpop.f32.mrb[0].mxu0
        %v1846 = vpop.f32.mrb[0].mxu0
        %v1847 = vadd.f32 0.0, %v1846
        %v1848 = vpop.f32.mrb[0].mxu0
        %1849 = vmatprep.mubr.bf16.mxu0 0
        %1850 = vmatmul.mubr.bf16.gmra.mrb[0].mxu0 %v1798
        %v1851 = vpop.f32.mrb[0].mxu0
        %v1852 = vadd.f32 0.0, %v1851
        %v1853 = vpop.f32.mrb[0].mxu0
        %v1854 = vpop.f32.mrb[0].mxu0
        %v1855 = vadd.f32 0.0, %v1854
        %v1856 = vpop.f32.mrb[0].mxu0
        %1857 = vmatprep.mubr.bf16.mxu0 0
        %1858 = vmatmul.mubr.bf16.gmra.mrb[0].mxu0 %v1801
        %v1859 = vpop.f32.mrb[0].mxu0
        %v1860 = vadd.f32 0.0, %v1859
        %v1861 = vpop.f32.mrb[0].mxu0
        %v1862 = vpop.f32.mrb[0].mxu0
        %v1863 = vadd.f32 0.0, %v1862
        %v1864 = vpop.f32.mrb[0].mxu0
        %1865 = vmatprep.mubr.bf16.mxu0 0
        %1866 = vmatmul.mubr.bf16.gmra.mrb[0].mxu0 %v1804
        %v1867 = vpop.f32.mrb[0].mxu0
        %v1868 = vadd.f32 0.0, %v1867
        %v1869 = vpop.f32.mrb[0].mxu0
        %v1870 = vpop.f32.mrb[0].mxu0
        %v1871 = vadd.f32 0.0, %v1870
        %v1872 = vpop.f32.mrb[0].mxu0
        %1873 = vmatprep.mubr.bf16.mxu0 0
        %1874 = vmatmul.mubr.bf16.gmra.mrb[0].mxu0 %v1807
        %v1875 = vpop.f32.mrb[0].mxu0
        %v1876 = vadd.f32 0.0, %v1875
        %v1877 = vpop.f32.mrb[0].mxu0
        %v1878 = vpop.f32.mrb[0].mxu0
        %v1879 = vpop.f32.mrb[0].mxu0
        %1880 = vdwg.mxu0
        %v1881 = vadd.f32 %v1768, %v1844
        %v1882 = vadd.f32 %v1769, %v1847
        %v1883 = vadd.f32 %v1770, %v1852
        %v1884 = vadd.f32 %v1771, %v1855
        %v1885 = vadd.f32 %v1772, %v1860
        %v1886 = vadd.f32 %v1773, %v1863
        %v1887 = vadd.f32 %v1774, %v1868
        %v1888 = vadd.f32 %v1775, %v1871
        %v1889 = vadd.f32 %v1776, %v1876
        %v1891 = vsel %vm1196, %v1889, 0
        %1893 = vmatprep.subr.mxu0 0.0
        %1894 = vmatpush1.msra.mxu0 %v1881
        %1895 = vmatprep.subr.mxu0 0.0
        %1896 = vmatpush1.msra.mxu0 %v1882
        %1897 = vmatprep.subr.mxu0 0.0
        %1898 = vmatpush1.msra.mxu0 %v1883
        %1899 = vmatprep.subr.mxu0 0.0
        %1900 = vmatpush1.msra.mxu0 %v1884
        %1901 = vmatprep.subr.mxu0 0.0
        %1902 = vmatpush1.msra.mxu0 %v1885
        %1903 = vmatprep.subr.mxu0 0.0
        %1904 = vmatpush1.msra.mxu0 %v1886
        %1905 = vmatprep.subr.mxu0 0.0
        %1906 = vmatpush1.msra.mxu0 %v1887
        %1907 = vmatprep.subr.mxu0 0.0
        %1908 = vmatpush1.msra.mxu0 %v1888
        %1909 = vmatprep.subr.mxu0 0.0
        %1910 = vmatpush1.msra.mxu0 %v1891
        %1911 = vmatprep.subr.mxu0 0.0
        %1912 = vmatpush1.msra.mxu0 0.0
        %1913 = vmatprep.subr.mxu0 0.0
        %1914 = vmatpush1.msra.mxu0 0.0
        %1915 = vmatprep.subr.mxu0 0.0
        %1916 = vmatpush1.msra.mxu0 0.0
        %1917 = vmatprep.subr.mxu0 0.0
        %1918 = vmatpush1.msra.mxu0 0.0
        %1919 = vmatprep.subr.mxu0 0.0
        %1920 = vmatpush1.msra.mxu0 0.0
        %1921 = vmatprep.subr.mxu0 0.0
        %1922 = vmatpush1.msra.mxu0 0.0
        %1923 = vmatprep.subr.mxu0 0.0
        %1924 = vmatpush1.msra.mxu0 0.0
        %1925 = vmatprep.subr.mxu0 0.0
        %1926 = vmatpush1.msra.mxu0 0.0
        %1927 = vmatprep.subr.mxu0 0.0
        %1928 = vmatpush1.msra.mxu0 0.0
        %1929 = vmatprep.subr.mxu0 0.0
        %1930 = vmatpush1.msra.mxu0 0.0
        %1931 = vmatprep.subr.mxu0 0.0
        %1932 = vmatpush1.msra.mxu0 0.0
        %1933 = vmatprep.subr.mxu0 0.0
        %1934 = vmatpush1.msra.mxu0 0.0
        %1935 = vmatprep.subr.mxu0 0.0
        %1936 = vmatpush1.msra.mxu0 0.0
        %1937 = vmatprep.subr.mxu0 0.0
        %1938 = vmatpush1.msra.mxu0 0.0
        %1939 = vmatprep.subr.mxu0 0.0
        %1940 = vmatpush1.msra.mxu0 0.0
        %1941 = vmatprep.subr.mxu0 0.0
        %1942 = vmatpush1.msra.mxu0 0.0
        %1943 = vmatprep.subr.mxu0 0.0
        %1944 = vmatpush1.msra.mxu0 0.0
        %1945 = vmatprep.subr.mxu0 0.0
        %1946 = vmatpush1.msra.mxu0 0.0
        %1947 = vmatprep.subr.mxu0 0.0
        %1948 = vmatpush1.msra.mxu0 0.0
        %1949 = vmatprep.subr.mxu0 0.0
        %1950 = vmatpush1.msra.mxu0 0.0
        %1951 = vmatprep.subr.mxu0 0.0
        %1952 = vmatpush1.msra.mxu0 0.0
        %1953 = vmatprep.subr.mxu0 0.0
        %1954 = vmatpush1.msra.mxu0 0.0
        %1955 = vmatprep.subr.mxu0 0.0
        %1956 = vmatpush1.msra.mxu0 0.0
        %1957 = vmatprep.mubr.f32.mxu0 0.0
        %1958 = vmatmul.mubr.f32.gmra.mrb[0].mxu0 %v1188
        %v1959 = vpop.f32.mrb[0].mxu0
        %v1960 = vadd.f32 %v1184, %v1959
        %v1961 = vpop.f32.mrb[0].mxu0
        %1962 = vmatprep.mubr.f32.mxu0 0.0
        %1963 = vmatmul.mubr.f32.gmra.mrb[0].mxu0 %v1191
        %v1964 = vpop.f32.mrb[0].mxu0
        %v1965 = vadd.f32 %v1184, %v1964
        %v1966 = vpop.f32.mrb[0].mxu0
        %1967 = vmatprep.mubr.f32.mxu0 0.0
        %1968 = vmatmul.mubr.f32.gmra.mrb[0].mxu0 %v1194
        %v1969 = vpop.f32.mrb[0].mxu0
        %v1970 = vadd.f32 %v1184, %v1969
        %v1971 = vpop.f32.mrb[0].mxu0
        %1972 = vdwg.mxu0
        %vm1973 = vcmp.ge.f32.partialorder %v1960, 0.0
        %vm1974 = vcmp.ge.f32.partialorder %v1965, 0.0
        %vm1975 = vcmp.ge.f32.partialorder %v1970, 0.0
        %v1976 = vmul.f32 %v1960, 0.1
        %v1977 = vmul.f32 %v1965, 0.1
        %v1978 = vmul.f32 %v1970, 0.1
        %v1979 = vsel %vm1973, %v1960, %v1976
        %v1980 = vsel %vm1974, %v1965, %v1977
        %v1981 = vsel %vm1975, %v1970, %v1978
        %v1982 = vpack.c.bf16 %v1980, %v1979
        %v1983 = vpack.c.bf16 %v1981, %v1981
        %1984 = vst.msk [vmem:[#allocation10 + $0x10] sm:$0xff] %vm1291, %v1982
        %v1985 = vld [vmem:[#allocation10 + $0x18] sm:$0xf]
        %v1986 = vsel %vm1295, %v1983, %v1985
        %1987 = vst [vmem:[#allocation10 + $0x18] sm:$0xf] %v1986
        %v1988 = vld [vmem:[%s124 + $0x50] sm:$0xf]
        %v1989 = vld [vmem:[%s124 + $0x54] sm:$0xf]
        %v1990 = vld [vmem:[%s124 + $0x58] sm:$0xf]
        %v1991 = vld [vmem:[%s124 + $0x5c] sm:$0xf]
        %v1992 = vld [vmem:[%s124 + $0x60] sm:$0xf]
        %v1993 = vld [vmem:[%s124 + $0x64] sm:$0xf]
        %v1994 = vld [vmem:[%s124 + $0x68] sm:$0xf]
        %v1995 = vld [vmem:[%s124 + $0x6c] sm:$0xf]
        %v1996 = vld [vmem:[%s124 + $0x70] sm:$0x3]
        %v2006 = vunpack.c.l.b16 %v1988
        %v2007 = vunpack.c.l.b16 %v1989
        %v2008 = vunpack.c.l.b16 %v1990
        %v2009 = vunpack.c.l.b16 %v1991
        %v2010 = vunpack.c.l.b16 %v1992
        %v2011 = vunpack.c.l.b16 %v1993
        %v2012 = vunpack.c.l.b16 %v1994
        %v2013 = vunpack.c.l.b16 %v1995
        %v2014 = vunpack.c.l.b16 %v1996
        %v2015 = vpack.c.b16 %v2007, %v2006
        %v2016 = vpack.c.b16 %v2009, %v2008
        %v2017 = vpack.c.b16 %v2011, %v2010
        %v2018 = vpack.c.b16 %v2013, %v2012
        %v2019 = vpack.c.b16 %v2014, %v2014
        %v2021 = vshrl.u32 %v2015, 16
        %v2023 = vshll.u32 %v2015, 16
        %v2025 = vrot.slane %v2023, 1
        %v2026 = vor.u32 %v2021, %v2025
        %v2028 = vshll.u32 %v2016, 16
        %v2030 = vrot.slane %v2028, 1
        %v2031 = vsel %vm600, %v2026, %v2030
        %v2032 = vshrl.u32 %v2016, 16
        %v2034 = vor.u32 %v2032, %v2030
        %v2036 = vshll.u32 %v2017, 16
        %v2038 = vrot.slane %v2036, 1
        %v2039 = vsel %vm600, %v2034, %v2038
        %v2040 = vshrl.u32 %v2017, 16
        %v2042 = vor.u32 %v2040, %v2038
        %v2044 = vshll.u32 %v2018, 16
        %v2046 = vrot.slane %v2044, 1
        %v2047 = vsel %vm600, %v2042, %v2046
        %v2048 = vshrl.u32 %v2018, 16
        %v2050 = vor.u32 %v2048, %v2046
        %v2052 = vshll.u32 %v2019, 16
        %v2054 = vrot.slane %v2052, 1
        %v2055 = vsel %vm600, %v2050, %v2054
        %v2056 = vshrl.u32 %v2019, 16
        %v2058 = vor.u32 %v2056, %v2054
        %v2060 = vsel %vm640, %v2031, 0
        %v2063 = vsel %vm640, %v2039, 0
        %v2066 = vsel %vm640, %v2047, 0
        %v2069 = vsel %vm640, %v2055, 0
        %v2072 = vsel %vm640, %v2058, 0
        %2074 = vmatprep.subr.bf16.mxu0 0
        %2075 = vmatpush1.bf16.msra.mxu0 %v658
        %2076 = vmatprep.subr.bf16.mxu0 0
        %2077 = vmatpush1.bf16.msra.mxu0 0
        %2078 = vmatprep.subr.bf16.mxu0 0
        %2079 = vmatpush1.bf16.msra.mxu0 0
        %2080 = vmatprep.subr.bf16.mxu0 0
        %2081 = vmatpush1.bf16.msra.mxu0 0
        %2082 = vmatprep.subr.bf16.mxu0 0
        %2083 = vmatpush1.bf16.msra.mxu0 0
        %2084 = vmatprep.subr.bf16.mxu0 0
        %2085 = vmatpush1.bf16.msra.mxu0 0
        %2086 = vmatprep.subr.bf16.mxu0 0
        %2087 = vmatpush1.bf16.msra.mxu0 0
        %2088 = vmatprep.subr.bf16.mxu0 0
        %2089 = vmatpush1.bf16.msra.mxu0 0
        %2090 = vmatprep.subr.bf16.mxu0 0
        %2091 = vmatpush1.bf16.msra.mxu0 0
        %2092 = vmatprep.subr.bf16.mxu0 0
        %2093 = vmatpush1.bf16.msra.mxu0 0
        %2094 = vmatprep.subr.bf16.mxu0 0
        %2095 = vmatpush1.bf16.msra.mxu0 0
        %2096 = vmatprep.subr.bf16.mxu0 0
        %2097 = vmatpush1.bf16.msra.mxu0 0
        %2098 = vmatprep.subr.bf16.mxu0 0
        %2099 = vmatpush1.bf16.msra.mxu0 0
        %2100 = vmatprep.subr.bf16.mxu0 0
        %2101 = vmatpush1.bf16.msra.mxu0 0
        %2102 = vmatprep.subr.bf16.mxu0 0
        %2103 = vmatpush1.bf16.msra.mxu0 0
        %2104 = vmatprep.subr.bf16.mxu0 0
        %2105 = vmatpush1.bf16.msra.mxu0 0
        %2106 = vmatprep.mubr.bf16.mxu0 0
        %2107 = vmatmul.mubr.bf16.gmra.mrb[0].mxu0 %v2060
        %v2108 = vpop.f32.mrb[0].mxu0
        %v2109 = vadd.f32 0.0, %v2108
        %v2110 = vpop.f32.mrb[0].mxu0
        %v2111 = vpop.f32.mrb[0].mxu0
        %v2112 = vadd.f32 0.0, %v2111
        %v2113 = vpop.f32.mrb[0].mxu0
        %2114 = vmatprep.mubr.bf16.mxu0 0
        %2115 = vmatmul.mubr.bf16.gmra.mrb[0].mxu0 %v2063
        %v2116 = vpop.f32.mrb[0].mxu0
        %v2117 = vadd.f32 0.0, %v2116
        %v2118 = vpop.f32.mrb[0].mxu0
        %v2119 = vpop.f32.mrb[0].mxu0
        %v2120 = vadd.f32 0.0, %v2119
        %v2121 = vpop.f32.mrb[0].mxu0
        %2122 = vmatprep.mubr.bf16.mxu0 0
        %2123 = vmatmul.mubr.bf16.gmra.mrb[0].mxu0 %v2066
        %v2124 = vpop.f32.mrb[0].mxu0
        %v2125 = vadd.f32 0.0, %v2124
        %v2126 = vpop.f32.mrb[0].mxu0
        %v2127 = vpop.f32.mrb[0].mxu0
        %v2128 = vadd.f32 0.0, %v2127
        %v2129 = vpop.f32.mrb[0].mxu0
        %2130 = vmatprep.mubr.bf16.mxu0 0
        %2131 = vmatmul.mubr.bf16.gmra.mrb[0].mxu0 %v2069
        %v2132 = vpop.f32.mrb[0].mxu0
        %v2133 = vadd.f32 0.0, %v2132
        %v2134 = vpop.f32.mrb[0].mxu0
        %v2135 = vpop.f32.mrb[0].mxu0
        %v2136 = vadd.f32 0.0, %v2135
        %v2137 = vpop.f32.mrb[0].mxu0
        %2138 = vmatprep.mubr.bf16.mxu0 0
        %2139 = vmatmul.mubr.bf16.gmra.mrb[0].mxu0 %v2072
        %v2140 = vpop.f32.mrb[0].mxu0
        %v2141 = vadd.f32 0.0, %v2140
        %v2142 = vpop.f32.mrb[0].mxu0
        %v2143 = vpop.f32.mrb[0].mxu0
        %v2144 = vpop.f32.mrb[0].mxu0
        %2145 = vdwg.mxu0
        %v2146 = vsel %vm640, %v2015, 0
        %v2148 = vsel %vm640, %v2016, 0
        %v2150 = vsel %vm640, %v2017, 0
        %v2152 = vsel %vm640, %v2018, 0
        %v2154 = vsel %vm640, %v2019, 0
        %2156 = vmatprep.subr.bf16.mxu0 0
        %2157 = vmatpush1.bf16.msra.mxu0 %v743
        %2158 = vmatprep.subr.bf16.mxu0 0
        %2159 = vmatpush1.bf16.msra.mxu0 0
        %2160 = vmatprep.subr.bf16.mxu0 0
        %2161 = vmatpush1.bf16.msra.mxu0 0
        %2162 = vmatprep.subr.bf16.mxu0 0
        %2163 = vmatpush1.bf16.msra.mxu0 0
        %2164 = vmatprep.subr.bf16.mxu0 0
        %2165 = vmatpush1.bf16.msra.mxu0 0
        %2166 = vmatprep.subr.bf16.mxu0 0
        %2167 = vmatpush1.bf16.msra.mxu0 0
        %2168 = vmatprep.subr.bf16.mxu0 0
        %2169 = vmatpush1.bf16.msra.mxu0 0
        %2170 = vmatprep.subr.bf16.mxu0 0
        %2171 = vmatpush1.bf16.msra.mxu0 0
        %2172 = vmatprep.subr.bf16.mxu0 0
        %2173 = vmatpush1.bf16.msra.mxu0 0
        %2174 = vmatprep.subr.bf16.mxu0 0
        %2175 = vmatpush1.bf16.msra.mxu0 0
        %2176 = vmatprep.subr.bf16.mxu0 0
        %2177 = vmatpush1.bf16.msra.mxu0 0
        %2178 = vmatprep.subr.bf16.mxu0 0
        %2179 = vmatpush1.bf16.msra.mxu0 0
        %2180 = vmatprep.subr.bf16.mxu0 0
        %2181 = vmatpush1.bf16.msra.mxu0 0
        %2182 = vmatprep.subr.bf16.mxu0 0
        %2183 = vmatpush1.bf16.msra.mxu0 0
        %2184 = vmatprep.subr.bf16.mxu0 0
        %2185 = vmatpush1.bf16.msra.mxu0 0
        %2186 = vmatprep.subr.bf16.mxu0 0
        %2187 = vmatpush1.bf16.msra.mxu0 0
        %2188 = vmatprep.mubr.bf16.mxu0 0
        %2189 = vmatmul.mubr.bf16.gmra.mrb[0].mxu0 %v2146
        %v2190 = vpop.f32.mrb[0].mxu0
        %v2191 = vadd.f32 %v2109, %v2190
        %v2192 = vpop.f32.mrb[0].mxu0
        %v2193 = vpop.f32.mrb[0].mxu0
        %v2194 = vadd.f32 %v2112, %v2193
        %v2195 = vpop.f32.mrb[0].mxu0
        %2196 = vmatprep.mubr.bf16.mxu0 0
        %2197 = vmatmul.mubr.bf16.gmra.mrb[0].mxu0 %v2148
        %v2198 = vpop.f32.mrb[0].mxu0
        %v2199 = vadd.f32 %v2117, %v2198
        %v2200 = vpop.f32.mrb[0].mxu0
        %v2201 = vpop.f32.mrb[0].mxu0
        %v2202 = vadd.f32 %v2120, %v2201
        %v2203 = vpop.f32.mrb[0].mxu0
        %2204 = vmatprep.mubr.bf16.mxu0 0
        %2205 = vmatmul.mubr.bf16.gmra.mrb[0].mxu0 %v2150
        %v2206 = vpop.f32.mrb[0].mxu0
        %v2207 = vadd.f32 %v2125, %v2206
        %v2208 = vpop.f32.mrb[0].mxu0
        %v2209 = vpop.f32.mrb[0].mxu0
        %v2210 = vadd.f32 %v2128, %v2209
        %v2211 = vpop.f32.mrb[0].mxu0
        %2212 = vmatprep.mubr.bf16.mxu0 0
        %2213 = vmatmul.mubr.bf16.gmra.mrb[0].mxu0 %v2152
        %v2214 = vpop.f32.mrb[0].mxu0
        %v2215 = vadd.f32 %v2133, %v2214
        %v2216 = vpop.f32.mrb[0].mxu0
        %v2217 = vpop.f32.mrb[0].mxu0
        %v2218 = vadd.f32 %v2136, %v2217
        %v2219 = vpop.f32.mrb[0].mxu0
        %2220 = vmatprep.mubr.bf16.mxu0 0
        %2221 = vmatmul.mubr.bf16.gmra.mrb[0].mxu0 %v2154
        %v2222 = vpop.f32.mrb[0].mxu0
        %v2223 = vadd.f32 %v2141, %v2222
        %v2224 = vpop.f32.mrb[0].mxu0
        %v2225 = vpop.f32.mrb[0].mxu0
        %v2226 = vpop.f32.mrb[0].mxu0
        %2227 = vdwg.mxu0
        %v2228 = vld [vmem:[%s124 + $0x50] sm:$0xe]
        %v2229 = vld [vmem:[%s124 + $0x70] sm:$0x7]
        %v2232 = vunpack.c.l.b16 %v2228
        %v2233 = vunpack.c.l.b16 %v2229
        %v2234 = vpack.c.b16 %v2007, %v2232
        %v2235 = vpack.c.b16 %v2233, %v2233
        %v2236 = vrot.slane %v2234, 1
        %v2237 = vrot.slane %v2016, 1
        %v2238 = vsel %vm825, %v2236, %v2237
        %v2239 = vrot.slane %v2017, 1
        %v2240 = vsel %vm825, %v2237, %v2239
        %v2241 = vrot.slane %v2018, 1
        %v2242 = vsel %vm825, %v2239, %v2241
        %v2243 = vrot.slane %v2235, 1
        %v2244 = vsel %vm825, %v2241, %v2243
        %v2246 = vsel %vm640, %v2238, 0
        %v2249 = vsel %vm640, %v2240, 0
        %v2252 = vsel %vm640, %v2242, 0
        %v2255 = vsel %vm640, %v2244, 0
        %v2258 = vsel %vm640, %v2243, 0
        %2260 = vmatprep.subr.bf16.mxu0 0
        %2261 = vmatpush1.bf16.msra.mxu0 %v851
        %2262 = vmatprep.subr.bf16.mxu0 0
        %2263 = vmatpush1.bf16.msra.mxu0 0
        %2264 = vmatprep.subr.bf16.mxu0 0
        %2265 = vmatpush1.bf16.msra.mxu0 0
        %2266 = vmatprep.subr.bf16.mxu0 0
        %2267 = vmatpush1.bf16.msra.mxu0 0
        %2268 = vmatprep.subr.bf16.mxu0 0
        %2269 = vmatpush1.bf16.msra.mxu0 0
        %2270 = vmatprep.subr.bf16.mxu0 0
        %2271 = vmatpush1.bf16.msra.mxu0 0
        %2272 = vmatprep.subr.bf16.mxu0 0
        %2273 = vmatpush1.bf16.msra.mxu0 0
        %2274 = vmatprep.subr.bf16.mxu0 0
        %2275 = vmatpush1.bf16.msra.mxu0 0
        %2276 = vmatprep.subr.bf16.mxu0 0
        %2277 = vmatpush1.bf16.msra.mxu0 0
        %2278 = vmatprep.subr.bf16.mxu0 0
        %2279 = vmatpush1.bf16.msra.mxu0 0
        %2280 = vmatprep.subr.bf16.mxu0 0
        %2281 = vmatpush1.bf16.msra.mxu0 0
        %2282 = vmatprep.subr.bf16.mxu0 0
        %2283 = vmatpush1.bf16.msra.mxu0 0
        %2284 = vmatprep.subr.bf16.mxu0 0
        %2285 = vmatpush1.bf16.msra.mxu0 0
        %2286 = vmatprep.subr.bf16.mxu0 0
        %2287 = vmatpush1.bf16.msra.mxu0 0
        %2288 = vmatprep.subr.bf16.mxu0 0
        %2289 = vmatpush1.bf16.msra.mxu0 0
        %2290 = vmatprep.subr.bf16.mxu0 0
        %2291 = vmatpush1.bf16.msra.mxu0 0
        %2292 = vmatprep.mubr.bf16.mxu0 0
        %2293 = vmatmul.mubr.bf16.gmra.mrb[0].mxu0 %v2246
        %v2294 = vpop.f32.mrb[0].mxu0
        %v2295 = vadd.f32 0.0, %v2294
        %v2296 = vpop.f32.mrb[0].mxu0
        %v2297 = vpop.f32.mrb[0].mxu0
        %v2298 = vadd.f32 0.0, %v2297
        %v2299 = vpop.f32.mrb[0].mxu0
        %2300 = vmatprep.mubr.bf16.mxu0 0
        %2301 = vmatmul.mubr.bf16.gmra.mrb[0].mxu0 %v2249
        %v2302 = vpop.f32.mrb[0].mxu0
        %v2303 = vadd.f32 0.0, %v2302
        %v2304 = vpop.f32.mrb[0].mxu0
        %v2305 = vpop.f32.mrb[0].mxu0
        %v2306 = vadd.f32 0.0, %v2305
        %v2307 = vpop.f32.mrb[0].mxu0
        %2308 = vmatprep.mubr.bf16.mxu0 0
        %2309 = vmatmul.mubr.bf16.gmra.mrb[0].mxu0 %v2252
        %v2310 = vpop.f32.mrb[0].mxu0
        %v2311 = vadd.f32 0.0, %v2310
        %v2312 = vpop.f32.mrb[0].mxu0
        %v2313 = vpop.f32.mrb[0].mxu0
        %v2314 = vadd.f32 0.0, %v2313
        %v2315 = vpop.f32.mrb[0].mxu0
        %2316 = vmatprep.mubr.bf16.mxu0 0
        %2317 = vmatmul.mubr.bf16.gmra.mrb[0].mxu0 %v2255
        %v2318 = vpop.f32.mrb[0].mxu0
        %v2319 = vadd.f32 0.0, %v2318
        %v2320 = vpop.f32.mrb[0].mxu0
        %v2321 = vpop.f32.mrb[0].mxu0
        %v2322 = vadd.f32 0.0, %v2321
        %v2323 = vpop.f32.mrb[0].mxu0
        %2324 = vmatprep.mubr.bf16.mxu0 0
        %2325 = vmatmul.mubr.bf16.gmra.mrb[0].mxu0 %v2258
        %v2326 = vpop.f32.mrb[0].mxu0
        %v2327 = vadd.f32 0.0, %v2326
        %v2328 = vpop.f32.mrb[0].mxu0
        %v2329 = vpop.f32.mrb[0].mxu0
        %v2330 = vpop.f32.mrb[0].mxu0
        %2331 = vdwg.mxu0
        %v2332 = vadd.f32 %v2191, %v2295
        %v2333 = vadd.f32 %v2194, %v2298
        %v2334 = vadd.f32 %v2199, %v2303
        %v2335 = vadd.f32 %v2202, %v2306
        %v2336 = vadd.f32 %v2207, %v2311
        %v2337 = vadd.f32 %v2210, %v2314
        %v2338 = vadd.f32 %v2215, %v2319
        %v2339 = vadd.f32 %v2218, %v2322
        %v2340 = vadd.f32 %v2223, %v2327
        %v2342 = vshrl.u32 %v2234, 16
        %v2344 = vrot.slane %v2342, 1
        %v2345 = vshll.u32 %v2234, 16
        %v2347 = vrot.slane %v2345, 2
        %v2348 = vor.u32 %v2344, %v2347
        %v2349 = vrot.slane %v2032, 1
        %v2350 = vrot.slane %v2028, 2
        %v2351 = vor.u32 %v2349, %v2350
        %v2352 = vsel %vm934, %v2348, %v2351
        %v2353 = vrot.slane %v2040, 1
        %v2354 = vrot.slane %v2036, 2
        %v2355 = vor.u32 %v2353, %v2354
        %v2356 = vsel %vm934, %v2351, %v2355
        %v2357 = vrot.slane %v2048, 1
        %v2358 = vrot.slane %v2044, 2
        %v2359 = vor.u32 %v2357, %v2358
        %v2360 = vsel %vm934, %v2355, %v2359
        %v2362 = vshrl.u32 %v2235, 16
        %v2364 = vrot.slane %v2362, 1
        %v2365 = vshll.u32 %v2235, 16
        %v2367 = vrot.slane %v2365, 2
        %v2368 = vor.u32 %v2364, %v2367
        %v2369 = vsel %vm934, %v2359, %v2368
        %v2371 = vsel %vm640, %v2352, 0
        %v2374 = vsel %vm640, %v2356, 0
        %v2377 = vsel %vm640, %v2360, 0
        %v2380 = vsel %vm640, %v2369, 0
        %v2383 = vsel %vm640, %v2368, 0
        %2385 = vmatprep.subr.bf16.mxu0 0
        %2386 = vmatpush1.bf16.msra.mxu0 %v980
        %2387 = vmatprep.subr.bf16.mxu0 0
        %2388 = vmatpush1.bf16.msra.mxu0 0
        %2389 = vmatprep.subr.bf16.mxu0 0
        %2390 = vmatpush1.bf16.msra.mxu0 0
        %2391 = vmatprep.subr.bf16.mxu0 0
        %2392 = vmatpush1.bf16.msra.mxu0 0
        %2393 = vmatprep.subr.bf16.mxu0 0
        %2394 = vmatpush1.bf16.msra.mxu0 0
        %2395 = vmatprep.subr.bf16.mxu0 0
        %2396 = vmatpush1.bf16.msra.mxu0 0
        %2397 = vmatprep.subr.bf16.mxu0 0
        %2398 = vmatpush1.bf16.msra.mxu0 0
        %2399 = vmatprep.subr.bf16.mxu0 0
        %2400 = vmatpush1.bf16.msra.mxu0 0
        %2401 = vmatprep.subr.bf16.mxu0 0
        %2402 = vmatpush1.bf16.msra.mxu0 0
        %2403 = vmatprep.subr.bf16.mxu0 0
        %2404 = vmatpush1.bf16.msra.mxu0 0
        %2405 = vmatprep.subr.bf16.mxu0 0
        %2406 = vmatpush1.bf16.msra.mxu0 0
        %2407 = vmatprep.subr.bf16.mxu0 0
        %2408 = vmatpush1.bf16.msra.mxu0 0
        %2409 = vmatprep.subr.bf16.mxu0 0
        %2410 = vmatpush1.bf16.msra.mxu0 0
        %2411 = vmatprep.subr.bf16.mxu0 0
        %2412 = vmatpush1.bf16.msra.mxu0 0
        %2413 = vmatprep.subr.bf16.mxu0 0
        %2414 = vmatpush1.bf16.msra.mxu0 0
        %2415 = vmatprep.subr.bf16.mxu0 0
        %2416 = vmatpush1.bf16.msra.mxu0 0
        %2417 = vmatprep.mubr.bf16.mxu0 0
        %2418 = vmatmul.mubr.bf16.gmra.mrb[0].mxu0 %v2371
        %v2419 = vpop.f32.mrb[0].mxu0
        %v2420 = vadd.f32 0.0, %v2419
        %v2421 = vpop.f32.mrb[0].mxu0
        %v2422 = vpop.f32.mrb[0].mxu0
        %v2423 = vadd.f32 0.0, %v2422
        %v2424 = vpop.f32.mrb[0].mxu0
        %2425 = vmatprep.mubr.bf16.mxu0 0
        %2426 = vmatmul.mubr.bf16.gmra.mrb[0].mxu0 %v2374
        %v2427 = vpop.f32.mrb[0].mxu0
        %v2428 = vadd.f32 0.0, %v2427
        %v2429 = vpop.f32.mrb[0].mxu0
        %v2430 = vpop.f32.mrb[0].mxu0
        %v2431 = vadd.f32 0.0, %v2430
        %v2432 = vpop.f32.mrb[0].mxu0
        %2433 = vmatprep.mubr.bf16.mxu0 0
        %2434 = vmatmul.mubr.bf16.gmra.mrb[0].mxu0 %v2377
        %v2435 = vpop.f32.mrb[0].mxu0
        %v2436 = vadd.f32 0.0, %v2435
        %v2437 = vpop.f32.mrb[0].mxu0
        %v2438 = vpop.f32.mrb[0].mxu0
        %v2439 = vadd.f32 0.0, %v2438
        %v2440 = vpop.f32.mrb[0].mxu0
        %2441 = vmatprep.mubr.bf16.mxu0 0
        %2442 = vmatmul.mubr.bf16.gmra.mrb[0].mxu0 %v2380
        %v2443 = vpop.f32.mrb[0].mxu0
        %v2444 = vadd.f32 0.0, %v2443
        %v2445 = vpop.f32.mrb[0].mxu0
        %v2446 = vpop.f32.mrb[0].mxu0
        %v2447 = vadd.f32 0.0, %v2446
        %v2448 = vpop.f32.mrb[0].mxu0
        %2449 = vmatprep.mubr.bf16.mxu0 0
        %2450 = vmatmul.mubr.bf16.gmra.mrb[0].mxu0 %v2383
        %v2451 = vpop.f32.mrb[0].mxu0
        %v2452 = vadd.f32 0.0, %v2451
        %v2453 = vpop.f32.mrb[0].mxu0
        %v2454 = vpop.f32.mrb[0].mxu0
        %v2455 = vpop.f32.mrb[0].mxu0
        %2456 = vdwg.mxu0
        %v2457 = vadd.f32 %v2332, %v2420
        %v2458 = vadd.f32 %v2333, %v2423
        %v2459 = vadd.f32 %v2334, %v2428
        %v2460 = vadd.f32 %v2335, %v2431
        %v2461 = vadd.f32 %v2336, %v2436
        %v2462 = vadd.f32 %v2337, %v2439
        %v2463 = vadd.f32 %v2338, %v2444
        %v2464 = vadd.f32 %v2339, %v2447
        %v2465 = vadd.f32 %v2340, %v2452
        %v2466 = vld [vmem:[%s124 + $0x50] sm:$0xc]
        %v2467 = vld [vmem:[%s124 + $0x70] sm:$0xf]
        %v2470 = vunpack.c.l.b16 %v2466
        %v2471 = vunpack.c.l.b16 %v2467
        %v2472 = vpack.c.b16 %v2007, %v2470
        %v2473 = vpack.c.b16 %v2471, %v2471
        %v2474 = vrot.slane %v2472, 2
        %v2475 = vrot.slane %v2016, 2
        %v2476 = vsel %vm1071, %v2474, %v2475
        %v2477 = vrot.slane %v2017, 2
        %v2478 = vsel %vm1071, %v2475, %v2477
        %v2479 = vrot.slane %v2018, 2
        %v2480 = vsel %vm1071, %v2477, %v2479
        %v2481 = vrot.slane %v2473, 2
        %v2482 = vsel %vm1071, %v2479, %v2481
        %v2484 = vsel %vm640, %v2476, 0
        %v2487 = vsel %vm640, %v2478, 0
        %v2490 = vsel %vm640, %v2480, 0
        %v2493 = vsel %vm640, %v2482, 0
        %v2496 = vsel %vm640, %v2481, 0
        %2498 = vmatprep.subr.bf16.mxu0 0
        %2499 = vmatpush1.bf16.msra.mxu0 %v1097
        %2500 = vmatprep.subr.bf16.mxu0 0
        %2501 = vmatpush1.bf16.msra.mxu0 0
        %2502 = vmatprep.subr.bf16.mxu0 0
        %2503 = vmatpush1.bf16.msra.mxu0 0
        %2504 = vmatprep.subr.bf16.mxu0 0
        %2505 = vmatpush1.bf16.msra.mxu0 0
        %2506 = vmatprep.subr.bf16.mxu0 0
        %2507 = vmatpush1.bf16.msra.mxu0 0
        %2508 = vmatprep.subr.bf16.mxu0 0
        %2509 = vmatpush1.bf16.msra.mxu0 0
        %2510 = vmatprep.subr.bf16.mxu0 0
        %2511 = vmatpush1.bf16.msra.mxu0 0
        %2512 = vmatprep.subr.bf16.mxu0 0
        %2513 = vmatpush1.bf16.msra.mxu0 0
        %2514 = vmatprep.subr.bf16.mxu0 0
        %2515 = vmatpush1.bf16.msra.mxu0 0
        %2516 = vmatprep.subr.bf16.mxu0 0
        %2517 = vmatpush1.bf16.msra.mxu0 0
        %2518 = vmatprep.subr.bf16.mxu0 0
        %2519 = vmatpush1.bf16.msra.mxu0 0
        %2520 = vmatprep.subr.bf16.mxu0 0
        %2521 = vmatpush1.bf16.msra.mxu0 0
        %2522 = vmatprep.subr.bf16.mxu0 0
        %2523 = vmatpush1.bf16.msra.mxu0 0
        %2524 = vmatprep.subr.bf16.mxu0 0
        %2525 = vmatpush1.bf16.msra.mxu0 0
        %2526 = vmatprep.subr.bf16.mxu0 0
        %2527 = vmatpush1.bf16.msra.mxu0 0
        %2528 = vmatprep.subr.bf16.mxu0 0
        %2529 = vmatpush1.bf16.msra.mxu0 0
        %2530 = vmatprep.mubr.bf16.mxu0 0
        %2531 = vmatmul.mubr.bf16.gmra.mrb[0].mxu0 %v2484
        %v2532 = vpop.f32.mrb[0].mxu0
        %v2533 = vadd.f32 0.0, %v2532
        %v2534 = vpop.f32.mrb[0].mxu0
        %v2535 = vpop.f32.mrb[0].mxu0
        %v2536 = vadd.f32 0.0, %v2535
        %v2537 = vpop.f32.mrb[0].mxu0
        %2538 = vmatprep.mubr.bf16.mxu0 0
        %2539 = vmatmul.mubr.bf16.gmra.mrb[0].mxu0 %v2487
        %v2540 = vpop.f32.mrb[0].mxu0
        %v2541 = vadd.f32 0.0, %v2540
        %v2542 = vpop.f32.mrb[0].mxu0
        %v2543 = vpop.f32.mrb[0].mxu0
        %v2544 = vadd.f32 0.0, %v2543
        %v2545 = vpop.f32.mrb[0].mxu0
        %2546 = vmatprep.mubr.bf16.mxu0 0
        %2547 = vmatmul.mubr.bf16.gmra.mrb[0].mxu0 %v2490
        %v2548 = vpop.f32.mrb[0].mxu0
        %v2549 = vadd.f32 0.0, %v2548
        %v2550 = vpop.f32.mrb[0].mxu0
        %v2551 = vpop.f32.mrb[0].mxu0
        %v2552 = vadd.f32 0.0, %v2551
        %v2553 = vpop.f32.mrb[0].mxu0
        %2554 = vmatprep.mubr.bf16.mxu0 0
        %2555 = vmatmul.mubr.bf16.gmra.mrb[0].mxu0 %v2493
        %v2556 = vpop.f32.mrb[0].mxu0
        %v2557 = vadd.f32 0.0, %v2556
        %v2558 = vpop.f32.mrb[0].mxu0
        %v2559 = vpop.f32.mrb[0].mxu0
        %v2560 = vadd.f32 0.0, %v2559
        %v2561 = vpop.f32.mrb[0].mxu0
        %2562 = vmatprep.mubr.bf16.mxu0 0
        %2563 = vmatmul.mubr.bf16.gmra.mrb[0].mxu0 %v2496
        %v2564 = vpop.f32.mrb[0].mxu0
        %v2565 = vadd.f32 0.0, %v2564
        %v2566 = vpop.f32.mrb[0].mxu0
        %v2567 = vpop.f32.mrb[0].mxu0
        %v2568 = vpop.f32.mrb[0].mxu0
        %2569 = vdwg.mxu0
        %v2570 = vadd.f32 %v2457, %v2533
        %v2571 = vadd.f32 %v2458, %v2536
        %v2572 = vadd.f32 %v2459, %v2541
        %v2573 = vadd.f32 %v2460, %v2544
        %v2574 = vadd.f32 %v2461, %v2549
        %v2575 = vadd.f32 %v2462, %v2552
        %v2576 = vadd.f32 %v2463, %v2557
        %v2577 = vadd.f32 %v2464, %v2560
        %v2578 = vadd.f32 %v2465, %v2565
        %v2580 = vsel %vm1196, %v2578, 0
        %2582 = vmatprep.subr.mxu0 0.0
        %2583 = vmatpush1.msra.mxu0 %v2570
        %2584 = vmatprep.subr.mxu0 0.0
        %2585 = vmatpush1.msra.mxu0 %v2571
        %2586 = vmatprep.subr.mxu0 0.0
        %2587 = vmatpush1.msra.mxu0 %v2572
        %2588 = vmatprep.subr.mxu0 0.0
        %2589 = vmatpush1.msra.mxu0 %v2573
        %2590 = vmatprep.subr.mxu0 0.0
        %2591 = vmatpush1.msra.mxu0 %v2574
        %2592 = vmatprep.subr.mxu0 0.0
        %2593 = vmatpush1.msra.mxu0 %v2575
        %2594 = vmatprep.subr.mxu0 0.0
        %2595 = vmatpush1.msra.mxu0 %v2576
        %2596 = vmatprep.subr.mxu0 0.0
        %2597 = vmatpush1.msra.mxu0 %v2577
        %2598 = vmatprep.subr.mxu0 0.0
        %2599 = vmatpush1.msra.mxu0 %v2580
        %2600 = vmatprep.subr.mxu0 0.0
        %2601 = vmatpush1.msra.mxu0 0.0
        %2602 = vmatprep.subr.mxu0 0.0
        %2603 = vmatpush1.msra.mxu0 0.0
        %2604 = vmatprep.subr.mxu0 0.0
        %2605 = vmatpush1.msra.mxu0 0.0
        %2606 = vmatprep.subr.mxu0 0.0
        %2607 = vmatpush1.msra.mxu0 0.0
        %2608 = vmatprep.subr.mxu0 0.0
        %2609 = vmatpush1.msra.mxu0 0.0
        %2610 = vmatprep.subr.mxu0 0.0
        %2611 = vmatpush1.msra.mxu0 0.0
        %2612 = vmatprep.subr.mxu0 0.0
        %2613 = vmatpush1.msra.mxu0 0.0
        %2614 = vmatprep.subr.mxu0 0.0
        %2615 = vmatpush1.msra.mxu0 0.0
        %2616 = vmatprep.subr.mxu0 0.0
        %2617 = vmatpush1.msra.mxu0 0.0
        %2618 = vmatprep.subr.mxu0 0.0
        %2619 = vmatpush1.msra.mxu0 0.0
        %2620 = vmatprep.subr.mxu0 0.0
        %2621 = vmatpush1.msra.mxu0 0.0
        %2622 = vmatprep.subr.mxu0 0.0
        %2623 = vmatpush1.msra.mxu0 0.0
        %2624 = vmatprep.subr.mxu0 0.0
        %2625 = vmatpush1.msra.mxu0 0.0
        %2626 = vmatprep.subr.mxu0 0.0
        %2627 = vmatpush1.msra.mxu0 0.0
        %2628 = vmatprep.subr.mxu0 0.0
        %2629 = vmatpush1.msra.mxu0 0.0
        %2630 = vmatprep.subr.mxu0 0.0
        %2631 = vmatpush1.msra.mxu0 0.0
        %2632 = vmatprep.subr.mxu0 0.0
        %2633 = vmatpush1.msra.mxu0 0.0
        %2634 = vmatprep.subr.mxu0 0.0
        %2635 = vmatpush1.msra.mxu0 0.0
        %2636 = vmatprep.subr.mxu0 0.0
        %2637 = vmatpush1.msra.mxu0 0.0
        %2638 = vmatprep.subr.mxu0 0.0
        %2639 = vmatpush1.msra.mxu0 0.0
        %2640 = vmatprep.subr.mxu0 0.0
        %2641 = vmatpush1.msra.mxu0 0.0
        %2642 = vmatprep.subr.mxu0 0.0
        %2643 = vmatpush1.msra.mxu0 0.0
        %2644 = vmatprep.subr.mxu0 0.0
        %2645 = vmatpush1.msra.mxu0 0.0
        %2646 = vmatprep.mubr.f32.mxu0 0.0
        %2647 = vmatmul.mubr.f32.gmra.mrb[0].mxu0 %v1188
        %v2648 = vpop.f32.mrb[0].mxu0
        %v2649 = vadd.f32 %v1184, %v2648
        %v2650 = vpop.f32.mrb[0].mxu0
        %2651 = vmatprep.mubr.f32.mxu0 0.0
        %2652 = vmatmul.mubr.f32.gmra.mrb[0].mxu0 %v1191
        %v2653 = vpop.f32.mrb[0].mxu0
        %v2654 = vadd.f32 %v1184, %v2653
        %v2655 = vpop.f32.mrb[0].mxu0
        %2656 = vmatprep.mubr.f32.mxu0 0.0
        %2657 = vmatmul.mubr.f32.gmra.mrb[0].mxu0 %v1194
        %v2658 = vpop.f32.mrb[0].mxu0
        %v2659 = vadd.f32 %v1184, %v2658
        %v2660 = vpop.f32.mrb[0].mxu0
        %2661 = vdwg.mxu0
        %vm2662 = vcmp.ge.f32.partialorder %v2649, 0.0
        %vm2663 = vcmp.ge.f32.partialorder %v2654, 0.0
        %vm2664 = vcmp.ge.f32.partialorder %v2659, 0.0
        %v2665 = vmul.f32 %v2649, 0.1
        %v2666 = vmul.f32 %v2654, 0.1
        %v2667 = vmul.f32 %v2659, 0.1
        %v2668 = vsel %vm2662, %v2649, %v2665
        %v2669 = vsel %vm2663, %v2654, %v2666
        %v2670 = vsel %vm2664, %v2659, %v2667
        %v2671 = vpack.c.bf16 %v2669, %v2668
        %v2672 = vpack.c.bf16 %v2670, %v2670
        %2673 = vst.msk [vmem:[#allocation10 + $0x20] sm:$0xff] %vm1291, %v2671
        %v2674 = vld [vmem:[#allocation10 + $0x28] sm:$0xf]
        %v2675 = vsel %vm1295, %v2672, %v2674
        %2676 = vst [vmem:[#allocation10 + $0x28] sm:$0xf] %v2675
        %v2677 = vld [vmem:[%s124 + $0x78] sm:$0xf]
        %v2678 = vld [vmem:[%s124 + $0x7c] sm:$0xf]
        %v2679 = vld [vmem:[%s124 + $0x80] sm:$0xf]
        %v2680 = vld [vmem:[%s124 + $0x84] sm:$0xf]
        %v2681 = vld [vmem:[%s124 + $0x88] sm:$0xf]
        %v2682 = vld [vmem:[%s124 + $0x8c] sm:$0xf]
        %v2683 = vld [vmem:[%s124 + $0x90] sm:$0xf]
        %v2684 = vld [vmem:[%s124 + $0x94] sm:$0xf]
        %v2685 = vld [vmem:[%s124 + $0x98] sm:$0x3]
        %v2695 = vunpack.c.l.b16 %v2677
        %v2696 = vunpack.c.l.b16 %v2678
        %v2697 = vunpack.c.l.b16 %v2679
        %v2698 = vunpack.c.l.b16 %v2680
        %v2699 = vunpack.c.l.b16 %v2681
        %v2700 = vunpack.c.l.b16 %v2682
        %v2701 = vunpack.c.l.b16 %v2683
        %v2702 = vunpack.c.l.b16 %v2684
        %v2703 = vunpack.c.l.b16 %v2685
        %v2704 = vpack.c.b16 %v2696, %v2695
        %v2705 = vpack.c.b16 %v2698, %v2697
        %v2706 = vpack.c.b16 %v2700, %v2699
        %v2707 = vpack.c.b16 %v2702, %v2701
        %v2708 = vpack.c.b16 %v2703, %v2703
        %v2710 = vshrl.u32 %v2704, 16
        %v2712 = vshll.u32 %v2704, 16
        %v2714 = vrot.slane %v2712, 1
        %v2715 = vor.u32 %v2710, %v2714
        %v2717 = vshll.u32 %v2705, 16
        %v2719 = vrot.slane %v2717, 1
        %v2720 = vsel %vm600, %v2715, %v2719
        %v2721 = vshrl.u32 %v2705, 16
        %v2723 = vor.u32 %v2721, %v2719
        %v2725 = vshll.u32 %v2706, 16
        %v2727 = vrot.slane %v2725, 1
        %v2728 = vsel %vm600, %v2723, %v2727
        %v2729 = vshrl.u32 %v2706, 16
        %v2731 = vor.u32 %v2729, %v2727
        %v2733 = vshll.u32 %v2707, 16
        %v2735 = vrot.slane %v2733, 1
        %v2736 = vsel %vm600, %v2731, %v2735
        %v2737 = vshrl.u32 %v2707, 16
        %v2739 = vor.u32 %v2737, %v2735
        %v2741 = vshll.u32 %v2708, 16
        %v2743 = vrot.slane %v2741, 1
        %v2744 = vsel %vm600, %v2739, %v2743
        %v2745 = vshrl.u32 %v2708, 16
        %v2747 = vor.u32 %v2745, %v2743
        %v2749 = vsel %vm640, %v2720, 0
        %v2752 = vsel %vm640, %v2728, 0
        %v2755 = vsel %vm640, %v2736, 0
        %v2758 = vsel %vm640, %v2744, 0
        %v2761 = vsel %vm640, %v2747, 0
        %2763 = vmatprep.subr.bf16.mxu0 0
        %2764 = vmatpush1.bf16.msra.mxu0 %v658
        %2765 = vmatprep.subr.bf16.mxu0 0
        %2766 = vmatpush1.bf16.msra.mxu0 0
        %2767 = vmatprep.subr.bf16.mxu0 0
        %2768 = vmatpush1.bf16.msra.mxu0 0
        %2769 = vmatprep.subr.bf16.mxu0 0
        %2770 = vmatpush1.bf16.msra.mxu0 0
        %2771 = vmatprep.subr.bf16.mxu0 0
        %2772 = vmatpush1.bf16.msra.mxu0 0
        %2773 = vmatprep.subr.bf16.mxu0 0
        %2774 = vmatpush1.bf16.msra.mxu0 0
        %2775 = vmatprep.subr.bf16.mxu0 0
        %2776 = vmatpush1.bf16.msra.mxu0 0
        %2777 = vmatprep.subr.bf16.mxu0 0
        %2778 = vmatpush1.bf16.msra.mxu0 0
        %2779 = vmatprep.subr.bf16.mxu0 0
        %2780 = vmatpush1.bf16.msra.mxu0 0
        %2781 = vmatprep.subr.bf16.mxu0 0
        %2782 = vmatpush1.bf16.msra.mxu0 0
        %2783 = vmatprep.subr.bf16.mxu0 0
        %2784 = vmatpush1.bf16.msra.mxu0 0
        %2785 = vmatprep.subr.bf16.mxu0 0
        %2786 = vmatpush1.bf16.msra.mxu0 0
        %2787 = vmatprep.subr.bf16.mxu0 0
        %2788 = vmatpush1.bf16.msra.mxu0 0
        %2789 = vmatprep.subr.bf16.mxu0 0
        %2790 = vmatpush1.bf16.msra.mxu0 0
        %2791 = vmatprep.subr.bf16.mxu0 0
        %2792 = vmatpush1.bf16.msra.mxu0 0
        %2793 = vmatprep.subr.bf16.mxu0 0
        %2794 = vmatpush1.bf16.msra.mxu0 0
        %2795 = vmatprep.mubr.bf16.mxu0 0
        %2796 = vmatmul.mubr.bf16.gmra.mrb[0].mxu0 %v2749
        %v2797 = vpop.f32.mrb[0].mxu0
        %v2798 = vadd.f32 0.0, %v2797
        %v2799 = vpop.f32.mrb[0].mxu0
        %v2800 = vpop.f32.mrb[0].mxu0
        %v2801 = vadd.f32 0.0, %v2800
        %v2802 = vpop.f32.mrb[0].mxu0
        %2803 = vmatprep.mubr.bf16.mxu0 0
        %2804 = vmatmul.mubr.bf16.gmra.mrb[0].mxu0 %v2752
        %v2805 = vpop.f32.mrb[0].mxu0
        %v2806 = vadd.f32 0.0, %v2805
        %v2807 = vpop.f32.mrb[0].mxu0
        %v2808 = vpop.f32.mrb[0].mxu0
        %v2809 = vadd.f32 0.0, %v2808
        %v2810 = vpop.f32.mrb[0].mxu0
        %2811 = vmatprep.mubr.bf16.mxu0 0
        %2812 = vmatmul.mubr.bf16.gmra.mrb[0].mxu0 %v2755
        %v2813 = vpop.f32.mrb[0].mxu0
        %v2814 = vadd.f32 0.0, %v2813
        %v2815 = vpop.f32.mrb[0].mxu0
        %v2816 = vpop.f32.mrb[0].mxu0
        %v2817 = vadd.f32 0.0, %v2816
        %v2818 = vpop.f32.mrb[0].mxu0
        %2819 = vmatprep.mubr.bf16.mxu0 0
        %2820 = vmatmul.mubr.bf16.gmra.mrb[0].mxu0 %v2758
        %v2821 = vpop.f32.mrb[0].mxu0
        %v2822 = vadd.f32 0.0, %v2821
        %v2823 = vpop.f32.mrb[0].mxu0
        %v2824 = vpop.f32.mrb[0].mxu0
        %v2825 = vadd.f32 0.0, %v2824
        %v2826 = vpop.f32.mrb[0].mxu0
        %2827 = vmatprep.mubr.bf16.mxu0 0
        %2828 = vmatmul.mubr.bf16.gmra.mrb[0].mxu0 %v2761
        %v2829 = vpop.f32.mrb[0].mxu0
        %v2830 = vadd.f32 0.0, %v2829
        %v2831 = vpop.f32.mrb[0].mxu0
        %v2832 = vpop.f32.mrb[0].mxu0
        %v2833 = vpop.f32.mrb[0].mxu0
        %2834 = vdwg.mxu0
        %v2835 = vsel %vm640, %v2704, 0
        %v2837 = vsel %vm640, %v2705, 0
        %v2839 = vsel %vm640, %v2706, 0
        %v2841 = vsel %vm640, %v2707, 0
        %v2843 = vsel %vm640, %v2708, 0
        %2845 = vmatprep.subr.bf16.mxu0 0
        %2846 = vmatpush1.bf16.msra.mxu0 %v743
        %2847 = vmatprep.subr.bf16.mxu0 0
        %2848 = vmatpush1.bf16.msra.mxu0 0
        %2849 = vmatprep.subr.bf16.mxu0 0
        %2850 = vmatpush1.bf16.msra.mxu0 0
        %2851 = vmatprep.subr.bf16.mxu0 0
        %2852 = vmatpush1.bf16.msra.mxu0 0
        %2853 = vmatprep.subr.bf16.mxu0 0
        %2854 = vmatpush1.bf16.msra.mxu0 0
        %2855 = vmatprep.subr.bf16.mxu0 0
        %2856 = vmatpush1.bf16.msra.mxu0 0
        %2857 = vmatprep.subr.bf16.mxu0 0
        %2858 = vmatpush1.bf16.msra.mxu0 0
        %2859 = vmatprep.subr.bf16.mxu0 0
        %2860 = vmatpush1.bf16.msra.mxu0 0
        %2861 = vmatprep.subr.bf16.mxu0 0
        %2862 = vmatpush1.bf16.msra.mxu0 0
        %2863 = vmatprep.subr.bf16.mxu0 0
        %2864 = vmatpush1.bf16.msra.mxu0 0
        %2865 = vmatprep.subr.bf16.mxu0 0
        %2866 = vmatpush1.bf16.msra.mxu0 0
        %2867 = vmatprep.subr.bf16.mxu0 0
        %2868 = vmatpush1.bf16.msra.mxu0 0
        %2869 = vmatprep.subr.bf16.mxu0 0
        %2870 = vmatpush1.bf16.msra.mxu0 0
        %2871 = vmatprep.subr.bf16.mxu0 0
        %2872 = vmatpush1.bf16.msra.mxu0 0
        %2873 = vmatprep.subr.bf16.mxu0 0
        %2874 = vmatpush1.bf16.msra.mxu0 0
        %2875 = vmatprep.subr.bf16.mxu0 0
        %2876 = vmatpush1.bf16.msra.mxu0 0
        %2877 = vmatprep.mubr.bf16.mxu0 0
        %2878 = vmatmul.mubr.bf16.gmra.mrb[0].mxu0 %v2835
        %v2879 = vpop.f32.mrb[0].mxu0
        %v2880 = vadd.f32 %v2798, %v2879
        %v2881 = vpop.f32.mrb[0].mxu0
        %v2882 = vpop.f32.mrb[0].mxu0
        %v2883 = vadd.f32 %v2801, %v2882
        %v2884 = vpop.f32.mrb[0].mxu0
        %2885 = vmatprep.mubr.bf16.mxu0 0
        %2886 = vmatmul.mubr.bf16.gmra.mrb[0].mxu0 %v2837
        %v2887 = vpop.f32.mrb[0].mxu0
        %v2888 = vadd.f32 %v2806, %v2887
        %v2889 = vpop.f32.mrb[0].mxu0
        %v2890 = vpop.f32.mrb[0].mxu0
        %v2891 = vadd.f32 %v2809, %v2890
        %v2892 = vpop.f32.mrb[0].mxu0
        %2893 = vmatprep.mubr.bf16.mxu0 0
        %2894 = vmatmul.mubr.bf16.gmra.mrb[0].mxu0 %v2839
        %v2895 = vpop.f32.mrb[0].mxu0
        %v2896 = vadd.f32 %v2814, %v2895
        %v2897 = vpop.f32.mrb[0].mxu0
        %v2898 = vpop.f32.mrb[0].mxu0
        %v2899 = vadd.f32 %v2817, %v2898
        %v2900 = vpop.f32.mrb[0].mxu0
        %2901 = vmatprep.mubr.bf16.mxu0 0
        %2902 = vmatmul.mubr.bf16.gmra.mrb[0].mxu0 %v2841
        %v2903 = vpop.f32.mrb[0].mxu0
        %v2904 = vadd.f32 %v2822, %v2903
        %v2905 = vpop.f32.mrb[0].mxu0
        %v2906 = vpop.f32.mrb[0].mxu0
        %v2907 = vadd.f32 %v2825, %v2906
        %v2908 = vpop.f32.mrb[0].mxu0
        %2909 = vmatprep.mubr.bf16.mxu0 0
        %2910 = vmatmul.mubr.bf16.gmra.mrb[0].mxu0 %v2843
        %v2911 = vpop.f32.mrb[0].mxu0
        %v2912 = vadd.f32 %v2830, %v2911
        %v2913 = vpop.f32.mrb[0].mxu0
        %v2914 = vpop.f32.mrb[0].mxu0
        %v2915 = vpop.f32.mrb[0].mxu0
        %2916 = vdwg.mxu0
        %v2917 = vld [vmem:[%s124 + $0x78] sm:$0xe]
        %v2918 = vld [vmem:[%s124 + $0x98] sm:$0x7]
        %v2921 = vunpack.c.l.b16 %v2917
        %v2922 = vunpack.c.l.b16 %v2918
        %v2923 = vpack.c.b16 %v2696, %v2921
        %v2924 = vpack.c.b16 %v2922, %v2922
        %v2925 = vrot.slane %v2923, 1
        %v2926 = vrot.slane %v2705, 1
        %v2927 = vsel %vm825, %v2925, %v2926
        %v2928 = vrot.slane %v2706, 1
        %v2929 = vsel %vm825, %v2926, %v2928
        %v2930 = vrot.slane %v2707, 1
        %v2931 = vsel %vm825, %v2928, %v2930
        %v2932 = vrot.slane %v2924, 1
        %v2933 = vsel %vm825, %v2930, %v2932
        %v2935 = vsel %vm640, %v2927, 0
        %v2938 = vsel %vm640, %v2929, 0
        %v2941 = vsel %vm640, %v2931, 0
        %v2944 = vsel %vm640, %v2933, 0
        %v2947 = vsel %vm640, %v2932, 0
        %2949 = vmatprep.subr.bf16.mxu0 0
        %2950 = vmatpush1.bf16.msra.mxu0 %v851
        %2951 = vmatprep.subr.bf16.mxu0 0
        %2952 = vmatpush1.bf16.msra.mxu0 0
        %2953 = vmatprep.subr.bf16.mxu0 0
        %2954 = vmatpush1.bf16.msra.mxu0 0
        %2955 = vmatprep.subr.bf16.mxu0 0
        %2956 = vmatpush1.bf16.msra.mxu0 0
        %2957 = vmatprep.subr.bf16.mxu0 0
        %2958 = vmatpush1.bf16.msra.mxu0 0
        %2959 = vmatprep.subr.bf16.mxu0 0
        %2960 = vmatpush1.bf16.msra.mxu0 0
        %2961 = vmatprep.subr.bf16.mxu0 0
        %2962 = vmatpush1.bf16.msra.mxu0 0
        %2963 = vmatprep.subr.bf16.mxu0 0
        %2964 = vmatpush1.bf16.msra.mxu0 0
        %2965 = vmatprep.subr.bf16.mxu0 0
        %2966 = vmatpush1.bf16.msra.mxu0 0
        %2967 = vmatprep.subr.bf16.mxu0 0
        %2968 = vmatpush1.bf16.msra.mxu0 0
        %2969 = vmatprep.subr.bf16.mxu0 0
        %2970 = vmatpush1.bf16.msra.mxu0 0
        %2971 = vmatprep.subr.bf16.mxu0 0
        %2972 = vmatpush1.bf16.msra.mxu0 0
        %2973 = vmatprep.subr.bf16.mxu0 0
        %2974 = vmatpush1.bf16.msra.mxu0 0
        %2975 = vmatprep.subr.bf16.mxu0 0
        %2976 = vmatpush1.bf16.msra.mxu0 0
        %2977 = vmatprep.subr.bf16.mxu0 0
        %2978 = vmatpush1.bf16.msra.mxu0 0
        %2979 = vmatprep.subr.bf16.mxu0 0
        %2980 = vmatpush1.bf16.msra.mxu0 0
        %2981 = vmatprep.mubr.bf16.mxu0 0
        %2982 = vmatmul.mubr.bf16.gmra.mrb[0].mxu0 %v2935
        %v2983 = vpop.f32.mrb[0].mxu0
        %v2984 = vadd.f32 0.0, %v2983
        %v2985 = vpop.f32.mrb[0].mxu0
        %v2986 = vpop.f32.mrb[0].mxu0
        %v2987 = vadd.f32 0.0, %v2986
        %v2988 = vpop.f32.mrb[0].mxu0
        %2989 = vmatprep.mubr.bf16.mxu0 0
        %2990 = vmatmul.mubr.bf16.gmra.mrb[0].mxu0 %v2938
        %v2991 = vpop.f32.mrb[0].mxu0
        %v2992 = vadd.f32 0.0, %v2991
        %v2993 = vpop.f32.mrb[0].mxu0
        %v2994 = vpop.f32.mrb[0].mxu0
        %v2995 = vadd.f32 0.0, %v2994
        %v2996 = vpop.f32.mrb[0].mxu0
        %2997 = vmatprep.mubr.bf16.mxu0 0
        %2998 = vmatmul.mubr.bf16.gmra.mrb[0].mxu0 %v2941
        %v2999 = vpop.f32.mrb[0].mxu0
        %v3000 = vadd.f32 0.0, %v2999
        %v3001 = vpop.f32.mrb[0].mxu0
        %v3002 = vpop.f32.mrb[0].mxu0
        %v3003 = vadd.f32 0.0, %v3002
        %v3004 = vpop.f32.mrb[0].mxu0
        %3005 = vmatprep.mubr.bf16.mxu0 0
        %3006 = vmatmul.mubr.bf16.gmra.mrb[0].mxu0 %v2944
        %v3007 = vpop.f32.mrb[0].mxu0
        %v3008 = vadd.f32 0.0, %v3007
        %v3009 = vpop.f32.mrb[0].mxu0
        %v3010 = vpop.f32.mrb[0].mxu0
        %v3011 = vadd.f32 0.0, %v3010
        %v3012 = vpop.f32.mrb[0].mxu0
        %3013 = vmatprep.mubr.bf16.mxu0 0
        %3014 = vmatmul.mubr.bf16.gmra.mrb[0].mxu0 %v2947
        %v3015 = vpop.f32.mrb[0].mxu0
        %v3016 = vadd.f32 0.0, %v3015
        %v3017 = vpop.f32.mrb[0].mxu0
        %v3018 = vpop.f32.mrb[0].mxu0
        %v3019 = vpop.f32.mrb[0].mxu0
        %3020 = vdwg.mxu0
        %v3021 = vadd.f32 %v2880, %v2984
        %v3022 = vadd.f32 %v2883, %v2987
        %v3023 = vadd.f32 %v2888, %v2992
        %v3024 = vadd.f32 %v2891, %v2995
        %v3025 = vadd.f32 %v2896, %v3000
        %v3026 = vadd.f32 %v2899, %v3003
        %v3027 = vadd.f32 %v2904, %v3008
        %v3028 = vadd.f32 %v2907, %v3011
        %v3029 = vadd.f32 %v2912, %v3016
        %v3031 = vshrl.u32 %v2923, 16
        %v3033 = vrot.slane %v3031, 1
        %v3034 = vshll.u32 %v2923, 16
        %v3036 = vrot.slane %v3034, 2
        %v3037 = vor.u32 %v3033, %v3036
        %v3038 = vrot.slane %v2721, 1
        %v3039 = vrot.slane %v2717, 2
        %v3040 = vor.u32 %v3038, %v3039
        %v3041 = vsel %vm934, %v3037, %v3040
        %v3042 = vrot.slane %v2729, 1
        %v3043 = vrot.slane %v2725, 2
        %v3044 = vor.u32 %v3042, %v3043
        %v3045 = vsel %vm934, %v3040, %v3044
        %v3046 = vrot.slane %v2737, 1
        %v3047 = vrot.slane %v2733, 2
        %v3048 = vor.u32 %v3046, %v3047
        %v3049 = vsel %vm934, %v3044, %v3048
        %v3051 = vshrl.u32 %v2924, 16
        %v3053 = vrot.slane %v3051, 1
        %v3054 = vshll.u32 %v2924, 16
        %v3056 = vrot.slane %v3054, 2
        %v3057 = vor.u32 %v3053, %v3056
        %v3058 = vsel %vm934, %v3048, %v3057
        %v3060 = vsel %vm640, %v3041, 0
        %v3063 = vsel %vm640, %v3045, 0
        %v3066 = vsel %vm640, %v3049, 0
        %v3069 = vsel %vm640, %v3058, 0
        %v3072 = vsel %vm640, %v3057, 0
        %3074 = vmatprep.subr.bf16.mxu0 0
        %3075 = vmatpush1.bf16.msra.mxu0 %v980
        %3076 = vmatprep.subr.bf16.mxu0 0
        %3077 = vmatpush1.bf16.msra.mxu0 0
        %3078 = vmatprep.subr.bf16.mxu0 0
        %3079 = vmatpush1.bf16.msra.mxu0 0
        %3080 = vmatprep.subr.bf16.mxu0 0
        %3081 = vmatpush1.bf16.msra.mxu0 0
        %3082 = vmatprep.subr.bf16.mxu0 0
        %3083 = vmatpush1.bf16.msra.mxu0 0
        %3084 = vmatprep.subr.bf16.mxu0 0
        %3085 = vmatpush1.bf16.msra.mxu0 0
        %3086 = vmatprep.subr.bf16.mxu0 0
        %3087 = vmatpush1.bf16.msra.mxu0 0
        %3088 = vmatprep.subr.bf16.mxu0 0
        %3089 = vmatpush1.bf16.msra.mxu0 0
        %3090 = vmatprep.subr.bf16.mxu0 0
        %3091 = vmatpush1.bf16.msra.mxu0 0
        %3092 = vmatprep.subr.bf16.mxu0 0
        %3093 = vmatpush1.bf16.msra.mxu0 0
        %3094 = vmatprep.subr.bf16.mxu0 0
        %3095 = vmatpush1.bf16.msra.mxu0 0
        %3096 = vmatprep.subr.bf16.mxu0 0
        %3097 = vmatpush1.bf16.msra.mxu0 0
        %3098 = vmatprep.subr.bf16.mxu0 0
        %3099 = vmatpush1.bf16.msra.mxu0 0
        %3100 = vmatprep.subr.bf16.mxu0 0
        %3101 = vmatpush1.bf16.msra.mxu0 0
        %3102 = vmatprep.subr.bf16.mxu0 0
        %3103 = vmatpush1.bf16.msra.mxu0 0
        %3104 = vmatprep.subr.bf16.mxu0 0
        %3105 = vmatpush1.bf16.msra.mxu0 0
        %3106 = vmatprep.mubr.bf16.mxu0 0
        %3107 = vmatmul.mubr.bf16.gmra.mrb[0].mxu0 %v3060
        %v3108 = vpop.f32.mrb[0].mxu0
        %v3109 = vadd.f32 0.0, %v3108
        %v3110 = vpop.f32.mrb[0].mxu0
        %v3111 = vpop.f32.mrb[0].mxu0
        %v3112 = vadd.f32 0.0, %v3111
        %v3113 = vpop.f32.mrb[0].mxu0
        %3114 = vmatprep.mubr.bf16.mxu0 0
        %3115 = vmatmul.mubr.bf16.gmra.mrb[0].mxu0 %v3063
        %v3116 = vpop.f32.mrb[0].mxu0
        %v3117 = vadd.f32 0.0, %v3116
        %v3118 = vpop.f32.mrb[0].mxu0
        %v3119 = vpop.f32.mrb[0].mxu0
        %v3120 = vadd.f32 0.0, %v3119
        %v3121 = vpop.f32.mrb[0].mxu0
        %3122 = vmatprep.mubr.bf16.mxu0 0
        %3123 = vmatmul.mubr.bf16.gmra.mrb[0].mxu0 %v3066
        %v3124 = vpop.f32.mrb[0].mxu0
        %v3125 = vadd.f32 0.0, %v3124
        %v3126 = vpop.f32.mrb[0].mxu0
        %v3127 = vpop.f32.mrb[0].mxu0
        %v3128 = vadd.f32 0.0, %v3127
        %v3129 = vpop.f32.mrb[0].mxu0
        %3130 = vmatprep.mubr.bf16.mxu0 0
        %3131 = vmatmul.mubr.bf16.gmra.mrb[0].mxu0 %v3069
        %v3132 = vpop.f32.mrb[0].mxu0
        %v3133 = vadd.f32 0.0, %v3132
        %v3134 = vpop.f32.mrb[0].mxu0
        %v3135 = vpop.f32.mrb[0].mxu0
        %v3136 = vadd.f32 0.0, %v3135
        %v3137 = vpop.f32.mrb[0].mxu0
        %3138 = vmatprep.mubr.bf16.mxu0 0
        %3139 = vmatmul.mubr.bf16.gmra.mrb[0].mxu0 %v3072
        %v3140 = vpop.f32.mrb[0].mxu0
        %v3141 = vadd.f32 0.0, %v3140
        %v3142 = vpop.f32.mrb[0].mxu0
        %v3143 = vpop.f32.mrb[0].mxu0
        %v3144 = vpop.f32.mrb[0].mxu0
        %3145 = vdwg.mxu0
        %v3146 = vadd.f32 %v3021, %v3109
        %v3147 = vadd.f32 %v3022, %v3112
        %v3148 = vadd.f32 %v3023, %v3117
        %v3149 = vadd.f32 %v3024, %v3120
        %v3150 = vadd.f32 %v3025, %v3125
        %v3151 = vadd.f32 %v3026, %v3128
        %v3152 = vadd.f32 %v3027, %v3133
        %v3153 = vadd.f32 %v3028, %v3136
        %v3154 = vadd.f32 %v3029, %v3141
        %v3155 = vld [vmem:[%s124 + $0x78] sm:$0xc]
        %v3156 = vld [vmem:[%s124 + $0x98] sm:$0xf]
        %v3159 = vunpack.c.l.b16 %v3155
        %v3160 = vunpack.c.l.b16 %v3156
        %v3161 = vpack.c.b16 %v2696, %v3159
        %v3162 = vpack.c.b16 %v3160, %v3160
        %v3163 = vrot.slane %v3161, 2
        %v3164 = vrot.slane %v2705, 2
        %v3165 = vsel %vm1071, %v3163, %v3164
        %v3166 = vrot.slane %v2706, 2
        %v3167 = vsel %vm1071, %v3164, %v3166
        %v3168 = vrot.slane %v2707, 2
        %v3169 = vsel %vm1071, %v3166, %v3168
        %v3170 = vrot.slane %v3162, 2
        %v3171 = vsel %vm1071, %v3168, %v3170
        %v3173 = vsel %vm640, %v3165, 0
        %v3176 = vsel %vm640, %v3167, 0
        %v3179 = vsel %vm640, %v3169, 0
        %v3182 = vsel %vm640, %v3171, 0
        %v3185 = vsel %vm640, %v3170, 0
        %3187 = vmatprep.subr.bf16.mxu0 0
        %3188 = vmatpush1.bf16.msra.mxu0 %v1097
        %3189 = vmatprep.subr.bf16.mxu0 0
        %3190 = vmatpush1.bf16.msra.mxu0 0
        %3191 = vmatprep.subr.bf16.mxu0 0
        %3192 = vmatpush1.bf16.msra.mxu0 0
        %3193 = vmatprep.subr.bf16.mxu0 0
        %3194 = vmatpush1.bf16.msra.mxu0 0
        %3195 = vmatprep.subr.bf16.mxu0 0
        %3196 = vmatpush1.bf16.msra.mxu0 0
        %3197 = vmatprep.subr.bf16.mxu0 0
        %3198 = vmatpush1.bf16.msra.mxu0 0
        %3199 = vmatprep.subr.bf16.mxu0 0
        %3200 = vmatpush1.bf16.msra.mxu0 0
        %3201 = vmatprep.subr.bf16.mxu0 0
        %3202 = vmatpush1.bf16.msra.mxu0 0
        %3203 = vmatprep.subr.bf16.mxu0 0
        %3204 = vmatpush1.bf16.msra.mxu0 0
        %3205 = vmatprep.subr.bf16.mxu0 0
        %3206 = vmatpush1.bf16.msra.mxu0 0
        %3207 = vmatprep.subr.bf16.mxu0 0
        %3208 = vmatpush1.bf16.msra.mxu0 0
        %3209 = vmatprep.subr.bf16.mxu0 0
        %3210 = vmatpush1.bf16.msra.mxu0 0
        %3211 = vmatprep.subr.bf16.mxu0 0
        %3212 = vmatpush1.bf16.msra.mxu0 0
        %3213 = vmatprep.subr.bf16.mxu0 0
        %3214 = vmatpush1.bf16.msra.mxu0 0
        %3215 = vmatprep.subr.bf16.mxu0 0
        %3216 = vmatpush1.bf16.msra.mxu0 0
        %3217 = vmatprep.subr.bf16.mxu0 0
        %3218 = vmatpush1.bf16.msra.mxu0 0
        %3219 = vmatprep.mubr.bf16.mxu0 0
        %3220 = vmatmul.mubr.bf16.gmra.mrb[0].mxu0 %v3173
        %v3221 = vpop.f32.mrb[0].mxu0
        %v3222 = vadd.f32 0.0, %v3221
        %v3223 = vpop.f32.mrb[0].mxu0
        %v3224 = vpop.f32.mrb[0].mxu0
        %v3225 = vadd.f32 0.0, %v3224
        %v3226 = vpop.f32.mrb[0].mxu0
        %3227 = vmatprep.mubr.bf16.mxu0 0
        %3228 = vmatmul.mubr.bf16.gmra.mrb[0].mxu0 %v3176
        %v3229 = vpop.f32.mrb[0].mxu0
        %v3230 = vadd.f32 0.0, %v3229
        %v3231 = vpop.f32.mrb[0].mxu0
        %v3232 = vpop.f32.mrb[0].mxu0
        %v3233 = vadd.f32 0.0, %v3232
        %v3234 = vpop.f32.mrb[0].mxu0
        %3235 = vmatprep.mubr.bf16.mxu0 0
        %3236 = vmatmul.mubr.bf16.gmra.mrb[0].mxu0 %v3179
        %v3237 = vpop.f32.mrb[0].mxu0
        %v3238 = vadd.f32 0.0, %v3237
        %v3239 = vpop.f32.mrb[0].mxu0
        %v3240 = vpop.f32.mrb[0].mxu0
        %v3241 = vadd.f32 0.0, %v3240
        %v3242 = vpop.f32.mrb[0].mxu0
        %3243 = vmatprep.mubr.bf16.mxu0 0
        %3244 = vmatmul.mubr.bf16.gmra.mrb[0].mxu0 %v3182
        %v3245 = vpop.f32.mrb[0].mxu0
        %v3246 = vadd.f32 0.0, %v3245
        %v3247 = vpop.f32.mrb[0].mxu0
        %v3248 = vpop.f32.mrb[0].mxu0
        %v3249 = vadd.f32 0.0, %v3248
        %v3250 = vpop.f32.mrb[0].mxu0
        %3251 = vmatprep.mubr.bf16.mxu0 0
        %3252 = vmatmul.mubr.bf16.gmra.mrb[0].mxu0 %v3185
        %v3253 = vpop.f32.mrb[0].mxu0
        %v3254 = vadd.f32 0.0, %v3253
        %v3255 = vpop.f32.mrb[0].mxu0
        %v3256 = vpop.f32.mrb[0].mxu0
        %v3257 = vpop.f32.mrb[0].mxu0
        %3258 = vdwg.mxu0
        %v3259 = vadd.f32 %v3146, %v3222
        %v3260 = vadd.f32 %v3147, %v3225
        %v3261 = vadd.f32 %v3148, %v3230
        %v3262 = vadd.f32 %v3149, %v3233
        %v3263 = vadd.f32 %v3150, %v3238
        %v3264 = vadd.f32 %v3151, %v3241
        %v3265 = vadd.f32 %v3152, %v3246
        %v3266 = vadd.f32 %v3153, %v3249
        %v3267 = vadd.f32 %v3154, %v3254
        %v3269 = vsel %vm1196, %v3267, 0
        %3271 = vmatprep.subr.mxu0 0.0
        %3272 = vmatpush1.msra.mxu0 %v3259
        %3273 = vmatprep.subr.mxu0 0.0
        %3274 = vmatpush1.msra.mxu0 %v3260
        %3275 = vmatprep.subr.mxu0 0.0
        %3276 = vmatpush1.msra.mxu0 %v3261
        %3277 = vmatprep.subr.mxu0 0.0
        %3278 = vmatpush1.msra.mxu0 %v3262
        %3279 = vmatprep.subr.mxu0 0.0
        %3280 = vmatpush1.msra.mxu0 %v3263
        %3281 = vmatprep.subr.mxu0 0.0
        %3282 = vmatpush1.msra.mxu0 %v3264
        %3283 = vmatprep.subr.mxu0 0.0
        %3284 = vmatpush1.msra.mxu0 %v3265
        %3285 = vmatprep.subr.mxu0 0.0
        %3286 = vmatpush1.msra.mxu0 %v3266
        %3287 = vmatprep.subr.mxu0 0.0
        %3288 = vmatpush1.msra.mxu0 %v3269
        %3289 = vmatprep.subr.mxu0 0.0
        %3290 = vmatpush1.msra.mxu0 0.0
        %3291 = vmatprep.subr.mxu0 0.0
        %3292 = vmatpush1.msra.mxu0 0.0
        %3293 = vmatprep.subr.mxu0 0.0
        %3294 = vmatpush1.msra.mxu0 0.0
        %3295 = vmatprep.subr.mxu0 0.0
        %3296 = vmatpush1.msra.mxu0 0.0
        %3297 = vmatprep.subr.mxu0 0.0
        %3298 = vmatpush1.msra.mxu0 0.0
        %3299 = vmatprep.subr.mxu0 0.0
        %3300 = vmatpush1.msra.mxu0 0.0
        %3301 = vmatprep.subr.mxu0 0.0
        %3302 = vmatpush1.msra.mxu0 0.0
        %3303 = vmatprep.subr.mxu0 0.0
        %3304 = vmatpush1.msra.mxu0 0.0
        %3305 = vmatprep.subr.mxu0 0.0
        %3306 = vmatpush1.msra.mxu0 0.0
        %3307 = vmatprep.subr.mxu0 0.0
        %3308 = vmatpush1.msra.mxu0 0.0
        %3309 = vmatprep.subr.mxu0 0.0
        %3310 = vmatpush1.msra.mxu0 0.0
        %3311 = vmatprep.subr.mxu0 0.0
        %3312 = vmatpush1.msra.mxu0 0.0
        %3313 = vmatprep.subr.mxu0 0.0
        %3314 = vmatpush1.msra.mxu0 0.0
        %3315 = vmatprep.subr.mxu0 0.0
        %3316 = vmatpush1.msra.mxu0 0.0
        %3317 = vmatprep.subr.mxu0 0.0
        %3318 = vmatpush1.msra.mxu0 0.0
        %3319 = vmatprep.subr.mxu0 0.0
        %3320 = vmatpush1.msra.mxu0 0.0
        %3321 = vmatprep.subr.mxu0 0.0
        %3322 = vmatpush1.msra.mxu0 0.0
        %3323 = vmatprep.subr.mxu0 0.0
        %3324 = vmatpush1.msra.mxu0 0.0
        %3325 = vmatprep.subr.mxu0 0.0
        %3326 = vmatpush1.msra.mxu0 0.0
        %3327 = vmatprep.subr.mxu0 0.0
        %3328 = vmatpush1.msra.mxu0 0.0
        %3329 = vmatprep.subr.mxu0 0.0
        %3330 = vmatpush1.msra.mxu0 0.0
        %3331 = vmatprep.subr.mxu0 0.0
        %3332 = vmatpush1.msra.mxu0 0.0
        %3333 = vmatprep.subr.mxu0 0.0
        %3334 = vmatpush1.msra.mxu0 0.0
        %3335 = vmatprep.mubr.f32.mxu0 0.0
        %3336 = vmatmul.mubr.f32.gmra.mrb[0].mxu0 %v1188
        %v3337 = vpop.f32.mrb[0].mxu0
        %v3338 = vadd.f32 %v1184, %v3337
        %v3339 = vpop.f32.mrb[0].mxu0
        %3340 = vmatprep.mubr.f32.mxu0 0.0
        %3341 = vmatmul.mubr.f32.gmra.mrb[0].mxu0 %v1191
        %v3342 = vpop.f32.mrb[0].mxu0
        %v3343 = vadd.f32 %v1184, %v3342
        %v3344 = vpop.f32.mrb[0].mxu0
        %3345 = vmatprep.mubr.f32.mxu0 0.0
        %3346 = vmatmul.mubr.f32.gmra.mrb[0].mxu0 %v1194
        %v3347 = vpop.f32.mrb[0].mxu0
        %v3348 = vadd.f32 %v1184, %v3347
        %v3349 = vpop.f32.mrb[0].mxu0
        %3350 = vdwg.mxu0
        %vm3351 = vcmp.ge.f32.partialorder %v3338, 0.0
        %vm3352 = vcmp.ge.f32.partialorder %v3343, 0.0
        %vm3353 = vcmp.ge.f32.partialorder %v3348, 0.0
        %v3354 = vmul.f32 %v3338, 0.1
        %v3355 = vmul.f32 %v3343, 0.1
        %v3356 = vmul.f32 %v3348, 0.1
        %v3357 = vsel %vm3351, %v3338, %v3354
        %v3358 = vsel %vm3352, %v3343, %v3355
        %v3359 = vsel %vm3353, %v3348, %v3356
        %v3360 = vpack.c.bf16 %v3358, %v3357
        %v3361 = vpack.c.bf16 %v3359, %v3359
        %3362 = vst.msk [vmem:[#allocation10 + $0x30] sm:$0xff] %vm1291, %v3360
        %v3363 = vld [vmem:[#allocation10 + $0x38] sm:$0xf]
        %v3364 = vsel %vm1295, %v3361, %v3363
        %3365 = vst [vmem:[#allocation10 + $0x38] sm:$0xf] %v3364
        %v3366 = vld [vmem:[#allocation3] sm:$0xff]
        %s3367 = scalar_lea.vmem [#allocation3], 8
        %v3368 = vld [vmem:[%s3367] sm:$0xff]
        %s3369 = scalar_lea.vmem [#allocation3], 16
        %v3370 = vld [vmem:[%s3369] sm:$0xff]
        %s3371 = scalar_lea.vmem [#allocation3], 24
        %v3372 = vld [vmem:[%s3371] sm:$0xff]
        %s3373 = scalar_lea.vmem [#allocation3], 32
        %v3374 = vld [vmem:[%s3373] sm:$0xff]
        %v3375 = vld [vmem:[#allocation7] sm:$0x1]
        %v3376 = vld [vmem:[#allocation10] sm:$0xff]
        %v3377 = vld [vmem:[#allocation10 + $0x8] sm:$0x3]
        %v3379 = vshrl.u32 %v3376, 16
        %v3381 = vshll.u32 %v3376, 16
        %v3383 = vrot.slane %v3381, 1
        %v3384 = vor.u32 %v3379, %v3383
        %v3386 = vshll.u32 %v3377, 16
        %v3388 = vrot.slane %v3386, 1
        %v3389 = vsel %vm600, %v3384, %v3388
        %v3390 = vshrl.u32 %v3377, 16
        %v3392 = vor.u32 %v3390, %v3388
        %v3394 = vsel %vm1291, %v3389, 0
        %v3397 = vsel %vm1291, %v3392, 0
        %3399 = vmatprep.subr.bf16.mxu0 0
        %3400 = vmatpush1.bf16.msra.mxu0 %v3368
        %3401 = vmatprep.subr.bf16.mxu0 0
        %3402 = vmatpush1.bf16.msra.mxu0 0
        %3403 = vmatprep.subr.bf16.mxu0 0
        %3404 = vmatpush1.bf16.msra.mxu0 0
        %3405 = vmatprep.subr.bf16.mxu0 0
        %3406 = vmatpush1.bf16.msra.mxu0 0
        %3407 = vmatprep.subr.bf16.mxu0 0
        %3408 = vmatpush1.bf16.msra.mxu0 0
        %3409 = vmatprep.subr.bf16.mxu0 0
        %3410 = vmatpush1.bf16.msra.mxu0 0
        %3411 = vmatprep.subr.bf16.mxu0 0
        %3412 = vmatpush1.bf16.msra.mxu0 0
        %3413 = vmatprep.subr.bf16.mxu0 0
        %3414 = vmatpush1.bf16.msra.mxu0 0
        %3415 = vmatprep.subr.bf16.mxu0 0
        %3416 = vmatpush1.bf16.msra.mxu0 0
        %3417 = vmatprep.subr.bf16.mxu0 0
        %3418 = vmatpush1.bf16.msra.mxu0 0
        %3419 = vmatprep.subr.bf16.mxu0 0
        %3420 = vmatpush1.bf16.msra.mxu0 0
        %3421 = vmatprep.subr.bf16.mxu0 0
        %3422 = vmatpush1.bf16.msra.mxu0 0
        %3423 = vmatprep.subr.bf16.mxu0 0
        %3424 = vmatpush1.bf16.msra.mxu0 0
        %3425 = vmatprep.subr.bf16.mxu0 0
        %3426 = vmatpush1.bf16.msra.mxu0 0
        %3427 = vmatprep.subr.bf16.mxu0 0
        %3428 = vmatpush1.bf16.msra.mxu0 0
        %3429 = vmatprep.subr.bf16.mxu0 0
        %3430 = vmatpush1.bf16.msra.mxu0 0
        %3431 = vmatprep.mubr.bf16.mxu0 0
        %3432 = vmatmul.mubr.bf16.gmra.mrb[0].mxu0 %v3394
        %v3433 = vpop.f32.mrb[0].mxu0
        %v3434 = vadd.f32 0.0, %v3433
        %v3435 = vpop.f32.mrb[0].mxu0
        %v3436 = vpop.f32.mrb[0].mxu0
        %v3437 = vadd.f32 0.0, %v3436
        %v3438 = vpop.f32.mrb[0].mxu0
        %3439 = vmatprep.mubr.bf16.mxu0 0
        %3440 = vmatmul.mubr.bf16.gmra.mrb[0].mxu0 %v3397
        %v3441 = vpop.f32.mrb[0].mxu0
        %v3442 = vadd.f32 0.0, %v3441
        %v3443 = vpop.f32.mrb[0].mxu0
        %v3444 = vpop.f32.mrb[0].mxu0
        %v3445 = vpop.f32.mrb[0].mxu0
        %3446 = vdwg.mxu0
        %v3447 = vsel %vm1291, %v3376, 0
        %v3449 = vsel %vm1291, %v3377, 0
        %3451 = vmatprep.subr.bf16.mxu0 0
        %3452 = vmatpush1.bf16.msra.mxu0 %v3366
        %3453 = vmatprep.subr.bf16.mxu0 0
        %3454 = vmatpush1.bf16.msra.mxu0 0
        %3455 = vmatprep.subr.bf16.mxu0 0
        %3456 = vmatpush1.bf16.msra.mxu0 0
        %3457 = vmatprep.subr.bf16.mxu0 0
        %3458 = vmatpush1.bf16.msra.mxu0 0
        %3459 = vmatprep.subr.bf16.mxu0 0
        %3460 = vmatpush1.bf16.msra.mxu0 0
        %3461 = vmatprep.subr.bf16.mxu0 0
        %3462 = vmatpush1.bf16.msra.mxu0 0
        %3463 = vmatprep.subr.bf16.mxu0 0
        %3464 = vmatpush1.bf16.msra.mxu0 0
        %3465 = vmatprep.subr.bf16.mxu0 0
        %3466 = vmatpush1.bf16.msra.mxu0 0
        %3467 = vmatprep.subr.bf16.mxu0 0
        %3468 = vmatpush1.bf16.msra.mxu0 0
        %3469 = vmatprep.subr.bf16.mxu0 0
        %3470 = vmatpush1.bf16.msra.mxu0 0
        %3471 = vmatprep.subr.bf16.mxu0 0
        %3472 = vmatpush1.bf16.msra.mxu0 0
        %3473 = vmatprep.subr.bf16.mxu0 0
        %3474 = vmatpush1.bf16.msra.mxu0 0
        %3475 = vmatprep.subr.bf16.mxu0 0
        %3476 = vmatpush1.bf16.msra.mxu0 0
        %3477 = vmatprep.subr.bf16.mxu0 0
        %3478 = vmatpush1.bf16.msra.mxu0 0
        %3479 = vmatprep.subr.bf16.mxu0 0
        %3480 = vmatpush1.bf16.msra.mxu0 0
        %3481 = vmatprep.subr.bf16.mxu0 0
        %3482 = vmatpush1.bf16.msra.mxu0 0
        %3483 = vmatprep.mubr.bf16.mxu0 0
        %3484 = vmatmul.mubr.bf16.gmra.mrb[0].mxu0 %v3447
        %v3485 = vpop.f32.mrb[0].mxu0
        %v3486 = vadd.f32 %v3434, %v3485
        %v3487 = vpop.f32.mrb[0].mxu0
        %v3488 = vpop.f32.mrb[0].mxu0
        %v3489 = vadd.f32 %v3437, %v3488
        %v3490 = vpop.f32.mrb[0].mxu0
        %3491 = vmatprep.mubr.bf16.mxu0 0
        %3492 = vmatmul.mubr.bf16.gmra.mrb[0].mxu0 %v3449
        %v3493 = vpop.f32.mrb[0].mxu0
        %v3494 = vadd.f32 %v3442, %v3493
        %v3495 = vpop.f32.mrb[0].mxu0
        %v3496 = vpop.f32.mrb[0].mxu0
        %v3497 = vpop.f32.mrb[0].mxu0
        %3498 = vdwg.mxu0
        %v3499 = vld [vmem:[#allocation10] sm:$0xfe]
        %v3500 = vld [vmem:[#allocation10 + $0x8] sm:$0x7]
        %v3503 = vrot.slane %v3499, 1
        %v3504 = vrot.slane %v3500, 1
        %v3505 = vsel %vm825, %v3503, %v3504
        %v3507 = vsel %vm1291, %v3505, 0
        %v3510 = vsel %vm1291, %v3504, 0
        %3512 = vmatprep.subr.bf16.mxu0 0
        %3513 = vmatpush1.bf16.msra.mxu0 %v3370
        %3514 = vmatprep.subr.bf16.mxu0 0
        %3515 = vmatpush1.bf16.msra.mxu0 0
        %3516 = vmatprep.subr.bf16.mxu0 0
        %3517 = vmatpush1.bf16.msra.mxu0 0
        %3518 = vmatprep.subr.bf16.mxu0 0
        %3519 = vmatpush1.bf16.msra.mxu0 0
        %3520 = vmatprep.subr.bf16.mxu0 0
        %3521 = vmatpush1.bf16.msra.mxu0 0
        %3522 = vmatprep.subr.bf16.mxu0 0
        %3523 = vmatpush1.bf16.msra.mxu0 0
        %3524 = vmatprep.subr.bf16.mxu0 0
        %3525 = vmatpush1.bf16.msra.mxu0 0
        %3526 = vmatprep.subr.bf16.mxu0 0
        %3527 = vmatpush1.bf16.msra.mxu0 0
        %3528 = vmatprep.subr.bf16.mxu0 0
        %3529 = vmatpush1.bf16.msra.mxu0 0
        %3530 = vmatprep.subr.bf16.mxu0 0
        %3531 = vmatpush1.bf16.msra.mxu0 0
        %3532 = vmatprep.subr.bf16.mxu0 0
        %3533 = vmatpush1.bf16.msra.mxu0 0
        %3534 = vmatprep.subr.bf16.mxu0 0
        %3535 = vmatpush1.bf16.msra.mxu0 0
        %3536 = vmatprep.subr.bf16.mxu0 0
        %3537 = vmatpush1.bf16.msra.mxu0 0
        %3538 = vmatprep.subr.bf16.mxu0 0
        %3539 = vmatpush1.bf16.msra.mxu0 0
        %3540 = vmatprep.subr.bf16.mxu0 0
        %3541 = vmatpush1.bf16.msra.mxu0 0
        %3542 = vmatprep.subr.bf16.mxu0 0
        %3543 = vmatpush1.bf16.msra.mxu0 0
        %3544 = vmatprep.mubr.bf16.mxu0 0
        %3545 = vmatmul.mubr.bf16.gmra.mrb[0].mxu0 %v3507
        %v3546 = vpop.f32.mrb[0].mxu0
        %v3547 = vadd.f32 0.0, %v3546
        %v3548 = vpop.f32.mrb[0].mxu0
        %v3549 = vpop.f32.mrb[0].mxu0
        %v3550 = vadd.f32 0.0, %v3549
        %v3551 = vpop.f32.mrb[0].mxu0
        %3552 = vmatprep.mubr.bf16.mxu0 0
        %3553 = vmatmul.mubr.bf16.gmra.mrb[0].mxu0 %v3510
        %v3554 = vpop.f32.mrb[0].mxu0
        %v3555 = vadd.f32 0.0, %v3554
        %v3556 = vpop.f32.mrb[0].mxu0
        %v3557 = vpop.f32.mrb[0].mxu0
        %v3558 = vpop.f32.mrb[0].mxu0
        %3559 = vdwg.mxu0
        %v3560 = vadd.f32 %v3486, %v3547
        %v3561 = vadd.f32 %v3489, %v3550
        %v3562 = vadd.f32 %v3494, %v3555
        %v3564 = vshrl.u32 %v3499, 16
        %v3566 = vrot.slane %v3564, 1
        %v3567 = vshll.u32 %v3499, 16
        %v3569 = vrot.slane %v3567, 2
        %v3570 = vor.u32 %v3566, %v3569
        %v3572 = vshrl.u32 %v3500, 16
        %v3574 = vrot.slane %v3572, 1
        %v3575 = vshll.u32 %v3500, 16
        %v3577 = vrot.slane %v3575, 2
        %v3578 = vor.u32 %v3574, %v3577
        %v3579 = vsel %vm934, %v3570, %v3578
        %v3581 = vsel %vm1291, %v3579, 0
        %v3584 = vsel %vm1291, %v3578, 0
        %3586 = vmatprep.subr.bf16.mxu0 0
        %3587 = vmatpush1.bf16.msra.mxu0 %v3372
        %3588 = vmatprep.subr.bf16.mxu0 0
        %3589 = vmatpush1.bf16.msra.mxu0 0
        %3590 = vmatprep.subr.bf16.mxu0 0
        %3591 = vmatpush1.bf16.msra.mxu0 0
        %3592 = vmatprep.subr.bf16.mxu0 0
        %3593 = vmatpush1.bf16.msra.mxu0 0
        %3594 = vmatprep.subr.bf16.mxu0 0
        %3595 = vmatpush1.bf16.msra.mxu0 0
        %3596 = vmatprep.subr.bf16.mxu0 0
        %3597 = vmatpush1.bf16.msra.mxu0 0
        %3598 = vmatprep.subr.bf16.mxu0 0
        %3599 = vmatpush1.bf16.msra.mxu0 0
        %3600 = vmatprep.subr.bf16.mxu0 0
        %3601 = vmatpush1.bf16.msra.mxu0 0
        %3602 = vmatprep.subr.bf16.mxu0 0
        %3603 = vmatpush1.bf16.msra.mxu0 0
        %3604 = vmatprep.subr.bf16.mxu0 0
        %3605 = vmatpush1.bf16.msra.mxu0 0
        %3606 = vmatprep.subr.bf16.mxu0 0
        %3607 = vmatpush1.bf16.msra.mxu0 0
        %3608 = vmatprep.subr.bf16.mxu0 0
        %3609 = vmatpush1.bf16.msra.mxu0 0
        %3610 = vmatprep.subr.bf16.mxu0 0
        %3611 = vmatpush1.bf16.msra.mxu0 0
        %3612 = vmatprep.subr.bf16.mxu0 0
        %3613 = vmatpush1.bf16.msra.mxu0 0
        %3614 = vmatprep.subr.bf16.mxu0 0
        %3615 = vmatpush1.bf16.msra.mxu0 0
        %3616 = vmatprep.subr.bf16.mxu0 0
        %3617 = vmatpush1.bf16.msra.mxu0 0
        %3618 = vmatprep.mubr.bf16.mxu0 0
        %3619 = vmatmul.mubr.bf16.gmra.mrb[0].mxu0 %v3581
        %v3620 = vpop.f32.mrb[0].mxu0
        %v3621 = vadd.f32 0.0, %v3620
        %v3622 = vpop.f32.mrb[0].mxu0
        %v3623 = vpop.f32.mrb[0].mxu0
        %v3624 = vadd.f32 0.0, %v3623
        %v3625 = vpop.f32.mrb[0].mxu0
        %3626 = vmatprep.mubr.bf16.mxu0 0
        %3627 = vmatmul.mubr.bf16.gmra.mrb[0].mxu0 %v3584
        %v3628 = vpop.f32.mrb[0].mxu0
        %v3629 = vadd.f32 0.0, %v3628
        %v3630 = vpop.f32.mrb[0].mxu0
        %v3631 = vpop.f32.mrb[0].mxu0
        %v3632 = vpop.f32.mrb[0].mxu0
        %3633 = vdwg.mxu0
        %v3634 = vadd.f32 %v3560, %v3621
        %v3635 = vadd.f32 %v3561, %v3624
        %v3636 = vadd.f32 %v3562, %v3629
        %v3637 = vld [vmem:[#allocation10] sm:$0xfc]
        %v3638 = vld [vmem:[#allocation10 + $0x8] sm:$0xf]
        %v3641 = vrot.slane %v3637, 2
        %v3642 = vrot.slane %v3638, 2
        %v3643 = vsel %vm1071, %v3641, %v3642
        %v3645 = vsel %vm1291, %v3643, 0
        %v3648 = vsel %vm1291, %v3642, 0
        %3650 = vmatprep.subr.bf16.mxu0 0
        %3651 = vmatpush1.bf16.msra.mxu0 %v3374
        %3652 = vmatprep.subr.bf16.mxu0 0
        %3653 = vmatpush1.bf16.msra.mxu0 0
        %3654 = vmatprep.subr.bf16.mxu0 0
        %3655 = vmatpush1.bf16.msra.mxu0 0
        %3656 = vmatprep.subr.bf16.mxu0 0
        %3657 = vmatpush1.bf16.msra.mxu0 0
        %3658 = vmatprep.subr.bf16.mxu0 0
        %3659 = vmatpush1.bf16.msra.mxu0 0
        %3660 = vmatprep.subr.bf16.mxu0 0
        %3661 = vmatpush1.bf16.msra.mxu0 0
        %3662 = vmatprep.subr.bf16.mxu0 0
        %3663 = vmatpush1.bf16.msra.mxu0 0
        %3664 = vmatprep.subr.bf16.mxu0 0
        %3665 = vmatpush1.bf16.msra.mxu0 0
        %3666 = vmatprep.subr.bf16.mxu0 0
        %3667 = vmatpush1.bf16.msra.mxu0 0
        %3668 = vmatprep.subr.bf16.mxu0 0
        %3669 = vmatpush1.bf16.msra.mxu0 0
        %3670 = vmatprep.subr.bf16.mxu0 0
        %3671 = vmatpush1.bf16.msra.mxu0 0
        %3672 = vmatprep.subr.bf16.mxu0 0
        %3673 = vmatpush1.bf16.msra.mxu0 0
        %3674 = vmatprep.subr.bf16.mxu0 0
        %3675 = vmatpush1.bf16.msra.mxu0 0
        %3676 = vmatprep.subr.bf16.mxu0 0
        %3677 = vmatpush1.bf16.msra.mxu0 0
        %3678 = vmatprep.subr.bf16.mxu0 0
        %3679 = vmatpush1.bf16.msra.mxu0 0
        %3680 = vmatprep.subr.bf16.mxu0 0
        %3681 = vmatpush1.bf16.msra.mxu0 0
        %3682 = vmatprep.mubr.bf16.mxu0 0
        %3683 = vmatmul.mubr.bf16.gmra.mrb[0].mxu0 %v3645
        %v3684 = vpop.f32.mrb[0].mxu0
        %v3685 = vadd.f32 0.0, %v3684
        %v3686 = vpop.f32.mrb[0].mxu0
        %v3687 = vpop.f32.mrb[0].mxu0
        %v3688 = vadd.f32 0.0, %v3687
        %v3689 = vpop.f32.mrb[0].mxu0
        %3690 = vmatprep.mubr.bf16.mxu0 0
        %3691 = vmatmul.mubr.bf16.gmra.mrb[0].mxu0 %v3648
        %v3692 = vpop.f32.mrb[0].mxu0
        %v3693 = vadd.f32 0.0, %v3692
        %v3694 = vpop.f32.mrb[0].mxu0
        %v3695 = vpop.f32.mrb[0].mxu0
        %v3696 = vpop.f32.mrb[0].mxu0
        %3697 = vdwg.mxu0
        %v3698 = vadd.f32 %v3634, %v3685
        %v3699 = vadd.f32 %v3635, %v3688
        %v3700 = vadd.f32 %v3636, %v3693
        %v3702 = vlaneseq
        %v3703 = vshrl.u32 %v3702, 7
        %v3704 = vsub.s32 0, %v3703
        %v3705 = vrot.slane %v3375, %v3704
        %vm3707 = vcmask 154624
        %v3708 = vsel %vm3707, %v565, 0
        %v3711 = vsel %vm1196, %v3700, 0
        %3713 = vmatprep.subr.mxu0 0.0
        %3714 = vmatpush1.msra.mxu0 %v3698
        %3715 = vmatprep.subr.mxu0 0.0
        %3716 = vmatpush1.msra.mxu0 %v3699
        %3717 = vmatprep.subr.mxu0 0.0
        %3718 = vmatpush1.msra.mxu0 %v3711
        %3719 = vmatprep.subr.mxu0 0.0
        %3720 = vmatpush1.msra.mxu0 0.0
        %3721 = vmatprep.subr.mxu0 0.0
        %3722 = vmatpush1.msra.mxu0 0.0
        %3723 = vmatprep.subr.mxu0 0.0
        %3724 = vmatpush1.msra.mxu0 0.0
        %3725 = vmatprep.subr.mxu0 0.0
        %3726 = vmatpush1.msra.mxu0 0.0
        %3727 = vmatprep.subr.mxu0 0.0
        %3728 = vmatpush1.msra.mxu0 0.0
        %3729 = vmatprep.subr.mxu0 0.0
        %3730 = vmatpush1.msra.mxu0 0.0
        %3731 = vmatprep.subr.mxu0 0.0
        %3732 = vmatpush1.msra.mxu0 0.0
        %3733 = vmatprep.subr.mxu0 0.0
        %3734 = vmatpush1.msra.mxu0 0.0
        %3735 = vmatprep.subr.mxu0 0.0
        %3736 = vmatpush1.msra.mxu0 0.0
        %3737 = vmatprep.subr.mxu0 0.0
        %3738 = vmatpush1.msra.mxu0 0.0
        %3739 = vmatprep.subr.mxu0 0.0
        %3740 = vmatpush1.msra.mxu0 0.0
        %3741 = vmatprep.subr.mxu0 0.0
        %3742 = vmatpush1.msra.mxu0 0.0
        %3743 = vmatprep.subr.mxu0 0.0
        %3744 = vmatpush1.msra.mxu0 0.0
        %3745 = vmatprep.subr.mxu0 0.0
        %3746 = vmatpush1.msra.mxu0 0.0
        %3747 = vmatprep.subr.mxu0 0.0
        %3748 = vmatpush1.msra.mxu0 0.0
        %3749 = vmatprep.subr.mxu0 0.0
        %3750 = vmatpush1.msra.mxu0 0.0
        %3751 = vmatprep.subr.mxu0 0.0
        %3752 = vmatpush1.msra.mxu0 0.0
        %3753 = vmatprep.subr.mxu0 0.0
        %3754 = vmatpush1.msra.mxu0 0.0
        %3755 = vmatprep.subr.mxu0 0.0
        %3756 = vmatpush1.msra.mxu0 0.0
        %3757 = vmatprep.subr.mxu0 0.0
        %3758 = vmatpush1.msra.mxu0 0.0
        %3759 = vmatprep.subr.mxu0 0.0
        %3760 = vmatpush1.msra.mxu0 0.0
        %3761 = vmatprep.subr.mxu0 0.0
        %3762 = vmatpush1.msra.mxu0 0.0
        %3763 = vmatprep.subr.mxu0 0.0
        %3764 = vmatpush1.msra.mxu0 0.0
        %3765 = vmatprep.subr.mxu0 0.0
        %3766 = vmatpush1.msra.mxu0 0.0
        %3767 = vmatprep.subr.mxu0 0.0
        %3768 = vmatpush1.msra.mxu0 0.0
        %3769 = vmatprep.subr.mxu0 0.0
        %3770 = vmatpush1.msra.mxu0 0.0
        %3771 = vmatprep.subr.mxu0 0.0
        %3772 = vmatpush1.msra.mxu0 0.0
        %3773 = vmatprep.subr.mxu0 0.0
        %3774 = vmatpush1.msra.mxu0 0.0
        %3775 = vmatprep.subr.mxu0 0.0
        %3776 = vmatpush1.msra.mxu0 0.0
        %3777 = vmatprep.mubr.f32.mxu0 0.0
        %3778 = vmatmul.mubr.f32.gmra.mrb[0].mxu0 %v3708
        %v3779 = vpop.f32.mrb[0].mxu0
        %v3780 = vadd.f32 %v3705, %v3779
        %v3781 = vpop.f32.mrb[0].mxu0
        %3782 = vdwg.mxu0
        %v3783 = vpack.c.bf16 %v3780, %v3780
        %v3784 = vld [vmem:[#allocation11] sm:$0xf]
        %v3785 = vsel %vm1295, %v3783, %v3784
        %3786 = vst [vmem:[#allocation11] sm:$0xf] %v3785
        %v3787 = vld [vmem:[#allocation10 + $0x10] sm:$0xff]
        %v3788 = vld [vmem:[#allocation10 + $0x18] sm:$0x3]
        %v3790 = vshrl.u32 %v3787, 16
        %v3792 = vshll.u32 %v3787, 16
        %v3794 = vrot.slane %v3792, 1
        %v3795 = vor.u32 %v3790, %v3794
        %v3797 = vshll.u32 %v3788, 16
        %v3799 = vrot.slane %v3797, 1
        %v3800 = vsel %vm600, %v3795, %v3799
        %v3801 = vshrl.u32 %v3788, 16
        %v3803 = vor.u32 %v3801, %v3799
        %v3805 = vsel %vm1291, %v3800, 0
        %v3808 = vsel %vm1291, %v3803, 0
        %3810 = vmatprep.subr.bf16.mxu0 0
        %3811 = vmatpush1.bf16.msra.mxu0 %v3368
        %3812 = vmatprep.subr.bf16.mxu0 0
        %3813 = vmatpush1.bf16.msra.mxu0 0
        %3814 = vmatprep.subr.bf16.mxu0 0
        %3815 = vmatpush1.bf16.msra.mxu0 0
        %3816 = vmatprep.subr.bf16.mxu0 0
        %3817 = vmatpush1.bf16.msra.mxu0 0
        %3818 = vmatprep.subr.bf16.mxu0 0
        %3819 = vmatpush1.bf16.msra.mxu0 0
        %3820 = vmatprep.subr.bf16.mxu0 0
        %3821 = vmatpush1.bf16.msra.mxu0 0
        %3822 = vmatprep.subr.bf16.mxu0 0
        %3823 = vmatpush1.bf16.msra.mxu0 0
        %3824 = vmatprep.subr.bf16.mxu0 0
        %3825 = vmatpush1.bf16.msra.mxu0 0
        %3826 = vmatprep.subr.bf16.mxu0 0
        %3827 = vmatpush1.bf16.msra.mxu0 0
        %3828 = vmatprep.subr.bf16.mxu0 0
        %3829 = vmatpush1.bf16.msra.mxu0 0
        %3830 = vmatprep.subr.bf16.mxu0 0
        %3831 = vmatpush1.bf16.msra.mxu0 0
        %3832 = vmatprep.subr.bf16.mxu0 0
        %3833 = vmatpush1.bf16.msra.mxu0 0
        %3834 = vmatprep.subr.bf16.mxu0 0
        %3835 = vmatpush1.bf16.msra.mxu0 0
        %3836 = vmatprep.subr.bf16.mxu0 0
        %3837 = vmatpush1.bf16.msra.mxu0 0
        %3838 = vmatprep.subr.bf16.mxu0 0
        %3839 = vmatpush1.bf16.msra.mxu0 0
        %3840 = vmatprep.subr.bf16.mxu0 0
        %3841 = vmatpush1.bf16.msra.mxu0 0
        %3842 = vmatprep.mubr.bf16.mxu0 0
        %3843 = vmatmul.mubr.bf16.gmra.mrb[0].mxu0 %v3805
        %v3844 = vpop.f32.mrb[0].mxu0
        %v3845 = vadd.f32 0.0, %v3844
        %v3846 = vpop.f32.mrb[0].mxu0
        %v3847 = vpop.f32.mrb[0].mxu0
        %v3848 = vadd.f32 0.0, %v3847
        %v3849 = vpop.f32.mrb[0].mxu0
        %3850 = vmatprep.mubr.bf16.mxu0 0
        %3851 = vmatmul.mubr.bf16.gmra.mrb[0].mxu0 %v3808
        %v3852 = vpop.f32.mrb[0].mxu0
        %v3853 = vadd.f32 0.0, %v3852
        %v3854 = vpop.f32.mrb[0].mxu0
        %v3855 = vpop.f32.mrb[0].mxu0
        %v3856 = vpop.f32.mrb[0].mxu0
        %3857 = vdwg.mxu0
        %v3858 = vsel %vm1291, %v3787, 0
        %v3860 = vsel %vm1291, %v3788, 0
        %3862 = vmatprep.subr.bf16.mxu0 0
        %3863 = vmatpush1.bf16.msra.mxu0 %v3366
        %3864 = vmatprep.subr.bf16.mxu0 0
        %3865 = vmatpush1.bf16.msra.mxu0 0
        %3866 = vmatprep.subr.bf16.mxu0 0
        %3867 = vmatpush1.bf16.msra.mxu0 0
        %3868 = vmatprep.subr.bf16.mxu0 0
        %3869 = vmatpush1.bf16.msra.mxu0 0
        %3870 = vmatprep.subr.bf16.mxu0 0
        %3871 = vmatpush1.bf16.msra.mxu0 0
        %3872 = vmatprep.subr.bf16.mxu0 0
        %3873 = vmatpush1.bf16.msra.mxu0 0
        %3874 = vmatprep.subr.bf16.mxu0 0
        %3875 = vmatpush1.bf16.msra.mxu0 0
        %3876 = vmatprep.subr.bf16.mxu0 0
        %3877 = vmatpush1.bf16.msra.mxu0 0
        %3878 = vmatprep.subr.bf16.mxu0 0
        %3879 = vmatpush1.bf16.msra.mxu0 0
        %3880 = vmatprep.subr.bf16.mxu0 0
        %3881 = vmatpush1.bf16.msra.mxu0 0
        %3882 = vmatprep.subr.bf16.mxu0 0
        %3883 = vmatpush1.bf16.msra.mxu0 0
        %3884 = vmatprep.subr.bf16.mxu0 0
        %3885 = vmatpush1.bf16.msra.mxu0 0
        %3886 = vmatprep.subr.bf16.mxu0 0
        %3887 = vmatpush1.bf16.msra.mxu0 0
        %3888 = vmatprep.subr.bf16.mxu0 0
        %3889 = vmatpush1.bf16.msra.mxu0 0
        %3890 = vmatprep.subr.bf16.mxu0 0
        %3891 = vmatpush1.bf16.msra.mxu0 0
        %3892 = vmatprep.subr.bf16.mxu0 0
        %3893 = vmatpush1.bf16.msra.mxu0 0
        %3894 = vmatprep.mubr.bf16.mxu0 0
        %3895 = vmatmul.mubr.bf16.gmra.mrb[0].mxu0 %v3858
        %v3896 = vpop.f32.mrb[0].mxu0
        %v3897 = vadd.f32 %v3845, %v3896
        %v3898 = vpop.f32.mrb[0].mxu0
        %v3899 = vpop.f32.mrb[0].mxu0
        %v3900 = vadd.f32 %v3848, %v3899
        %v3901 = vpop.f32.mrb[0].mxu0
        %3902 = vmatprep.mubr.bf16.mxu0 0
        %3903 = vmatmul.mubr.bf16.gmra.mrb[0].mxu0 %v3860
        %v3904 = vpop.f32.mrb[0].mxu0
        %v3905 = vadd.f32 %v3853, %v3904
        %v3906 = vpop.f32.mrb[0].mxu0
        %v3907 = vpop.f32.mrb[0].mxu0
        %v3908 = vpop.f32.mrb[0].mxu0
        %3909 = vdwg.mxu0
        %v3910 = vld [vmem:[#allocation10 + $0x10] sm:$0xfe]
        %v3911 = vld [vmem:[#allocation10 + $0x18] sm:$0x7]
        %v3914 = vrot.slane %v3910, 1
        %v3915 = vrot.slane %v3911, 1
        %v3916 = vsel %vm825, %v3914, %v3915
        %v3918 = vsel %vm1291, %v3916, 0
        %v3921 = vsel %vm1291, %v3915, 0
        %3923 = vmatprep.subr.bf16.mxu0 0
        %3924 = vmatpush1.bf16.msra.mxu0 %v3370
        %3925 = vmatprep.subr.bf16.mxu0 0
        %3926 = vmatpush1.bf16.msra.mxu0 0
        %3927 = vmatprep.subr.bf16.mxu0 0
        %3928 = vmatpush1.bf16.msra.mxu0 0
        %3929 = vmatprep.subr.bf16.mxu0 0
        %3930 = vmatpush1.bf16.msra.mxu0 0
        %3931 = vmatprep.subr.bf16.mxu0 0
        %3932 = vmatpush1.bf16.msra.mxu0 0
        %3933 = vmatprep.subr.bf16.mxu0 0
        %3934 = vmatpush1.bf16.msra.mxu0 0
        %3935 = vmatprep.subr.bf16.mxu0 0
        %3936 = vmatpush1.bf16.msra.mxu0 0
        %3937 = vmatprep.subr.bf16.mxu0 0
        %3938 = vmatpush1.bf16.msra.mxu0 0
        %3939 = vmatprep.subr.bf16.mxu0 0
        %3940 = vmatpush1.bf16.msra.mxu0 0
        %3941 = vmatprep.subr.bf16.mxu0 0
        %3942 = vmatpush1.bf16.msra.mxu0 0
        %3943 = vmatprep.subr.bf16.mxu0 0
        %3944 = vmatpush1.bf16.msra.mxu0 0
        %3945 = vmatprep.subr.bf16.mxu0 0
        %3946 = vmatpush1.bf16.msra.mxu0 0
        %3947 = vmatprep.subr.bf16.mxu0 0
        %3948 = vmatpush1.bf16.msra.mxu0 0
        %3949 = vmatprep.subr.bf16.mxu0 0
        %3950 = vmatpush1.bf16.msra.mxu0 0
        %3951 = vmatprep.subr.bf16.mxu0 0
        %3952 = vmatpush1.bf16.msra.mxu0 0
        %3953 = vmatprep.subr.bf16.mxu0 0
        %3954 = vmatpush1.bf16.msra.mxu0 0
        %3955 = vmatprep.mubr.bf16.mxu0 0
        %3956 = vmatmul.mubr.bf16.gmra.mrb[0].mxu0 %v3918
        %v3957 = vpop.f32.mrb[0].mxu0
        %v3958 = vadd.f32 0.0, %v3957
        %v3959 = vpop.f32.mrb[0].mxu0
        %v3960 = vpop.f32.mrb[0].mxu0
        %v3961 = vadd.f32 0.0, %v3960
        %v3962 = vpop.f32.mrb[0].mxu0
        %3963 = vmatprep.mubr.bf16.mxu0 0
        %3964 = vmatmul.mubr.bf16.gmra.mrb[0].mxu0 %v3921
        %v3965 = vpop.f32.mrb[0].mxu0
        %v3966 = vadd.f32 0.0, %v3965
        %v3967 = vpop.f32.mrb[0].mxu0
        %v3968 = vpop.f32.mrb[0].mxu0
        %v3969 = vpop.f32.mrb[0].mxu0
        %3970 = vdwg.mxu0
        %v3971 = vadd.f32 %v3897, %v3958
        %v3972 = vadd.f32 %v3900, %v3961
        %v3973 = vadd.f32 %v3905, %v3966
        %v3975 = vshrl.u32 %v3910, 16
        %v3977 = vrot.slane %v3975, 1
        %v3978 = vshll.u32 %v3910, 16
        %v3980 = vrot.slane %v3978, 2
        %v3981 = vor.u32 %v3977, %v3980
        %v3983 = vshrl.u32 %v3911, 16
        %v3985 = vrot.slane %v3983, 1
        %v3986 = vshll.u32 %v3911, 16
        %v3988 = vrot.slane %v3986, 2
        %v3989 = vor.u32 %v3985, %v3988
        %v3990 = vsel %vm934, %v3981, %v3989
        %v3992 = vsel %vm1291, %v3990, 0
        %v3995 = vsel %vm1291, %v3989, 0
        %3997 = vmatprep.subr.bf16.mxu0 0
        %3998 = vmatpush1.bf16.msra.mxu0 %v3372
        %3999 = vmatprep.subr.bf16.mxu0 0
        %4000 = vmatpush1.bf16.msra.mxu0 0
        %4001 = vmatprep.subr.bf16.mxu0 0
        %4002 = vmatpush1.bf16.msra.mxu0 0
        %4003 = vmatprep.subr.bf16.mxu0 0
        %4004 = vmatpush1.bf16.msra.mxu0 0
        %4005 = vmatprep.subr.bf16.mxu0 0
        %4006 = vmatpush1.bf16.msra.mxu0 0
        %4007 = vmatprep.subr.bf16.mxu0 0
        %4008 = vmatpush1.bf16.msra.mxu0 0
        %4009 = vmatprep.subr.bf16.mxu0 0
        %4010 = vmatpush1.bf16.msra.mxu0 0
        %4011 = vmatprep.subr.bf16.mxu0 0
        %4012 = vmatpush1.bf16.msra.mxu0 0
        %4013 = vmatprep.subr.bf16.mxu0 0
        %4014 = vmatpush1.bf16.msra.mxu0 0
        %4015 = vmatprep.subr.bf16.mxu0 0
        %4016 = vmatpush1.bf16.msra.mxu0 0
        %4017 = vmatprep.subr.bf16.mxu0 0
        %4018 = vmatpush1.bf16.msra.mxu0 0
        %4019 = vmatprep.subr.bf16.mxu0 0
        %4020 = vmatpush1.bf16.msra.mxu0 0
        %4021 = vmatprep.subr.bf16.mxu0 0
        %4022 = vmatpush1.bf16.msra.mxu0 0
        %4023 = vmatprep.subr.bf16.mxu0 0
        %4024 = vmatpush1.bf16.msra.mxu0 0
        %4025 = vmatprep.subr.bf16.mxu0 0
        %4026 = vmatpush1.bf16.msra.mxu0 0
        %4027 = vmatprep.subr.bf16.mxu0 0
        %4028 = vmatpush1.bf16.msra.mxu0 0
        %4029 = vmatprep.mubr.bf16.mxu0 0
        %4030 = vmatmul.mubr.bf16.gmra.mrb[0].mxu0 %v3992
        %v4031 = vpop.f32.mrb[0].mxu0
        %v4032 = vadd.f32 0.0, %v4031
        %v4033 = vpop.f32.mrb[0].mxu0
        %v4034 = vpop.f32.mrb[0].mxu0
        %v4035 = vadd.f32 0.0, %v4034
        %v4036 = vpop.f32.mrb[0].mxu0
        %4037 = vmatprep.mubr.bf16.mxu0 0
        %4038 = vmatmul.mubr.bf16.gmra.mrb[0].mxu0 %v3995
        %v4039 = vpop.f32.mrb[0].mxu0
        %v4040 = vadd.f32 0.0, %v4039
        %v4041 = vpop.f32.mrb[0].mxu0
        %v4042 = vpop.f32.mrb[0].mxu0
        %v4043 = vpop.f32.mrb[0].mxu0
        %4044 = vdwg.mxu0
        %v4045 = vadd.f32 %v3971, %v4032
        %v4046 = vadd.f32 %v3972, %v4035
        %v4047 = vadd.f32 %v3973, %v4040
        %v4048 = vld [vmem:[#allocation10 + $0x10] sm:$0xfc]
        %v4049 = vld [vmem:[#allocation10 + $0x18] sm:$0xf]
        %v4052 = vrot.slane %v4048, 2
        %v4053 = vrot.slane %v4049, 2
        %v4054 = vsel %vm1071, %v4052, %v4053
        %v4056 = vsel %vm1291, %v4054, 0
        %v4059 = vsel %vm1291, %v4053, 0
        %4061 = vmatprep.subr.bf16.mxu0 0
        %4062 = vmatpush1.bf16.msra.mxu0 %v3374
        %4063 = vmatprep.subr.bf16.mxu0 0
        %4064 = vmatpush1.bf16.msra.mxu0 0
        %4065 = vmatprep.subr.bf16.mxu0 0
        %4066 = vmatpush1.bf16.msra.mxu0 0
        %4067 = vmatprep.subr.bf16.mxu0 0
        %4068 = vmatpush1.bf16.msra.mxu0 0
        %4069 = vmatprep.subr.bf16.mxu0 0
        %4070 = vmatpush1.bf16.msra.mxu0 0
        %4071 = vmatprep.subr.bf16.mxu0 0
        %4072 = vmatpush1.bf16.msra.mxu0 0
        %4073 = vmatprep.subr.bf16.mxu0 0
        %4074 = vmatpush1.bf16.msra.mxu0 0
        %4075 = vmatprep.subr.bf16.mxu0 0
        %4076 = vmatpush1.bf16.msra.mxu0 0
        %4077 = vmatprep.subr.bf16.mxu0 0
        %4078 = vmatpush1.bf16.msra.mxu0 0
        %4079 = vmatprep.subr.bf16.mxu0 0
        %4080 = vmatpush1.bf16.msra.mxu0 0
        %4081 = vmatprep.subr.bf16.mxu0 0
        %4082 = vmatpush1.bf16.msra.mxu0 0
        %4083 = vmatprep.subr.bf16.mxu0 0
        %4084 = vmatpush1.bf16.msra.mxu0 0
        %4085 = vmatprep.subr.bf16.mxu0 0
        %4086 = vmatpush1.bf16.msra.mxu0 0
        %4087 = vmatprep.subr.bf16.mxu0 0
        %4088 = vmatpush1.bf16.msra.mxu0 0
        %4089 = vmatprep.subr.bf16.mxu0 0
        %4090 = vmatpush1.bf16.msra.mxu0 0
        %4091 = vmatprep.subr.bf16.mxu0 0
        %4092 = vmatpush1.bf16.msra.mxu0 0
        %4093 = vmatprep.mubr.bf16.mxu0 0
        %4094 = vmatmul.mubr.bf16.gmra.mrb[0].mxu0 %v4056
        %v4095 = vpop.f32.mrb[0].mxu0
        %v4096 = vadd.f32 0.0, %v4095
        %v4097 = vpop.f32.mrb[0].mxu0
        %v4098 = vpop.f32.mrb[0].mxu0
        %v4099 = vadd.f32 0.0, %v4098
        %v4100 = vpop.f32.mrb[0].mxu0
        %4101 = vmatprep.mubr.bf16.mxu0 0
        %4102 = vmatmul.mubr.bf16.gmra.mrb[0].mxu0 %v4059
        %v4103 = vpop.f32.mrb[0].mxu0
        %v4104 = vadd.f32 0.0, %v4103
        %v4105 = vpop.f32.mrb[0].mxu0
        %v4106 = vpop.f32.mrb[0].mxu0
        %v4107 = vpop.f32.mrb[0].mxu0
        %4108 = vdwg.mxu0
        %v4109 = vadd.f32 %v4045, %v4096
        %v4110 = vadd.f32 %v4046, %v4099
        %v4111 = vadd.f32 %v4047, %v4104
        %v4113 = vsel %vm1196, %v4111, 0
        %4115 = vmatprep.subr.mxu0 0.0
        %4116 = vmatpush1.msra.mxu0 %v4109
        %4117 = vmatprep.subr.mxu0 0.0
        %4118 = vmatpush1.msra.mxu0 %v4110
        %4119 = vmatprep.subr.mxu0 0.0
        %4120 = vmatpush1.msra.mxu0 %v4113
        %4121 = vmatprep.subr.mxu0 0.0
        %4122 = vmatpush1.msra.mxu0 0.0
        %4123 = vmatprep.subr.mxu0 0.0
        %4124 = vmatpush1.msra.mxu0 0.0
        %4125 = vmatprep.subr.mxu0 0.0
        %4126 = vmatpush1.msra.mxu0 0.0
        %4127 = vmatprep.subr.mxu0 0.0
        %4128 = vmatpush1.msra.mxu0 0.0
        %4129 = vmatprep.subr.mxu0 0.0
        %4130 = vmatpush1.msra.mxu0 0.0
        %4131 = vmatprep.subr.mxu0 0.0
        %4132 = vmatpush1.msra.mxu0 0.0
        %4133 = vmatprep.subr.mxu0 0.0
        %4134 = vmatpush1.msra.mxu0 0.0
        %4135 = vmatprep.subr.mxu0 0.0
        %4136 = vmatpush1.msra.mxu0 0.0
        %4137 = vmatprep.subr.mxu0 0.0
        %4138 = vmatpush1.msra.mxu0 0.0
        %4139 = vmatprep.subr.mxu0 0.0
        %4140 = vmatpush1.msra.mxu0 0.0
        %4141 = vmatprep.subr.mxu0 0.0
        %4142 = vmatpush1.msra.mxu0 0.0
        %4143 = vmatprep.subr.mxu0 0.0
        %4144 = vmatpush1.msra.mxu0 0.0
        %4145 = vmatprep.subr.mxu0 0.0
        %4146 = vmatpush1.msra.mxu0 0.0
        %4147 = vmatprep.subr.mxu0 0.0
        %4148 = vmatpush1.msra.mxu0 0.0
        %4149 = vmatprep.subr.mxu0 0.0
        %4150 = vmatpush1.msra.mxu0 0.0
        %4151 = vmatprep.subr.mxu0 0.0
        %4152 = vmatpush1.msra.mxu0 0.0
        %4153 = vmatprep.subr.mxu0 0.0
        %4154 = vmatpush1.msra.mxu0 0.0
        %4155 = vmatprep.subr.mxu0 0.0
        %4156 = vmatpush1.msra.mxu0 0.0
        %4157 = vmatprep.subr.mxu0 0.0
        %4158 = vmatpush1.msra.mxu0 0.0
        %4159 = vmatprep.subr.mxu0 0.0
        %4160 = vmatpush1.msra.mxu0 0.0
        %4161 = vmatprep.subr.mxu0 0.0
        %4162 = vmatpush1.msra.mxu0 0.0
        %4163 = vmatprep.subr.mxu0 0.0
        %4164 = vmatpush1.msra.mxu0 0.0
        %4165 = vmatprep.subr.mxu0 0.0
        %4166 = vmatpush1.msra.mxu0 0.0
        %4167 = vmatprep.subr.mxu0 0.0
        %4168 = vmatpush1.msra.mxu0 0.0
        %4169 = vmatprep.subr.mxu0 0.0
        %4170 = vmatpush1.msra.mxu0 0.0
        %4171 = vmatprep.subr.mxu0 0.0
        %4172 = vmatpush1.msra.mxu0 0.0
        %4173 = vmatprep.subr.mxu0 0.0
        %4174 = vmatpush1.msra.mxu0 0.0
        %4175 = vmatprep.subr.mxu0 0.0
        %4176 = vmatpush1.msra.mxu0 0.0
        %4177 = vmatprep.subr.mxu0 0.0
        %4178 = vmatpush1.msra.mxu0 0.0
        %4179 = vmatprep.mubr.f32.mxu0 0.0
        %4180 = vmatmul.mubr.f32.gmra.mrb[0].mxu0 %v3708
        %v4181 = vpop.f32.mrb[0].mxu0
        %v4182 = vadd.f32 %v3705, %v4181
        %v4183 = vpop.f32.mrb[0].mxu0
        %4184 = vdwg.mxu0
        %v4185 = vpack.c.bf16 %v4182, %v4182
        %v4186 = vld [vmem:[#allocation11 + $0x8] sm:$0xf]
        %v4187 = vsel %vm1295, %v4185, %v4186
        %4188 = vst [vmem:[#allocation11 + $0x8] sm:$0xf] %v4187
        %v4189 = vld [vmem:[#allocation10 + $0x20] sm:$0xff]
        %v4190 = vld [vmem:[#allocation10 + $0x28] sm:$0x3]
        %v4192 = vshrl.u32 %v4189, 16
        %v4194 = vshll.u32 %v4189, 16
        %v4196 = vrot.slane %v4194, 1
        %v4197 = vor.u32 %v4192, %v4196
        %v4199 = vshll.u32 %v4190, 16
        %v4201 = vrot.slane %v4199, 1
        %v4202 = vsel %vm600, %v4197, %v4201
        %v4203 = vshrl.u32 %v4190, 16
        %v4205 = vor.u32 %v4203, %v4201
        %v4207 = vsel %vm1291, %v4202, 0
        %v4210 = vsel %vm1291, %v4205, 0
        %4212 = vmatprep.subr.bf16.mxu0 0
        %4213 = vmatpush1.bf16.msra.mxu0 %v3368
        %4214 = vmatprep.subr.bf16.mxu0 0
        %4215 = vmatpush1.bf16.msra.mxu0 0
        %4216 = vmatprep.subr.bf16.mxu0 0
        %4217 = vmatpush1.bf16.msra.mxu0 0
        %4218 = vmatprep.subr.bf16.mxu0 0
        %4219 = vmatpush1.bf16.msra.mxu0 0
        %4220 = vmatprep.subr.bf16.mxu0 0
        %4221 = vmatpush1.bf16.msra.mxu0 0
        %4222 = vmatprep.subr.bf16.mxu0 0
        %4223 = vmatpush1.bf16.msra.mxu0 0
        %4224 = vmatprep.subr.bf16.mxu0 0
        %4225 = vmatpush1.bf16.msra.mxu0 0
        %4226 = vmatprep.subr.bf16.mxu0 0
        %4227 = vmatpush1.bf16.msra.mxu0 0
        %4228 = vmatprep.subr.bf16.mxu0 0
        %4229 = vmatpush1.bf16.msra.mxu0 0
        %4230 = vmatprep.subr.bf16.mxu0 0
        %4231 = vmatpush1.bf16.msra.mxu0 0
        %4232 = vmatprep.subr.bf16.mxu0 0
        %4233 = vmatpush1.bf16.msra.mxu0 0
        %4234 = vmatprep.subr.bf16.mxu0 0
        %4235 = vmatpush1.bf16.msra.mxu0 0
        %4236 = vmatprep.subr.bf16.mxu0 0
        %4237 = vmatpush1.bf16.msra.mxu0 0
        %4238 = vmatprep.subr.bf16.mxu0 0
        %4239 = vmatpush1.bf16.msra.mxu0 0
        %4240 = vmatprep.subr.bf16.mxu0 0
        %4241 = vmatpush1.bf16.msra.mxu0 0
        %4242 = vmatprep.subr.bf16.mxu0 0
        %4243 = vmatpush1.bf16.msra.mxu0 0
        %4244 = vmatprep.mubr.bf16.mxu0 0
        %4245 = vmatmul.mubr.bf16.gmra.mrb[0].mxu0 %v4207
        %v4246 = vpop.f32.mrb[0].mxu0
        %v4247 = vadd.f32 0.0, %v4246
        %v4248 = vpop.f32.mrb[0].mxu0
        %v4249 = vpop.f32.mrb[0].mxu0
        %v4250 = vadd.f32 0.0, %v4249
        %v4251 = vpop.f32.mrb[0].mxu0
        %4252 = vmatprep.mubr.bf16.mxu0 0
        %4253 = vmatmul.mubr.bf16.gmra.mrb[0].mxu0 %v4210
        %v4254 = vpop.f32.mrb[0].mxu0
        %v4255 = vadd.f32 0.0, %v4254
        %v4256 = vpop.f32.mrb[0].mxu0
        %v4257 = vpop.f32.mrb[0].mxu0
        %v4258 = vpop.f32.mrb[0].mxu0
        %4259 = vdwg.mxu0
        %v4260 = vsel %vm1291, %v4189, 0
        %v4262 = vsel %vm1291, %v4190, 0
        %4264 = vmatprep.subr.bf16.mxu0 0
        %4265 = vmatpush1.bf16.msra.mxu0 %v3366
        %4266 = vmatprep.subr.bf16.mxu0 0
        %4267 = vmatpush1.bf16.msra.mxu0 0
        %4268 = vmatprep.subr.bf16.mxu0 0
        %4269 = vmatpush1.bf16.msra.mxu0 0
        %4270 = vmatprep.subr.bf16.mxu0 0
        %4271 = vmatpush1.bf16.msra.mxu0 0
        %4272 = vmatprep.subr.bf16.mxu0 0
        %4273 = vmatpush1.bf16.msra.mxu0 0
        %4274 = vmatprep.subr.bf16.mxu0 0
        %4275 = vmatpush1.bf16.msra.mxu0 0
        %4276 = vmatprep.subr.bf16.mxu0 0
        %4277 = vmatpush1.bf16.msra.mxu0 0
        %4278 = vmatprep.subr.bf16.mxu0 0
        %4279 = vmatpush1.bf16.msra.mxu0 0
        %4280 = vmatprep.subr.bf16.mxu0 0
        %4281 = vmatpush1.bf16.msra.mxu0 0
        %4282 = vmatprep.subr.bf16.mxu0 0
        %4283 = vmatpush1.bf16.msra.mxu0 0
        %4284 = vmatprep.subr.bf16.mxu0 0
        %4285 = vmatpush1.bf16.msra.mxu0 0
        %4286 = vmatprep.subr.bf16.mxu0 0
        %4287 = vmatpush1.bf16.msra.mxu0 0
        %4288 = vmatprep.subr.bf16.mxu0 0
        %4289 = vmatpush1.bf16.msra.mxu0 0
        %4290 = vmatprep.subr.bf16.mxu0 0
        %4291 = vmatpush1.bf16.msra.mxu0 0
        %4292 = vmatprep.subr.bf16.mxu0 0
        %4293 = vmatpush1.bf16.msra.mxu0 0
        %4294 = vmatprep.subr.bf16.mxu0 0
        %4295 = vmatpush1.bf16.msra.mxu0 0
        %4296 = vmatprep.mubr.bf16.mxu0 0
        %4297 = vmatmul.mubr.bf16.gmra.mrb[0].mxu0 %v4260
        %v4298 = vpop.f32.mrb[0].mxu0
        %v4299 = vadd.f32 %v4247, %v4298
        %v4300 = vpop.f32.mrb[0].mxu0
        %v4301 = vpop.f32.mrb[0].mxu0
        %v4302 = vadd.f32 %v4250, %v4301
        %v4303 = vpop.f32.mrb[0].mxu0
        %4304 = vmatprep.mubr.bf16.mxu0 0
        %4305 = vmatmul.mubr.bf16.gmra.mrb[0].mxu0 %v4262
        %v4306 = vpop.f32.mrb[0].mxu0
        %v4307 = vadd.f32 %v4255, %v4306
        %v4308 = vpop.f32.mrb[0].mxu0
        %v4309 = vpop.f32.mrb[0].mxu0
        %v4310 = vpop.f32.mrb[0].mxu0
        %4311 = vdwg.mxu0
        %v4312 = vld [vmem:[#allocation10 + $0x20] sm:$0xfe]
        %v4313 = vld [vmem:[#allocation10 + $0x28] sm:$0x7]
        %v4316 = vrot.slane %v4312, 1
        %v4317 = vrot.slane %v4313, 1
        %v4318 = vsel %vm825, %v4316, %v4317
        %v4320 = vsel %vm1291, %v4318, 0
        %v4323 = vsel %vm1291, %v4317, 0
        %4325 = vmatprep.subr.bf16.mxu0 0
        %4326 = vmatpush1.bf16.msra.mxu0 %v3370
        %4327 = vmatprep.subr.bf16.mxu0 0
        %4328 = vmatpush1.bf16.msra.mxu0 0
        %4329 = vmatprep.subr.bf16.mxu0 0
        %4330 = vmatpush1.bf16.msra.mxu0 0
        %4331 = vmatprep.subr.bf16.mxu0 0
        %4332 = vmatpush1.bf16.msra.mxu0 0
        %4333 = vmatprep.subr.bf16.mxu0 0
        %4334 = vmatpush1.bf16.msra.mxu0 0
        %4335 = vmatprep.subr.bf16.mxu0 0
        %4336 = vmatpush1.bf16.msra.mxu0 0
        %4337 = vmatprep.subr.bf16.mxu0 0
        %4338 = vmatpush1.bf16.msra.mxu0 0
        %4339 = vmatprep.subr.bf16.mxu0 0
        %4340 = vmatpush1.bf16.msra.mxu0 0
        %4341 = vmatprep.subr.bf16.mxu0 0
        %4342 = vmatpush1.bf16.msra.mxu0 0
        %4343 = vmatprep.subr.bf16.mxu0 0
        %4344 = vmatpush1.bf16.msra.mxu0 0
        %4345 = vmatprep.subr.bf16.mxu0 0
        %4346 = vmatpush1.bf16.msra.mxu0 0
        %4347 = vmatprep.subr.bf16.mxu0 0
        %4348 = vmatpush1.bf16.msra.mxu0 0
        %4349 = vmatprep.subr.bf16.mxu0 0
        %4350 = vmatpush1.bf16.msra.mxu0 0
        %4351 = vmatprep.subr.bf16.mxu0 0
        %4352 = vmatpush1.bf16.msra.mxu0 0
        %4353 = vmatprep.subr.bf16.mxu0 0
        %4354 = vmatpush1.bf16.msra.mxu0 0
        %4355 = vmatprep.subr.bf16.mxu0 0
        %4356 = vmatpush1.bf16.msra.mxu0 0
        %4357 = vmatprep.mubr.bf16.mxu0 0
        %4358 = vmatmul.mubr.bf16.gmra.mrb[0].mxu0 %v4320
        %v4359 = vpop.f32.mrb[0].mxu0
        %v4360 = vadd.f32 0.0, %v4359
        %v4361 = vpop.f32.mrb[0].mxu0
        %v4362 = vpop.f32.mrb[0].mxu0
        %v4363 = vadd.f32 0.0, %v4362
        %v4364 = vpop.f32.mrb[0].mxu0
        %4365 = vmatprep.mubr.bf16.mxu0 0
        %4366 = vmatmul.mubr.bf16.gmra.mrb[0].mxu0 %v4323
        %v4367 = vpop.f32.mrb[0].mxu0
        %v4368 = vadd.f32 0.0, %v4367
        %v4369 = vpop.f32.mrb[0].mxu0
        %v4370 = vpop.f32.mrb[0].mxu0
        %v4371 = vpop.f32.mrb[0].mxu0
        %4372 = vdwg.mxu0
        %v4373 = vadd.f32 %v4299, %v4360
        %v4374 = vadd.f32 %v4302, %v4363
        %v4375 = vadd.f32 %v4307, %v4368
        %v4377 = vshrl.u32 %v4312, 16
        %v4379 = vrot.slane %v4377, 1
        %v4380 = vshll.u32 %v4312, 16
        %v4382 = vrot.slane %v4380, 2
        %v4383 = vor.u32 %v4379, %v4382
        %v4385 = vshrl.u32 %v4313, 16
        %v4387 = vrot.slane %v4385, 1
        %v4388 = vshll.u32 %v4313, 16
        %v4390 = vrot.slane %v4388, 2
        %v4391 = vor.u32 %v4387, %v4390
        %v4392 = vsel %vm934, %v4383, %v4391
        %v4394 = vsel %vm1291, %v4392, 0
        %v4397 = vsel %vm1291, %v4391, 0
        %4399 = vmatprep.subr.bf16.mxu0 0
        %4400 = vmatpush1.bf16.msra.mxu0 %v3372
        %4401 = vmatprep.subr.bf16.mxu0 0
        %4402 = vmatpush1.bf16.msra.mxu0 0
        %4403 = vmatprep.subr.bf16.mxu0 0
        %4404 = vmatpush1.bf16.msra.mxu0 0
        %4405 = vmatprep.subr.bf16.mxu0 0
        %4406 = vmatpush1.bf16.msra.mxu0 0
        %4407 = vmatprep.subr.bf16.mxu0 0
        %4408 = vmatpush1.bf16.msra.mxu0 0
        %4409 = vmatprep.subr.bf16.mxu0 0
        %4410 = vmatpush1.bf16.msra.mxu0 0
        %4411 = vmatprep.subr.bf16.mxu0 0
        %4412 = vmatpush1.bf16.msra.mxu0 0
        %4413 = vmatprep.subr.bf16.mxu0 0
        %4414 = vmatpush1.bf16.msra.mxu0 0
        %4415 = vmatprep.subr.bf16.mxu0 0
        %4416 = vmatpush1.bf16.msra.mxu0 0
        %4417 = vmatprep.subr.bf16.mxu0 0
        %4418 = vmatpush1.bf16.msra.mxu0 0
        %4419 = vmatprep.subr.bf16.mxu0 0
        %4420 = vmatpush1.bf16.msra.mxu0 0
        %4421 = vmatprep.subr.bf16.mxu0 0
        %4422 = vmatpush1.bf16.msra.mxu0 0
        %4423 = vmatprep.subr.bf16.mxu0 0
        %4424 = vmatpush1.bf16.msra.mxu0 0
        %4425 = vmatprep.subr.bf16.mxu0 0
        %4426 = vmatpush1.bf16.msra.mxu0 0
        %4427 = vmatprep.subr.bf16.mxu0 0
        %4428 = vmatpush1.bf16.msra.mxu0 0
        %4429 = vmatprep.subr.bf16.mxu0 0
        %4430 = vmatpush1.bf16.msra.mxu0 0
        %4431 = vmatprep.mubr.bf16.mxu0 0
        %4432 = vmatmul.mubr.bf16.gmra.mrb[0].mxu0 %v4394
        %v4433 = vpop.f32.mrb[0].mxu0
        %v4434 = vadd.f32 0.0, %v4433
        %v4435 = vpop.f32.mrb[0].mxu0
        %v4436 = vpop.f32.mrb[0].mxu0
        %v4437 = vadd.f32 0.0, %v4436
        %v4438 = vpop.f32.mrb[0].mxu0
        %4439 = vmatprep.mubr.bf16.mxu0 0
        %4440 = vmatmul.mubr.bf16.gmra.mrb[0].mxu0 %v4397
        %v4441 = vpop.f32.mrb[0].mxu0
        %v4442 = vadd.f32 0.0, %v4441
        %v4443 = vpop.f32.mrb[0].mxu0
        %v4444 = vpop.f32.mrb[0].mxu0
        %v4445 = vpop.f32.mrb[0].mxu0
        %4446 = vdwg.mxu0
        %v4447 = vadd.f32 %v4373, %v4434
        %v4448 = vadd.f32 %v4374, %v4437
        %v4449 = vadd.f32 %v4375, %v4442
        %v4450 = vld [vmem:[#allocation10 + $0x20] sm:$0xfc]
        %v4451 = vld [vmem:[#allocation10 + $0x28] sm:$0xf]
        %v4454 = vrot.slane %v4450, 2
        %v4455 = vrot.slane %v4451, 2
        %v4456 = vsel %vm1071, %v4454, %v4455
        %v4458 = vsel %vm1291, %v4456, 0
        %v4461 = vsel %vm1291, %v4455, 0
        %4463 = vmatprep.subr.bf16.mxu0 0
        %4464 = vmatpush1.bf16.msra.mxu0 %v3374
        %4465 = vmatprep.subr.bf16.mxu0 0
        %4466 = vmatpush1.bf16.msra.mxu0 0
        %4467 = vmatprep.subr.bf16.mxu0 0
        %4468 = vmatpush1.bf16.msra.mxu0 0
        %4469 = vmatprep.subr.bf16.mxu0 0
        %4470 = vmatpush1.bf16.msra.mxu0 0
        %4471 = vmatprep.subr.bf16.mxu0 0
        %4472 = vmatpush1.bf16.msra.mxu0 0
        %4473 = vmatprep.subr.bf16.mxu0 0
        %4474 = vmatpush1.bf16.msra.mxu0 0
        %4475 = vmatprep.subr.bf16.mxu0 0
        %4476 = vmatpush1.bf16.msra.mxu0 0
        %4477 = vmatprep.subr.bf16.mxu0 0
        %4478 = vmatpush1.bf16.msra.mxu0 0
        %4479 = vmatprep.subr.bf16.mxu0 0
        %4480 = vmatpush1.bf16.msra.mxu0 0
        %4481 = vmatprep.subr.bf16.mxu0 0
        %4482 = vmatpush1.bf16.msra.mxu0 0
        %4483 = vmatprep.subr.bf16.mxu0 0
        %4484 = vmatpush1.bf16.msra.mxu0 0
        %4485 = vmatprep.subr.bf16.mxu0 0
        %4486 = vmatpush1.bf16.msra.mxu0 0
        %4487 = vmatprep.subr.bf16.mxu0 0
        %4488 = vmatpush1.bf16.msra.mxu0 0
        %4489 = vmatprep.subr.bf16.mxu0 0
        %4490 = vmatpush1.bf16.msra.mxu0 0
        %4491 = vmatprep.subr.bf16.mxu0 0
        %4492 = vmatpush1.bf16.msra.mxu0 0
        %4493 = vmatprep.subr.bf16.mxu0 0
        %4494 = vmatpush1.bf16.msra.mxu0 0
        %4495 = vmatprep.mubr.bf16.mxu0 0
        %4496 = vmatmul.mubr.bf16.gmra.mrb[0].mxu0 %v4458
        %v4497 = vpop.f32.mrb[0].mxu0
        %v4498 = vadd.f32 0.0, %v4497
        %v4499 = vpop.f32.mrb[0].mxu0
        %v4500 = vpop.f32.mrb[0].mxu0
        %v4501 = vadd.f32 0.0, %v4500
        %v4502 = vpop.f32.mrb[0].mxu0
        %4503 = vmatprep.mubr.bf16.mxu0 0
        %4504 = vmatmul.mubr.bf16.gmra.mrb[0].mxu0 %v4461
        %v4505 = vpop.f32.mrb[0].mxu0
        %v4506 = vadd.f32 0.0, %v4505
        %v4507 = vpop.f32.mrb[0].mxu0
        %v4508 = vpop.f32.mrb[0].mxu0
        %v4509 = vpop.f32.mrb[0].mxu0
        %4510 = vdwg.mxu0
        %v4511 = vadd.f32 %v4447, %v4498
        %v4512 = vadd.f32 %v4448, %v4501
        %v4513 = vadd.f32 %v4449, %v4506
        %v4515 = vsel %vm1196, %v4513, 0
        %4517 = vmatprep.subr.mxu0 0.0
        %4518 = vmatpush1.msra.mxu0 %v4511
        %4519 = vmatprep.subr.mxu0 0.0
        %4520 = vmatpush1.msra.mxu0 %v4512
        %4521 = vmatprep.subr.mxu0 0.0
        %4522 = vmatpush1.msra.mxu0 %v4515
        %4523 = vmatprep.subr.mxu0 0.0
        %4524 = vmatpush1.msra.mxu0 0.0
        %4525 = vmatprep.subr.mxu0 0.0
        %4526 = vmatpush1.msra.mxu0 0.0
        %4527 = vmatprep.subr.mxu0 0.0
        %4528 = vmatpush1.msra.mxu0 0.0
        %4529 = vmatprep.subr.mxu0 0.0
        %4530 = vmatpush1.msra.mxu0 0.0
        %4531 = vmatprep.subr.mxu0 0.0
        %4532 = vmatpush1.msra.mxu0 0.0
        %4533 = vmatprep.subr.mxu0 0.0
        %4534 = vmatpush1.msra.mxu0 0.0
        %4535 = vmatprep.subr.mxu0 0.0
        %4536 = vmatpush1.msra.mxu0 0.0
        %4537 = vmatprep.subr.mxu0 0.0
        %4538 = vmatpush1.msra.mxu0 0.0
        %4539 = vmatprep.subr.mxu0 0.0
        %4540 = vmatpush1.msra.mxu0 0.0
        %4541 = vmatprep.subr.mxu0 0.0
        %4542 = vmatpush1.msra.mxu0 0.0
        %4543 = vmatprep.subr.mxu0 0.0
        %4544 = vmatpush1.msra.mxu0 0.0
        %4545 = vmatprep.subr.mxu0 0.0
        %4546 = vmatpush1.msra.mxu0 0.0
        %4547 = vmatprep.subr.mxu0 0.0
        %4548 = vmatpush1.msra.mxu0 0.0
        %4549 = vmatprep.subr.mxu0 0.0
        %4550 = vmatpush1.msra.mxu0 0.0
        %4551 = vmatprep.subr.mxu0 0.0
        %4552 = vmatpush1.msra.mxu0 0.0
        %4553 = vmatprep.subr.mxu0 0.0
        %4554 = vmatpush1.msra.mxu0 0.0
        %4555 = vmatprep.subr.mxu0 0.0
        %4556 = vmatpush1.msra.mxu0 0.0
        %4557 = vmatprep.subr.mxu0 0.0
        %4558 = vmatpush1.msra.mxu0 0.0
        %4559 = vmatprep.subr.mxu0 0.0
        %4560 = vmatpush1.msra.mxu0 0.0
        %4561 = vmatprep.subr.mxu0 0.0
        %4562 = vmatpush1.msra.mxu0 0.0
        %4563 = vmatprep.subr.mxu0 0.0
        %4564 = vmatpush1.msra.mxu0 0.0
        %4565 = vmatprep.subr.mxu0 0.0
        %4566 = vmatpush1.msra.mxu0 0.0
        %4567 = vmatprep.subr.mxu0 0.0
        %4568 = vmatpush1.msra.mxu0 0.0
        %4569 = vmatprep.subr.mxu0 0.0
        %4570 = vmatpush1.msra.mxu0 0.0
        %4571 = vmatprep.subr.mxu0 0.0
        %4572 = vmatpush1.msra.mxu0 0.0
        %4573 = vmatprep.subr.mxu0 0.0
        %4574 = vmatpush1.msra.mxu0 0.0
        %4575 = vmatprep.subr.mxu0 0.0
        %4576 = vmatpush1.msra.mxu0 0.0
        %4577 = vmatprep.subr.mxu0 0.0
        %4578 = vmatpush1.msra.mxu0 0.0
        %4579 = vmatprep.subr.mxu0 0.0
        %4580 = vmatpush1.msra.mxu0 0.0
        %4581 = vmatprep.mubr.f32.mxu0 0.0
        %4582 = vmatmul.mubr.f32.gmra.mrb[0].mxu0 %v3708
        %v4583 = vpop.f32.mrb[0].mxu0
        %v4584 = vadd.f32 %v3705, %v4583
        %v4585 = vpop.f32.mrb[0].mxu0
        %4586 = vdwg.mxu0
        %v4587 = vpack.c.bf16 %v4584, %v4584
        %v4588 = vld [vmem:[#allocation11 + $0x10] sm:$0xf]
        %v4589 = vsel %vm1295, %v4587, %v4588
        %4590 = vst [vmem:[#allocation11 + $0x10] sm:$0xf] %v4589
        %v4591 = vld [vmem:[#allocation10 + $0x30] sm:$0xff]
        %v4592 = vld [vmem:[#allocation10 + $0x38] sm:$0x3]
        %v4594 = vshrl.u32 %v4591, 16
        %v4596 = vshll.u32 %v4591, 16
        %v4598 = vrot.slane %v4596, 1
        %v4599 = vor.u32 %v4594, %v4598
        %v4601 = vshll.u32 %v4592, 16
        %v4603 = vrot.slane %v4601, 1
        %v4604 = vsel %vm600, %v4599, %v4603
        %v4605 = vshrl.u32 %v4592, 16
        %v4607 = vor.u32 %v4605, %v4603
        %v4609 = vsel %vm1291, %v4604, 0
        %v4612 = vsel %vm1291, %v4607, 0
        %4614 = vmatprep.subr.bf16.mxu0 0
        %4615 = vmatpush1.bf16.msra.mxu0 %v3368
        %4616 = vmatprep.subr.bf16.mxu0 0
        %4617 = vmatpush1.bf16.msra.mxu0 0
        %4618 = vmatprep.subr.bf16.mxu0 0
        %4619 = vmatpush1.bf16.msra.mxu0 0
        %4620 = vmatprep.subr.bf16.mxu0 0
        %4621 = vmatpush1.bf16.msra.mxu0 0
        %4622 = vmatprep.subr.bf16.mxu0 0
        %4623 = vmatpush1.bf16.msra.mxu0 0
        %4624 = vmatprep.subr.bf16.mxu0 0
        %4625 = vmatpush1.bf16.msra.mxu0 0
        %4626 = vmatprep.subr.bf16.mxu0 0
        %4627 = vmatpush1.bf16.msra.mxu0 0
        %4628 = vmatprep.subr.bf16.mxu0 0
        %4629 = vmatpush1.bf16.msra.mxu0 0
        %4630 = vmatprep.subr.bf16.mxu0 0
        %4631 = vmatpush1.bf16.msra.mxu0 0
        %4632 = vmatprep.subr.bf16.mxu0 0
        %4633 = vmatpush1.bf16.msra.mxu0 0
        %4634 = vmatprep.subr.bf16.mxu0 0
        %4635 = vmatpush1.bf16.msra.mxu0 0
        %4636 = vmatprep.subr.bf16.mxu0 0
        %4637 = vmatpush1.bf16.msra.mxu0 0
        %4638 = vmatprep.subr.bf16.mxu0 0
        %4639 = vmatpush1.bf16.msra.mxu0 0
        %4640 = vmatprep.subr.bf16.mxu0 0
        %4641 = vmatpush1.bf16.msra.mxu0 0
        %4642 = vmatprep.subr.bf16.mxu0 0
        %4643 = vmatpush1.bf16.msra.mxu0 0
        %4644 = vmatprep.subr.bf16.mxu0 0
        %4645 = vmatpush1.bf16.msra.mxu0 0
        %4646 = vmatprep.mubr.bf16.mxu0 0
        %4647 = vmatmul.mubr.bf16.gmra.mrb[0].mxu0 %v4609
        %v4648 = vpop.f32.mrb[0].mxu0
        %v4649 = vadd.f32 0.0, %v4648
        %v4650 = vpop.f32.mrb[0].mxu0
        %v4651 = vpop.f32.mrb[0].mxu0
        %v4652 = vadd.f32 0.0, %v4651
        %v4653 = vpop.f32.mrb[0].mxu0
        %4654 = vmatprep.mubr.bf16.mxu0 0
        %4655 = vmatmul.mubr.bf16.gmra.mrb[0].mxu0 %v4612
        %v4656 = vpop.f32.mrb[0].mxu0
        %v4657 = vadd.f32 0.0, %v4656
        %v4658 = vpop.f32.mrb[0].mxu0
        %v4659 = vpop.f32.mrb[0].mxu0
        %v4660 = vpop.f32.mrb[0].mxu0
        %4661 = vdwg.mxu0
        %v4662 = vsel %vm1291, %v4591, 0
        %v4664 = vsel %vm1291, %v4592, 0
        %4666 = vmatprep.subr.bf16.mxu0 0
        %4667 = vmatpush1.bf16.msra.mxu0 %v3366
        %4668 = vmatprep.subr.bf16.mxu0 0
        %4669 = vmatpush1.bf16.msra.mxu0 0
        %4670 = vmatprep.subr.bf16.mxu0 0
        %4671 = vmatpush1.bf16.msra.mxu0 0
        %4672 = vmatprep.subr.bf16.mxu0 0
        %4673 = vmatpush1.bf16.msra.mxu0 0
        %4674 = vmatprep.subr.bf16.mxu0 0
        %4675 = vmatpush1.bf16.msra.mxu0 0
        %4676 = vmatprep.subr.bf16.mxu0 0
        %4677 = vmatpush1.bf16.msra.mxu0 0
        %4678 = vmatprep.subr.bf16.mxu0 0
        %4679 = vmatpush1.bf16.msra.mxu0 0
        %4680 = vmatprep.subr.bf16.mxu0 0
        %4681 = vmatpush1.bf16.msra.mxu0 0
        %4682 = vmatprep.subr.bf16.mxu0 0
        %4683 = vmatpush1.bf16.msra.mxu0 0
        %4684 = vmatprep.subr.bf16.mxu0 0
        %4685 = vmatpush1.bf16.msra.mxu0 0
        %4686 = vmatprep.subr.bf16.mxu0 0
        %4687 = vmatpush1.bf16.msra.mxu0 0
        %4688 = vmatprep.subr.bf16.mxu0 0
        %4689 = vmatpush1.bf16.msra.mxu0 0
        %4690 = vmatprep.subr.bf16.mxu0 0
        %4691 = vmatpush1.bf16.msra.mxu0 0
        %4692 = vmatprep.subr.bf16.mxu0 0
        %4693 = vmatpush1.bf16.msra.mxu0 0
        %4694 = vmatprep.subr.bf16.mxu0 0
        %4695 = vmatpush1.bf16.msra.mxu0 0
        %4696 = vmatprep.subr.bf16.mxu0 0
        %4697 = vmatpush1.bf16.msra.mxu0 0
        %4698 = vmatprep.mubr.bf16.mxu0 0
        %4699 = vmatmul.mubr.bf16.gmra.mrb[0].mxu0 %v4662
        %v4700 = vpop.f32.mrb[0].mxu0
        %v4701 = vadd.f32 %v4649, %v4700
        %v4702 = vpop.f32.mrb[0].mxu0
        %v4703 = vpop.f32.mrb[0].mxu0
        %v4704 = vadd.f32 %v4652, %v4703
        %v4705 = vpop.f32.mrb[0].mxu0
        %4706 = vmatprep.mubr.bf16.mxu0 0
        %4707 = vmatmul.mubr.bf16.gmra.mrb[0].mxu0 %v4664
        %v4708 = vpop.f32.mrb[0].mxu0
        %v4709 = vadd.f32 %v4657, %v4708
        %v4710 = vpop.f32.mrb[0].mxu0
        %v4711 = vpop.f32.mrb[0].mxu0
        %v4712 = vpop.f32.mrb[0].mxu0
        %4713 = vdwg.mxu0
        %v4714 = vld [vmem:[#allocation10 + $0x30] sm:$0xfe]
        %v4715 = vld [vmem:[#allocation10 + $0x38] sm:$0x7]
        %v4718 = vrot.slane %v4714, 1
        %v4719 = vrot.slane %v4715, 1
        %v4720 = vsel %vm825, %v4718, %v4719
        %v4722 = vsel %vm1291, %v4720, 0
        %v4725 = vsel %vm1291, %v4719, 0
        %4727 = vmatprep.subr.bf16.mxu0 0
        %4728 = vmatpush1.bf16.msra.mxu0 %v3370
        %4729 = vmatprep.subr.bf16.mxu0 0
        %4730 = vmatpush1.bf16.msra.mxu0 0
        %4731 = vmatprep.subr.bf16.mxu0 0
        %4732 = vmatpush1.bf16.msra.mxu0 0
        %4733 = vmatprep.subr.bf16.mxu0 0
        %4734 = vmatpush1.bf16.msra.mxu0 0
        %4735 = vmatprep.subr.bf16.mxu0 0
        %4736 = vmatpush1.bf16.msra.mxu0 0
        %4737 = vmatprep.subr.bf16.mxu0 0
        %4738 = vmatpush1.bf16.msra.mxu0 0
        %4739 = vmatprep.subr.bf16.mxu0 0
        %4740 = vmatpush1.bf16.msra.mxu0 0
        %4741 = vmatprep.subr.bf16.mxu0 0
        %4742 = vmatpush1.bf16.msra.mxu0 0
        %4743 = vmatprep.subr.bf16.mxu0 0
        %4744 = vmatpush1.bf16.msra.mxu0 0
        %4745 = vmatprep.subr.bf16.mxu0 0
        %4746 = vmatpush1.bf16.msra.mxu0 0
        %4747 = vmatprep.subr.bf16.mxu0 0
        %4748 = vmatpush1.bf16.msra.mxu0 0
        %4749 = vmatprep.subr.bf16.mxu0 0
        %4750 = vmatpush1.bf16.msra.mxu0 0
        %4751 = vmatprep.subr.bf16.mxu0 0
        %4752 = vmatpush1.bf16.msra.mxu0 0
        %4753 = vmatprep.subr.bf16.mxu0 0
        %4754 = vmatpush1.bf16.msra.mxu0 0
        %4755 = vmatprep.subr.bf16.mxu0 0
        %4756 = vmatpush1.bf16.msra.mxu0 0
        %4757 = vmatprep.subr.bf16.mxu0 0
        %4758 = vmatpush1.bf16.msra.mxu0 0
        %4759 = vmatprep.mubr.bf16.mxu0 0
        %4760 = vmatmul.mubr.bf16.gmra.mrb[0].mxu0 %v4722
        %v4761 = vpop.f32.mrb[0].mxu0
        %v4762 = vadd.f32 0.0, %v4761
        %v4763 = vpop.f32.mrb[0].mxu0
        %v4764 = vpop.f32.mrb[0].mxu0
        %v4765 = vadd.f32 0.0, %v4764
        %v4766 = vpop.f32.mrb[0].mxu0
        %4767 = vmatprep.mubr.bf16.mxu0 0
        %4768 = vmatmul.mubr.bf16.gmra.mrb[0].mxu0 %v4725
        %v4769 = vpop.f32.mrb[0].mxu0
        %v4770 = vadd.f32 0.0, %v4769
        %v4771 = vpop.f32.mrb[0].mxu0
        %v4772 = vpop.f32.mrb[0].mxu0
        %v4773 = vpop.f32.mrb[0].mxu0
        %4774 = vdwg.mxu0
        %v4775 = vadd.f32 %v4701, %v4762
        %v4776 = vadd.f32 %v4704, %v4765
        %v4777 = vadd.f32 %v4709, %v4770
        %v4779 = vshrl.u32 %v4714, 16
        %v4781 = vrot.slane %v4779, 1
        %v4782 = vshll.u32 %v4714, 16
        %v4784 = vrot.slane %v4782, 2
        %v4785 = vor.u32 %v4781, %v4784
        %v4787 = vshrl.u32 %v4715, 16
        %v4789 = vrot.slane %v4787, 1
        %v4790 = vshll.u32 %v4715, 16
        %v4792 = vrot.slane %v4790, 2
        %v4793 = vor.u32 %v4789, %v4792
        %v4794 = vsel %vm934, %v4785, %v4793
        %v4796 = vsel %vm1291, %v4794, 0
        %v4799 = vsel %vm1291, %v4793, 0
        %4801 = vmatprep.subr.bf16.mxu0 0
        %4802 = vmatpush1.bf16.msra.mxu0 %v3372
        %4803 = vmatprep.subr.bf16.mxu0 0
        %4804 = vmatpush1.bf16.msra.mxu0 0
        %4805 = vmatprep.subr.bf16.mxu0 0
        %4806 = vmatpush1.bf16.msra.mxu0 0
        %4807 = vmatprep.subr.bf16.mxu0 0
        %4808 = vmatpush1.bf16.msra.mxu0 0
        %4809 = vmatprep.subr.bf16.mxu0 0
        %4810 = vmatpush1.bf16.msra.mxu0 0
        %4811 = vmatprep.subr.bf16.mxu0 0
        %4812 = vmatpush1.bf16.msra.mxu0 0
        %4813 = vmatprep.subr.bf16.mxu0 0
        %4814 = vmatpush1.bf16.msra.mxu0 0
        %4815 = vmatprep.subr.bf16.mxu0 0
        %4816 = vmatpush1.bf16.msra.mxu0 0
        %4817 = vmatprep.subr.bf16.mxu0 0
        %4818 = vmatpush1.bf16.msra.mxu0 0
        %4819 = vmatprep.subr.bf16.mxu0 0
        %4820 = vmatpush1.bf16.msra.mxu0 0
        %4821 = vmatprep.subr.bf16.mxu0 0
        %4822 = vmatpush1.bf16.msra.mxu0 0
        %4823 = vmatprep.subr.bf16.mxu0 0
        %4824 = vmatpush1.bf16.msra.mxu0 0
        %4825 = vmatprep.subr.bf16.mxu0 0
        %4826 = vmatpush1.bf16.msra.mxu0 0
        %4827 = vmatprep.subr.bf16.mxu0 0
        %4828 = vmatpush1.bf16.msra.mxu0 0
        %4829 = vmatprep.subr.bf16.mxu0 0
        %4830 = vmatpush1.bf16.msra.mxu0 0
        %4831 = vmatprep.subr.bf16.mxu0 0
        %4832 = vmatpush1.bf16.msra.mxu0 0
        %4833 = vmatprep.mubr.bf16.mxu0 0
        %4834 = vmatmul.mubr.bf16.gmra.mrb[0].mxu0 %v4796
        %v4835 = vpop.f32.mrb[0].mxu0
        %v4836 = vadd.f32 0.0, %v4835
        %v4837 = vpop.f32.mrb[0].mxu0
        %v4838 = vpop.f32.mrb[0].mxu0
        %v4839 = vadd.f32 0.0, %v4838
        %v4840 = vpop.f32.mrb[0].mxu0
        %4841 = vmatprep.mubr.bf16.mxu0 0
        %4842 = vmatmul.mubr.bf16.gmra.mrb[0].mxu0 %v4799
        %v4843 = vpop.f32.mrb[0].mxu0
        %v4844 = vadd.f32 0.0, %v4843
        %v4845 = vpop.f32.mrb[0].mxu0
        %v4846 = vpop.f32.mrb[0].mxu0
        %v4847 = vpop.f32.mrb[0].mxu0
        %4848 = vdwg.mxu0
        %v4849 = vadd.f32 %v4775, %v4836
        %v4850 = vadd.f32 %v4776, %v4839
        %v4851 = vadd.f32 %v4777, %v4844
        %v4852 = vld [vmem:[#allocation10 + $0x30] sm:$0xfc]
        %v4853 = vld [vmem:[#allocation10 + $0x38] sm:$0xf]
        %v4856 = vrot.slane %v4852, 2
        %v4857 = vrot.slane %v4853, 2
        %v4858 = vsel %vm1071, %v4856, %v4857
        %v4860 = vsel %vm1291, %v4858, 0
        %v4863 = vsel %vm1291, %v4857, 0
        %4865 = vmatprep.subr.bf16.mxu0 0
        %4866 = vmatpush1.bf16.msra.mxu0 %v3374
        %4867 = vmatprep.subr.bf16.mxu0 0
        %4868 = vmatpush1.bf16.msra.mxu0 0
        %4869 = vmatprep.subr.bf16.mxu0 0
        %4870 = vmatpush1.bf16.msra.mxu0 0
        %4871 = vmatprep.subr.bf16.mxu0 0
        %4872 = vmatpush1.bf16.msra.mxu0 0
        %4873 = vmatprep.subr.bf16.mxu0 0
        %4874 = vmatpush1.bf16.msra.mxu0 0
        %4875 = vmatprep.subr.bf16.mxu0 0
        %4876 = vmatpush1.bf16.msra.mxu0 0
        %4877 = vmatprep.subr.bf16.mxu0 0
        %4878 = vmatpush1.bf16.msra.mxu0 0
        %4879 = vmatprep.subr.bf16.mxu0 0
        %4880 = vmatpush1.bf16.msra.mxu0 0
        %4881 = vmatprep.subr.bf16.mxu0 0
        %4882 = vmatpush1.bf16.msra.mxu0 0
        %4883 = vmatprep.subr.bf16.mxu0 0
        %4884 = vmatpush1.bf16.msra.mxu0 0
        %4885 = vmatprep.subr.bf16.mxu0 0
        %4886 = vmatpush1.bf16.msra.mxu0 0
        %4887 = vmatprep.subr.bf16.mxu0 0
        %4888 = vmatpush1.bf16.msra.mxu0 0
        %4889 = vmatprep.subr.bf16.mxu0 0
        %4890 = vmatpush1.bf16.msra.mxu0 0
        %4891 = vmatprep.subr.bf16.mxu0 0
        %4892 = vmatpush1.bf16.msra.mxu0 0
        %4893 = vmatprep.subr.bf16.mxu0 0
        %4894 = vmatpush1.bf16.msra.mxu0 0
        %4895 = vmatprep.subr.bf16.mxu0 0
        %4896 = vmatpush1.bf16.msra.mxu0 0
        %4897 = vmatprep.mubr.bf16.mxu0 0
        %4898 = vmatmul.mubr.bf16.gmra.mrb[0].mxu0 %v4860
        %v4899 = vpop.f32.mrb[0].mxu0
        %v4900 = vadd.f32 0.0, %v4899
        %v4901 = vpop.f32.mrb[0].mxu0
        %v4902 = vpop.f32.mrb[0].mxu0
        %v4903 = vadd.f32 0.0, %v4902
        %v4904 = vpop.f32.mrb[0].mxu0
        %4905 = vmatprep.mubr.bf16.mxu0 0
        %4906 = vmatmul.mubr.bf16.gmra.mrb[0].mxu0 %v4863
        %v4907 = vpop.f32.mrb[0].mxu0
        %v4908 = vadd.f32 0.0, %v4907
        %v4909 = vpop.f32.mrb[0].mxu0
        %v4910 = vpop.f32.mrb[0].mxu0
        %v4911 = vpop.f32.mrb[0].mxu0
        %4912 = vdwg.mxu0
        %v4913 = vadd.f32 %v4849, %v4900
        %v4914 = vadd.f32 %v4850, %v4903
        %v4915 = vadd.f32 %v4851, %v4908
        %v4917 = vsel %vm1196, %v4915, 0
        %4919 = vmatprep.subr.mxu0 0.0
        %4920 = vmatpush1.msra.mxu0 %v4913
        %4921 = vmatprep.subr.mxu0 0.0
        %4922 = vmatpush1.msra.mxu0 %v4914
        %4923 = vmatprep.subr.mxu0 0.0
        %4924 = vmatpush1.msra.mxu0 %v4917
        %4925 = vmatprep.subr.mxu0 0.0
        %4926 = vmatpush1.msra.mxu0 0.0
        %4927 = vmatprep.subr.mxu0 0.0
        %4928 = vmatpush1.msra.mxu0 0.0
        %4929 = vmatprep.subr.mxu0 0.0
        %4930 = vmatpush1.msra.mxu0 0.0
        %4931 = vmatprep.subr.mxu0 0.0
        %4932 = vmatpush1.msra.mxu0 0.0
        %4933 = vmatprep.subr.mxu0 0.0
        %4934 = vmatpush1.msra.mxu0 0.0
        %4935 = vmatprep.subr.mxu0 0.0
        %4936 = vmatpush1.msra.mxu0 0.0
        %4937 = vmatprep.subr.mxu0 0.0
        %4938 = vmatpush1.msra.mxu0 0.0
        %4939 = vmatprep.subr.mxu0 0.0
        %4940 = vmatpush1.msra.mxu0 0.0
        %4941 = vmatprep.subr.mxu0 0.0
        %4942 = vmatpush1.msra.mxu0 0.0
        %4943 = vmatprep.subr.mxu0 0.0
        %4944 = vmatpush1.msra.mxu0 0.0
        %4945 = vmatprep.subr.mxu0 0.0
        %4946 = vmatpush1.msra.mxu0 0.0
        %4947 = vmatprep.subr.mxu0 0.0
        %4948 = vmatpush1.msra.mxu0 0.0
        %4949 = vmatprep.subr.mxu0 0.0
        %4950 = vmatpush1.msra.mxu0 0.0
        %4951 = vmatprep.subr.mxu0 0.0
        %4952 = vmatpush1.msra.mxu0 0.0
        %4953 = vmatprep.subr.mxu0 0.0
        %4954 = vmatpush1.msra.mxu0 0.0
        %4955 = vmatprep.subr.mxu0 0.0
        %4956 = vmatpush1.msra.mxu0 0.0
        %4957 = vmatprep.subr.mxu0 0.0
        %4958 = vmatpush1.msra.mxu0 0.0
        %4959 = vmatprep.subr.mxu0 0.0
        %4960 = vmatpush1.msra.mxu0 0.0
        %4961 = vmatprep.subr.mxu0 0.0
        %4962 = vmatpush1.msra.mxu0 0.0
        %4963 = vmatprep.subr.mxu0 0.0
        %4964 = vmatpush1.msra.mxu0 0.0
        %4965 = vmatprep.subr.mxu0 0.0
        %4966 = vmatpush1.msra.mxu0 0.0
        %4967 = vmatprep.subr.mxu0 0.0
        %4968 = vmatpush1.msra.mxu0 0.0
        %4969 = vmatprep.subr.mxu0 0.0
        %4970 = vmatpush1.msra.mxu0 0.0
        %4971 = vmatprep.subr.mxu0 0.0
        %4972 = vmatpush1.msra.mxu0 0.0
        %4973 = vmatprep.subr.mxu0 0.0
        %4974 = vmatpush1.msra.mxu0 0.0
        %4975 = vmatprep.subr.mxu0 0.0
        %4976 = vmatpush1.msra.mxu0 0.0
        %4977 = vmatprep.subr.mxu0 0.0
        %4978 = vmatpush1.msra.mxu0 0.0
        %4979 = vmatprep.subr.mxu0 0.0
        %4980 = vmatpush1.msra.mxu0 0.0
        %4981 = vmatprep.subr.mxu0 0.0
        %4982 = vmatpush1.msra.mxu0 0.0
        %4983 = vmatprep.mubr.f32.mxu0 0.0
        %4984 = vmatmul.mubr.f32.gmra.mrb[0].mxu0 %v3708
        %v4985 = vpop.f32.mrb[0].mxu0
        %v4986 = vadd.f32 %v3705, %v4985
        %v4987 = vpop.f32.mrb[0].mxu0
        %4988 = vdwg.mxu0
        %v4989 = vpack.c.bf16 %v4986, %v4986
        %v4990 = vld [vmem:[#allocation11 + $0x18] sm:$0xf]
        %v4991 = vsel %vm1295, %v4989, %v4990
        %4992 = vst [vmem:[#allocation11 + $0x18] sm:$0xf] %v4991
        %v4993 = vld [vmem:[#allocation4] sm:$0xff]
        %s4994 = scalar_lea.vmem [#allocation4], 8
        %v4995 = vld [vmem:[%s4994] sm:$0xff]
        %s4996 = scalar_lea.vmem [#allocation4], 16
        %v4997 = vld [vmem:[%s4996] sm:$0xff]
        %s4998 = scalar_lea.vmem [#allocation4], 24
        %v4999 = vld [vmem:[%s4998] sm:$0xff]
        %s5000 = scalar_lea.vmem [#allocation4], 32
        %v5001 = vld [vmem:[%s5000] sm:$0xff]
        %v5002 = vld [vmem:[#allocation8] sm:$0x1]
        %v5003 = vld [vmem:[#allocation11] sm:$0x3]
        %v5005 = vshrl.u32 %v5003, 16
        %v5007 = vshll.u32 %v5003, 16
        %v5009 = vrot.slane %v5007, 1
        %v5010 = vor.u32 %v5005, %v5009
        %v5012 = vsel %vm1291, %v5010, 0
        %5014 = vmatprep.subr.bf16.mxu0 0
        %5015 = vmatpush1.bf16.msra.mxu0 %v4995
        %5016 = vmatprep.subr.bf16.mxu0 0
        %5017 = vmatpush1.bf16.msra.mxu0 0
        %5018 = vmatprep.subr.bf16.mxu0 0
        %5019 = vmatpush1.bf16.msra.mxu0 0
        %5020 = vmatprep.subr.bf16.mxu0 0
        %5021 = vmatpush1.bf16.msra.mxu0 0
        %5022 = vmatprep.subr.bf16.mxu0 0
        %5023 = vmatpush1.bf16.msra.mxu0 0
        %5024 = vmatprep.subr.bf16.mxu0 0
        %5025 = vmatpush1.bf16.msra.mxu0 0
        %5026 = vmatprep.subr.bf16.mxu0 0
        %5027 = vmatpush1.bf16.msra.mxu0 0
        %5028 = vmatprep.subr.bf16.mxu0 0
        %5029 = vmatpush1.bf16.msra.mxu0 0
        %5030 = vmatprep.subr.bf16.mxu0 0
        %5031 = vmatpush1.bf16.msra.mxu0 0
        %5032 = vmatprep.subr.bf16.mxu0 0
        %5033 = vmatpush1.bf16.msra.mxu0 0
        %5034 = vmatprep.subr.bf16.mxu0 0
        %5035 = vmatpush1.bf16.msra.mxu0 0
        %5036 = vmatprep.subr.bf16.mxu0 0
        %5037 = vmatpush1.bf16.msra.mxu0 0
        %5038 = vmatprep.subr.bf16.mxu0 0
        %5039 = vmatpush1.bf16.msra.mxu0 0
        %5040 = vmatprep.subr.bf16.mxu0 0
        %5041 = vmatpush1.bf16.msra.mxu0 0
        %5042 = vmatprep.subr.bf16.mxu0 0
        %5043 = vmatpush1.bf16.msra.mxu0 0
        %5044 = vmatprep.subr.bf16.mxu0 0
        %5045 = vmatpush1.bf16.msra.mxu0 0
        %5046 = vmatprep.mubr.bf16.mxu0 0
        %5047 = vmatmul.mubr.bf16.gmra.mrb[0].mxu0 %v5012
        %v5048 = vpop.f32.mrb[0].mxu0
        %v5049 = vadd.f32 0.0, %v5048
        %v5050 = vpop.f32.mrb[0].mxu0
        %v5051 = vpop.f32.mrb[0].mxu0
        %v5052 = vpop.f32.mrb[0].mxu0
        %5053 = vdwg.mxu0
        %v5054 = vsel %vm1291, %v5003, 0
        %5056 = vmatprep.subr.bf16.mxu0 0
        %5057 = vmatpush1.bf16.msra.mxu0 %v4993
        %5058 = vmatprep.subr.bf16.mxu0 0
        %5059 = vmatpush1.bf16.msra.mxu0 0
        %5060 = vmatprep.subr.bf16.mxu0 0
        %5061 = vmatpush1.bf16.msra.mxu0 0
        %5062 = vmatprep.subr.bf16.mxu0 0
        %5063 = vmatpush1.bf16.msra.mxu0 0
        %5064 = vmatprep.subr.bf16.mxu0 0
        %5065 = vmatpush1.bf16.msra.mxu0 0
        %5066 = vmatprep.subr.bf16.mxu0 0
        %5067 = vmatpush1.bf16.msra.mxu0 0
        %5068 = vmatprep.subr.bf16.mxu0 0
        %5069 = vmatpush1.bf16.msra.mxu0 0
        %5070 = vmatprep.subr.bf16.mxu0 0
        %5071 = vmatpush1.bf16.msra.mxu0 0
        %5072 = vmatprep.subr.bf16.mxu0 0
        %5073 = vmatpush1.bf16.msra.mxu0 0
        %5074 = vmatprep.subr.bf16.mxu0 0
        %5075 = vmatpush1.bf16.msra.mxu0 0
        %5076 = vmatprep.subr.bf16.mxu0 0
        %5077 = vmatpush1.bf16.msra.mxu0 0
        %5078 = vmatprep.subr.bf16.mxu0 0
        %5079 = vmatpush1.bf16.msra.mxu0 0
        %5080 = vmatprep.subr.bf16.mxu0 0
        %5081 = vmatpush1.bf16.msra.mxu0 0
        %5082 = vmatprep.subr.bf16.mxu0 0
        %5083 = vmatpush1.bf16.msra.mxu0 0
        %5084 = vmatprep.subr.bf16.mxu0 0
        %5085 = vmatpush1.bf16.msra.mxu0 0
        %5086 = vmatprep.subr.bf16.mxu0 0
        %5087 = vmatpush1.bf16.msra.mxu0 0
        %5088 = vmatprep.mubr.bf16.mxu0 0
        %5089 = vmatmul.mubr.bf16.gmra.mrb[0].mxu0 %v5054
        %v5090 = vpop.f32.mrb[0].mxu0
        %v5091 = vadd.f32 %v5049, %v5090
        %v5092 = vpop.f32.mrb[0].mxu0
        %v5093 = vpop.f32.mrb[0].mxu0
        %v5094 = vpop.f32.mrb[0].mxu0
        %5095 = vdwg.mxu0
        %v5096 = vld [vmem:[#allocation11] sm:$0x6]
        %v5098 = vrot.slane %v5096, 1
        %v5100 = vsel %vm1291, %v5098, 0
        %5102 = vmatprep.subr.bf16.mxu0 0
        %5103 = vmatpush1.bf16.msra.mxu0 %v4997
        %5104 = vmatprep.subr.bf16.mxu0 0
        %5105 = vmatpush1.bf16.msra.mxu0 0
        %5106 = vmatprep.subr.bf16.mxu0 0
        %5107 = vmatpush1.bf16.msra.mxu0 0
        %5108 = vmatprep.subr.bf16.mxu0 0
        %5109 = vmatpush1.bf16.msra.mxu0 0
        %5110 = vmatprep.subr.bf16.mxu0 0
        %5111 = vmatpush1.bf16.msra.mxu0 0
        %5112 = vmatprep.subr.bf16.mxu0 0
        %5113 = vmatpush1.bf16.msra.mxu0 0
        %5114 = vmatprep.subr.bf16.mxu0 0
        %5115 = vmatpush1.bf16.msra.mxu0 0
        %5116 = vmatprep.subr.bf16.mxu0 0
        %5117 = vmatpush1.bf16.msra.mxu0 0
        %5118 = vmatprep.subr.bf16.mxu0 0
        %5119 = vmatpush1.bf16.msra.mxu0 0
        %5120 = vmatprep.subr.bf16.mxu0 0
        %5121 = vmatpush1.bf16.msra.mxu0 0
        %5122 = vmatprep.subr.bf16.mxu0 0
        %5123 = vmatpush1.bf16.msra.mxu0 0
        %5124 = vmatprep.subr.bf16.mxu0 0
        %5125 = vmatpush1.bf16.msra.mxu0 0
        %5126 = vmatprep.subr.bf16.mxu0 0
        %5127 = vmatpush1.bf16.msra.mxu0 0
        %5128 = vmatprep.subr.bf16.mxu0 0
        %5129 = vmatpush1.bf16.msra.mxu0 0
        %5130 = vmatprep.subr.bf16.mxu0 0
        %5131 = vmatpush1.bf16.msra.mxu0 0
        %5132 = vmatprep.subr.bf16.mxu0 0
        %5133 = vmatpush1.bf16.msra.mxu0 0
        %5134 = vmatprep.mubr.bf16.mxu0 0
        %5135 = vmatmul.mubr.bf16.gmra.mrb[0].mxu0 %v5100
        %v5136 = vpop.f32.mrb[0].mxu0
        %v5137 = vadd.f32 0.0, %v5136
        %v5138 = vpop.f32.mrb[0].mxu0
        %v5139 = vpop.f32.mrb[0].mxu0
        %v5140 = vpop.f32.mrb[0].mxu0
        %5141 = vdwg.mxu0
        %v5142 = vadd.f32 %v5091, %v5137
        %v5144 = vshrl.u32 %v5096, 16
        %v5146 = vrot.slane %v5144, 1
        %v5147 = vshll.u32 %v5096, 16
        %v5149 = vrot.slane %v5147, 2
        %v5150 = vor.u32 %v5146, %v5149
        %v5152 = vsel %vm1291, %v5150, 0
        %5154 = vmatprep.subr.bf16.mxu0 0
        %5155 = vmatpush1.bf16.msra.mxu0 %v4999
        %5156 = vmatprep.subr.bf16.mxu0 0
        %5157 = vmatpush1.bf16.msra.mxu0 0
        %5158 = vmatprep.subr.bf16.mxu0 0
        %5159 = vmatpush1.bf16.msra.mxu0 0
        %5160 = vmatprep.subr.bf16.mxu0 0
        %5161 = vmatpush1.bf16.msra.mxu0 0
        %5162 = vmatprep.subr.bf16.mxu0 0
        %5163 = vmatpush1.bf16.msra.mxu0 0
        %5164 = vmatprep.subr.bf16.mxu0 0
        %5165 = vmatpush1.bf16.msra.mxu0 0
        %5166 = vmatprep.subr.bf16.mxu0 0
        %5167 = vmatpush1.bf16.msra.mxu0 0
        %5168 = vmatprep.subr.bf16.mxu0 0
        %5169 = vmatpush1.bf16.msra.mxu0 0
        %5170 = vmatprep.subr.bf16.mxu0 0
        %5171 = vmatpush1.bf16.msra.mxu0 0
        %5172 = vmatprep.subr.bf16.mxu0 0
        %5173 = vmatpush1.bf16.msra.mxu0 0
        %5174 = vmatprep.subr.bf16.mxu0 0
        %5175 = vmatpush1.bf16.msra.mxu0 0
        %5176 = vmatprep.subr.bf16.mxu0 0
        %5177 = vmatpush1.bf16.msra.mxu0 0
        %5178 = vmatprep.subr.bf16.mxu0 0
        %5179 = vmatpush1.bf16.msra.mxu0 0
        %5180 = vmatprep.subr.bf16.mxu0 0
        %5181 = vmatpush1.bf16.msra.mxu0 0
        %5182 = vmatprep.subr.bf16.mxu0 0
        %5183 = vmatpush1.bf16.msra.mxu0 0
        %5184 = vmatprep.subr.bf16.mxu0 0
        %5185 = vmatpush1.bf16.msra.mxu0 0
        %5186 = vmatprep.mubr.bf16.mxu0 0
        %5187 = vmatmul.mubr.bf16.gmra.mrb[0].mxu0 %v5152
        %v5188 = vpop.f32.mrb[0].mxu0
        %v5189 = vadd.f32 0.0, %v5188
        %v5190 = vpop.f32.mrb[0].mxu0
        %v5191 = vpop.f32.mrb[0].mxu0
        %v5192 = vpop.f32.mrb[0].mxu0
        %5193 = vdwg.mxu0
        %v5194 = vadd.f32 %v5142, %v5189
        %v5195 = vld [vmem:[#allocation11] sm:$0xc]
        %v5197 = vrot.slane %v5195, 2
        %v5199 = vsel %vm1291, %v5197, 0
        %5201 = vmatprep.subr.bf16.mxu0 0
        %5202 = vmatpush1.bf16.msra.mxu0 %v5001
        %5203 = vmatprep.subr.bf16.mxu0 0
        %5204 = vmatpush1.bf16.msra.mxu0 0
        %5205 = vmatprep.subr.bf16.mxu0 0
        %5206 = vmatpush1.bf16.msra.mxu0 0
        %5207 = vmatprep.subr.bf16.mxu0 0
        %5208 = vmatpush1.bf16.msra.mxu0 0
        %5209 = vmatprep.subr.bf16.mxu0 0
        %5210 = vmatpush1.bf16.msra.mxu0 0
        %5211 = vmatprep.subr.bf16.mxu0 0
        %5212 = vmatpush1.bf16.msra.mxu0 0
        %5213 = vmatprep.subr.bf16.mxu0 0
        %5214 = vmatpush1.bf16.msra.mxu0 0
        %5215 = vmatprep.subr.bf16.mxu0 0
        %5216 = vmatpush1.bf16.msra.mxu0 0
        %5217 = vmatprep.subr.bf16.mxu0 0
        %5218 = vmatpush1.bf16.msra.mxu0 0
        %5219 = vmatprep.subr.bf16.mxu0 0
        %5220 = vmatpush1.bf16.msra.mxu0 0
        %5221 = vmatprep.subr.bf16.mxu0 0
        %5222 = vmatpush1.bf16.msra.mxu0 0
        %5223 = vmatprep.subr.bf16.mxu0 0
        %5224 = vmatpush1.bf16.msra.mxu0 0
        %5225 = vmatprep.subr.bf16.mxu0 0
        %5226 = vmatpush1.bf16.msra.mxu0 0
        %5227 = vmatprep.subr.bf16.mxu0 0
        %5228 = vmatpush1.bf16.msra.mxu0 0
        %5229 = vmatprep.subr.bf16.mxu0 0
        %5230 = vmatpush1.bf16.msra.mxu0 0
        %5231 = vmatprep.subr.bf16.mxu0 0
        %5232 = vmatpush1.bf16.msra.mxu0 0
        %5233 = vmatprep.mubr.bf16.mxu0 0
        %5234 = vmatmul.mubr.bf16.gmra.mrb[0].mxu0 %v5199
        %v5235 = vpop.f32.mrb[0].mxu0
        %v5236 = vadd.f32 0.0, %v5235
        %v5237 = vpop.f32.mrb[0].mxu0
        %v5238 = vpop.f32.mrb[0].mxu0
        %v5239 = vpop.f32.mrb[0].mxu0
        %5240 = vdwg.mxu0
        %v5241 = vadd.f32 %v5194, %v5236
        %v5243 = vlaneseq
        %v5244 = vshrl.u32 %v5243, 7
        %v5245 = vsub.s32 0, %v5244
        %v5246 = vrot.slane %v5002, %v5245
        %v5248 = vadd.f32 %v5241, %v5246
        %vm5249 = vcmp.ge.f32.partialorder %v5248, 0.0
        %v5250 = vmul.f32 %v5248, 0.1
        %v5251 = vsel %vm5249, %v5248, %v5250
        %v5252 = vpack.c.bf16 %v5251, %v5251
        %vm5253 = vcmask 123904
        %vm5254 = vsmask.f32 1280
        %vm5255 = vmand %vm5253, %vm5254
        %v5256 = vld [vmem:[#allocation12] sm:$0x3]
        %v5257 = vsel %vm5255, %v5252, %v5256
        %5258 = vst [vmem:[#allocation12] sm:$0x3] %v5257
        %v5259 = vld [vmem:[#allocation11 + $0x8] sm:$0x3]
        %v5261 = vshrl.u32 %v5259, 16
        %v5263 = vshll.u32 %v5259, 16
        %v5265 = vrot.slane %v5263, 1
        %v5266 = vor.u32 %v5261, %v5265
        %v5268 = vsel %vm1291, %v5266, 0
        %5270 = vmatprep.subr.bf16.mxu0 0
        %5271 = vmatpush1.bf16.msra.mxu0 %v4995
        %5272 = vmatprep.subr.bf16.mxu0 0
        %5273 = vmatpush1.bf16.msra.mxu0 0
        %5274 = vmatprep.subr.bf16.mxu0 0
        %5275 = vmatpush1.bf16.msra.mxu0 0
        %5276 = vmatprep.subr.bf16.mxu0 0
        %5277 = vmatpush1.bf16.msra.mxu0 0
        %5278 = vmatprep.subr.bf16.mxu0 0
        %5279 = vmatpush1.bf16.msra.mxu0 0
        %5280 = vmatprep.subr.bf16.mxu0 0
        %5281 = vmatpush1.bf16.msra.mxu0 0
        %5282 = vmatprep.subr.bf16.mxu0 0
        %5283 = vmatpush1.bf16.msra.mxu0 0
        %5284 = vmatprep.subr.bf16.mxu0 0
        %5285 = vmatpush1.bf16.msra.mxu0 0
        %5286 = vmatprep.subr.bf16.mxu0 0
        %5287 = vmatpush1.bf16.msra.mxu0 0
        %5288 = vmatprep.subr.bf16.mxu0 0
        %5289 = vmatpush1.bf16.msra.mxu0 0
        %5290 = vmatprep.subr.bf16.mxu0 0
        %5291 = vmatpush1.bf16.msra.mxu0 0
        %5292 = vmatprep.subr.bf16.mxu0 0
        %5293 = vmatpush1.bf16.msra.mxu0 0
        %5294 = vmatprep.subr.bf16.mxu0 0
        %5295 = vmatpush1.bf16.msra.mxu0 0
        %5296 = vmatprep.subr.bf16.mxu0 0
        %5297 = vmatpush1.bf16.msra.mxu0 0
        %5298 = vmatprep.subr.bf16.mxu0 0
        %5299 = vmatpush1.bf16.msra.mxu0 0
        %5300 = vmatprep.subr.bf16.mxu0 0
        %5301 = vmatpush1.bf16.msra.mxu0 0
        %5302 = vmatprep.mubr.bf16.mxu0 0
        %5303 = vmatmul.mubr.bf16.gmra.mrb[0].mxu0 %v5268
        %v5304 = vpop.f32.mrb[0].mxu0
        %v5305 = vadd.f32 0.0, %v5304
        %v5306 = vpop.f32.mrb[0].mxu0
        %v5307 = vpop.f32.mrb[0].mxu0
        %v5308 = vpop.f32.mrb[0].mxu0
        %5309 = vdwg.mxu0
        %v5310 = vsel %vm1291, %v5259, 0
        %5312 = vmatprep.subr.bf16.mxu0 0
        %5313 = vmatpush1.bf16.msra.mxu0 %v4993
        %5314 = vmatprep.subr.bf16.mxu0 0
        %5315 = vmatpush1.bf16.msra.mxu0 0
        %5316 = vmatprep.subr.bf16.mxu0 0
        %5317 = vmatpush1.bf16.msra.mxu0 0
        %5318 = vmatprep.subr.bf16.mxu0 0
        %5319 = vmatpush1.bf16.msra.mxu0 0
        %5320 = vmatprep.subr.bf16.mxu0 0
        %5321 = vmatpush1.bf16.msra.mxu0 0
        %5322 = vmatprep.subr.bf16.mxu0 0
        %5323 = vmatpush1.bf16.msra.mxu0 0
        %5324 = vmatprep.subr.bf16.mxu0 0
        %5325 = vmatpush1.bf16.msra.mxu0 0
        %5326 = vmatprep.subr.bf16.mxu0 0
        %5327 = vmatpush1.bf16.msra.mxu0 0
        %5328 = vmatprep.subr.bf16.mxu0 0
        %5329 = vmatpush1.bf16.msra.mxu0 0
        %5330 = vmatprep.subr.bf16.mxu0 0
        %5331 = vmatpush1.bf16.msra.mxu0 0
        %5332 = vmatprep.subr.bf16.mxu0 0
        %5333 = vmatpush1.bf16.msra.mxu0 0
        %5334 = vmatprep.subr.bf16.mxu0 0
        %5335 = vmatpush1.bf16.msra.mxu0 0
        %5336 = vmatprep.subr.bf16.mxu0 0
        %5337 = vmatpush1.bf16.msra.mxu0 0
        %5338 = vmatprep.subr.bf16.mxu0 0
        %5339 = vmatpush1.bf16.msra.mxu0 0
        %5340 = vmatprep.subr.bf16.mxu0 0
        %5341 = vmatpush1.bf16.msra.mxu0 0
        %5342 = vmatprep.subr.bf16.mxu0 0
        %5343 = vmatpush1.bf16.msra.mxu0 0
        %5344 = vmatprep.mubr.bf16.mxu0 0
        %5345 = vmatmul.mubr.bf16.gmra.mrb[0].mxu0 %v5310
        %v5346 = vpop.f32.mrb[0].mxu0
        %v5347 = vadd.f32 %v5305, %v5346
        %v5348 = vpop.f32.mrb[0].mxu0
        %v5349 = vpop.f32.mrb[0].mxu0
        %v5350 = vpop.f32.mrb[0].mxu0
        %5351 = vdwg.mxu0
        %v5352 = vld [vmem:[#allocation11 + $0x8] sm:$0x6]
        %v5354 = vrot.slane %v5352, 1
        %v5356 = vsel %vm1291, %v5354, 0
        %5358 = vmatprep.subr.bf16.mxu0 0
        %5359 = vmatpush1.bf16.msra.mxu0 %v4997
        %5360 = vmatprep.subr.bf16.mxu0 0
        %5361 = vmatpush1.bf16.msra.mxu0 0
        %5362 = vmatprep.subr.bf16.mxu0 0
        %5363 = vmatpush1.bf16.msra.mxu0 0
        %5364 = vmatprep.subr.bf16.mxu0 0
        %5365 = vmatpush1.bf16.msra.mxu0 0
        %5366 = vmatprep.subr.bf16.mxu0 0
        %5367 = vmatpush1.bf16.msra.mxu0 0
        %5368 = vmatprep.subr.bf16.mxu0 0
        %5369 = vmatpush1.bf16.msra.mxu0 0
        %5370 = vmatprep.subr.bf16.mxu0 0
        %5371 = vmatpush1.bf16.msra.mxu0 0
        %5372 = vmatprep.subr.bf16.mxu0 0
        %5373 = vmatpush1.bf16.msra.mxu0 0
        %5374 = vmatprep.subr.bf16.mxu0 0
        %5375 = vmatpush1.bf16.msra.mxu0 0
        %5376 = vmatprep.subr.bf16.mxu0 0
        %5377 = vmatpush1.bf16.msra.mxu0 0
        %5378 = vmatprep.subr.bf16.mxu0 0
        %5379 = vmatpush1.bf16.msra.mxu0 0
        %5380 = vmatprep.subr.bf16.mxu0 0
        %5381 = vmatpush1.bf16.msra.mxu0 0
        %5382 = vmatprep.subr.bf16.mxu0 0
        %5383 = vmatpush1.bf16.msra.mxu0 0
        %5384 = vmatprep.subr.bf16.mxu0 0
        %5385 = vmatpush1.bf16.msra.mxu0 0
        %5386 = vmatprep.subr.bf16.mxu0 0
        %5387 = vmatpush1.bf16.msra.mxu0 0
        %5388 = vmatprep.subr.bf16.mxu0 0
        %5389 = vmatpush1.bf16.msra.mxu0 0
        %5390 = vmatprep.mubr.bf16.mxu0 0
        %5391 = vmatmul.mubr.bf16.gmra.mrb[0].mxu0 %v5356
        %v5392 = vpop.f32.mrb[0].mxu0
        %v5393 = vadd.f32 0.0, %v5392
        %v5394 = vpop.f32.mrb[0].mxu0
        %v5395 = vpop.f32.mrb[0].mxu0
        %v5396 = vpop.f32.mrb[0].mxu0
        %5397 = vdwg.mxu0
        %v5398 = vadd.f32 %v5347, %v5393
        %v5400 = vshrl.u32 %v5352, 16
        %v5402 = vrot.slane %v5400, 1
        %v5403 = vshll.u32 %v5352, 16
        %v5405 = vrot.slane %v5403, 2
        %v5406 = vor.u32 %v5402, %v5405
        %v5408 = vsel %vm1291, %v5406, 0
        %5410 = vmatprep.subr.bf16.mxu0 0
        %5411 = vmatpush1.bf16.msra.mxu0 %v4999
        %5412 = vmatprep.subr.bf16.mxu0 0
        %5413 = vmatpush1.bf16.msra.mxu0 0
        %5414 = vmatprep.subr.bf16.mxu0 0
        %5415 = vmatpush1.bf16.msra.mxu0 0
        %5416 = vmatprep.subr.bf16.mxu0 0
        %5417 = vmatpush1.bf16.msra.mxu0 0
        %5418 = vmatprep.subr.bf16.mxu0 0
        %5419 = vmatpush1.bf16.msra.mxu0 0
        %5420 = vmatprep.subr.bf16.mxu0 0
        %5421 = vmatpush1.bf16.msra.mxu0 0
        %5422 = vmatprep.subr.bf16.mxu0 0
        %5423 = vmatpush1.bf16.msra.mxu0 0
        %5424 = vmatprep.subr.bf16.mxu0 0
        %5425 = vmatpush1.bf16.msra.mxu0 0
        %5426 = vmatprep.subr.bf16.mxu0 0
        %5427 = vmatpush1.bf16.msra.mxu0 0
        %5428 = vmatprep.subr.bf16.mxu0 0
        %5429 = vmatpush1.bf16.msra.mxu0 0
        %5430 = vmatprep.subr.bf16.mxu0 0
        %5431 = vmatpush1.bf16.msra.mxu0 0
        %5432 = vmatprep.subr.bf16.mxu0 0
        %5433 = vmatpush1.bf16.msra.mxu0 0
        %5434 = vmatprep.subr.bf16.mxu0 0
        %5435 = vmatpush1.bf16.msra.mxu0 0
        %5436 = vmatprep.subr.bf16.mxu0 0
        %5437 = vmatpush1.bf16.msra.mxu0 0
        %5438 = vmatprep.subr.bf16.mxu0 0
        %5439 = vmatpush1.bf16.msra.mxu0 0
        %5440 = vmatprep.subr.bf16.mxu0 0
        %5441 = vmatpush1.bf16.msra.mxu0 0
        %5442 = vmatprep.mubr.bf16.mxu0 0
        %5443 = vmatmul.mubr.bf16.gmra.mrb[0].mxu0 %v5408
        %v5444 = vpop.f32.mrb[0].mxu0
        %v5445 = vadd.f32 0.0, %v5444
        %v5446 = vpop.f32.mrb[0].mxu0
        %v5447 = vpop.f32.mrb[0].mxu0
        %v5448 = vpop.f32.mrb[0].mxu0
        %5449 = vdwg.mxu0
        %v5450 = vadd.f32 %v5398, %v5445
        %v5451 = vld [vmem:[#allocation11 + $0x8] sm:$0xc]
        %v5453 = vrot.slane %v5451, 2
        %v5455 = vsel %vm1291, %v5453, 0
        %5457 = vmatprep.subr.bf16.mxu0 0
        %5458 = vmatpush1.bf16.msra.mxu0 %v5001
        %5459 = vmatprep.subr.bf16.mxu0 0
        %5460 = vmatpush1.bf16.msra.mxu0 0
        %5461 = vmatprep.subr.bf16.mxu0 0
        %5462 = vmatpush1.bf16.msra.mxu0 0
        %5463 = vmatprep.subr.bf16.mxu0 0
        %5464 = vmatpush1.bf16.msra.mxu0 0
        %5465 = vmatprep.subr.bf16.mxu0 0
        %5466 = vmatpush1.bf16.msra.mxu0 0
        %5467 = vmatprep.subr.bf16.mxu0 0
        %5468 = vmatpush1.bf16.msra.mxu0 0
        %5469 = vmatprep.subr.bf16.mxu0 0
        %5470 = vmatpush1.bf16.msra.mxu0 0
        %5471 = vmatprep.subr.bf16.mxu0 0
        %5472 = vmatpush1.bf16.msra.mxu0 0
        %5473 = vmatprep.subr.bf16.mxu0 0
        %5474 = vmatpush1.bf16.msra.mxu0 0
        %5475 = vmatprep.subr.bf16.mxu0 0
        %5476 = vmatpush1.bf16.msra.mxu0 0
        %5477 = vmatprep.subr.bf16.mxu0 0
        %5478 = vmatpush1.bf16.msra.mxu0 0
        %5479 = vmatprep.subr.bf16.mxu0 0
        %5480 = vmatpush1.bf16.msra.mxu0 0
        %5481 = vmatprep.subr.bf16.mxu0 0
        %5482 = vmatpush1.bf16.msra.mxu0 0
        %5483 = vmatprep.subr.bf16.mxu0 0
        %5484 = vmatpush1.bf16.msra.mxu0 0
        %5485 = vmatprep.subr.bf16.mxu0 0
        %5486 = vmatpush1.bf16.msra.mxu0 0
        %5487 = vmatprep.subr.bf16.mxu0 0
        %5488 = vmatpush1.bf16.msra.mxu0 0
        %5489 = vmatprep.mubr.bf16.mxu0 0
        %5490 = vmatmul.mubr.bf16.gmra.mrb[0].mxu0 %v5455
        %v5491 = vpop.f32.mrb[0].mxu0
        %v5492 = vadd.f32 0.0, %v5491
        %v5493 = vpop.f32.mrb[0].mxu0
        %v5494 = vpop.f32.mrb[0].mxu0
        %v5495 = vpop.f32.mrb[0].mxu0
        %5496 = vdwg.mxu0
        %v5497 = vadd.f32 %v5450, %v5492
        %v5498 = vadd.f32 %v5497, %v5246
        %vm5499 = vcmp.ge.f32.partialorder %v5498, 0.0
        %v5500 = vmul.f32 %v5498, 0.1
        %v5501 = vsel %vm5499, %v5498, %v5500
        %v5502 = vpack.c.bf16 %v5501, %v5501
        %v5503 = vld [vmem:[#allocation12 + $0x8] sm:$0x3]
        %v5504 = vsel %vm5255, %v5502, %v5503
        %5505 = vst [vmem:[#allocation12 + $0x8] sm:$0x3] %v5504
        %v5506 = vld [vmem:[#allocation11 + $0x10] sm:$0x3]
        %v5508 = vshrl.u32 %v5506, 16
        %v5510 = vshll.u32 %v5506, 16
        %v5512 = vrot.slane %v5510, 1
        %v5513 = vor.u32 %v5508, %v5512
        %v5515 = vsel %vm1291, %v5513, 0
        %5517 = vmatprep.subr.bf16.mxu0 0
        %5518 = vmatpush1.bf16.msra.mxu0 %v4995
        %5519 = vmatprep.subr.bf16.mxu0 0
        %5520 = vmatpush1.bf16.msra.mxu0 0
        %5521 = vmatprep.subr.bf16.mxu0 0
        %5522 = vmatpush1.bf16.msra.mxu0 0
        %5523 = vmatprep.subr.bf16.mxu0 0
        %5524 = vmatpush1.bf16.msra.mxu0 0
        %5525 = vmatprep.subr.bf16.mxu0 0
        %5526 = vmatpush1.bf16.msra.mxu0 0
        %5527 = vmatprep.subr.bf16.mxu0 0
        %5528 = vmatpush1.bf16.msra.mxu0 0
        %5529 = vmatprep.subr.bf16.mxu0 0
        %5530 = vmatpush1.bf16.msra.mxu0 0
        %5531 = vmatprep.subr.bf16.mxu0 0
        %5532 = vmatpush1.bf16.msra.mxu0 0
        %5533 = vmatprep.subr.bf16.mxu0 0
        %5534 = vmatpush1.bf16.msra.mxu0 0
        %5535 = vmatprep.subr.bf16.mxu0 0
        %5536 = vmatpush1.bf16.msra.mxu0 0
        %5537 = vmatprep.subr.bf16.mxu0 0
        %5538 = vmatpush1.bf16.msra.mxu0 0
        %5539 = vmatprep.subr.bf16.mxu0 0
        %5540 = vmatpush1.bf16.msra.mxu0 0
        %5541 = vmatprep.subr.bf16.mxu0 0
        %5542 = vmatpush1.bf16.msra.mxu0 0
        %5543 = vmatprep.subr.bf16.mxu0 0
        %5544 = vmatpush1.bf16.msra.mxu0 0
        %5545 = vmatprep.subr.bf16.mxu0 0
        %5546 = vmatpush1.bf16.msra.mxu0 0
        %5547 = vmatprep.subr.bf16.mxu0 0
        %5548 = vmatpush1.bf16.msra.mxu0 0
        %5549 = vmatprep.mubr.bf16.mxu0 0
        %5550 = vmatmul.mubr.bf16.gmra.mrb[0].mxu0 %v5515
        %v5551 = vpop.f32.mrb[0].mxu0
        %v5552 = vadd.f32 0.0, %v5551
        %v5553 = vpop.f32.mrb[0].mxu0
        %v5554 = vpop.f32.mrb[0].mxu0
        %v5555 = vpop.f32.mrb[0].mxu0
        %5556 = vdwg.mxu0
        %v5557 = vsel %vm1291, %v5506, 0
        %5559 = vmatprep.subr.bf16.mxu0 0
        %5560 = vmatpush1.bf16.msra.mxu0 %v4993
        %5561 = vmatprep.subr.bf16.mxu0 0
        %5562 = vmatpush1.bf16.msra.mxu0 0
        %5563 = vmatprep.subr.bf16.mxu0 0
        %5564 = vmatpush1.bf16.msra.mxu0 0
        %5565 = vmatprep.subr.bf16.mxu0 0
        %5566 = vmatpush1.bf16.msra.mxu0 0
        %5567 = vmatprep.subr.bf16.mxu0 0
        %5568 = vmatpush1.bf16.msra.mxu0 0
        %5569 = vmatprep.subr.bf16.mxu0 0
        %5570 = vmatpush1.bf16.msra.mxu0 0
        %5571 = vmatprep.subr.bf16.mxu0 0
        %5572 = vmatpush1.bf16.msra.mxu0 0
        %5573 = vmatprep.subr.bf16.mxu0 0
        %5574 = vmatpush1.bf16.msra.mxu0 0
        %5575 = vmatprep.subr.bf16.mxu0 0
        %5576 = vmatpush1.bf16.msra.mxu0 0
        %5577 = vmatprep.subr.bf16.mxu0 0
        %5578 = vmatpush1.bf16.msra.mxu0 0
        %5579 = vmatprep.subr.bf16.mxu0 0
        %5580 = vmatpush1.bf16.msra.mxu0 0
        %5581 = vmatprep.subr.bf16.mxu0 0
        %5582 = vmatpush1.bf16.msra.mxu0 0
        %5583 = vmatprep.subr.bf16.mxu0 0
        %5584 = vmatpush1.bf16.msra.mxu0 0
        %5585 = vmatprep.subr.bf16.mxu0 0
        %5586 = vmatpush1.bf16.msra.mxu0 0
        %5587 = vmatprep.subr.bf16.mxu0 0
        %5588 = vmatpush1.bf16.msra.mxu0 0
        %5589 = vmatprep.subr.bf16.mxu0 0
        %5590 = vmatpush1.bf16.msra.mxu0 0
        %5591 = vmatprep.mubr.bf16.mxu0 0
        %5592 = vmatmul.mubr.bf16.gmra.mrb[0].mxu0 %v5557
        %v5593 = vpop.f32.mrb[0].mxu0
        %v5594 = vadd.f32 %v5552, %v5593
        %v5595 = vpop.f32.mrb[0].mxu0
        %v5596 = vpop.f32.mrb[0].mxu0
        %v5597 = vpop.f32.mrb[0].mxu0
        %5598 = vdwg.mxu0
        %v5599 = vld [vmem:[#allocation11 + $0x10] sm:$0x6]
        %v5601 = vrot.slane %v5599, 1
        %v5603 = vsel %vm1291, %v5601, 0
        %5605 = vmatprep.subr.bf16.mxu0 0
        %5606 = vmatpush1.bf16.msra.mxu0 %v4997
        %5607 = vmatprep.subr.bf16.mxu0 0
        %5608 = vmatpush1.bf16.msra.mxu0 0
        %5609 = vmatprep.subr.bf16.mxu0 0
        %5610 = vmatpush1.bf16.msra.mxu0 0
        %5611 = vmatprep.subr.bf16.mxu0 0
        %5612 = vmatpush1.bf16.msra.mxu0 0
        %5613 = vmatprep.subr.bf16.mxu0 0
        %5614 = vmatpush1.bf16.msra.mxu0 0
        %5615 = vmatprep.subr.bf16.mxu0 0
        %5616 = vmatpush1.bf16.msra.mxu0 0
        %5617 = vmatprep.subr.bf16.mxu0 0
        %5618 = vmatpush1.bf16.msra.mxu0 0
        %5619 = vmatprep.subr.bf16.mxu0 0
        %5620 = vmatpush1.bf16.msra.mxu0 0
        %5621 = vmatprep.subr.bf16.mxu0 0
        %5622 = vmatpush1.bf16.msra.mxu0 0
        %5623 = vmatprep.subr.bf16.mxu0 0
        %5624 = vmatpush1.bf16.msra.mxu0 0
        %5625 = vmatprep.subr.bf16.mxu0 0
        %5626 = vmatpush1.bf16.msra.mxu0 0
        %5627 = vmatprep.subr.bf16.mxu0 0
        %5628 = vmatpush1.bf16.msra.mxu0 0
        %5629 = vmatprep.subr.bf16.mxu0 0
        %5630 = vmatpush1.bf16.msra.mxu0 0
        %5631 = vmatprep.subr.bf16.mxu0 0
        %5632 = vmatpush1.bf16.msra.mxu0 0
        %5633 = vmatprep.subr.bf16.mxu0 0
        %5634 = vmatpush1.bf16.msra.mxu0 0
        %5635 = vmatprep.subr.bf16.mxu0 0
        %5636 = vmatpush1.bf16.msra.mxu0 0
        %5637 = vmatprep.mubr.bf16.mxu0 0
        %5638 = vmatmul.mubr.bf16.gmra.mrb[0].mxu0 %v5603
        %v5639 = vpop.f32.mrb[0].mxu0
        %v5640 = vadd.f32 0.0, %v5639
        %v5641 = vpop.f32.mrb[0].mxu0
        %v5642 = vpop.f32.mrb[0].mxu0
        %v5643 = vpop.f32.mrb[0].mxu0
        %5644 = vdwg.mxu0
        %v5645 = vadd.f32 %v5594, %v5640
        %v5647 = vshrl.u32 %v5599, 16
        %v5649 = vrot.slane %v5647, 1
        %v5650 = vshll.u32 %v5599, 16
        %v5652 = vrot.slane %v5650, 2
        %v5653 = vor.u32 %v5649, %v5652
        %v5655 = vsel %vm1291, %v5653, 0
        %5657 = vmatprep.subr.bf16.mxu0 0
        %5658 = vmatpush1.bf16.msra.mxu0 %v4999
        %5659 = vmatprep.subr.bf16.mxu0 0
        %5660 = vmatpush1.bf16.msra.mxu0 0
        %5661 = vmatprep.subr.bf16.mxu0 0
        %5662 = vmatpush1.bf16.msra.mxu0 0
        %5663 = vmatprep.subr.bf16.mxu0 0
        %5664 = vmatpush1.bf16.msra.mxu0 0
        %5665 = vmatprep.subr.bf16.mxu0 0
        %5666 = vmatpush1.bf16.msra.mxu0 0
        %5667 = vmatprep.subr.bf16.mxu0 0
        %5668 = vmatpush1.bf16.msra.mxu0 0
        %5669 = vmatprep.subr.bf16.mxu0 0
        %5670 = vmatpush1.bf16.msra.mxu0 0
        %5671 = vmatprep.subr.bf16.mxu0 0
        %5672 = vmatpush1.bf16.msra.mxu0 0
        %5673 = vmatprep.subr.bf16.mxu0 0
        %5674 = vmatpush1.bf16.msra.mxu0 0
        %5675 = vmatprep.subr.bf16.mxu0 0
        %5676 = vmatpush1.bf16.msra.mxu0 0
        %5677 = vmatprep.subr.bf16.mxu0 0
        %5678 = vmatpush1.bf16.msra.mxu0 0
        %5679 = vmatprep.subr.bf16.mxu0 0
        %5680 = vmatpush1.bf16.msra.mxu0 0
        %5681 = vmatprep.subr.bf16.mxu0 0
        %5682 = vmatpush1.bf16.msra.mxu0 0
        %5683 = vmatprep.subr.bf16.mxu0 0
        %5684 = vmatpush1.bf16.msra.mxu0 0
        %5685 = vmatprep.subr.bf16.mxu0 0
        %5686 = vmatpush1.bf16.msra.mxu0 0
        %5687 = vmatprep.subr.bf16.mxu0 0
        %5688 = vmatpush1.bf16.msra.mxu0 0
        %5689 = vmatprep.mubr.bf16.mxu0 0
        %5690 = vmatmul.mubr.bf16.gmra.mrb[0].mxu0 %v5655
        %v5691 = vpop.f32.mrb[0].mxu0
        %v5692 = vadd.f32 0.0, %v5691
        %v5693 = vpop.f32.mrb[0].mxu0
        %v5694 = vpop.f32.mrb[0].mxu0
        %v5695 = vpop.f32.mrb[0].mxu0
        %5696 = vdwg.mxu0
        %v5697 = vadd.f32 %v5645, %v5692
        %v5698 = vld [vmem:[#allocation11 + $0x10] sm:$0xc]
        %v5700 = vrot.slane %v5698, 2
        %v5702 = vsel %vm1291, %v5700, 0
        %5704 = vmatprep.subr.bf16.mxu0 0
        %5705 = vmatpush1.bf16.msra.mxu0 %v5001
        %5706 = vmatprep.subr.bf16.mxu0 0
        %5707 = vmatpush1.bf16.msra.mxu0 0
        %5708 = vmatprep.subr.bf16.mxu0 0
        %5709 = vmatpush1.bf16.msra.mxu0 0
        %5710 = vmatprep.subr.bf16.mxu0 0
        %5711 = vmatpush1.bf16.msra.mxu0 0
        %5712 = vmatprep.subr.bf16.mxu0 0
        %5713 = vmatpush1.bf16.msra.mxu0 0
        %5714 = vmatprep.subr.bf16.mxu0 0
        %5715 = vmatpush1.bf16.msra.mxu0 0
        %5716 = vmatprep.subr.bf16.mxu0 0
        %5717 = vmatpush1.bf16.msra.mxu0 0
        %5718 = vmatprep.subr.bf16.mxu0 0
        %5719 = vmatpush1.bf16.msra.mxu0 0
        %5720 = vmatprep.subr.bf16.mxu0 0
        %5721 = vmatpush1.bf16.msra.mxu0 0
        %5722 = vmatprep.subr.bf16.mxu0 0
        %5723 = vmatpush1.bf16.msra.mxu0 0
        %5724 = vmatprep.subr.bf16.mxu0 0
        %5725 = vmatpush1.bf16.msra.mxu0 0
        %5726 = vmatprep.subr.bf16.mxu0 0
        %5727 = vmatpush1.bf16.msra.mxu0 0
        %5728 = vmatprep.subr.bf16.mxu0 0
        %5729 = vmatpush1.bf16.msra.mxu0 0
        %5730 = vmatprep.subr.bf16.mxu0 0
        %5731 = vmatpush1.bf16.msra.mxu0 0
        %5732 = vmatprep.subr.bf16.mxu0 0
        %5733 = vmatpush1.bf16.msra.mxu0 0
        %5734 = vmatprep.subr.bf16.mxu0 0
        %5735 = vmatpush1.bf16.msra.mxu0 0
        %5736 = vmatprep.mubr.bf16.mxu0 0
        %5737 = vmatmul.mubr.bf16.gmra.mrb[0].mxu0 %v5702
        %v5738 = vpop.f32.mrb[0].mxu0
        %v5739 = vadd.f32 0.0, %v5738
        %v5740 = vpop.f32.mrb[0].mxu0
        %v5741 = vpop.f32.mrb[0].mxu0
        %v5742 = vpop.f32.mrb[0].mxu0
        %5743 = vdwg.mxu0
        %v5744 = vadd.f32 %v5697, %v5739
        %v5745 = vadd.f32 %v5744, %v5246
        %vm5746 = vcmp.ge.f32.partialorder %v5745, 0.0
        %v5747 = vmul.f32 %v5745, 0.1
        %v5748 = vsel %vm5746, %v5745, %v5747
        %v5749 = vpack.c.bf16 %v5748, %v5748
        %v5750 = vld [vmem:[#allocation12 + $0x10] sm:$0x3]
        %v5751 = vsel %vm5255, %v5749, %v5750
        %5752 = vst [vmem:[#allocation12 + $0x10] sm:$0x3] %v5751
        %v5753 = vld [vmem:[#allocation11 + $0x18] sm:$0x3]
        %v5755 = vshrl.u32 %v5753, 16
        %v5757 = vshll.u32 %v5753, 16
        %v5759 = vrot.slane %v5757, 1
        %v5760 = vor.u32 %v5755, %v5759
        %v5762 = vsel %vm1291, %v5760, 0
        %5764 = vmatprep.subr.bf16.mxu0 0
        %5765 = vmatpush1.bf16.msra.mxu0 %v4995
        %5766 = vmatprep.subr.bf16.mxu0 0
        %5767 = vmatpush1.bf16.msra.mxu0 0
        %5768 = vmatprep.subr.bf16.mxu0 0
        %5769 = vmatpush1.bf16.msra.mxu0 0
        %5770 = vmatprep.subr.bf16.mxu0 0
        %5771 = vmatpush1.bf16.msra.mxu0 0
        %5772 = vmatprep.subr.bf16.mxu0 0
        %5773 = vmatpush1.bf16.msra.mxu0 0
        %5774 = vmatprep.subr.bf16.mxu0 0
        %5775 = vmatpush1.bf16.msra.mxu0 0
        %5776 = vmatprep.subr.bf16.mxu0 0
        %5777 = vmatpush1.bf16.msra.mxu0 0
        %5778 = vmatprep.subr.bf16.mxu0 0
        %5779 = vmatpush1.bf16.msra.mxu0 0
        %5780 = vmatprep.subr.bf16.mxu0 0
        %5781 = vmatpush1.bf16.msra.mxu0 0
        %5782 = vmatprep.subr.bf16.mxu0 0
        %5783 = vmatpush1.bf16.msra.mxu0 0
        %5784 = vmatprep.subr.bf16.mxu0 0
        %5785 = vmatpush1.bf16.msra.mxu0 0
        %5786 = vmatprep.subr.bf16.mxu0 0
        %5787 = vmatpush1.bf16.msra.mxu0 0
        %5788 = vmatprep.subr.bf16.mxu0 0
        %5789 = vmatpush1.bf16.msra.mxu0 0
        %5790 = vmatprep.subr.bf16.mxu0 0
        %5791 = vmatpush1.bf16.msra.mxu0 0
        %5792 = vmatprep.subr.bf16.mxu0 0
        %5793 = vmatpush1.bf16.msra.mxu0 0
        %5794 = vmatprep.subr.bf16.mxu0 0
        %5795 = vmatpush1.bf16.msra.mxu0 0
        %5796 = vmatprep.mubr.bf16.mxu0 0
        %5797 = vmatmul.mubr.bf16.gmra.mrb[0].mxu0 %v5762
        %v5798 = vpop.f32.mrb[0].mxu0
        %v5799 = vadd.f32 0.0, %v5798
        %v5800 = vpop.f32.mrb[0].mxu0
        %v5801 = vpop.f32.mrb[0].mxu0
        %v5802 = vpop.f32.mrb[0].mxu0
        %5803 = vdwg.mxu0
        %v5804 = vsel %vm1291, %v5753, 0
        %5806 = vmatprep.subr.bf16.mxu0 0
        %5807 = vmatpush1.bf16.msra.mxu0 %v4993
        %5808 = vmatprep.subr.bf16.mxu0 0
        %5809 = vmatpush1.bf16.msra.mxu0 0
        %5810 = vmatprep.subr.bf16.mxu0 0
        %5811 = vmatpush1.bf16.msra.mxu0 0
        %5812 = vmatprep.subr.bf16.mxu0 0
        %5813 = vmatpush1.bf16.msra.mxu0 0
        %5814 = vmatprep.subr.bf16.mxu0 0
        %5815 = vmatpush1.bf16.msra.mxu0 0
        %5816 = vmatprep.subr.bf16.mxu0 0
        %5817 = vmatpush1.bf16.msra.mxu0 0
        %5818 = vmatprep.subr.bf16.mxu0 0
        %5819 = vmatpush1.bf16.msra.mxu0 0
        %5820 = vmatprep.subr.bf16.mxu0 0
        %5821 = vmatpush1.bf16.msra.mxu0 0
        %5822 = vmatprep.subr.bf16.mxu0 0
        %5823 = vmatpush1.bf16.msra.mxu0 0
        %5824 = vmatprep.subr.bf16.mxu0 0
        %5825 = vmatpush1.bf16.msra.mxu0 0
        %5826 = vmatprep.subr.bf16.mxu0 0
        %5827 = vmatpush1.bf16.msra.mxu0 0
        %5828 = vmatprep.subr.bf16.mxu0 0
        %5829 = vmatpush1.bf16.msra.mxu0 0
        %5830 = vmatprep.subr.bf16.mxu0 0
        %5831 = vmatpush1.bf16.msra.mxu0 0
        %5832 = vmatprep.subr.bf16.mxu0 0
        %5833 = vmatpush1.bf16.msra.mxu0 0
        %5834 = vmatprep.subr.bf16.mxu0 0
        %5835 = vmatpush1.bf16.msra.mxu0 0
        %5836 = vmatprep.subr.bf16.mxu0 0
        %5837 = vmatpush1.bf16.msra.mxu0 0
        %5838 = vmatprep.mubr.bf16.mxu0 0
        %5839 = vmatmul.mubr.bf16.gmra.mrb[0].mxu0 %v5804
        %v5840 = vpop.f32.mrb[0].mxu0
        %v5841 = vadd.f32 %v5799, %v5840
        %v5842 = vpop.f32.mrb[0].mxu0
        %v5843 = vpop.f32.mrb[0].mxu0
        %v5844 = vpop.f32.mrb[0].mxu0
        %5845 = vdwg.mxu0
        %v5846 = vld [vmem:[#allocation11 + $0x18] sm:$0x6]
        %v5848 = vrot.slane %v5846, 1
        %v5850 = vsel %vm1291, %v5848, 0
        %5852 = vmatprep.subr.bf16.mxu0 0
        %5853 = vmatpush1.bf16.msra.mxu0 %v4997
        %5854 = vmatprep.subr.bf16.mxu0 0
        %5855 = vmatpush1.bf16.msra.mxu0 0
        %5856 = vmatprep.subr.bf16.mxu0 0
        %5857 = vmatpush1.bf16.msra.mxu0 0
        %5858 = vmatprep.subr.bf16.mxu0 0
        %5859 = vmatpush1.bf16.msra.mxu0 0
        %5860 = vmatprep.subr.bf16.mxu0 0
        %5861 = vmatpush1.bf16.msra.mxu0 0
        %5862 = vmatprep.subr.bf16.mxu0 0
        %5863 = vmatpush1.bf16.msra.mxu0 0
        %5864 = vmatprep.subr.bf16.mxu0 0
        %5865 = vmatpush1.bf16.msra.mxu0 0
        %5866 = vmatprep.subr.bf16.mxu0 0
        %5867 = vmatpush1.bf16.msra.mxu0 0
        %5868 = vmatprep.subr.bf16.mxu0 0
        %5869 = vmatpush1.bf16.msra.mxu0 0
        %5870 = vmatprep.subr.bf16.mxu0 0
        %5871 = vmatpush1.bf16.msra.mxu0 0
        %5872 = vmatprep.subr.bf16.mxu0 0
        %5873 = vmatpush1.bf16.msra.mxu0 0
        %5874 = vmatprep.subr.bf16.mxu0 0
        %5875 = vmatpush1.bf16.msra.mxu0 0
        %5876 = vmatprep.subr.bf16.mxu0 0
        %5877 = vmatpush1.bf16.msra.mxu0 0
        %5878 = vmatprep.subr.bf16.mxu0 0
        %5879 = vmatpush1.bf16.msra.mxu0 0
        %5880 = vmatprep.subr.bf16.mxu0 0
        %5881 = vmatpush1.bf16.msra.mxu0 0
        %5882 = vmatprep.subr.bf16.mxu0 0
        %5883 = vmatpush1.bf16.msra.mxu0 0
        %5884 = vmatprep.mubr.bf16.mxu0 0
        %5885 = vmatmul.mubr.bf16.gmra.mrb[0].mxu0 %v5850
        %v5886 = vpop.f32.mrb[0].mxu0
        %v5887 = vadd.f32 0.0, %v5886
        %v5888 = vpop.f32.mrb[0].mxu0
        %v5889 = vpop.f32.mrb[0].mxu0
        %v5890 = vpop.f32.mrb[0].mxu0
        %5891 = vdwg.mxu0
        %v5892 = vadd.f32 %v5841, %v5887
        %v5894 = vshrl.u32 %v5846, 16
        %v5896 = vrot.slane %v5894, 1
        %v5897 = vshll.u32 %v5846, 16
        %v5899 = vrot.slane %v5897, 2
        %v5900 = vor.u32 %v5896, %v5899
        %v5902 = vsel %vm1291, %v5900, 0
        %5904 = vmatprep.subr.bf16.mxu0 0
        %5905 = vmatpush1.bf16.msra.mxu0 %v4999
        %5906 = vmatprep.subr.bf16.mxu0 0
        %5907 = vmatpush1.bf16.msra.mxu0 0
        %5908 = vmatprep.subr.bf16.mxu0 0
        %5909 = vmatpush1.bf16.msra.mxu0 0
        %5910 = vmatprep.subr.bf16.mxu0 0
        %5911 = vmatpush1.bf16.msra.mxu0 0
        %5912 = vmatprep.subr.bf16.mxu0 0
        %5913 = vmatpush1.bf16.msra.mxu0 0
        %5914 = vmatprep.subr.bf16.mxu0 0
        %5915 = vmatpush1.bf16.msra.mxu0 0
        %5916 = vmatprep.subr.bf16.mxu0 0
        %5917 = vmatpush1.bf16.msra.mxu0 0
        %5918 = vmatprep.subr.bf16.mxu0 0
        %5919 = vmatpush1.bf16.msra.mxu0 0
        %5920 = vmatprep.subr.bf16.mxu0 0
        %5921 = vmatpush1.bf16.msra.mxu0 0
        %5922 = vmatprep.subr.bf16.mxu0 0
        %5923 = vmatpush1.bf16.msra.mxu0 0
        %5924 = vmatprep.subr.bf16.mxu0 0
        %5925 = vmatpush1.bf16.msra.mxu0 0
        %5926 = vmatprep.subr.bf16.mxu0 0
        %5927 = vmatpush1.bf16.msra.mxu0 0
        %5928 = vmatprep.subr.bf16.mxu0 0
        %5929 = vmatpush1.bf16.msra.mxu0 0
        %5930 = vmatprep.subr.bf16.mxu0 0
        %5931 = vmatpush1.bf16.msra.mxu0 0
        %5932 = vmatprep.subr.bf16.mxu0 0
        %5933 = vmatpush1.bf16.msra.mxu0 0
        %5934 = vmatprep.subr.bf16.mxu0 0
        %5935 = vmatpush1.bf16.msra.mxu0 0
        %5936 = vmatprep.mubr.bf16.mxu0 0
        %5937 = vmatmul.mubr.bf16.gmra.mrb[0].mxu0 %v5902
        %v5938 = vpop.f32.mrb[0].mxu0
        %v5939 = vadd.f32 0.0, %v5938
        %v5940 = vpop.f32.mrb[0].mxu0
        %v5941 = vpop.f32.mrb[0].mxu0
        %v5942 = vpop.f32.mrb[0].mxu0
        %5943 = vdwg.mxu0
        %v5944 = vadd.f32 %v5892, %v5939
        %v5945 = vld [vmem:[#allocation11 + $0x18] sm:$0xc]
        %v5947 = vrot.slane %v5945, 2
        %v5949 = vsel %vm1291, %v5947, 0
        %5951 = vmatprep.subr.bf16.mxu0 0
        %5952 = vmatpush1.bf16.msra.mxu0 %v5001
        %5953 = vmatprep.subr.bf16.mxu0 0
        %5954 = vmatpush1.bf16.msra.mxu0 0
        %5955 = vmatprep.subr.bf16.mxu0 0
        %5956 = vmatpush1.bf16.msra.mxu0 0
        %5957 = vmatprep.subr.bf16.mxu0 0
        %5958 = vmatpush1.bf16.msra.mxu0 0
        %5959 = vmatprep.subr.bf16.mxu0 0
        %5960 = vmatpush1.bf16.msra.mxu0 0
        %5961 = vmatprep.subr.bf16.mxu0 0
        %5962 = vmatpush1.bf16.msra.mxu0 0
        %5963 = vmatprep.subr.bf16.mxu0 0
        %5964 = vmatpush1.bf16.msra.mxu0 0
        %5965 = vmatprep.subr.bf16.mxu0 0
        %5966 = vmatpush1.bf16.msra.mxu0 0
        %5967 = vmatprep.subr.bf16.mxu0 0
        %5968 = vmatpush1.bf16.msra.mxu0 0
        %5969 = vmatprep.subr.bf16.mxu0 0
        %5970 = vmatpush1.bf16.msra.mxu0 0
        %5971 = vmatprep.subr.bf16.mxu0 0
        %5972 = vmatpush1.bf16.msra.mxu0 0
        %5973 = vmatprep.subr.bf16.mxu0 0
        %5974 = vmatpush1.bf16.msra.mxu0 0
        %5975 = vmatprep.subr.bf16.mxu0 0
        %5976 = vmatpush1.bf16.msra.mxu0 0
        %5977 = vmatprep.subr.bf16.mxu0 0
        %5978 = vmatpush1.bf16.msra.mxu0 0
        %5979 = vmatprep.subr.bf16.mxu0 0
        %5980 = vmatpush1.bf16.msra.mxu0 0
        %5981 = vmatprep.subr.bf16.mxu0 0
        %5982 = vmatpush1.bf16.msra.mxu0 0
        %5983 = vmatprep.mubr.bf16.mxu0 0
        %5984 = vmatmul.mubr.bf16.gmra.mrb[0].mxu0 %v5949
        %v5985 = vpop.f32.mrb[0].mxu0
        %v5986 = vadd.f32 0.0, %v5985
        %v5987 = vpop.f32.mrb[0].mxu0
        %v5988 = vpop.f32.mrb[0].mxu0
        %v5989 = vpop.f32.mrb[0].mxu0
        %5990 = vdwg.mxu0
        %v5991 = vadd.f32 %v5944, %v5986
        %v5992 = vadd.f32 %v5991, %v5246
        %vm5993 = vcmp.ge.f32.partialorder %v5992, 0.0
        %v5994 = vmul.f32 %v5992, 0.1
        %v5995 = vsel %vm5993, %v5992, %v5994
        %v5996 = vpack.c.bf16 %v5995, %v5995
        %v5997 = vld [vmem:[#allocation12 + $0x18] sm:$0x3]
        %v5998 = vsel %vm5255, %v5996, %v5997
        %5999 = vst [vmem:[#allocation12 + $0x18] sm:$0x3] %v5998
        %v6000 = vld [vmem:[#allocation5] sm:$0xff]
        %s6001 = scalar_lea.vmem [#allocation5], 8
        %v6002 = vld [vmem:[%s6001] sm:$0xff]
        %s6003 = scalar_lea.vmem [#allocation5], 16
        %v6004 = vld [vmem:[%s6003] sm:$0xff]
        %v6005 = vld [vmem:[#allocation9] sm:$0x1]
        %v6006 = vld [vmem:[#allocation12] sm:$0x1]
        %v6008 = vshrl.u32 %v6006, 16
        %v6011 = vsel %vm1291, %v6008, 0
        %6013 = vmatprep.subr.bf16.mxu0 0
        %6014 = vmatpush1.bf16.msra.mxu0 %v6002
        %6015 = vmatprep.subr.bf16.mxu0 0
        %6016 = vmatpush1.bf16.msra.mxu0 0
        %6017 = vmatprep.subr.bf16.mxu0 0
        %6018 = vmatpush1.bf16.msra.mxu0 0
        %6019 = vmatprep.subr.bf16.mxu0 0
        %6020 = vmatpush1.bf16.msra.mxu0 0
        %6021 = vmatprep.subr.bf16.mxu0 0
        %6022 = vmatpush1.bf16.msra.mxu0 0
        %6023 = vmatprep.subr.bf16.mxu0 0
        %6024 = vmatpush1.bf16.msra.mxu0 0
        %6025 = vmatprep.subr.bf16.mxu0 0
        %6026 = vmatpush1.bf16.msra.mxu0 0
        %6027 = vmatprep.subr.bf16.mxu0 0
        %6028 = vmatpush1.bf16.msra.mxu0 0
        %6029 = vmatprep.subr.bf16.mxu0 0
        %6030 = vmatpush1.bf16.msra.mxu0 0
        %6031 = vmatprep.subr.bf16.mxu0 0
        %6032 = vmatpush1.bf16.msra.mxu0 0
        %6033 = vmatprep.subr.bf16.mxu0 0
        %6034 = vmatpush1.bf16.msra.mxu0 0
        %6035 = vmatprep.subr.bf16.mxu0 0
        %6036 = vmatpush1.bf16.msra.mxu0 0
        %6037 = vmatprep.subr.bf16.mxu0 0
        %6038 = vmatpush1.bf16.msra.mxu0 0
        %6039 = vmatprep.subr.bf16.mxu0 0
        %6040 = vmatpush1.bf16.msra.mxu0 0
        %6041 = vmatprep.subr.bf16.mxu0 0
        %6042 = vmatpush1.bf16.msra.mxu0 0
        %6043 = vmatprep.subr.bf16.mxu0 0
        %6044 = vmatpush1.bf16.msra.mxu0 0
        %6045 = vmatprep.mubr.bf16.mxu0 0
        %6046 = vmatmul.mubr.bf16.gmra.mrb[0].mxu0 %v6011
        %v6047 = vpop.f32.mrb[0].mxu0
        %v6048 = vadd.f32 0.0, %v6047
        %v6049 = vpop.f32.mrb[0].mxu0
        %v6050 = vpop.f32.mrb[0].mxu0
        %v6051 = vpop.f32.mrb[0].mxu0
        %6052 = vdwg.mxu0
        %v6053 = vsel %vm1291, %v6006, 0
        %6055 = vmatprep.subr.bf16.mxu0 0
        %6056 = vmatpush1.bf16.msra.mxu0 %v6000
        %6057 = vmatprep.subr.bf16.mxu0 0
        %6058 = vmatpush1.bf16.msra.mxu0 0
        %6059 = vmatprep.subr.bf16.mxu0 0
        %6060 = vmatpush1.bf16.msra.mxu0 0
        %6061 = vmatprep.subr.bf16.mxu0 0
        %6062 = vmatpush1.bf16.msra.mxu0 0
        %6063 = vmatprep.subr.bf16.mxu0 0
        %6064 = vmatpush1.bf16.msra.mxu0 0
        %6065 = vmatprep.subr.bf16.mxu0 0
        %6066 = vmatpush1.bf16.msra.mxu0 0
        %6067 = vmatprep.subr.bf16.mxu0 0
        %6068 = vmatpush1.bf16.msra.mxu0 0
        %6069 = vmatprep.subr.bf16.mxu0 0
        %6070 = vmatpush1.bf16.msra.mxu0 0
        %6071 = vmatprep.subr.bf16.mxu0 0
        %6072 = vmatpush1.bf16.msra.mxu0 0
        %6073 = vmatprep.subr.bf16.mxu0 0
        %6074 = vmatpush1.bf16.msra.mxu0 0
        %6075 = vmatprep.subr.bf16.mxu0 0
        %6076 = vmatpush1.bf16.msra.mxu0 0
        %6077 = vmatprep.subr.bf16.mxu0 0
        %6078 = vmatpush1.bf16.msra.mxu0 0
        %6079 = vmatprep.subr.bf16.mxu0 0
        %6080 = vmatpush1.bf16.msra.mxu0 0
        %6081 = vmatprep.subr.bf16.mxu0 0
        %6082 = vmatpush1.bf16.msra.mxu0 0
        %6083 = vmatprep.subr.bf16.mxu0 0
        %6084 = vmatpush1.bf16.msra.mxu0 0
        %6085 = vmatprep.subr.bf16.mxu0 0
        %6086 = vmatpush1.bf16.msra.mxu0 0
        %6087 = vmatprep.mubr.bf16.mxu0 0
        %6088 = vmatmul.mubr.bf16.gmra.mrb[0].mxu0 %v6053
        %v6089 = vpop.f32.mrb[0].mxu0
        %v6090 = vadd.f32 %v6048, %v6089
        %v6091 = vpop.f32.mrb[0].mxu0
        %v6092 = vpop.f32.mrb[0].mxu0
        %v6093 = vpop.f32.mrb[0].mxu0
        %6094 = vdwg.mxu0
        %v6095 = vld [vmem:[#allocation12] sm:$0x2]
        %v6097 = vrot.slane %v6095, 1
        %v6099 = vsel %vm1291, %v6097, 0
        %6101 = vmatprep.subr.bf16.mxu0 0
        %6102 = vmatpush1.bf16.msra.mxu0 %v6004
        %6103 = vmatprep.subr.bf16.mxu0 0
        %6104 = vmatpush1.bf16.msra.mxu0 0
        %6105 = vmatprep.subr.bf16.mxu0 0
        %6106 = vmatpush1.bf16.msra.mxu0 0
        %6107 = vmatprep.subr.bf16.mxu0 0
        %6108 = vmatpush1.bf16.msra.mxu0 0
        %6109 = vmatprep.subr.bf16.mxu0 0
        %6110 = vmatpush1.bf16.msra.mxu0 0
        %6111 = vmatprep.subr.bf16.mxu0 0
        %6112 = vmatpush1.bf16.msra.mxu0 0
        %6113 = vmatprep.subr.bf16.mxu0 0
        %6114 = vmatpush1.bf16.msra.mxu0 0
        %6115 = vmatprep.subr.bf16.mxu0 0
        %6116 = vmatpush1.bf16.msra.mxu0 0
        %6117 = vmatprep.subr.bf16.mxu0 0
        %6118 = vmatpush1.bf16.msra.mxu0 0
        %6119 = vmatprep.subr.bf16.mxu0 0
        %6120 = vmatpush1.bf16.msra.mxu0 0
        %6121 = vmatprep.subr.bf16.mxu0 0
        %6122 = vmatpush1.bf16.msra.mxu0 0
        %6123 = vmatprep.subr.bf16.mxu0 0
        %6124 = vmatpush1.bf16.msra.mxu0 0
        %6125 = vmatprep.subr.bf16.mxu0 0
        %6126 = vmatpush1.bf16.msra.mxu0 0
        %6127 = vmatprep.subr.bf16.mxu0 0
        %6128 = vmatpush1.bf16.msra.mxu0 0
        %6129 = vmatprep.subr.bf16.mxu0 0
        %6130 = vmatpush1.bf16.msra.mxu0 0
        %6131 = vmatprep.subr.bf16.mxu0 0
        %6132 = vmatpush1.bf16.msra.mxu0 0
        %6133 = vmatprep.mubr.bf16.mxu0 0
        %6134 = vmatmul.mubr.bf16.gmra.mrb[0].mxu0 %v6099
        %v6135 = vpop.f32.mrb[0].mxu0
        %v6136 = vadd.f32 0.0, %v6135
        %v6137 = vpop.f32.mrb[0].mxu0
        %v6138 = vpop.f32.mrb[0].mxu0
        %v6139 = vpop.f32.mrb[0].mxu0
        %6140 = vdwg.mxu0
        %v6141 = vadd.f32 %v6090, %v6136
        %v6142 = vadd.f32 %v6141, %v6005
        %vm6143 = vcmask 0
        %6144 = vst.msk [vmem:[%s119] sm:$0x1] %vm6143, %v6142
        %v6145 = vld [vmem:[#allocation12 + $0x8] sm:$0x1]
        %v6147 = vshrl.u32 %v6145, 16
        %v6150 = vsel %vm1291, %v6147, 0
        %6152 = vmatprep.subr.bf16.mxu0 0
        %6153 = vmatpush1.bf16.msra.mxu0 %v6002
        %6154 = vmatprep.subr.bf16.mxu0 0
        %6155 = vmatpush1.bf16.msra.mxu0 0
        %6156 = vmatprep.subr.bf16.mxu0 0
        %6157 = vmatpush1.bf16.msra.mxu0 0
        %6158 = vmatprep.subr.bf16.mxu0 0
        %6159 = vmatpush1.bf16.msra.mxu0 0
        %6160 = vmatprep.subr.bf16.mxu0 0
        %6161 = vmatpush1.bf16.msra.mxu0 0
        %6162 = vmatprep.subr.bf16.mxu0 0
        %6163 = vmatpush1.bf16.msra.mxu0 0
        %6164 = vmatprep.subr.bf16.mxu0 0
        %6165 = vmatpush1.bf16.msra.mxu0 0
        %6166 = vmatprep.subr.bf16.mxu0 0
        %6167 = vmatpush1.bf16.msra.mxu0 0
        %6168 = vmatprep.subr.bf16.mxu0 0
        %6169 = vmatpush1.bf16.msra.mxu0 0
        %6170 = vmatprep.subr.bf16.mxu0 0
        %6171 = vmatpush1.bf16.msra.mxu0 0
        %6172 = vmatprep.subr.bf16.mxu0 0
        %6173 = vmatpush1.bf16.msra.mxu0 0
        %6174 = vmatprep.subr.bf16.mxu0 0
        %6175 = vmatpush1.bf16.msra.mxu0 0
        %6176 = vmatprep.subr.bf16.mxu0 0
        %6177 = vmatpush1.bf16.msra.mxu0 0
        %6178 = vmatprep.subr.bf16.mxu0 0
        %6179 = vmatpush1.bf16.msra.mxu0 0
        %6180 = vmatprep.subr.bf16.mxu0 0
        %6181 = vmatpush1.bf16.msra.mxu0 0
        %6182 = vmatprep.subr.bf16.mxu0 0
        %6183 = vmatpush1.bf16.msra.mxu0 0
        %6184 = vmatprep.mubr.bf16.mxu0 0
        %6185 = vmatmul.mubr.bf16.gmra.mrb[0].mxu0 %v6150
        %v6186 = vpop.f32.mrb[0].mxu0
        %v6187 = vadd.f32 0.0, %v6186
        %v6188 = vpop.f32.mrb[0].mxu0
        %v6189 = vpop.f32.mrb[0].mxu0
        %v6190 = vpop.f32.mrb[0].mxu0
        %6191 = vdwg.mxu0
        %v6192 = vsel %vm1291, %v6145, 0
        %6194 = vmatprep.subr.bf16.mxu0 0
        %6195 = vmatpush1.bf16.msra.mxu0 %v6000
        %6196 = vmatprep.subr.bf16.mxu0 0
        %6197 = vmatpush1.bf16.msra.mxu0 0
        %6198 = vmatprep.subr.bf16.mxu0 0
        %6199 = vmatpush1.bf16.msra.mxu0 0
        %6200 = vmatprep.subr.bf16.mxu0 0
        %6201 = vmatpush1.bf16.msra.mxu0 0
        %6202 = vmatprep.subr.bf16.mxu0 0
        %6203 = vmatpush1.bf16.msra.mxu0 0
        %6204 = vmatprep.subr.bf16.mxu0 0
        %6205 = vmatpush1.bf16.msra.mxu0 0
        %6206 = vmatprep.subr.bf16.mxu0 0
        %6207 = vmatpush1.bf16.msra.mxu0 0
        %6208 = vmatprep.subr.bf16.mxu0 0
        %6209 = vmatpush1.bf16.msra.mxu0 0
        %6210 = vmatprep.subr.bf16.mxu0 0
        %6211 = vmatpush1.bf16.msra.mxu0 0
        %6212 = vmatprep.subr.bf16.mxu0 0
        %6213 = vmatpush1.bf16.msra.mxu0 0
        %6214 = vmatprep.subr.bf16.mxu0 0
        %6215 = vmatpush1.bf16.msra.mxu0 0
        %6216 = vmatprep.subr.bf16.mxu0 0
        %6217 = vmatpush1.bf16.msra.mxu0 0
        %6218 = vmatprep.subr.bf16.mxu0 0
        %6219 = vmatpush1.bf16.msra.mxu0 0
        %6220 = vmatprep.subr.bf16.mxu0 0
        %6221 = vmatpush1.bf16.msra.mxu0 0
        %6222 = vmatprep.subr.bf16.mxu0 0
        %6223 = vmatpush1.bf16.msra.mxu0 0
        %6224 = vmatprep.subr.bf16.mxu0 0
        %6225 = vmatpush1.bf16.msra.mxu0 0
        %6226 = vmatprep.mubr.bf16.mxu0 0
        %6227 = vmatmul.mubr.bf16.gmra.mrb[0].mxu0 %v6192
        %v6228 = vpop.f32.mrb[0].mxu0
        %v6229 = vadd.f32 %v6187, %v6228
        %v6230 = vpop.f32.mrb[0].mxu0
        %v6231 = vpop.f32.mrb[0].mxu0
        %v6232 = vpop.f32.mrb[0].mxu0
        %6233 = vdwg.mxu0
        %v6234 = vld [vmem:[#allocation12 + $0x8] sm:$0x2]
        %v6236 = vrot.slane %v6234, 1
        %v6238 = vsel %vm1291, %v6236, 0
        %6240 = vmatprep.subr.bf16.mxu0 0
        %6241 = vmatpush1.bf16.msra.mxu0 %v6004
        %6242 = vmatprep.subr.bf16.mxu0 0
        %6243 = vmatpush1.bf16.msra.mxu0 0
        %6244 = vmatprep.subr.bf16.mxu0 0
        %6245 = vmatpush1.bf16.msra.mxu0 0
        %6246 = vmatprep.subr.bf16.mxu0 0
        %6247 = vmatpush1.bf16.msra.mxu0 0
        %6248 = vmatprep.subr.bf16.mxu0 0
        %6249 = vmatpush1.bf16.msra.mxu0 0
        %6250 = vmatprep.subr.bf16.mxu0 0
        %6251 = vmatpush1.bf16.msra.mxu0 0
        %6252 = vmatprep.subr.bf16.mxu0 0
        %6253 = vmatpush1.bf16.msra.mxu0 0
        %6254 = vmatprep.subr.bf16.mxu0 0
        %6255 = vmatpush1.bf16.msra.mxu0 0
        %6256 = vmatprep.subr.bf16.mxu0 0
        %6257 = vmatpush1.bf16.msra.mxu0 0
        %6258 = vmatprep.subr.bf16.mxu0 0
        %6259 = vmatpush1.bf16.msra.mxu0 0
        %6260 = vmatprep.subr.bf16.mxu0 0
        %6261 = vmatpush1.bf16.msra.mxu0 0
        %6262 = vmatprep.subr.bf16.mxu0 0
        %6263 = vmatpush1.bf16.msra.mxu0 0
        %6264 = vmatprep.subr.bf16.mxu0 0
        %6265 = vmatpush1.bf16.msra.mxu0 0
        %6266 = vmatprep.subr.bf16.mxu0 0
        %6267 = vmatpush1.bf16.msra.mxu0 0
        %6268 = vmatprep.subr.bf16.mxu0 0
        %6269 = vmatpush1.bf16.msra.mxu0 0
        %6270 = vmatprep.subr.bf16.mxu0 0
        %6271 = vmatpush1.bf16.msra.mxu0 0
        %6272 = vmatprep.mubr.bf16.mxu0 0
        %6273 = vmatmul.mubr.bf16.gmra.mrb[0].mxu0 %v6238
        %v6274 = vpop.f32.mrb[0].mxu0
        %v6275 = vadd.f32 0.0, %v6274
        %v6276 = vpop.f32.mrb[0].mxu0
        %v6277 = vpop.f32.mrb[0].mxu0
        %v6278 = vpop.f32.mrb[0].mxu0
        %6279 = vdwg.mxu0
        %v6280 = vadd.f32 %v6229, %v6275
        %v6281 = vadd.f32 %v6280, %v6005
        %6283 = vrot.lane.b32.xlu0 %v6281, 1
        %v6284 = vpop.permute.xlu0 %6283
        %vm6286 = vcmask 8200
        %6287 = vst.msk [vmem:[%s119] sm:$0x1] %vm6286, %v6284
        %v6288 = vld [vmem:[#allocation12 + $0x10] sm:$0x1]
        %v6290 = vshrl.u32 %v6288, 16
        %v6293 = vsel %vm1291, %v6290, 0
        %6295 = vmatprep.subr.bf16.mxu0 0
        %6296 = vmatpush1.bf16.msra.mxu0 %v6002
        %6297 = vmatprep.subr.bf16.mxu0 0
        %6298 = vmatpush1.bf16.msra.mxu0 0
        %6299 = vmatprep.subr.bf16.mxu0 0
        %6300 = vmatpush1.bf16.msra.mxu0 0
        %6301 = vmatprep.subr.bf16.mxu0 0
        %6302 = vmatpush1.bf16.msra.mxu0 0
        %6303 = vmatprep.subr.bf16.mxu0 0
        %6304 = vmatpush1.bf16.msra.mxu0 0
        %6305 = vmatprep.subr.bf16.mxu0 0
        %6306 = vmatpush1.bf16.msra.mxu0 0
        %6307 = vmatprep.subr.bf16.mxu0 0
        %6308 = vmatpush1.bf16.msra.mxu0 0
        %6309 = vmatprep.subr.bf16.mxu0 0
        %6310 = vmatpush1.bf16.msra.mxu0 0
        %6311 = vmatprep.subr.bf16.mxu0 0
        %6312 = vmatpush1.bf16.msra.mxu0 0
        %6313 = vmatprep.subr.bf16.mxu0 0
        %6314 = vmatpush1.bf16.msra.mxu0 0
        %6315 = vmatprep.subr.bf16.mxu0 0
        %6316 = vmatpush1.bf16.msra.mxu0 0
        %6317 = vmatprep.subr.bf16.mxu0 0
        %6318 = vmatpush1.bf16.msra.mxu0 0
        %6319 = vmatprep.subr.bf16.mxu0 0
        %6320 = vmatpush1.bf16.msra.mxu0 0
        %6321 = vmatprep.subr.bf16.mxu0 0
        %6322 = vmatpush1.bf16.msra.mxu0 0
        %6323 = vmatprep.subr.bf16.mxu0 0
        %6324 = vmatpush1.bf16.msra.mxu0 0
        %6325 = vmatprep.subr.bf16.mxu0 0
        %6326 = vmatpush1.bf16.msra.mxu0 0
        %6327 = vmatprep.mubr.bf16.mxu0 0
        %6328 = vmatmul.mubr.bf16.gmra.mrb[0].mxu0 %v6293
        %v6329 = vpop.f32.mrb[0].mxu0
        %v6330 = vadd.f32 0.0, %v6329
        %v6331 = vpop.f32.mrb[0].mxu0
        %v6332 = vpop.f32.mrb[0].mxu0
        %v6333 = vpop.f32.mrb[0].mxu0
        %6334 = vdwg.mxu0
        %v6335 = vsel %vm1291, %v6288, 0
        %6337 = vmatprep.subr.bf16.mxu0 0
        %6338 = vmatpush1.bf16.msra.mxu0 %v6000
        %6339 = vmatprep.subr.bf16.mxu0 0
        %6340 = vmatpush1.bf16.msra.mxu0 0
        %6341 = vmatprep.subr.bf16.mxu0 0
        %6342 = vmatpush1.bf16.msra.mxu0 0
        %6343 = vmatprep.subr.bf16.mxu0 0
        %6344 = vmatpush1.bf16.msra.mxu0 0
        %6345 = vmatprep.subr.bf16.mxu0 0
        %6346 = vmatpush1.bf16.msra.mxu0 0
        %6347 = vmatprep.subr.bf16.mxu0 0
        %6348 = vmatpush1.bf16.msra.mxu0 0
        %6349 = vmatprep.subr.bf16.mxu0 0
        %6350 = vmatpush1.bf16.msra.mxu0 0
        %6351 = vmatprep.subr.bf16.mxu0 0
        %6352 = vmatpush1.bf16.msra.mxu0 0
        %6353 = vmatprep.subr.bf16.mxu0 0
        %6354 = vmatpush1.bf16.msra.mxu0 0
        %6355 = vmatprep.subr.bf16.mxu0 0
        %6356 = vmatpush1.bf16.msra.mxu0 0
        %6357 = vmatprep.subr.bf16.mxu0 0
        %6358 = vmatpush1.bf16.msra.mxu0 0
        %6359 = vmatprep.subr.bf16.mxu0 0
        %6360 = vmatpush1.bf16.msra.mxu0 0
        %6361 = vmatprep.subr.bf16.mxu0 0
        %6362 = vmatpush1.bf16.msra.mxu0 0
        %6363 = vmatprep.subr.bf16.mxu0 0
        %6364 = vmatpush1.bf16.msra.mxu0 0
        %6365 = vmatprep.subr.bf16.mxu0 0
        %6366 = vmatpush1.bf16.msra.mxu0 0
        %6367 = vmatprep.subr.bf16.mxu0 0
        %6368 = vmatpush1.bf16.msra.mxu0 0
        %6369 = vmatprep.mubr.bf16.mxu0 0
        %6370 = vmatmul.mubr.bf16.gmra.mrb[0].mxu0 %v6335
        %v6371 = vpop.f32.mrb[0].mxu0
        %v6372 = vadd.f32 %v6330, %v6371
        %v6373 = vpop.f32.mrb[0].mxu0
        %v6374 = vpop.f32.mrb[0].mxu0
        %v6375 = vpop.f32.mrb[0].mxu0
        %6376 = vdwg.mxu0
        %v6377 = vld [vmem:[#allocation12 + $0x10] sm:$0x2]
        %v6379 = vrot.slane %v6377, 1
        %v6381 = vsel %vm1291, %v6379, 0
        %6383 = vmatprep.subr.bf16.mxu0 0
        %6384 = vmatpush1.bf16.msra.mxu0 %v6004
        %6385 = vmatprep.subr.bf16.mxu0 0
        %6386 = vmatpush1.bf16.msra.mxu0 0
        %6387 = vmatprep.subr.bf16.mxu0 0
        %6388 = vmatpush1.bf16.msra.mxu0 0
        %6389 = vmatprep.subr.bf16.mxu0 0
        %6390 = vmatpush1.bf16.msra.mxu0 0
        %6391 = vmatprep.subr.bf16.mxu0 0
        %6392 = vmatpush1.bf16.msra.mxu0 0
        %6393 = vmatprep.subr.bf16.mxu0 0
        %6394 = vmatpush1.bf16.msra.mxu0 0
        %6395 = vmatprep.subr.bf16.mxu0 0
        %6396 = vmatpush1.bf16.msra.mxu0 0
        %6397 = vmatprep.subr.bf16.mxu0 0
        %6398 = vmatpush1.bf16.msra.mxu0 0
        %6399 = vmatprep.subr.bf16.mxu0 0
        %6400 = vmatpush1.bf16.msra.mxu0 0
        %6401 = vmatprep.subr.bf16.mxu0 0
        %6402 = vmatpush1.bf16.msra.mxu0 0
        %6403 = vmatprep.subr.bf16.mxu0 0
        %6404 = vmatpush1.bf16.msra.mxu0 0
        %6405 = vmatprep.subr.bf16.mxu0 0
        %6406 = vmatpush1.bf16.msra.mxu0 0
        %6407 = vmatprep.subr.bf16.mxu0 0
        %6408 = vmatpush1.bf16.msra.mxu0 0
        %6409 = vmatprep.subr.bf16.mxu0 0
        %6410 = vmatpush1.bf16.msra.mxu0 0
        %6411 = vmatprep.subr.bf16.mxu0 0
        %6412 = vmatpush1.bf16.msra.mxu0 0
        %6413 = vmatprep.subr.bf16.mxu0 0
        %6414 = vmatpush1.bf16.msra.mxu0 0
        %6415 = vmatprep.mubr.bf16.mxu0 0
        %6416 = vmatmul.mubr.bf16.gmra.mrb[0].mxu0 %v6381
        %v6417 = vpop.f32.mrb[0].mxu0
        %v6418 = vadd.f32 0.0, %v6417
        %v6419 = vpop.f32.mrb[0].mxu0
        %v6420 = vpop.f32.mrb[0].mxu0
        %v6421 = vpop.f32.mrb[0].mxu0
        %6422 = vdwg.mxu0
        %v6423 = vadd.f32 %v6372, %v6418
        %v6424 = vadd.f32 %v6423, %v6005
        %6425 = vst.msk [vmem:[%s119 + $0x1] sm:$0x1] %vm6143, %v6424
        %v6426 = vld [vmem:[#allocation12 + $0x18] sm:$0x1]
        %v6428 = vshrl.u32 %v6426, 16
        %v6431 = vsel %vm1291, %v6428, 0
        %6433 = vmatprep.subr.bf16.mxu0 0
        %6434 = vmatpush1.bf16.msra.mxu0 %v6002
        %6435 = vmatprep.subr.bf16.mxu0 0
        %6436 = vmatpush1.bf16.msra.mxu0 0
        %6437 = vmatprep.subr.bf16.mxu0 0
        %6438 = vmatpush1.bf16.msra.mxu0 0
        %6439 = vmatprep.subr.bf16.mxu0 0
        %6440 = vmatpush1.bf16.msra.mxu0 0
        %6441 = vmatprep.subr.bf16.mxu0 0
        %6442 = vmatpush1.bf16.msra.mxu0 0
        %6443 = vmatprep.subr.bf16.mxu0 0
        %6444 = vmatpush1.bf16.msra.mxu0 0
        %6445 = vmatprep.subr.bf16.mxu0 0
        %6446 = vmatpush1.bf16.msra.mxu0 0
        %6447 = vmatprep.subr.bf16.mxu0 0
        %6448 = vmatpush1.bf16.msra.mxu0 0
        %6449 = vmatprep.subr.bf16.mxu0 0
        %6450 = vmatpush1.bf16.msra.mxu0 0
        %6451 = vmatprep.subr.bf16.mxu0 0
        %6452 = vmatpush1.bf16.msra.mxu0 0
        %6453 = vmatprep.subr.bf16.mxu0 0
        %6454 = vmatpush1.bf16.msra.mxu0 0
        %6455 = vmatprep.subr.bf16.mxu0 0
        %6456 = vmatpush1.bf16.msra.mxu0 0
        %6457 = vmatprep.subr.bf16.mxu0 0
        %6458 = vmatpush1.bf16.msra.mxu0 0
        %6459 = vmatprep.subr.bf16.mxu0 0
        %6460 = vmatpush1.bf16.msra.mxu0 0
        %6461 = vmatprep.subr.bf16.mxu0 0
        %6462 = vmatpush1.bf16.msra.mxu0 0
        %6463 = vmatprep.subr.bf16.mxu0 0
        %6464 = vmatpush1.bf16.msra.mxu0 0
        %6465 = vmatprep.mubr.bf16.mxu0 0
        %6466 = vmatmul.mubr.bf16.gmra.mrb[0].mxu0 %v6431
        %v6467 = vpop.f32.mrb[0].mxu0
        %v6468 = vadd.f32 0.0, %v6467
        %v6469 = vpop.f32.mrb[0].mxu0
        %v6470 = vpop.f32.mrb[0].mxu0
        %v6471 = vpop.f32.mrb[0].mxu0
        %6472 = vdwg.mxu0
        %v6473 = vsel %vm1291, %v6426, 0
        %6475 = vmatprep.subr.bf16.mxu0 0
        %6476 = vmatpush1.bf16.msra.mxu0 %v6000
        %6477 = vmatprep.subr.bf16.mxu0 0
        %6478 = vmatpush1.bf16.msra.mxu0 0
        %6479 = vmatprep.subr.bf16.mxu0 0
        %6480 = vmatpush1.bf16.msra.mxu0 0
        %6481 = vmatprep.subr.bf16.mxu0 0
        %6482 = vmatpush1.bf16.msra.mxu0 0
        %6483 = vmatprep.subr.bf16.mxu0 0
        %6484 = vmatpush1.bf16.msra.mxu0 0
        %6485 = vmatprep.subr.bf16.mxu0 0
        %6486 = vmatpush1.bf16.msra.mxu0 0
        %6487 = vmatprep.subr.bf16.mxu0 0
        %6488 = vmatpush1.bf16.msra.mxu0 0
        %6489 = vmatprep.subr.bf16.mxu0 0
        %6490 = vmatpush1.bf16.msra.mxu0 0
        %6491 = vmatprep.subr.bf16.mxu0 0
        %6492 = vmatpush1.bf16.msra.mxu0 0
        %6493 = vmatprep.subr.bf16.mxu0 0
        %6494 = vmatpush1.bf16.msra.mxu0 0
        %6495 = vmatprep.subr.bf16.mxu0 0
        %6496 = vmatpush1.bf16.msra.mxu0 0
        %6497 = vmatprep.subr.bf16.mxu0 0
        %6498 = vmatpush1.bf16.msra.mxu0 0
        %6499 = vmatprep.subr.bf16.mxu0 0
        %6500 = vmatpush1.bf16.msra.mxu0 0
        %6501 = vmatprep.subr.bf16.mxu0 0
        %6502 = vmatpush1.bf16.msra.mxu0 0
        %6503 = vmatprep.subr.bf16.mxu0 0
        %6504 = vmatpush1.bf16.msra.mxu0 0
        %6505 = vmatprep.subr.bf16.mxu0 0
        %6506 = vmatpush1.bf16.msra.mxu0 0
        %6507 = vmatprep.mubr.bf16.mxu0 0
        %6508 = vmatmul.mubr.bf16.gmra.mrb[0].mxu0 %v6473
        %v6509 = vpop.f32.mrb[0].mxu0
        %v6510 = vadd.f32 %v6468, %v6509
        %v6511 = vpop.f32.mrb[0].mxu0
        %v6512 = vpop.f32.mrb[0].mxu0
        %v6513 = vpop.f32.mrb[0].mxu0
        %6514 = vdwg.mxu0
        %v6515 = vld [vmem:[#allocation12 + $0x18] sm:$0x2]
        %v6517 = vrot.slane %v6515, 1
        %v6519 = vsel %vm1291, %v6517, 0
        %6521 = vmatprep.subr.bf16.mxu0 0
        %6522 = vmatpush1.bf16.msra.mxu0 %v6004
        %6523 = vmatprep.subr.bf16.mxu0 0
        %6524 = vmatpush1.bf16.msra.mxu0 0
        %6525 = vmatprep.subr.bf16.mxu0 0
        %6526 = vmatpush1.bf16.msra.mxu0 0
        %6527 = vmatprep.subr.bf16.mxu0 0
        %6528 = vmatpush1.bf16.msra.mxu0 0
        %6529 = vmatprep.subr.bf16.mxu0 0
        %6530 = vmatpush1.bf16.msra.mxu0 0
        %6531 = vmatprep.subr.bf16.mxu0 0
        %6532 = vmatpush1.bf16.msra.mxu0 0
        %6533 = vmatprep.subr.bf16.mxu0 0
        %6534 = vmatpush1.bf16.msra.mxu0 0
        %6535 = vmatprep.subr.bf16.mxu0 0
        %6536 = vmatpush1.bf16.msra.mxu0 0
        %6537 = vmatprep.subr.bf16.mxu0 0
        %6538 = vmatpush1.bf16.msra.mxu0 0
        %6539 = vmatprep.subr.bf16.mxu0 0
        %6540 = vmatpush1.bf16.msra.mxu0 0
        %6541 = vmatprep.subr.bf16.mxu0 0
        %6542 = vmatpush1.bf16.msra.mxu0 0
        %6543 = vmatprep.subr.bf16.mxu0 0
        %6544 = vmatpush1.bf16.msra.mxu0 0
        %6545 = vmatprep.subr.bf16.mxu0 0
        %6546 = vmatpush1.bf16.msra.mxu0 0
        %6547 = vmatprep.subr.bf16.mxu0 0
        %6548 = vmatpush1.bf16.msra.mxu0 0
        %6549 = vmatprep.subr.bf16.mxu0 0
        %6550 = vmatpush1.bf16.msra.mxu0 0
        %6551 = vmatprep.subr.bf16.mxu0 0
        %6552 = vmatpush1.bf16.msra.mxu0 0
        %6553 = vmatprep.mubr.bf16.mxu0 0
        %6554 = vmatmul.mubr.bf16.gmra.mrb[0].mxu0 %v6519
        %v6555 = vpop.f32.mrb[0].mxu0
        %v6556 = vadd.f32 0.0, %v6555
        %v6557 = vpop.f32.mrb[0].mxu0
        %v6558 = vpop.f32.mrb[0].mxu0
        %v6559 = vpop.f32.mrb[0].mxu0
        %6560 = vdwg.mxu0
        %v6561 = vadd.f32 %v6510, %v6556
        %v6562 = vadd.f32 %v6561, %v6005
        %6564 = vrot.lane.b32.xlu0 %v6562, 1
        %v6565 = vpop.permute.xlu0 %6564
        %6567 = vst.msk [vmem:[%s119 + $0x1] sm:$0x1] %vm6286, %v6565
        %s6568 = sand.u32 %s59, 1
        %s6569 = scalar_lea.sflag [#allocation16], %s6568
        %s6570 = sand.u32 %s59, 1
        %s6571 = smul.addr %s6570, 2
        %s6572 = scalar_lea.vmem [#allocation15], %s6571
        // Predicated region
        $region288: #{tpu_custom_call.1} parent=23 // pred_check
          %p6573 = pneg %p69
        $region289: #{tpu_custom_call.1} parent=23 // pred_check_branch
          %6575 = sbr.rel (%p6573) target = $region291
        $region290: #{tpu_custom_call.1} parent=23 // pred_region
          %s6577 = ssub.s32 32, 32
          %6578 = vsyncadd %s6569, %s6577
          %s6579 = smul.addr %s25, 32
          %s6580 = scalar_lea.hbm %s9, %s6579
          %s6582 = sshll.u32 %s6572, 4
          %s6583 = int_to_ptr.vmem [resolvable:$true] %s6582
          %6585 = dma.vmem_to_hbm [thread:$0]  %s6583, 32, %s6580, %s6569
        $region291: #{tpu_custom_call.1} parent=23 // pred_fallthru
          _
      $region24: #{tpu_custom_call.1} parent=5 // pred_fallthru
        _
      %p6586 = scmp.le.s32.totalorder 2, %s20
      // Predicated region
      $region292: #{tpu_custom_call.1} parent=5 // pred_check
        %p6587 = pneg %p6586
      $region293: #{tpu_custom_call.1} parent=5 // pred_check_branch
        %6589 = sbr.rel (%p6587) target = $region295
      $region294: #{tpu_custom_call.1} parent=5 // pred_region
        %s6590 = ssub.s32 %s20, 2
        // Predicated region
        $region296: #{tpu_custom_call.1} parent=294 // pred_check
          %p6591 = pneg %p75
        $region297: #{tpu_custom_call.1} parent=294 // pred_check_branch
          %6593 = sbr.rel (%p6591) target = $region299
        $region298: #{tpu_custom_call.1} parent=294 // pred_region
          %s6594 = sand.u32 %s60, 1
          %s6595 = scalar_lea.sflag [#allocation16], %s6594
          %s6596 = sand.u32 %s60, 1
          %s6597 = smul.addr %s6596, 2
          %s6598 = scalar_lea.vmem [#allocation15], %s6597
          %6599 = dma.done %s6595, 32
        $region299: #{tpu_custom_call.1} parent=294 // pred_fallthru
          _
      $region295: #{tpu_custom_call.1} parent=5 // pred_fallthru
        _
    $region6: #{tpu_custom_call.1} parent=1 // loop_footer
      %s24 = sadd.s32 1, %s20
    $region7: #{tpu_custom_call.1} parent=1 // loop_footer_branch
      %19 = sbr.rel target = $region3
    $region8: #{tpu_custom_call.1} parent=1 // loop_exit
      _
    %6600 = vsyncpa [#allocation16], 1
    %s6601 = scalar_lea.sflag [#allocation16], 1
    %6602 = vsyncpa %s6601, 1
  %6603 = vsyncmov [#allocation13]
  %s6604 = vpop.sfrf %6603
  %p6605 = scmp.eq.s32.totalorder %s6604, 0
  %p6606 = pneg %p6605
  %6608 = shalt.err (%p6606)
  %s6609 = scalar_lea.sflag [#allocation13], 1
  %6610 = vsyncmov %s6609
  %s6611 = vpop.sfrf %6610
  %p6612 = scmp.eq.s32.totalorder %s6611, 0
  %p6613 = pneg %p6612
  %6615 = shalt.err (%p6613)
  %s6616 = scalar_lea.sflag [#allocation13], 2
  %6617 = vsyncmov %s6616
  %s6618 = vpop.sfrf %6617
  %p6619 = scmp.eq.s32.totalorder %s6618, 0
  %p6620 = pneg %p6619
  %6622 = shalt.err (%p6620)
  %s6623 = scalar_lea.sflag [#allocation13], 3
  %6624 = vsyncmov %s6623
  %s6625 = vpop.sfrf %6624
  %p6626 = scmp.eq.s32.totalorder %s6625, 0
  %p6627 = pneg %p6626
  %6629 = shalt.err (%p6627)
  %s6630 = scalar_lea.sflag [#allocation13], 4
  %6631 = vsyncmov %s6630
  %s6632 = vpop.sfrf %6631
  %p6633 = scmp.eq.s32.totalorder %s6632, 0
  %p6634 = pneg %p6633
  %6636 = shalt.err (%p6634)
  %s6637 = scalar_lea.sflag [#allocation13], 5
  %6638 = vsyncmov %s6637
  %s6639 = vpop.sfrf %6638
  %p6640 = scmp.eq.s32.totalorder %s6639, 0
  %p6641 = pneg %p6640
  %6643 = shalt.err (%p6641)
  %s6644 = scalar_lea.sflag [#allocation13], 6
  %6645 = vsyncmov %s6644
  %s6646 = vpop.sfrf %6645
  %p6647 = scmp.eq.s32.totalorder %s6646, 0
  %p6648 = pneg %p6647
  %6650 = shalt.err (%p6648)
  %s6651 = scalar_lea.sflag [#allocation13], 7
  %6652 = vsyncmov %s6651
  %s6653 = vpop.sfrf %6652
  %p6654 = scmp.eq.s32.totalorder %s6653, 0
  %p6655 = pneg %p6654
  %6657 = shalt.err (%p6655)

</llo_original>
